<compile_context>
chip_gen: v5e
topology: v5e:2x2
jax: 0.10.0
libtpu: 0.0.40
codegen_flags: <defaults>
</compile_context>

<pallas_src>
import math
from functools import partial

import jax
import jax.numpy as jnp
from jax.experimental import pallas as pl
from jax.experimental.pallas import tpu as pltpu


def mha_kernel(x_ref, wqkv_ref, bqkv_ref, wo_ref, bo_ref, o_ref, *, num_heads):
    L, E, bn = x_ref.shape          # seq positions per sequence, embed, lanes/block
    H = num_heads
    hd = E // H
    LN = L * bn                      # flattened (l-major, n-minor) lane extent

    # Flatten the L axis into lanes: x_flat[e, l*bn + n].  Lane concat of
    # 128-multiple-wide aligned slabs -> cheap vreg copies, no relayout.
    x_flat = jnp.concatenate([x_ref[l] for l in range(L)], axis=-1)   # (E, L*bn)

    # Single fused QKV projection on the MXU (scale already folded into Q rows).
    qkv = jnp.dot(wqkv_ref[...], x_flat,
                  preferred_element_type=jnp.float32) + bqkv_ref[...]  # (3E, L*bn)

    ctx_heads = []
    for h in range(H):
        # Sublane-group-aligned row slices (hd == 8): no relayout.
        qh = qkv[h * hd:(h + 1) * hd, :]                       # (hd, L*bn)
        kh = qkv[E + h * hd:E + (h + 1) * hd, :]               # (hd, L*bn)
        vh = qkv[2 * E + h * hd:2 * E + (h + 1) * hd, :]       # (hd, L*bn)

        # Scores: s_rows[m][0, l*bn+n] = sum_d qh[d, l*bn+n] * kh[d, m*bn+n]
        # Dense (hd, L*bn) VPU multiplies + sublane (XLU) reductions.
        s_rows = []
        for m in range(L):
            k_m = kh[:, m * bn:(m + 1) * bn]                   # (hd, bn) aligned
            k_rep = jnp.concatenate([k_m] * L, axis=-1)        # (hd, L*bn)
            s_rows.append(jnp.sum(qh * k_rep, axis=0, keepdims=True))  # (1, L*bn)

        # Softmax over key position m (kept as a row list: no sublane re-pack).
        m_max = s_rows[0]
        for m in range(1, L):
            m_max = jnp.maximum(m_max, s_rows[m])
        e_rows = [jnp.exp(s - m_max) for s in s_rows]
        denom = e_rows[0]
        for m in range(1, L):
            denom = denom + e_rows[m]
        inv = 1.0 / denom                                       # exact normalization

        # Context: ctx[d, l*bn+n] = sum_m softmax_p[m] * vh[d, m*bn+n]
        acc = jnp.concatenate([vh[:, 0:bn]] * L, axis=-1) * e_rows[0]
        for m in range(1, L):
            v_m = vh[:, m * bn:(m + 1) * bn]
            acc = acc + jnp.concatenate([v_m] * L, axis=-1) * e_rows[m]
        ctx_heads.append(acc * inv)                             # (hd, L*bn)

    # Heads stacked along sublanes (whole 8-sublane groups -> free-ish concat).
    ctx = jnp.concatenate(ctx_heads, axis=0)                    # (E, L*bn)

    # Single K=E output projection + bias (one MXU matmul, one add pass).
    out = jnp.dot(wo_ref[...], ctx,
                  preferred_element_type=jnp.float32) + bo_ref[...]   # (E, L*bn)

    # Lane-dense stores: (E, bn) slabs, bn a multiple of 128 (unmasked vst).
    for l in range(L):
        o_ref[l] = out[:, l * bn:(l + 1) * bn].astype(o_ref.dtype)


def multihead_self_attention_lanes(x_len, params_k, num_heads, bn=None):
    """x_len: (L, E, N) with the batch axis N on lanes; returns (L, E, N)."""
    L, E, N = x_len.shape
    wqkv, bqkv, wo, bo = params_k
    assert E % num_heads == 0
    assert wqkv.shape == (3 * E, E)

    if bn is None:
        # Whole problem in one grid step when it comfortably fits (overhead-
        # bound regime); otherwise tile the lane axis in multiples of 128.
        bn = N
        if N > 1024:
            for c in (1024, 896, 768, 640, 512, 384, 256, 128):
                if N % c == 0:
                    bn = c
                    break
    assert N % bn == 0

    kernel = partial(mha_kernel, num_heads=num_heads)
    return pl.pallas_call(
        kernel,
        out_shape=jax.ShapeDtypeStruct((L, E, N), x_len.dtype),
        grid_spec=pltpu.PrefetchScalarGridSpec(
            num_scalar_prefetch=0,
            grid=(N // bn,),
            in_specs=[
                pl.BlockSpec((L, E, bn), lambda i: (0, 0, i)),   # x  (bn sequences)
                pl.BlockSpec((3 * E, E), lambda i: (0, 0)),      # fused W_qkv
                pl.BlockSpec((3 * E, 1), lambda i: (0, 0)),      # fused b_qkv
                pl.BlockSpec((E, E), lambda i: (0, 0)),          # W_o
                pl.BlockSpec((E, 1), lambda i: (0, 0)),          # b_o
            ],
            out_specs=pl.BlockSpec((L, E, bn), lambda i: (0, 0, i)),
        ),
        compiler_params=pltpu.CompilerParams(
            dimension_semantics=("parallel",),     # both v7x TCs if grid > 1
            vmem_limit_bytes=32 * 1024 * 1024,
        ),
    )(x_len, wqkv, bqkv, wo, bo)


def prepare_kernel_params(params, num_heads):
    """Torch-convention MHA params -> kernel layout, with 1/sqrt(hd) folded
    into the Q rows of the fused in-projection (free at prep time)."""
    in_w, in_b, out_w, out_b = params          # (3E,E), (3E,), (E,E), (E,)
    E = out_w.shape[0]
    hd = E // num_heads
    scale = 1.0 / math.sqrt(hd)
    s = jnp.concatenate([jnp.full((E,), scale, in_w.dtype),
                         jnp.ones((2 * E,), in_w.dtype)])
    wqkv = in_w * s[:, None]                   # (3E, E): rows [q | k | v]
    bqkv = (in_b * s)[:, None]                 # (3E, 1)
    return wqkv, bqkv, out_w, out_b[:, None]


@partial(jax.jit, static_argnums=(2,))
def attention_block_nlp_forward(input_img, params, num_heads):
    B, C, D, H, W = input_img.shape
    N, L, E = B * C * H, D, W
    # Batch-in-lanes layout: x_len[l, e, n] with n = (b, c, h) flattened.
    # Single fused XLA transpose each way.
    x_len = jnp.transpose(input_img, (2, 4, 0, 1, 3)).reshape(L, E, N)

    params_k = prepare_kernel_params(params, num_heads)
    out_len = multihead_self_attention_lanes(x_len, params_k, num_heads)  # (L, E, N)

    # Torch epilogue: (L, N, E) -> view(D, B, C*H//W, W, W) -> permute(1,2,0,3,4).
    G = (C * H) // W
    out = out_len.reshape(D, W, B, G, W)
    return jnp.transpose(out, (2, 3, 0, 4, 1))           # (B, G, D, W, W)


def init_mha_params(key, embed_dim):
    """Deterministic params matching nn.MultiheadAttention shapes (torch convention)."""
    E = embed_dim
    kw, ko, kb1, kb2 = jax.random.split(key, 4)
    bound = 1.0 / math.sqrt(E)
    in_w = jax.random.uniform(kw, (3 * E, E), jnp.float32, -bound, bound)
    out_w = jax.random.uniform(ko, (E, E), jnp.float32, -bound, bound)
    # PyTorch zero-inits in_proj_bias; use random biases for a stronger check.
    in_b = jax.random.uniform(kb1, (3 * E,), jnp.float32, -bound, bound)
    out_b = jax.random.uniform(kb2, (E,), jnp.float32, -bound, bound)
    return in_w, in_b, out_w, out_b


def reference_forward(input_img, params, num_heads):
    """Pure-JAX reference following the torch op order (sanity check)."""
    in_w, in_b, out_w, out_b = params
    B, C, D, H, W = input_img.shape
    E = W
    hd = E // num_heads
    x = jnp.transpose(input_img, (2, 0, 1, 3, 4)).reshape(D, B * C * H, W)  # (L, N, E)
    qkv = x @ in_w.T + in_b
    q, k, v = qkv[..., :E], qkv[..., E:2 * E], qkv[..., 2 * E:]
    L, N, _ = x.shape
    def heads(t):  # (L, N, E) -> (N, H, L, hd)
        return jnp.transpose(t.reshape(L, N, num_heads, hd), (1, 2, 0, 3))
    qh, kh, vh = heads(q), heads(k), heads(v)
    s = jnp.einsum('nhld,nhmd->nhlm', qh, kh) / math.sqrt(hd)
    p = jax.nn.softmax(s, axis=-1)
    o = jnp.einsum('nhlm,nhmd->nhld', p, vh)
    o = jnp.transpose(o, (2, 0, 1, 3)).reshape(L, N, E)
    o = o @ out_w.T + out_b
    o = o.reshape(D, B, (C * H) // W, W, W)
    return jnp.transpose(o, (1, 2, 0, 3, 4))


if __name__ == "__main__":
    # Small shapes consistent with the module: embed_dim must equal W and
    # C*H must be divisible by W for the final .view to succeed.
    B, C, D, H, W = 2, 4, 8, 32, 32          # N = B*C*H = 256, L = 8, E = 32
    embed_dim, num_heads = W, 4

    key = jax.random.PRNGKey(0)
    k_x, k_p = jax.random.split(key)
    input_img = jax.random.normal(k_x, (B, C, D, H, W), jnp.float32)
    params = init_mha_params(k_p, embed_dim)

    out = attention_block_nlp_forward(input_img, params, num_heads)
    out = jax.block_until_ready(out)
    assert out.shape == (B, (C * H) // W, D, W, W), out.shape

    ref = jax.block_until_ready(reference_forward(input_img, params, num_heads))
    err = float(jnp.max(jnp.abs(out - ref)))
    assert jnp.allclose(out, ref, atol=1e-4, rtol=1e-4), err

    print("KERNEL_OK")
</pallas_src>

<mosaic_0001>
module attributes {stable_mosaic.version = 11 : i64} {
  func.func @mha_kernel(%arg0: i32, %arg1: memref<8x32x256xf32, #tpu.memory_space<vmem>>, %arg2: memref<96x32xf32, #tpu.memory_space<vmem>>, %arg3: memref<96x1xf32, #tpu.memory_space<vmem>>, %arg4: memref<32x32xf32, #tpu.memory_space<vmem>>, %arg5: memref<32x1xf32, #tpu.memory_space<vmem>>, %arg6: memref<8x32x256xf32, #tpu.memory_space<vmem>>) attributes {dimension_semantics = [#tpu.dimension_semantics<parallel>], iteration_bounds = array<i64: 1>, scalar_prefetch = 0 : i64, scratch_operands = 0 : i64, tpu.core_type = #tpu.core_type<tc>, window_params = [{transform_indices = @transform_0, window_bounds = array<i64: 8, 32, 256>}, {pipeline_mode = #tpu.pipeline_mode<synchronous>, transform_indices = @transform_1, window_bounds = array<i64: 96, 32>}, {pipeline_mode = #tpu.pipeline_mode<synchronous>, transform_indices = @transform_2, window_bounds = array<i64: 96, 1>}, {pipeline_mode = #tpu.pipeline_mode<synchronous>, transform_indices = @transform_3, window_bounds = array<i64: 32, 32>}, {pipeline_mode = #tpu.pipeline_mode<synchronous>, transform_indices = @transform_4, window_bounds = array<i64: 32, 1>}, {transform_indices = @transform_5, window_bounds = array<i64: 8, 32, 256>}]} {
    %c0 = arith.constant 0 : index
    %c0_0 = arith.constant 0 : index
    %c0_1 = arith.constant 0 : index
    %0 = vector.load %arg1[%c0, %c0_0, %c0_1] : memref<8x32x256xf32, #tpu.memory_space<vmem>>, vector<1x32x256xf32>
    %1 = vector.shape_cast %0 : vector<1x32x256xf32> to vector<32x256xf32>
    %c1 = arith.constant 1 : index
    %c0_2 = arith.constant 0 : index
    %c0_3 = arith.constant 0 : index
    %2 = vector.load %arg1[%c1, %c0_2, %c0_3] : memref<8x32x256xf32, #tpu.memory_space<vmem>>, vector<1x32x256xf32>
    %3 = vector.shape_cast %2 : vector<1x32x256xf32> to vector<32x256xf32>
    %c2 = arith.constant 2 : index
    %c0_4 = arith.constant 0 : index
    %c0_5 = arith.constant 0 : index
    %4 = vector.load %arg1[%c2, %c0_4, %c0_5] : memref<8x32x256xf32, #tpu.memory_space<vmem>>, vector<1x32x256xf32>
    %5 = vector.shape_cast %4 : vector<1x32x256xf32> to vector<32x256xf32>
    %c3 = arith.constant 3 : index
    %c0_6 = arith.constant 0 : index
    %c0_7 = arith.constant 0 : index
    %6 = vector.load %arg1[%c3, %c0_6, %c0_7] : memref<8x32x256xf32, #tpu.memory_space<vmem>>, vector<1x32x256xf32>
    %7 = vector.shape_cast %6 : vector<1x32x256xf32> to vector<32x256xf32>
    %c4 = arith.constant 4 : index
    %c0_8 = arith.constant 0 : index
    %c0_9 = arith.constant 0 : index
    %8 = vector.load %arg1[%c4, %c0_8, %c0_9] : memref<8x32x256xf32, #tpu.memory_space<vmem>>, vector<1x32x256xf32>
    %9 = vector.shape_cast %8 : vector<1x32x256xf32> to vector<32x256xf32>
    %c5 = arith.constant 5 : index
    %c0_10 = arith.constant 0 : index
    %c0_11 = arith.constant 0 : index
    %10 = vector.load %arg1[%c5, %c0_10, %c0_11] : memref<8x32x256xf32, #tpu.memory_space<vmem>>, vector<1x32x256xf32>
    %11 = vector.shape_cast %10 : vector<1x32x256xf32> to vector<32x256xf32>
    %c6 = arith.constant 6 : index
    %c0_12 = arith.constant 0 : index
    %c0_13 = arith.constant 0 : index
    %12 = vector.load %arg1[%c6, %c0_12, %c0_13] : memref<8x32x256xf32, #tpu.memory_space<vmem>>, vector<1x32x256xf32>
    %13 = vector.shape_cast %12 : vector<1x32x256xf32> to vector<32x256xf32>
    %c7 = arith.constant 7 : index
    %c0_14 = arith.constant 0 : index
    %c0_15 = arith.constant 0 : index
    %14 = vector.load %arg1[%c7, %c0_14, %c0_15] : memref<8x32x256xf32, #tpu.memory_space<vmem>>, vector<1x32x256xf32>
    %15 = vector.shape_cast %14 : vector<1x32x256xf32> to vector<32x256xf32>
    %16 = tpu.concatenate %1, %3, %5, %7, %9, %11, %13, %15 in 1 : vector<32x256xf32>, vector<32x256xf32>, vector<32x256xf32>, vector<32x256xf32>, vector<32x256xf32>, vector<32x256xf32>, vector<32x256xf32>, vector<32x256xf32> -> vector<32x2048xf32>
    %c0_16 = arith.constant 0 : index
    %c0_17 = arith.constant 0 : index
    %17 = vector.load %arg2[%c0_16, %c0_17] : memref<96x32xf32, #tpu.memory_space<vmem>>, vector<96x32xf32>
    %cst = arith.constant dense<0.000000e+00> : vector<96x2048xf32>
    %18 = tpu.matmul %17, %16, %cst {dimension_numbers = #tpu.dot_dimension_numbers<[1], [0], [0], [1], [0, 0, 1, 1], [], []>} : vector<96x32xf32>, vector<32x2048xf32>, vector<96x2048xf32> -> vector<96x2048xf32>
    %c0_18 = arith.constant 0 : index
    %c0_19 = arith.constant 0 : index
    %19 = vector.load %arg3[%c0_18, %c0_19] : memref<96x1xf32, #tpu.memory_space<vmem>>, vector<96x1xf32>
    %20 = vector.broadcast %19 : vector<96x1xf32> to vector<96x2048xf32>
    %21 = arith.addf %18, %20 : vector<96x2048xf32>
    %22 = vector.extract_strided_slice %21 {offsets = [0, 0], sizes = [8, 2048], strides = [1, 1]} : vector<96x2048xf32> to vector<8x2048xf32>
    %23 = vector.extract_strided_slice %21 {offsets = [32, 0], sizes = [8, 2048], strides = [1, 1]} : vector<96x2048xf32> to vector<8x2048xf32>
    %24 = vector.extract_strided_slice %21 {offsets = [64, 0], sizes = [8, 2048], strides = [1, 1]} : vector<96x2048xf32> to vector<8x2048xf32>
    %25 = vector.extract_strided_slice %23 {offsets = [0, 0], sizes = [8, 256], strides = [1, 1]} : vector<8x2048xf32> to vector<8x256xf32>
    %26 = tpu.concatenate %25, %25, %25, %25, %25, %25, %25, %25 in 1 : vector<8x256xf32>, vector<8x256xf32>, vector<8x256xf32>, vector<8x256xf32>, vector<8x256xf32>, vector<8x256xf32>, vector<8x256xf32>, vector<8x256xf32> -> vector<8x2048xf32>
    %27 = arith.mulf %22, %26 : vector<8x2048xf32>
    %cst_20 = arith.constant dense<0.000000e+00> : vector<2048xf32>
    %28 = vector.multi_reduction <add>, %27, %cst_20 [0] : vector<8x2048xf32> to vector<2048xf32>
    %29 = vector.shape_cast %28 : vector<2048xf32> to vector<1x2048xf32>
    %30 = vector.extract_strided_slice %23 {offsets = [0, 256], sizes = [8, 256], strides = [1, 1]} : vector<8x2048xf32> to vector<8x256xf32>
    %31 = tpu.concatenate %30, %30, %30, %30, %30, %30, %30, %30 in 1 : vector<8x256xf32>, vector<8x256xf32>, vector<8x256xf32>, vector<8x256xf32>, vector<8x256xf32>, vector<8x256xf32>, vector<8x256xf32>, vector<8x256xf32> -> vector<8x2048xf32>
    %32 = arith.mulf %22, %31 : vector<8x2048xf32>
    %cst_21 = arith.constant dense<0.000000e+00> : vector<2048xf32>
    %33 = vector.multi_reduction <add>, %32, %cst_21 [0] : vector<8x2048xf32> to vector<2048xf32>
    %34 = vector.shape_cast %33 : vector<2048xf32> to vector<1x2048xf32>
    %35 = vector.extract_strided_slice %23 {offsets = [0, 512], sizes = [8, 256], strides = [1, 1]} : vector<8x2048xf32> to vector<8x256xf32>
    %36 = tpu.concatenate %35, %35, %35, %35, %35, %35, %35, %35 in 1 : vector<8x256xf32>, vector<8x256xf32>, vector<8x256xf32>, vector<8x256xf32>, vector<8x256xf32>, vector<8x256xf32>, vector<8x256xf32>, vector<8x256xf32> -> vector<8x2048xf32>
    %37 = arith.mulf %22, %36 : vector<8x2048xf32>
    %cst_22 = arith.constant dense<0.000000e+00> : vector<2048xf32>
    %38 = vector.multi_reduction <add>, %37, %cst_22 [0] : vector<8x2048xf32> to vector<2048xf32>
    %39 = vector.shape_cast %38 : vector<2048xf32> to vector<1x2048xf32>
    %40 = vector.extract_strided_slice %23 {offsets = [0, 768], sizes = [8, 256], strides = [1, 1]} : vector<8x2048xf32> to vector<8x256xf32>
    %41 = tpu.concatenate %40, %40, %40, %40, %40, %40, %40, %40 in 1 : vector<8x256xf32>, vector<8x256xf32>, vector<8x256xf32>, vector<8x256xf32>, vector<8x256xf32>, vector<8x256xf32>, vector<8x256xf32>, vector<8x256xf32> -> vector<8x2048xf32>
    %42 = arith.mulf %22, %41 : vector<8x2048xf32>
    %cst_23 = arith.constant dense<0.000000e+00> : vector<2048xf32>
    %43 = vector.multi_reduction <add>, %42, %cst_23 [0] : vector<8x2048xf32> to vector<2048xf32>
    %44 = vector.shape_cast %43 : vector<2048xf32> to vector<1x2048xf32>
    %45 = vector.extract_strided_slice %23 {offsets = [0, 1024], sizes = [8, 256], strides = [1, 1]} : vector<8x2048xf32> to vector<8x256xf32>
    %46 = tpu.concatenate %45, %45, %45, %45, %45, %45, %45, %45 in 1 : vector<8x256xf32>, vector<8x256xf32>, vector<8x256xf32>, vector<8x256xf32>, vector<8x256xf32>, vector<8x256xf32>, vector<8x256xf32>, vector<8x256xf32> -> vector<8x2048xf32>
    %47 = arith.mulf %22, %46 : vector<8x2048xf32>
    %cst_24 = arith.constant dense<0.000000e+00> : vector<2048xf32>
    %48 = vector.multi_reduction <add>, %47, %cst_24 [0] : vector<8x2048xf32> to vector<2048xf32>
    %49 = vector.shape_cast %48 : vector<2048xf32> to vector<1x2048xf32>
    %50 = vector.extract_strided_slice %23 {offsets = [0, 1280], sizes = [8, 256], strides = [1, 1]} : vector<8x2048xf32> to vector<8x256xf32>
    %51 = tpu.concatenate %50, %50, %50, %50, %50, %50, %50, %50 in 1 : vector<8x256xf32>, vector<8x256xf32>, vector<8x256xf32>, vector<8x256xf32>, vector<8x256xf32>, vector<8x256xf32>, vector<8x256xf32>, vector<8x256xf32> -> vector<8x2048xf32>
    %52 = arith.mulf %22, %51 : vector<8x2048xf32>
    %cst_25 = arith.constant dense<0.000000e+00> : vector<2048xf32>
    %53 = vector.multi_reduction <add>, %52, %cst_25 [0] : vector<8x2048xf32> to vector<2048xf32>
    %54 = vector.shape_cast %53 : vector<2048xf32> to vector<1x2048xf32>
    %55 = vector.extract_strided_slice %23 {offsets = [0, 1536], sizes = [8, 256], strides = [1, 1]} : vector<8x2048xf32> to vector<8x256xf32>
    %56 = tpu.concatenate %55, %55, %55, %55, %55, %55, %55, %55 in 1 : vector<8x256xf32>, vector<8x256xf32>, vector<8x256xf32>, vector<8x256xf32>, vector<8x256xf32>, vector<8x256xf32>, vector<8x256xf32>, vector<8x256xf32> -> vector<8x2048xf32>
    %57 = arith.mulf %22, %56 : vector<8x2048xf32>
    %cst_26 = arith.constant dense<0.000000e+00> : vector<2048xf32>
    %58 = vector.multi_reduction <add>, %57, %cst_26 [0] : vector<8x2048xf32> to vector<2048xf32>
    %59 = vector.shape_cast %58 : vector<2048xf32> to vector<1x2048xf32>
    %60 = vector.extract_strided_slice %23 {offsets = [0, 1792], sizes = [8, 256], strides = [1, 1]} : vector<8x2048xf32> to vector<8x256xf32>
    %61 = tpu.concatenate %60, %60, %60, %60, %60, %60, %60, %60 in 1 : vector<8x256xf32>, vector<8x256xf32>, vector<8x256xf32>, vector<8x256xf32>, vector<8x256xf32>, vector<8x256xf32>, vector<8x256xf32>, vector<8x256xf32> -> vector<8x2048xf32>
    %62 = arith.mulf %22, %61 : vector<8x2048xf32>
    %cst_27 = arith.constant dense<0.000000e+00> : vector<2048xf32>
    %63 = vector.multi_reduction <add>, %62, %cst_27 [0] : vector<8x2048xf32> to vector<2048xf32>
    %64 = vector.shape_cast %63 : vector<2048xf32> to vector<1x2048xf32>
    %65 = arith.maximumf %29, %34 : vector<1x2048xf32>
    %66 = arith.maximumf %65, %39 : vector<1x2048xf32>
    %67 = arith.maximumf %66, %44 : vector<1x2048xf32>
    %68 = arith.maximumf %67, %49 : vector<1x2048xf32>
    %69 = arith.maximumf %68, %54 : vector<1x2048xf32>
    %70 = arith.maximumf %69, %59 : vector<1x2048xf32>
    %71 = arith.maximumf %70, %64 : vector<1x2048xf32>
    %72 = arith.subf %29, %71 : vector<1x2048xf32>
    %73 = math.exp %72 : vector<1x2048xf32>
    %74 = arith.subf %34, %71 : vector<1x2048xf32>
    %75 = math.exp %74 : vector<1x2048xf32>
    %76 = arith.subf %39, %71 : vector<1x2048xf32>
    %77 = math.exp %76 : vector<1x2048xf32>
    %78 = arith.subf %44, %71 : vector<1x2048xf32>
    %79 = math.exp %78 : vector<1x2048xf32>
    %80 = arith.subf %49, %71 : vector<1x2048xf32>
    %81 = math.exp %80 : vector<1x2048xf32>
    %82 = arith.subf %54, %71 : vector<1x2048xf32>
    %83 = math.exp %82 : vector<1x2048xf32>
    %84 = arith.subf %59, %71 : vector<1x2048xf32>
    %85 = math.exp %84 : vector<1x2048xf32>
    %86 = arith.subf %64, %71 : vector<1x2048xf32>
    %87 = math.exp %86 : vector<1x2048xf32>
    %88 = arith.addf %73, %75 : vector<1x2048xf32>
    %89 = arith.addf %88, %77 : vector<1x2048xf32>
    %90 = arith.addf %89, %79 : vector<1x2048xf32>
    %91 = arith.addf %90, %81 : vector<1x2048xf32>
    %92 = arith.addf %91, %83 : vector<1x2048xf32>
    %93 = arith.addf %92, %85 : vector<1x2048xf32>
    %94 = arith.addf %93, %87 : vector<1x2048xf32>
    %cst_28 = arith.constant 1.000000e+00 : f32
    %95 = vector.broadcast %cst_28 : f32 to vector<1x2048xf32>
    %96 = arith.divf %95, %94 : vector<1x2048xf32>
    %97 = vector.extract_strided_slice %24 {offsets = [0, 0], sizes = [8, 256], strides = [1, 1]} : vector<8x2048xf32> to vector<8x256xf32>
    %98 = tpu.concatenate %97, %97, %97, %97, %97, %97, %97, %97 in 1 : vector<8x256xf32>, vector<8x256xf32>, vector<8x256xf32>, vector<8x256xf32>, vector<8x256xf32>, vector<8x256xf32>, vector<8x256xf32>, vector<8x256xf32> -> vector<8x2048xf32>
    %99 = vector.broadcast %73 : vector<1x2048xf32> to vector<8x2048xf32>
    %100 = arith.mulf %98, %99 : vector<8x2048xf32>
    %101 = vector.extract_strided_slice %24 {offsets = [0, 256], sizes = [8, 256], strides = [1, 1]} : vector<8x2048xf32> to vector<8x256xf32>
    %102 = tpu.concatenate %101, %101, %101, %101, %101, %101, %101, %101 in 1 : vector<8x256xf32>, vector<8x256xf32>, vector<8x256xf32>, vector<8x256xf32>, vector<8x256xf32>, vector<8x256xf32>, vector<8x256xf32>, vector<8x256xf32> -> vector<8x2048xf32>
    %103 = vector.broadcast %75 : vector<1x2048xf32> to vector<8x2048xf32>
    %104 = arith.mulf %102, %103 : vector<8x2048xf32>
    %105 = arith.addf %100, %104 : vector<8x2048xf32>
    %106 = vector.extract_strided_slice %24 {offsets = [0, 512], sizes = [8, 256], strides = [1, 1]} : vector<8x2048xf32> to vector<8x256xf32>
    %107 = tpu.concatenate %106, %106, %106, %106, %106, %106, %106, %106 in 1 : vector<8x256xf32>, vector<8x256xf32>, vector<8x256xf32>, vector<8x256xf32>, vector<8x256xf32>, vector<8x256xf32>, vector<8x256xf32>, vector<8x256xf32> -> vector<8x2048xf32>
    %108 = vector.broadcast %77 : vector<1x2048xf32> to vector<8x2048xf32>
    %109 = arith.mulf %107, %108 : vector<8x2048xf32>
    %110 = arith.addf %105, %109 : vector<8x2048xf32>
    %111 = vector.extract_strided_slice %24 {offsets = [0, 768], sizes = [8, 256], strides = [1, 1]} : vector<8x2048xf32> to vector<8x256xf32>
    %112 = tpu.concatenate %111, %111, %111, %111, %111, %111, %111, %111 in 1 : vector<8x256xf32>, vector<8x256xf32>, vector<8x256xf32>, vector<8x256xf32>, vector<8x256xf32>, vector<8x256xf32>, vector<8x256xf32>, vector<8x256xf32> -> vector<8x2048xf32>
    %113 = vector.broadcast %79 : vector<1x2048xf32> to vector<8x2048xf32>
    %114 = arith.mulf %112, %113 : vector<8x2048xf32>
    %115 = arith.addf %110, %114 : vector<8x2048xf32>
    %116 = vector.extract_strided_slice %24 {offsets = [0, 1024], sizes = [8, 256], strides = [1, 1]} : vector<8x2048xf32> to vector<8x256xf32>
    %117 = tpu.concatenate %116, %116, %116, %116, %116, %116, %116, %116 in 1 : vector<8x256xf32>, vector<8x256xf32>, vector<8x256xf32>, vector<8x256xf32>, vector<8x256xf32>, vector<8x256xf32>, vector<8x256xf32>, vector<8x256xf32> -> vector<8x2048xf32>
    %118 = vector.broadcast %81 : vector<1x2048xf32> to vector<8x2048xf32>
    %119 = arith.mulf %117, %118 : vector<8x2048xf32>
    %120 = arith.addf %115, %119 : vector<8x2048xf32>
    %121 = vector.extract_strided_slice %24 {offsets = [0, 1280], sizes = [8, 256], strides = [1, 1]} : vector<8x2048xf32> to vector<8x256xf32>
    %122 = tpu.concatenate %121, %121, %121, %121, %121, %121, %121, %121 in 1 : vector<8x256xf32>, vector<8x256xf32>, vector<8x256xf32>, vector<8x256xf32>, vector<8x256xf32>, vector<8x256xf32>, vector<8x256xf32>, vector<8x256xf32> -> vector<8x2048xf32>
    %123 = vector.broadcast %83 : vector<1x2048xf32> to vector<8x2048xf32>
    %124 = arith.mulf %122, %123 : vector<8x2048xf32>
    %125 = arith.addf %120, %124 : vector<8x2048xf32>
    %126 = vector.extract_strided_slice %24 {offsets = [0, 1536], sizes = [8, 256], strides = [1, 1]} : vector<8x2048xf32> to vector<8x256xf32>
    %127 = tpu.concatenate %126, %126, %126, %126, %126, %126, %126, %126 in 1 : vector<8x256xf32>, vector<8x256xf32>, vector<8x256xf32>, vector<8x256xf32>, vector<8x256xf32>, vector<8x256xf32>, vector<8x256xf32>, vector<8x256xf32> -> vector<8x2048xf32>
    %128 = vector.broadcast %85 : vector<1x2048xf32> to vector<8x2048xf32>
    %129 = arith.mulf %127, %128 : vector<8x2048xf32>
    %130 = arith.addf %125, %129 : vector<8x2048xf32>
    %131 = vector.extract_strided_slice %24 {offsets = [0, 1792], sizes = [8, 256], strides = [1, 1]} : vector<8x2048xf32> to vector<8x256xf32>
    %132 = tpu.concatenate %131, %131, %131, %131, %131, %131, %131, %131 in 1 : vector<8x256xf32>, vector<8x256xf32>, vector<8x256xf32>, vector<8x256xf32>, vector<8x256xf32>, vector<8x256xf32>, vector<8x256xf32>, vector<8x256xf32> -> vector<8x2048xf32>
    %133 = vector.broadcast %87 : vector<1x2048xf32> to vector<8x2048xf32>
    %134 = arith.mulf %132, %133 : vector<8x2048xf32>
    %135 = arith.addf %130, %134 : vector<8x2048xf32>
    %136 = vector.broadcast %96 : vector<1x2048xf32> to vector<8x2048xf32>
    %137 = arith.mulf %135, %136 : vector<8x2048xf32>
    %138 = vector.extract_strided_slice %21 {offsets = [8, 0], sizes = [8, 2048], strides = [1, 1]} : vector<96x2048xf32> to vector<8x2048xf32>
    %139 = vector.extract_strided_slice %21 {offsets = [40, 0], sizes = [8, 2048], strides = [1, 1]} : vector<96x2048xf32> to vector<8x2048xf32>
    %140 = vector.extract_strided_slice %21 {offsets = [72, 0], sizes = [8, 2048], strides = [1, 1]} : vector<96x2048xf32> to vector<8x2048xf32>
    %141 = vector.extract_strided_slice %139 {offsets = [0, 0], sizes = [8, 256], strides = [1, 1]} : vector<8x2048xf32> to vector<8x256xf32>
    %142 = tpu.concatenate %141, %141, %141, %141, %141, %141, %141, %141 in 1 : vector<8x256xf32>, vector<8x256xf32>, vector<8x256xf32>, vector<8x256xf32>, vector<8x256xf32>, vector<8x256xf32>, vector<8x256xf32>, vector<8x256xf32> -> vector<8x2048xf32>
    %143 = arith.mulf %138, %142 : vector<8x2048xf32>
    %cst_29 = arith.constant dense<0.000000e+00> : vector<2048xf32>
    %144 = vector.multi_reduction <add>, %143, %cst_29 [0] : vector<8x2048xf32> to vector<2048xf32>
    %145 = vector.shape_cast %144 : vector<2048xf32> to vector<1x2048xf32>
    %146 = vector.extract_strided_slice %139 {offsets = [0, 256], sizes = [8, 256], strides = [1, 1]} : vector<8x2048xf32> to vector<8x256xf32>
    %147 = tpu.concatenate %146, %146, %146, %146, %146, %146, %146, %146 in 1 : vector<8x256xf32>, vector<8x256xf32>, vector<8x256xf32>, vector<8x256xf32>, vector<8x256xf32>, vector<8x256xf32>, vector<8x256xf32>, vector<8x256xf32> -> vector<8x2048xf32>
    %148 = arith.mulf %138, %147 : vector<8x2048xf32>
    %cst_30 = arith.constant dense<0.000000e+00> : vector<2048xf32>
    %149 = vector.multi_reduction <add>, %148, %cst_30 [0] : vector<8x2048xf32> to vector<2048xf32>
    %150 = vector.shape_cast %149 : vector<2048xf32> to vector<1x2048xf32>
    %151 = vector.extract_strided_slice %139 {offsets = [0, 512], sizes = [8, 256], strides = [1, 1]} : vector<8x2048xf32> to vector<8x256xf32>
    %152 = tpu.concatenate %151, %151, %151, %151, %151, %151, %151, %151 in 1 : vector<8x256xf32>, vector<8x256xf32>, vector<8x256xf32>, vector<8x256xf32>, vector<8x256xf32>, vector<8x256xf32>, vector<8x256xf32>, vector<8x256xf32> -> vector<8x2048xf32>
    %153 = arith.mulf %138, %152 : vector<8x2048xf32>
    %cst_31 = arith.constant dense<0.000000e+00> : vector<2048xf32>
    %154 = vector.multi_reduction <add>, %153, %cst_31 [0] : vector<8x2048xf32> to vector<2048xf32>
    %155 = vector.shape_cast %154 : vector<2048xf32> to vector<1x2048xf32>
    %156 = vector.extract_strided_slice %139 {offsets = [0, 768], sizes = [8, 256], strides = [1, 1]} : vector<8x2048xf32> to vector<8x256xf32>
    %157 = tpu.concatenate %156, %156, %156, %156, %156, %156, %156, %156 in 1 : vector<8x256xf32>, vector<8x256xf32>, vector<8x256xf32>, vector<8x256xf32>, vector<8x256xf32>, vector<8x256xf32>, vector<8x256xf32>, vector<8x256xf32> -> vector<8x2048xf32>
    %158 = arith.mulf %138, %157 : vector<8x2048xf32>
    %cst_32 = arith.constant dense<0.000000e+00> : vector<2048xf32>
    %159 = vector.multi_reduction <add>, %158, %cst_32 [0] : vector<8x2048xf32> to vector<2048xf32>
    %160 = vector.shape_cast %159 : vector<2048xf32> to vector<1x2048xf32>
    %161 = vector.extract_strided_slice %139 {offsets = [0, 1024], sizes = [8, 256], strides = [1, 1]} : vector<8x2048xf32> to vector<8x256xf32>
    %162 = tpu.concatenate %161, %161, %161, %161, %161, %161, %161, %161 in 1 : vector<8x256xf32>, vector<8x256xf32>, vector<8x256xf32>, vector<8x256xf32>, vector<8x256xf32>, vector<8x256xf32>, vector<8x256xf32>, vector<8x256xf32> -> vector<8x2048xf32>
    %163 = arith.mulf %138, %162 : vector<8x2048xf32>
    %cst_33 = arith.constant dense<0.000000e+00> : vector<2048xf32>
    %164 = vector.multi_reduction <add>, %163, %cst_33 [0] : vector<8x2048xf32> to vector<2048xf32>
    %165 = vector.shape_cast %164 : vector<2048xf32> to vector<1x2048xf32>
    %166 = vector.extract_strided_slice %139 {offsets = [0, 1280], sizes = [8, 256], strides = [1, 1]} : vector<8x2048xf32> to vector<8x256xf32>
    %167 = tpu.concatenate %166, %166, %166, %166, %166, %166, %166, %166 in 1 : vector<8x256xf32>, vector<8x256xf32>, vector<8x256xf32>, vector<8x256xf32>, vector<8x256xf32>, vector<8x256xf32>, vector<8x256xf32>, vector<8x256xf32> -> vector<8x2048xf32>
    %168 = arith.mulf %138, %167 : vector<8x2048xf32>
    %cst_34 = arith.constant dense<0.000000e+00> : vector<2048xf32>
    %169 = vector.multi_reduction <add>, %168, %cst_34 [0] : vector<8x2048xf32> to vector<2048xf32>
    %170 = vector.shape_cast %169 : vector<2048xf32> to vector<1x2048xf32>
    %171 = vector.extract_strided_slice %139 {offsets = [0, 1536], sizes = [8, 256], strides = [1, 1]} : vector<8x2048xf32> to vector<8x256xf32>
    %172 = tpu.concatenate %171, %171, %171, %171, %171, %171, %171, %171 in 1 : vector<8x256xf32>, vector<8x256xf32>, vector<8x256xf32>, vector<8x256xf32>, vector<8x256xf32>, vector<8x256xf32>, vector<8x256xf32>, vector<8x256xf32> -> vector<8x2048xf32>
    %173 = arith.mulf %138, %172 : vector<8x2048xf32>
    %cst_35 = arith.constant dense<0.000000e+00> : vector<2048xf32>
    %174 = vector.multi_reduction <add>, %173, %cst_35 [0] : vector<8x2048xf32> to vector<2048xf32>
    %175 = vector.shape_cast %174 : vector<2048xf32> to vector<1x2048xf32>
    %176 = vector.extract_strided_slice %139 {offsets = [0, 1792], sizes = [8, 256], strides = [1, 1]} : vector<8x2048xf32> to vector<8x256xf32>
    %177 = tpu.concatenate %176, %176, %176, %176, %176, %176, %176, %176 in 1 : vector<8x256xf32>, vector<8x256xf32>, vector<8x256xf32>, vector<8x256xf32>, vector<8x256xf32>, vector<8x256xf32>, vector<8x256xf32>, vector<8x256xf32> -> vector<8x2048xf32>
    %178 = arith.mulf %138, %177 : vector<8x2048xf32>
    %cst_36 = arith.constant dense<0.000000e+00> : vector<2048xf32>
    %179 = vector.multi_reduction <add>, %178, %cst_36 [0] : vector<8x2048xf32> to vector<2048xf32>
    %180 = vector.shape_cast %179 : vector<2048xf32> to vector<1x2048xf32>
    %181 = arith.maximumf %145, %150 : vector<1x2048xf32>
    %182 = arith.maximumf %181, %155 : vector<1x2048xf32>
    %183 = arith.maximumf %182, %160 : vector<1x2048xf32>
    %184 = arith.maximumf %183, %165 : vector<1x2048xf32>
    %185 = arith.maximumf %184, %170 : vector<1x2048xf32>
    %186 = arith.maximumf %185, %175 : vector<1x2048xf32>
    %187 = arith.maximumf %186, %180 : vector<1x2048xf32>
    %188 = arith.subf %145, %187 : vector<1x2048xf32>
    %189 = math.exp %188 : vector<1x2048xf32>
    %190 = arith.subf %150, %187 : vector<1x2048xf32>
    %191 = math.exp %190 : vector<1x2048xf32>
    %192 = arith.subf %155, %187 : vector<1x2048xf32>
    %193 = math.exp %192 : vector<1x2048xf32>
    %194 = arith.subf %160, %187 : vector<1x2048xf32>
    %195 = math.exp %194 : vector<1x2048xf32>
    %196 = arith.subf %165, %187 : vector<1x2048xf32>
    %197 = math.exp %196 : vector<1x2048xf32>
    %198 = arith.subf %170, %187 : vector<1x2048xf32>
    %199 = math.exp %198 : vector<1x2048xf32>
    %200 = arith.subf %175, %187 : vector<1x2048xf32>
    %201 = math.exp %200 : vector<1x2048xf32>
    %202 = arith.subf %180, %187 : vector<1x2048xf32>
    %203 = math.exp %202 : vector<1x2048xf32>
    %204 = arith.addf %189, %191 : vector<1x2048xf32>
    %205 = arith.addf %204, %193 : vector<1x2048xf32>
    %206 = arith.addf %205, %195 : vector<1x2048xf32>
    %207 = arith.addf %206, %197 : vector<1x2048xf32>
    %208 = arith.addf %207, %199 : vector<1x2048xf32>
    %209 = arith.addf %208, %201 : vector<1x2048xf32>
    %210 = arith.addf %209, %203 : vector<1x2048xf32>
    %cst_37 = arith.constant 1.000000e+00 : f32
    %211 = vector.broadcast %cst_37 : f32 to vector<1x2048xf32>
    %212 = arith.divf %211, %210 : vector<1x2048xf32>
    %213 = vector.extract_strided_slice %140 {offsets = [0, 0], sizes = [8, 256], strides = [1, 1]} : vector<8x2048xf32> to vector<8x256xf32>
    %214 = tpu.concatenate %213, %213, %213, %213, %213, %213, %213, %213 in 1 : vector<8x256xf32>, vector<8x256xf32>, vector<8x256xf32>, vector<8x256xf32>, vector<8x256xf32>, vector<8x256xf32>, vector<8x256xf32>, vector<8x256xf32> -> vector<8x2048xf32>
    %215 = vector.broadcast %189 : vector<1x2048xf32> to vector<8x2048xf32>
    %216 = arith.mulf %214, %215 : vector<8x2048xf32>
    %217 = vector.extract_strided_slice %140 {offsets = [0, 256], sizes = [8, 256], strides = [1, 1]} : vector<8x2048xf32> to vector<8x256xf32>
    %218 = tpu.concatenate %217, %217, %217, %217, %217, %217, %217, %217 in 1 : vector<8x256xf32>, vector<8x256xf32>, vector<8x256xf32>, vector<8x256xf32>, vector<8x256xf32>, vector<8x256xf32>, vector<8x256xf32>, vector<8x256xf32> -> vector<8x2048xf32>
    %219 = vector.broadcast %191 : vector<1x2048xf32> to vector<8x2048xf32>
    %220 = arith.mulf %218, %219 : vector<8x2048xf32>
    %221 = arith.addf %216, %220 : vector<8x2048xf32>
    %222 = vector.extract_strided_slice %140 {offsets = [0, 512], sizes = [8, 256], strides = [1, 1]} : vector<8x2048xf32> to vector<8x256xf32>
    %223 = tpu.concatenate %222, %222, %222, %222, %222, %222, %222, %222 in 1 : vector<8x256xf32>, vector<8x256xf32>, vector<8x256xf32>, vector<8x256xf32>, vector<8x256xf32>, vector<8x256xf32>, vector<8x256xf32>, vector<8x256xf32> -> vector<8x2048xf32>
    %224 = vector.broadcast %193 : vector<1x2048xf32> to vector<8x2048xf32>
    %225 = arith.mulf %223, %224 : vector<8x2048xf32>
    %226 = arith.addf %221, %225 : vector<8x2048xf32>
    %227 = vector.extract_strided_slice %140 {offsets = [0, 768], sizes = [8, 256], strides = [1, 1]} : vector<8x2048xf32> to vector<8x256xf32>
    %228 = tpu.concatenate %227, %227, %227, %227, %227, %227, %227, %227 in 1 : vector<8x256xf32>, vector<8x256xf32>, vector<8x256xf32>, vector<8x256xf32>, vector<8x256xf32>, vector<8x256xf32>, vector<8x256xf32>, vector<8x256xf32> -> vector<8x2048xf32>
    %229 = vector.broadcast %195 : vector<1x2048xf32> to vector<8x2048xf32>
    %230 = arith.mulf %228, %229 : vector<8x2048xf32>
    %231 = arith.addf %226, %230 : vector<8x2048xf32>
    %232 = vector.extract_strided_slice %140 {offsets = [0, 1024], sizes = [8, 256], strides = [1, 1]} : vector<8x2048xf32> to vector<8x256xf32>
    %233 = tpu.concatenate %232, %232, %232, %232, %232, %232, %232, %232 in 1 : vector<8x256xf32>, vector<8x256xf32>, vector<8x256xf32>, vector<8x256xf32>, vector<8x256xf32>, vector<8x256xf32>, vector<8x256xf32>, vector<8x256xf32> -> vector<8x2048xf32>
    %234 = vector.broadcast %197 : vector<1x2048xf32> to vector<8x2048xf32>
    %235 = arith.mulf %233, %234 : vector<8x2048xf32>
    %236 = arith.addf %231, %235 : vector<8x2048xf32>
    %237 = vector.extract_strided_slice %140 {offsets = [0, 1280], sizes = [8, 256], strides = [1, 1]} : vector<8x2048xf32> to vector<8x256xf32>
    %238 = tpu.concatenate %237, %237, %237, %237, %237, %237, %237, %237 in 1 : vector<8x256xf32>, vector<8x256xf32>, vector<8x256xf32>, vector<8x256xf32>, vector<8x256xf32>, vector<8x256xf32>, vector<8x256xf32>, vector<8x256xf32> -> vector<8x2048xf32>
    %239 = vector.broadcast %199 : vector<1x2048xf32> to vector<8x2048xf32>
    %240 = arith.mulf %238, %239 : vector<8x2048xf32>
    %241 = arith.addf %236, %240 : vector<8x2048xf32>
    %242 = vector.extract_strided_slice %140 {offsets = [0, 1536], sizes = [8, 256], strides = [1, 1]} : vector<8x2048xf32> to vector<8x256xf32>
    %243 = tpu.concatenate %242, %242, %242, %242, %242, %242, %242, %242 in 1 : vector<8x256xf32>, vector<8x256xf32>, vector<8x256xf32>, vector<8x256xf32>, vector<8x256xf32>, vector<8x256xf32>, vector<8x256xf32>, vector<8x256xf32> -> vector<8x2048xf32>
    %244 = vector.broadcast %201 : vector<1x2048xf32> to vector<8x2048xf32>
    %245 = arith.mulf %243, %244 : vector<8x2048xf32>
    %246 = arith.addf %241, %245 : vector<8x2048xf32>
    %247 = vector.extract_strided_slice %140 {offsets = [0, 1792], sizes = [8, 256], strides = [1, 1]} : vector<8x2048xf32> to vector<8x256xf32>
    %248 = tpu.concatenate %247, %247, %247, %247, %247, %247, %247, %247 in 1 : vector<8x256xf32>, vector<8x256xf32>, vector<8x256xf32>, vector<8x256xf32>, vector<8x256xf32>, vector<8x256xf32>, vector<8x256xf32>, vector<8x256xf32> -> vector<8x2048xf32>
    %249 = vector.broadcast %203 : vector<1x2048xf32> to vector<8x2048xf32>
    %250 = arith.mulf %248, %249 : vector<8x2048xf32>
    %251 = arith.addf %246, %250 : vector<8x2048xf32>
    %252 = vector.broadcast %212 : vector<1x2048xf32> to vector<8x2048xf32>
    %253 = arith.mulf %251, %252 : vector<8x2048xf32>
    %254 = vector.extract_strided_slice %21 {offsets = [16, 0], sizes = [8, 2048], strides = [1, 1]} : vector<96x2048xf32> to vector<8x2048xf32>
    %255 = vector.extract_strided_slice %21 {offsets = [48, 0], sizes = [8, 2048], strides = [1, 1]} : vector<96x2048xf32> to vector<8x2048xf32>
    %256 = vector.extract_strided_slice %21 {offsets = [80, 0], sizes = [8, 2048], strides = [1, 1]} : vector<96x2048xf32> to vector<8x2048xf32>
    %257 = vector.extract_strided_slice %255 {offsets = [0, 0], sizes = [8, 256], strides = [1, 1]} : vector<8x2048xf32> to vector<8x256xf32>
    %258 = tpu.concatenate %257, %257, %257, %257, %257, %257, %257, %257 in 1 : vector<8x256xf32>, vector<8x256xf32>, vector<8x256xf32>, vector<8x256xf32>, vector<8x256xf32>, vector<8x256xf32>, vector<8x256xf32>, vector<8x256xf32> -> vector<8x2048xf32>
    %259 = arith.mulf %254, %258 : vector<8x2048xf32>
    %cst_38 = arith.constant dense<0.000000e+00> : vector<2048xf32>
    %260 = vector.multi_reduction <add>, %259, %cst_38 [0] : vector<8x2048xf32> to vector<2048xf32>
    %261 = vector.shape_cast %260 : vector<2048xf32> to vector<1x2048xf32>
    %262 = vector.extract_strided_slice %255 {offsets = [0, 256], sizes = [8, 256], strides = [1, 1]} : vector<8x2048xf32> to vector<8x256xf32>
    %263 = tpu.concatenate %262, %262, %262, %262, %262, %262, %262, %262 in 1 : vector<8x256xf32>, vector<8x256xf32>, vector<8x256xf32>, vector<8x256xf32>, vector<8x256xf32>, vector<8x256xf32>, vector<8x256xf32>, vector<8x256xf32> -> vector<8x2048xf32>
    %264 = arith.mulf %254, %263 : vector<8x2048xf32>
    %cst_39 = arith.constant dense<0.000000e+00> : vector<2048xf32>
    %265 = vector.multi_reduction <add>, %264, %cst_39 [0] : vector<8x2048xf32> to vector<2048xf32>
    %266 = vector.shape_cast %265 : vector<2048xf32> to vector<1x2048xf32>
    %267 = vector.extract_strided_slice %255 {offsets = [0, 512], sizes = [8, 256], strides = [1, 1]} : vector<8x2048xf32> to vector<8x256xf32>
    %268 = tpu.concatenate %267, %267, %267, %267, %267, %267, %267, %267 in 1 : vector<8x256xf32>, vector<8x256xf32>, vector<8x256xf32>, vector<8x256xf32>, vector<8x256xf32>, vector<8x256xf32>, vector<8x256xf32>, vector<8x256xf32> -> vector<8x2048xf32>
    %269 = arith.mulf %254, %268 : vector<8x2048xf32>
    %cst_40 = arith.constant dense<0.000000e+00> : vector<2048xf32>
    %270 = vector.multi_reduction <add>, %269, %cst_40 [0] : vector<8x2048xf32> to vector<2048xf32>
    %271 = vector.shape_cast %270 : vector<2048xf32> to vector<1x2048xf32>
    %272 = vector.extract_strided_slice %255 {offsets = [0, 768], sizes = [8, 256], strides = [1, 1]} : vector<8x2048xf32> to vector<8x256xf32>
    %273 = tpu.concatenate %272, %272, %272, %272, %272, %272, %272, %272 in 1 : vector<8x256xf32>, vector<8x256xf32>, vector<8x256xf32>, vector<8x256xf32>, vector<8x256xf32>, vector<8x256xf32>, vector<8x256xf32>, vector<8x256xf32> -> vector<8x2048xf32>
    %274 = arith.mulf %254, %273 : vector<8x2048xf32>
    %cst_41 = arith.constant dense<0.000000e+00> : vector<2048xf32>
    %275 = vector.multi_reduction <add>, %274, %cst_41 [0] : vector<8x2048xf32> to vector<2048xf32>
    %276 = vector.shape_cast %275 : vector<2048xf32> to vector<1x2048xf32>
    %277 = vector.extract_strided_slice %255 {offsets = [0, 1024], sizes = [8, 256], strides = [1, 1]} : vector<8x2048xf32> to vector<8x256xf32>
    %278 = tpu.concatenate %277, %277, %277, %277, %277, %277, %277, %277 in 1 : vector<8x256xf32>, vector<8x256xf32>, vector<8x256xf32>, vector<8x256xf32>, vector<8x256xf32>, vector<8x256xf32>, vector<8x256xf32>, vector<8x256xf32> -> vector<8x2048xf32>
    %279 = arith.mulf %254, %278 : vector<8x2048xf32>
    %cst_42 = arith.constant dense<0.000000e+00> : vector<2048xf32>
    %280 = vector.multi_reduction <add>, %279, %cst_42 [0] : vector<8x2048xf32> to vector<2048xf32>
    %281 = vector.shape_cast %280 : vector<2048xf32> to vector<1x2048xf32>
    %282 = vector.extract_strided_slice %255 {offsets = [0, 1280], sizes = [8, 256], strides = [1, 1]} : vector<8x2048xf32> to vector<8x256xf32>
    %283 = tpu.concatenate %282, %282, %282, %282, %282, %282, %282, %282 in 1 : vector<8x256xf32>, vector<8x256xf32>, vector<8x256xf32>, vector<8x256xf32>, vector<8x256xf32>, vector<8x256xf32>, vector<8x256xf32>, vector<8x256xf32> -> vector<8x2048xf32>
    %284 = arith.mulf %254, %283 : vector<8x2048xf32>
    %cst_43 = arith.constant dense<0.000000e+00> : vector<2048xf32>
    %285 = vector.multi_reduction <add>, %284, %cst_43 [0] : vector<8x2048xf32> to vector<2048xf32>
    %286 = vector.shape_cast %285 : vector<2048xf32> to vector<1x2048xf32>
    %287 = vector.extract_strided_slice %255 {offsets = [0, 1536], sizes = [8, 256], strides = [1, 1]} : vector<8x2048xf32> to vector<8x256xf32>
    %288 = tpu.concatenate %287, %287, %287, %287, %287, %287, %287, %287 in 1 : vector<8x256xf32>, vector<8x256xf32>, vector<8x256xf32>, vector<8x256xf32>, vector<8x256xf32>, vector<8x256xf32>, vector<8x256xf32>, vector<8x256xf32> -> vector<8x2048xf32>
    %289 = arith.mulf %254, %288 : vector<8x2048xf32>
    %cst_44 = arith.constant dense<0.000000e+00> : vector<2048xf32>
    %290 = vector.multi_reduction <add>, %289, %cst_44 [0] : vector<8x2048xf32> to vector<2048xf32>
    %291 = vector.shape_cast %290 : vector<2048xf32> to vector<1x2048xf32>
    %292 = vector.extract_strided_slice %255 {offsets = [0, 1792], sizes = [8, 256], strides = [1, 1]} : vector<8x2048xf32> to vector<8x256xf32>
    %293 = tpu.concatenate %292, %292, %292, %292, %292, %292, %292, %292 in 1 : vector<8x256xf32>, vector<8x256xf32>, vector<8x256xf32>, vector<8x256xf32>, vector<8x256xf32>, vector<8x256xf32>, vector<8x256xf32>, vector<8x256xf32> -> vector<8x2048xf32>
    %294 = arith.mulf %254, %293 : vector<8x2048xf32>
    %cst_45 = arith.constant dense<0.000000e+00> : vector<2048xf32>
    %295 = vector.multi_reduction <add>, %294, %cst_45 [0] : vector<8x2048xf32> to vector<2048xf32>
    %296 = vector.shape_cast %295 : vector<2048xf32> to vector<1x2048xf32>
    %297 = arith.maximumf %261, %266 : vector<1x2048xf32>
    %298 = arith.maximumf %297, %271 : vector<1x2048xf32>
    %299 = arith.maximumf %298, %276 : vector<1x2048xf32>
    %300 = arith.maximumf %299, %281 : vector<1x2048xf32>
    %301 = arith.maximumf %300, %286 : vector<1x2048xf32>
    %302 = arith.maximumf %301, %291 : vector<1x2048xf32>
    %303 = arith.maximumf %302, %296 : vector<1x2048xf32>
    %304 = arith.subf %261, %303 : vector<1x2048xf32>
    %305 = math.exp %304 : vector<1x2048xf32>
    %306 = arith.subf %266, %303 : vector<1x2048xf32>
    %307 = math.exp %306 : vector<1x2048xf32>
    %308 = arith.subf %271, %303 : vector<1x2048xf32>
    %309 = math.exp %308 : vector<1x2048xf32>
    %310 = arith.subf %276, %303 : vector<1x2048xf32>
    %311 = math.exp %310 : vector<1x2048xf32>
    %312 = arith.subf %281, %303 : vector<1x2048xf32>
    %313 = math.exp %312 : vector<1x2048xf32>
    %314 = arith.subf %286, %303 : vector<1x2048xf32>
    %315 = math.exp %314 : vector<1x2048xf32>
    %316 = arith.subf %291, %303 : vector<1x2048xf32>
    %317 = math.exp %316 : vector<1x2048xf32>
    %318 = arith.subf %296, %303 : vector<1x2048xf32>
    %319 = math.exp %318 : vector<1x2048xf32>
    %320 = arith.addf %305, %307 : vector<1x2048xf32>
    %321 = arith.addf %320, %309 : vector<1x2048xf32>
    %322 = arith.addf %321, %311 : vector<1x2048xf32>
    %323 = arith.addf %322, %313 : vector<1x2048xf32>
    %324 = arith.addf %323, %315 : vector<1x2048xf32>
    %325 = arith.addf %324, %317 : vector<1x2048xf32>
    %326 = arith.addf %325, %319 : vector<1x2048xf32>
    %cst_46 = arith.constant 1.000000e+00 : f32
    %327 = vector.broadcast %cst_46 : f32 to vector<1x2048xf32>
    %328 = arith.divf %327, %326 : vector<1x2048xf32>
    %329 = vector.extract_strided_slice %256 {offsets = [0, 0], sizes = [8, 256], strides = [1, 1]} : vector<8x2048xf32> to vector<8x256xf32>
    %330 = tpu.concatenate %329, %329, %329, %329, %329, %329, %329, %329 in 1 : vector<8x256xf32>, vector<8x256xf32>, vector<8x256xf32>, vector<8x256xf32>, vector<8x256xf32>, vector<8x256xf32>, vector<8x256xf32>, vector<8x256xf32> -> vector<8x2048xf32>
    %331 = vector.broadcast %305 : vector<1x2048xf32> to vector<8x2048xf32>
    %332 = arith.mulf %330, %331 : vector<8x2048xf32>
    %333 = vector.extract_strided_slice %256 {offsets = [0, 256], sizes = [8, 256], strides = [1, 1]} : vector<8x2048xf32> to vector<8x256xf32>
    %334 = tpu.concatenate %333, %333, %333, %333, %333, %333, %333, %333 in 1 : vector<8x256xf32>, vector<8x256xf32>, vector<8x256xf32>, vector<8x256xf32>, vector<8x256xf32>, vector<8x256xf32>, vector<8x256xf32>, vector<8x256xf32> -> vector<8x2048xf32>
    %335 = vector.broadcast %307 : vector<1x2048xf32> to vector<8x2048xf32>
    %336 = arith.mulf %334, %335 : vector<8x2048xf32>
    %337 = arith.addf %332, %336 : vector<8x2048xf32>
    %338 = vector.extract_strided_slice %256 {offsets = [0, 512], sizes = [8, 256], strides = [1, 1]} : vector<8x2048xf32> to vector<8x256xf32>
    %339 = tpu.concatenate %338, %338, %338, %338, %338, %338, %338, %338 in 1 : vector<8x256xf32>, vector<8x256xf32>, vector<8x256xf32>, vector<8x256xf32>, vector<8x256xf32>, vector<8x256xf32>, vector<8x256xf32>, vector<8x256xf32> -> vector<8x2048xf32>
    %340 = vector.broadcast %309 : vector<1x2048xf32> to vector<8x2048xf32>
    %341 = arith.mulf %339, %340 : vector<8x2048xf32>
    %342 = arith.addf %337, %341 : vector<8x2048xf32>
    %343 = vector.extract_strided_slice %256 {offsets = [0, 768], sizes = [8, 256], strides = [1, 1]} : vector<8x2048xf32> to vector<8x256xf32>
    %344 = tpu.concatenate %343, %343, %343, %343, %343, %343, %343, %343 in 1 : vector<8x256xf32>, vector<8x256xf32>, vector<8x256xf32>, vector<8x256xf32>, vector<8x256xf32>, vector<8x256xf32>, vector<8x256xf32>, vector<8x256xf32> -> vector<8x2048xf32>
    %345 = vector.broadcast %311 : vector<1x2048xf32> to vector<8x2048xf32>
    %346 = arith.mulf %344, %345 : vector<8x2048xf32>
    %347 = arith.addf %342, %346 : vector<8x2048xf32>
    %348 = vector.extract_strided_slice %256 {offsets = [0, 1024], sizes = [8, 256], strides = [1, 1]} : vector<8x2048xf32> to vector<8x256xf32>
    %349 = tpu.concatenate %348, %348, %348, %348, %348, %348, %348, %348 in 1 : vector<8x256xf32>, vector<8x256xf32>, vector<8x256xf32>, vector<8x256xf32>, vector<8x256xf32>, vector<8x256xf32>, vector<8x256xf32>, vector<8x256xf32> -> vector<8x2048xf32>
    %350 = vector.broadcast %313 : vector<1x2048xf32> to vector<8x2048xf32>
    %351 = arith.mulf %349, %350 : vector<8x2048xf32>
    %352 = arith.addf %347, %351 : vector<8x2048xf32>
    %353 = vector.extract_strided_slice %256 {offsets = [0, 1280], sizes = [8, 256], strides = [1, 1]} : vector<8x2048xf32> to vector<8x256xf32>
    %354 = tpu.concatenate %353, %353, %353, %353, %353, %353, %353, %353 in 1 : vector<8x256xf32>, vector<8x256xf32>, vector<8x256xf32>, vector<8x256xf32>, vector<8x256xf32>, vector<8x256xf32>, vector<8x256xf32>, vector<8x256xf32> -> vector<8x2048xf32>
    %355 = vector.broadcast %315 : vector<1x2048xf32> to vector<8x2048xf32>
    %356 = arith.mulf %354, %355 : vector<8x2048xf32>
    %357 = arith.addf %352, %356 : vector<8x2048xf32>
    %358 = vector.extract_strided_slice %256 {offsets = [0, 1536], sizes = [8, 256], strides = [1, 1]} : vector<8x2048xf32> to vector<8x256xf32>
    %359 = tpu.concatenate %358, %358, %358, %358, %358, %358, %358, %358 in 1 : vector<8x256xf32>, vector<8x256xf32>, vector<8x256xf32>, vector<8x256xf32>, vector<8x256xf32>, vector<8x256xf32>, vector<8x256xf32>, vector<8x256xf32> -> vector<8x2048xf32>
    %360 = vector.broadcast %317 : vector<1x2048xf32> to vector<8x2048xf32>
    %361 = arith.mulf %359, %360 : vector<8x2048xf32>
    %362 = arith.addf %357, %361 : vector<8x2048xf32>
    %363 = vector.extract_strided_slice %256 {offsets = [0, 1792], sizes = [8, 256], strides = [1, 1]} : vector<8x2048xf32> to vector<8x256xf32>
    %364 = tpu.concatenate %363, %363, %363, %363, %363, %363, %363, %363 in 1 : vector<8x256xf32>, vector<8x256xf32>, vector<8x256xf32>, vector<8x256xf32>, vector<8x256xf32>, vector<8x256xf32>, vector<8x256xf32>, vector<8x256xf32> -> vector<8x2048xf32>
    %365 = vector.broadcast %319 : vector<1x2048xf32> to vector<8x2048xf32>
    %366 = arith.mulf %364, %365 : vector<8x2048xf32>
    %367 = arith.addf %362, %366 : vector<8x2048xf32>
    %368 = vector.broadcast %328 : vector<1x2048xf32> to vector<8x2048xf32>
    %369 = arith.mulf %367, %368 : vector<8x2048xf32>
    %370 = vector.extract_strided_slice %21 {offsets = [24, 0], sizes = [8, 2048], strides = [1, 1]} : vector<96x2048xf32> to vector<8x2048xf32>
    %371 = vector.extract_strided_slice %21 {offsets = [56, 0], sizes = [8, 2048], strides = [1, 1]} : vector<96x2048xf32> to vector<8x2048xf32>
    %372 = vector.extract_strided_slice %21 {offsets = [88, 0], sizes = [8, 2048], strides = [1, 1]} : vector<96x2048xf32> to vector<8x2048xf32>
    %373 = vector.extract_strided_slice %371 {offsets = [0, 0], sizes = [8, 256], strides = [1, 1]} : vector<8x2048xf32> to vector<8x256xf32>
    %374 = tpu.concatenate %373, %373, %373, %373, %373, %373, %373, %373 in 1 : vector<8x256xf32>, vector<8x256xf32>, vector<8x256xf32>, vector<8x256xf32>, vector<8x256xf32>, vector<8x256xf32>, vector<8x256xf32>, vector<8x256xf32> -> vector<8x2048xf32>
    %375 = arith.mulf %370, %374 : vector<8x2048xf32>
    %cst_47 = arith.constant dense<0.000000e+00> : vector<2048xf32>
    %376 = vector.multi_reduction <add>, %375, %cst_47 [0] : vector<8x2048xf32> to vector<2048xf32>
    %377 = vector.shape_cast %376 : vector<2048xf32> to vector<1x2048xf32>
    %378 = vector.extract_strided_slice %371 {offsets = [0, 256], sizes = [8, 256], strides = [1, 1]} : vector<8x2048xf32> to vector<8x256xf32>
    %379 = tpu.concatenate %378, %378, %378, %378, %378, %378, %378, %378 in 1 : vector<8x256xf32>, vector<8x256xf32>, vector<8x256xf32>, vector<8x256xf32>, vector<8x256xf32>, vector<8x256xf32>, vector<8x256xf32>, vector<8x256xf32> -> vector<8x2048xf32>
    %380 = arith.mulf %370, %379 : vector<8x2048xf32>
    %cst_48 = arith.constant dense<0.000000e+00> : vector<2048xf32>
    %381 = vector.multi_reduction <add>, %380, %cst_48 [0] : vector<8x2048xf32> to vector<2048xf32>
    %382 = vector.shape_cast %381 : vector<2048xf32> to vector<1x2048xf32>
    %383 = vector.extract_strided_slice %371 {offsets = [0, 512], sizes = [8, 256], strides = [1, 1]} : vector<8x2048xf32> to vector<8x256xf32>
    %384 = tpu.concatenate %383, %383, %383, %383, %383, %383, %383, %383 in 1 : vector<8x256xf32>, vector<8x256xf32>, vector<8x256xf32>, vector<8x256xf32>, vector<8x256xf32>, vector<8x256xf32>, vector<8x256xf32>, vector<8x256xf32> -> vector<8x2048xf32>
    %385 = arith.mulf %370, %384 : vector<8x2048xf32>
    %cst_49 = arith.constant dense<0.000000e+00> : vector<2048xf32>
    %386 = vector.multi_reduction <add>, %385, %cst_49 [0] : vector<8x2048xf32> to vector<2048xf32>
    %387 = vector.shape_cast %386 : vector<2048xf32> to vector<1x2048xf32>
    %388 = vector.extract_strided_slice %371 {offsets = [0, 768], sizes = [8, 256], strides = [1, 1]} : vector<8x2048xf32> to vector<8x256xf32>
    %389 = tpu.concatenate %388, %388, %388, %388, %388, %388, %388, %388 in 1 : vector<8x256xf32>, vector<8x256xf32>, vector<8x256xf32>, vector<8x256xf32>, vector<8x256xf32>, vector<8x256xf32>, vector<8x256xf32>, vector<8x256xf32> -> vector<8x2048xf32>
    %390 = arith.mulf %370, %389 : vector<8x2048xf32>
    %cst_50 = arith.constant dense<0.000000e+00> : vector<2048xf32>
    %391 = vector.multi_reduction <add>, %390, %cst_50 [0] : vector<8x2048xf32> to vector<2048xf32>
    %392 = vector.shape_cast %391 : vector<2048xf32> to vector<1x2048xf32>
    %393 = vector.extract_strided_slice %371 {offsets = [0, 1024], sizes = [8, 256], strides = [1, 1]} : vector<8x2048xf32> to vector<8x256xf32>
    %394 = tpu.concatenate %393, %393, %393, %393, %393, %393, %393, %393 in 1 : vector<8x256xf32>, vector<8x256xf32>, vector<8x256xf32>, vector<8x256xf32>, vector<8x256xf32>, vector<8x256xf32>, vector<8x256xf32>, vector<8x256xf32> -> vector<8x2048xf32>
    %395 = arith.mulf %370, %394 : vector<8x2048xf32>
    %cst_51 = arith.constant dense<0.000000e+00> : vector<2048xf32>
    %396 = vector.multi_reduction <add>, %395, %cst_51 [0] : vector<8x2048xf32> to vector<2048xf32>
    %397 = vector.shape_cast %396 : vector<2048xf32> to vector<1x2048xf32>
    %398 = vector.extract_strided_slice %371 {offsets = [0, 1280], sizes = [8, 256], strides = [1, 1]} : vector<8x2048xf32> to vector<8x256xf32>
    %399 = tpu.concatenate %398, %398, %398, %398, %398, %398, %398, %398 in 1 : vector<8x256xf32>, vector<8x256xf32>, vector<8x256xf32>, vector<8x256xf32>, vector<8x256xf32>, vector<8x256xf32>, vector<8x256xf32>, vector<8x256xf32> -> vector<8x2048xf32>
    %400 = arith.mulf %370, %399 : vector<8x2048xf32>
    %cst_52 = arith.constant dense<0.000000e+00> : vector<2048xf32>
    %401 = vector.multi_reduction <add>, %400, %cst_52 [0] : vector<8x2048xf32> to vector<2048xf32>
    %402 = vector.shape_cast %401 : vector<2048xf32> to vector<1x2048xf32>
    %403 = vector.extract_strided_slice %371 {offsets = [0, 1536], sizes = [8, 256], strides = [1, 1]} : vector<8x2048xf32> to vector<8x256xf32>
    %404 = tpu.concatenate %403, %403, %403, %403, %403, %403, %403, %403 in 1 : vector<8x256xf32>, vector<8x256xf32>, vector<8x256xf32>, vector<8x256xf32>, vector<8x256xf32>, vector<8x256xf32>, vector<8x256xf32>, vector<8x256xf32> -> vector<8x2048xf32>
    %405 = arith.mulf %370, %404 : vector<8x2048xf32>
    %cst_53 = arith.constant dense<0.000000e+00> : vector<2048xf32>
    %406 = vector.multi_reduction <add>, %405, %cst_53 [0] : vector<8x2048xf32> to vector<2048xf32>
    %407 = vector.shape_cast %406 : vector<2048xf32> to vector<1x2048xf32>
    %408 = vector.extract_strided_slice %371 {offsets = [0, 1792], sizes = [8, 256], strides = [1, 1]} : vector<8x2048xf32> to vector<8x256xf32>
    %409 = tpu.concatenate %408, %408, %408, %408, %408, %408, %408, %408 in 1 : vector<8x256xf32>, vector<8x256xf32>, vector<8x256xf32>, vector<8x256xf32>, vector<8x256xf32>, vector<8x256xf32>, vector<8x256xf32>, vector<8x256xf32> -> vector<8x2048xf32>
    %410 = arith.mulf %370, %409 : vector<8x2048xf32>
    %cst_54 = arith.constant dense<0.000000e+00> : vector<2048xf32>
    %411 = vector.multi_reduction <add>, %410, %cst_54 [0] : vector<8x2048xf32> to vector<2048xf32>
    %412 = vector.shape_cast %411 : vector<2048xf32> to vector<1x2048xf32>
    %413 = arith.maximumf %377, %382 : vector<1x2048xf32>
    %414 = arith.maximumf %413, %387 : vector<1x2048xf32>
    %415 = arith.maximumf %414, %392 : vector<1x2048xf32>
    %416 = arith.maximumf %415, %397 : vector<1x2048xf32>
    %417 = arith.maximumf %416, %402 : vector<1x2048xf32>
    %418 = arith.maximumf %417, %407 : vector<1x2048xf32>
    %419 = arith.maximumf %418, %412 : vector<1x2048xf32>
    %420 = arith.subf %377, %419 : vector<1x2048xf32>
    %421 = math.exp %420 : vector<1x2048xf32>
    %422 = arith.subf %382, %419 : vector<1x2048xf32>
    %423 = math.exp %422 : vector<1x2048xf32>
    %424 = arith.subf %387, %419 : vector<1x2048xf32>
    %425 = math.exp %424 : vector<1x2048xf32>
    %426 = arith.subf %392, %419 : vector<1x2048xf32>
    %427 = math.exp %426 : vector<1x2048xf32>
    %428 = arith.subf %397, %419 : vector<1x2048xf32>
    %429 = math.exp %428 : vector<1x2048xf32>
    %430 = arith.subf %402, %419 : vector<1x2048xf32>
    %431 = math.exp %430 : vector<1x2048xf32>
    %432 = arith.subf %407, %419 : vector<1x2048xf32>
    %433 = math.exp %432 : vector<1x2048xf32>
    %434 = arith.subf %412, %419 : vector<1x2048xf32>
    %435 = math.exp %434 : vector<1x2048xf32>
    %436 = arith.addf %421, %423 : vector<1x2048xf32>
    %437 = arith.addf %436, %425 : vector<1x2048xf32>
    %438 = arith.addf %437, %427 : vector<1x2048xf32>
    %439 = arith.addf %438, %429 : vector<1x2048xf32>
    %440 = arith.addf %439, %431 : vector<1x2048xf32>
    %441 = arith.addf %440, %433 : vector<1x2048xf32>
    %442 = arith.addf %441, %435 : vector<1x2048xf32>
    %cst_55 = arith.constant 1.000000e+00 : f32
    %443 = vector.broadcast %cst_55 : f32 to vector<1x2048xf32>
    %444 = arith.divf %443, %442 : vector<1x2048xf32>
    %445 = vector.extract_strided_slice %372 {offsets = [0, 0], sizes = [8, 256], strides = [1, 1]} : vector<8x2048xf32> to vector<8x256xf32>
    %446 = tpu.concatenate %445, %445, %445, %445, %445, %445, %445, %445 in 1 : vector<8x256xf32>, vector<8x256xf32>, vector<8x256xf32>, vector<8x256xf32>, vector<8x256xf32>, vector<8x256xf32>, vector<8x256xf32>, vector<8x256xf32> -> vector<8x2048xf32>
    %447 = vector.broadcast %421 : vector<1x2048xf32> to vector<8x2048xf32>
    %448 = arith.mulf %446, %447 : vector<8x2048xf32>
    %449 = vector.extract_strided_slice %372 {offsets = [0, 256], sizes = [8, 256], strides = [1, 1]} : vector<8x2048xf32> to vector<8x256xf32>
    %450 = tpu.concatenate %449, %449, %449, %449, %449, %449, %449, %449 in 1 : vector<8x256xf32>, vector<8x256xf32>, vector<8x256xf32>, vector<8x256xf32>, vector<8x256xf32>, vector<8x256xf32>, vector<8x256xf32>, vector<8x256xf32> -> vector<8x2048xf32>
    %451 = vector.broadcast %423 : vector<1x2048xf32> to vector<8x2048xf32>
    %452 = arith.mulf %450, %451 : vector<8x2048xf32>
    %453 = arith.addf %448, %452 : vector<8x2048xf32>
    %454 = vector.extract_strided_slice %372 {offsets = [0, 512], sizes = [8, 256], strides = [1, 1]} : vector<8x2048xf32> to vector<8x256xf32>
    %455 = tpu.concatenate %454, %454, %454, %454, %454, %454, %454, %454 in 1 : vector<8x256xf32>, vector<8x256xf32>, vector<8x256xf32>, vector<8x256xf32>, vector<8x256xf32>, vector<8x256xf32>, vector<8x256xf32>, vector<8x256xf32> -> vector<8x2048xf32>
    %456 = vector.broadcast %425 : vector<1x2048xf32> to vector<8x2048xf32>
    %457 = arith.mulf %455, %456 : vector<8x2048xf32>
    %458 = arith.addf %453, %457 : vector<8x2048xf32>
    %459 = vector.extract_strided_slice %372 {offsets = [0, 768], sizes = [8, 256], strides = [1, 1]} : vector<8x2048xf32> to vector<8x256xf32>
    %460 = tpu.concatenate %459, %459, %459, %459, %459, %459, %459, %459 in 1 : vector<8x256xf32>, vector<8x256xf32>, vector<8x256xf32>, vector<8x256xf32>, vector<8x256xf32>, vector<8x256xf32>, vector<8x256xf32>, vector<8x256xf32> -> vector<8x2048xf32>
    %461 = vector.broadcast %427 : vector<1x2048xf32> to vector<8x2048xf32>
    %462 = arith.mulf %460, %461 : vector<8x2048xf32>
    %463 = arith.addf %458, %462 : vector<8x2048xf32>
    %464 = vector.extract_strided_slice %372 {offsets = [0, 1024], sizes = [8, 256], strides = [1, 1]} : vector<8x2048xf32> to vector<8x256xf32>
    %465 = tpu.concatenate %464, %464, %464, %464, %464, %464, %464, %464 in 1 : vector<8x256xf32>, vector<8x256xf32>, vector<8x256xf32>, vector<8x256xf32>, vector<8x256xf32>, vector<8x256xf32>, vector<8x256xf32>, vector<8x256xf32> -> vector<8x2048xf32>
    %466 = vector.broadcast %429 : vector<1x2048xf32> to vector<8x2048xf32>
    %467 = arith.mulf %465, %466 : vector<8x2048xf32>
    %468 = arith.addf %463, %467 : vector<8x2048xf32>
    %469 = vector.extract_strided_slice %372 {offsets = [0, 1280], sizes = [8, 256], strides = [1, 1]} : vector<8x2048xf32> to vector<8x256xf32>
    %470 = tpu.concatenate %469, %469, %469, %469, %469, %469, %469, %469 in 1 : vector<8x256xf32>, vector<8x256xf32>, vector<8x256xf32>, vector<8x256xf32>, vector<8x256xf32>, vector<8x256xf32>, vector<8x256xf32>, vector<8x256xf32> -> vector<8x2048xf32>
    %471 = vector.broadcast %431 : vector<1x2048xf32> to vector<8x2048xf32>
    %472 = arith.mulf %470, %471 : vector<8x2048xf32>
    %473 = arith.addf %468, %472 : vector<8x2048xf32>
    %474 = vector.extract_strided_slice %372 {offsets = [0, 1536], sizes = [8, 256], strides = [1, 1]} : vector<8x2048xf32> to vector<8x256xf32>
    %475 = tpu.concatenate %474, %474, %474, %474, %474, %474, %474, %474 in 1 : vector<8x256xf32>, vector<8x256xf32>, vector<8x256xf32>, vector<8x256xf32>, vector<8x256xf32>, vector<8x256xf32>, vector<8x256xf32>, vector<8x256xf32> -> vector<8x2048xf32>
    %476 = vector.broadcast %433 : vector<1x2048xf32> to vector<8x2048xf32>
    %477 = arith.mulf %475, %476 : vector<8x2048xf32>
    %478 = arith.addf %473, %477 : vector<8x2048xf32>
    %479 = vector.extract_strided_slice %372 {offsets = [0, 1792], sizes = [8, 256], strides = [1, 1]} : vector<8x2048xf32> to vector<8x256xf32>
    %480 = tpu.concatenate %479, %479, %479, %479, %479, %479, %479, %479 in 1 : vector<8x256xf32>, vector<8x256xf32>, vector<8x256xf32>, vector<8x256xf32>, vector<8x256xf32>, vector<8x256xf32>, vector<8x256xf32>, vector<8x256xf32> -> vector<8x2048xf32>
    %481 = vector.broadcast %435 : vector<1x2048xf32> to vector<8x2048xf32>
    %482 = arith.mulf %480, %481 : vector<8x2048xf32>
    %483 = arith.addf %478, %482 : vector<8x2048xf32>
    %484 = vector.broadcast %444 : vector<1x2048xf32> to vector<8x2048xf32>
    %485 = arith.mulf %483, %484 : vector<8x2048xf32>
    %486 = tpu.concatenate %137, %253, %369, %485 in 0 : vector<8x2048xf32>, vector<8x2048xf32>, vector<8x2048xf32>, vector<8x2048xf32> -> vector<32x2048xf32>
    %c0_56 = arith.constant 0 : index
    %c0_57 = arith.constant 0 : index
    %487 = vector.load %arg4[%c0_56, %c0_57] : memref<32x32xf32, #tpu.memory_space<vmem>>, vector<32x32xf32>
    %cst_58 = arith.constant dense<0.000000e+00> : vector<32x2048xf32>
    %488 = tpu.matmul %487, %486, %cst_58 {dimension_numbers = #tpu.dot_dimension_numbers<[1], [0], [0], [1], [0, 0, 1, 1], [], []>} : vector<32x32xf32>, vector<32x2048xf32>, vector<32x2048xf32> -> vector<32x2048xf32>
    %c0_59 = arith.constant 0 : index
    %c0_60 = arith.constant 0 : index
    %489 = vector.load %arg5[%c0_59, %c0_60] : memref<32x1xf32, #tpu.memory_space<vmem>>, vector<32x1xf32>
    %490 = vector.broadcast %489 : vector<32x1xf32> to vector<32x2048xf32>
    %491 = arith.addf %488, %490 : vector<32x2048xf32>
    %492 = vector.extract_strided_slice %491 {offsets = [0, 0], sizes = [32, 256], strides = [1, 1]} : vector<32x2048xf32> to vector<32x256xf32>
    %c0_61 = arith.constant 0 : index
    %c0_62 = arith.constant 0 : index
    %c0_63 = arith.constant 0 : index
    %493 = vector.load %arg6[%c0_61, %c0_62, %c0_63] : memref<8x32x256xf32, #tpu.memory_space<vmem>>, vector<1x32x256xf32>
    %494 = vector.shape_cast %493 : vector<1x32x256xf32> to vector<32x256xf32>
    %495 = vector.shape_cast %492 : vector<32x256xf32> to vector<1x32x256xf32>
    tpu.vector_store %arg6[%c0_61, %c0_62, %c0_63], %495 {strides = array<i32>} : memref<8x32x256xf32, #tpu.memory_space<vmem>>, vector<1x32x256xf32>,
    %496 = vector.extract_strided_slice %491 {offsets = [0, 256], sizes = [32, 256], strides = [1, 1]} : vector<32x2048xf32> to vector<32x256xf32>
    %c1_64 = arith.constant 1 : index
    %c0_65 = arith.constant 0 : index
    %c0_66 = arith.constant 0 : index
    %497 = vector.load %arg6[%c1_64, %c0_65, %c0_66] : memref<8x32x256xf32, #tpu.memory_space<vmem>>, vector<1x32x256xf32>
    %498 = vector.shape_cast %497 : vector<1x32x256xf32> to vector<32x256xf32>
    %499 = vector.shape_cast %496 : vector<32x256xf32> to vector<1x32x256xf32>
    tpu.vector_store %arg6[%c1_64, %c0_65, %c0_66], %499 {strides = array<i32>} : memref<8x32x256xf32, #tpu.memory_space<vmem>>, vector<1x32x256xf32>,
    %500 = vector.extract_strided_slice %491 {offsets = [0, 512], sizes = [32, 256], strides = [1, 1]} : vector<32x2048xf32> to vector<32x256xf32>
    %c2_67 = arith.constant 2 : index
    %c0_68 = arith.constant 0 : index
    %c0_69 = arith.constant 0 : index
    %501 = vector.load %arg6[%c2_67, %c0_68, %c0_69] : memref<8x32x256xf32, #tpu.memory_space<vmem>>, vector<1x32x256xf32>
    %502 = vector.shape_cast %501 : vector<1x32x256xf32> to vector<32x256xf32>
    %503 = vector.shape_cast %500 : vector<32x256xf32> to vector<1x32x256xf32>
    tpu.vector_store %arg6[%c2_67, %c0_68, %c0_69], %503 {strides = array<i32>} : memref<8x32x256xf32, #tpu.memory_space<vmem>>, vector<1x32x256xf32>,
    %504 = vector.extract_strided_slice %491 {offsets = [0, 768], sizes = [32, 256], strides = [1, 1]} : vector<32x2048xf32> to vector<32x256xf32>
    %c3_70 = arith.constant 3 : index
    %c0_71 = arith.constant 0 : index
    %c0_72 = arith.constant 0 : index
    %505 = vector.load %arg6[%c3_70, %c0_71, %c0_72] : memref<8x32x256xf32, #tpu.memory_space<vmem>>, vector<1x32x256xf32>
    %506 = vector.shape_cast %505 : vector<1x32x256xf32> to vector<32x256xf32>
    %507 = vector.shape_cast %504 : vector<32x256xf32> to vector<1x32x256xf32>
    tpu.vector_store %arg6[%c3_70, %c0_71, %c0_72], %507 {strides = array<i32>} : memref<8x32x256xf32, #tpu.memory_space<vmem>>, vector<1x32x256xf32>,
    %508 = vector.extract_strided_slice %491 {offsets = [0, 1024], sizes = [32, 256], strides = [1, 1]} : vector<32x2048xf32> to vector<32x256xf32>
    %c4_73 = arith.constant 4 : index
    %c0_74 = arith.constant 0 : index
    %c0_75 = arith.constant 0 : index
    %509 = vector.load %arg6[%c4_73, %c0_74, %c0_75] : memref<8x32x256xf32, #tpu.memory_space<vmem>>, vector<1x32x256xf32>
    %510 = vector.shape_cast %509 : vector<1x32x256xf32> to vector<32x256xf32>
    %511 = vector.shape_cast %508 : vector<32x256xf32> to vector<1x32x256xf32>
    tpu.vector_store %arg6[%c4_73, %c0_74, %c0_75], %511 {strides = array<i32>} : memref<8x32x256xf32, #tpu.memory_space<vmem>>, vector<1x32x256xf32>,
    %512 = vector.extract_strided_slice %491 {offsets = [0, 1280], sizes = [32, 256], strides = [1, 1]} : vector<32x2048xf32> to vector<32x256xf32>
    %c5_76 = arith.constant 5 : index
    %c0_77 = arith.constant 0 : index
    %c0_78 = arith.constant 0 : index
    %513 = vector.load %arg6[%c5_76, %c0_77, %c0_78] : memref<8x32x256xf32, #tpu.memory_space<vmem>>, vector<1x32x256xf32>
    %514 = vector.shape_cast %513 : vector<1x32x256xf32> to vector<32x256xf32>
    %515 = vector.shape_cast %512 : vector<32x256xf32> to vector<1x32x256xf32>
    tpu.vector_store %arg6[%c5_76, %c0_77, %c0_78], %515 {strides = array<i32>} : memref<8x32x256xf32, #tpu.memory_space<vmem>>, vector<1x32x256xf32>,
    %516 = vector.extract_strided_slice %491 {offsets = [0, 1536], sizes = [32, 256], strides = [1, 1]} : vector<32x2048xf32> to vector<32x256xf32>
    %c6_79 = arith.constant 6 : index
    %c0_80 = arith.constant 0 : index
    %c0_81 = arith.constant 0 : index
    %517 = vector.load %arg6[%c6_79, %c0_80, %c0_81] : memref<8x32x256xf32, #tpu.memory_space<vmem>>, vector<1x32x256xf32>
    %518 = vector.shape_cast %517 : vector<1x32x256xf32> to vector<32x256xf32>
    %519 = vector.shape_cast %516 : vector<32x256xf32> to vector<1x32x256xf32>
    tpu.vector_store %arg6[%c6_79, %c0_80, %c0_81], %519 {strides = array<i32>} : memref<8x32x256xf32, #tpu.memory_space<vmem>>, vector<1x32x256xf32>,
    %520 = vector.extract_strided_slice %491 {offsets = [0, 1792], sizes = [32, 256], strides = [1, 1]} : vector<32x2048xf32> to vector<32x256xf32>
    %c7_82 = arith.constant 7 : index
    %c0_83 = arith.constant 0 : index
    %c0_84 = arith.constant 0 : index
    %521 = vector.load %arg6[%c7_82, %c0_83, %c0_84] : memref<8x32x256xf32, #tpu.memory_space<vmem>>, vector<1x32x256xf32>
    %522 = vector.shape_cast %521 : vector<1x32x256xf32> to vector<32x256xf32>
    %523 = vector.shape_cast %520 : vector<32x256xf32> to vector<1x32x256xf32>
    tpu.vector_store %arg6[%c7_82, %c0_83, %c0_84], %523 {strides = array<i32>} : memref<8x32x256xf32, #tpu.memory_space<vmem>>, vector<1x32x256xf32>,
    return
  }
  func.func @transform_0(%arg0: i32) -> (i32, i32, i32) {
    %c0_i32 = arith.constant 0 : i32
    %c0_i32_0 = arith.constant 0 : i32
    %c0_i32_1 = arith.constant 0 : i32
    return %c0_i32, %c0_i32_0, %arg0 : i32, i32, i32
  }
  func.func @transform_1(%arg0: i32) -> (i32, i32) {
    %c0_i32 = arith.constant 0 : i32
    %c0_i32_0 = arith.constant 0 : i32
    %c0_i32_1 = arith.constant 0 : i32
    return %c0_i32, %c0_i32_0 : i32, i32
  }
  func.func @transform_2(%arg0: i32) -> (i32, i32) {
    %c0_i32 = arith.constant 0 : i32
    %c0_i32_0 = arith.constant 0 : i32
    %c0_i32_1 = arith.constant 0 : i32
    return %c0_i32, %c0_i32_0 : i32, i32
  }
  func.func @transform_3(%arg0: i32) -> (i32, i32) {
    %c0_i32 = arith.constant 0 : i32
    %c0_i32_0 = arith.constant 0 : i32
    %c0_i32_1 = arith.constant 0 : i32
    return %c0_i32, %c0_i32_0 : i32, i32
  }
  func.func @transform_4(%arg0: i32) -> (i32, i32) {
    %c0_i32 = arith.constant 0 : i32
    %c0_i32_0 = arith.constant 0 : i32
    %c0_i32_1 = arith.constant 0 : i32
    return %c0_i32, %c0_i32_0 : i32, i32
  }
  func.func @transform_5(%arg0: i32) -> (i32, i32, i32) {
    %c0_i32 = arith.constant 0 : i32
    %c0_i32_0 = arith.constant 0 : i32
    %c0_i32_1 = arith.constant 0 : i32
    return %c0_i32, %c0_i32_0, %arg0 : i32, i32, i32
  }
}

</mosaic_0001>

<llo_original>
// kernel: attention_block_nlp_forward.1
$region0: #{attention_block_nlp_forward.1}
  #allocation0 [shape = 'u32[]', space=smem, size = 0x4, offset = 0x4, fixed_abs, tag = 'smem constant byte address 0x4 - core index']
  #allocation1 [shape = 'u32[72,128]{1,0:T(1,128)}', space=vmem, size = 0x9000, scoped, tag = 'internal scratch']
  %s0 = inlined_call_operand.vmem [shape: f32[8,32,256], index: 0, kind: input, shape index: {}]
  %s1 = inlined_call_operand.vmem [shape: f32[96,32], index: 1, kind: input, shape index: {}]
  %s2 = inlined_call_operand.vmem [shape: f32[96,1], index: 2, kind: input, shape index: {}]
  %s3 = inlined_call_operand.vmem [shape: f32[32,32], index: 3, kind: input, shape index: {}]
  %s4 = inlined_call_operand.vmem [shape: f32[32,1], index: 4, kind: input, shape index: {}]
  %s5 = inlined_call_operand.vmem [shape: f32[8,32,256], index: 5, kind: output, shape index: {}]
  %s6 = sld [smem:[#allocation0]]
  $region30: #{attention_block_nlp_forward.1} parent=0
    _
  %s8 = ssub.s32 1, %s6
  %s9 = scalar_select 0, %s8, %s6
  // Predicated region
  $region2: #{attention_block_nlp_forward.1} parent=0 // pred_check
    _
  $region3: #{attention_block_nlp_forward.1} parent=0 // pred_check_branch
    %11 = sbr.rel (0) target = $region5
  $region4: #{attention_block_nlp_forward.1} parent=0 // pred_region
    _
  $region5: #{attention_block_nlp_forward.1} parent=0 // pred_fallthru
    _
  // Predicated region
  $region6: #{attention_block_nlp_forward.1} parent=0 // pred_check
    _
  $region7: #{attention_block_nlp_forward.1} parent=0 // pred_check_branch
    %13 = sbr.rel (0) target = $region9
  $region8: #{attention_block_nlp_forward.1} parent=0 // pred_region
    _
  $region9: #{attention_block_nlp_forward.1} parent=0 // pred_fallthru
    _
  // Predicated region
  $region10: #{attention_block_nlp_forward.1} parent=0 // pred_check
    _
  $region11: #{attention_block_nlp_forward.1} parent=0 // pred_check_branch
    %15 = sbr.rel (0) target = $region13
  $region12: #{attention_block_nlp_forward.1} parent=0 // pred_region
    _
  $region13: #{attention_block_nlp_forward.1} parent=0 // pred_fallthru
    _
  // Predicated region
  $region14: #{attention_block_nlp_forward.1} parent=0 // pred_check
    _
  $region15: #{attention_block_nlp_forward.1} parent=0 // pred_check_branch
    %17 = sbr.rel (0) target = $region17
  $region16: #{attention_block_nlp_forward.1} parent=0 // pred_region
    _
  $region17: #{attention_block_nlp_forward.1} parent=0 // pred_fallthru
    _
  // Predicated region
  $region18: #{attention_block_nlp_forward.1} parent=0 // pred_check
    _
  $region19: #{attention_block_nlp_forward.1} parent=0 // pred_check_branch
    %19 = sbr.rel (0) target = $region21
  $region20: #{attention_block_nlp_forward.1} parent=0 // pred_region
    _
  $region21: #{attention_block_nlp_forward.1} parent=0 // pred_fallthru
    _
  %v20 = vld [vmem:[%s0] sm:$0xff]
  %v21 = vld [vmem:[%s0 + $0x8] sm:$0xff]
  %v22 = vld [vmem:[%s0 + $0x10] sm:$0xff]
  %v23 = vld [vmem:[%s0 + $0x18] sm:$0xff]
  %v24 = vld [vmem:[%s0 + $0x20] sm:$0xff]
  %v25 = vld [vmem:[%s0 + $0x28] sm:$0xff]
  %v26 = vld [vmem:[%s0 + $0x30] sm:$0xff]
  %v27 = vld [vmem:[%s0 + $0x38] sm:$0xff]
  %s28 = scalar_lea.vmem %s0, 64
  %v29 = vld [vmem:[%s28] sm:$0xff]
  %v30 = vld [vmem:[%s28 + $0x8] sm:$0xff]
  %v31 = vld [vmem:[%s28 + $0x10] sm:$0xff]
  %v32 = vld [vmem:[%s28 + $0x18] sm:$0xff]
  %v33 = vld [vmem:[%s28 + $0x20] sm:$0xff]
  %v34 = vld [vmem:[%s28 + $0x28] sm:$0xff]
  %v35 = vld [vmem:[%s28 + $0x30] sm:$0xff]
  %v36 = vld [vmem:[%s28 + $0x38] sm:$0xff]
  %s37 = scalar_lea.vmem %s0, 128
  %v38 = vld [vmem:[%s37] sm:$0xff]
  %v39 = vld [vmem:[%s37 + $0x8] sm:$0xff]
  %v40 = vld [vmem:[%s37 + $0x10] sm:$0xff]
  %v41 = vld [vmem:[%s37 + $0x18] sm:$0xff]
  %v42 = vld [vmem:[%s37 + $0x20] sm:$0xff]
  %v43 = vld [vmem:[%s37 + $0x28] sm:$0xff]
  %v44 = vld [vmem:[%s37 + $0x30] sm:$0xff]
  %v45 = vld [vmem:[%s37 + $0x38] sm:$0xff]
  %s46 = scalar_lea.vmem %s0, 192
  %v47 = vld [vmem:[%s46] sm:$0xff]
  %v48 = vld [vmem:[%s46 + $0x8] sm:$0xff]
  %v49 = vld [vmem:[%s46 + $0x10] sm:$0xff]
  %v50 = vld [vmem:[%s46 + $0x18] sm:$0xff]
  %v51 = vld [vmem:[%s46 + $0x20] sm:$0xff]
  %v52 = vld [vmem:[%s46 + $0x28] sm:$0xff]
  %v53 = vld [vmem:[%s46 + $0x30] sm:$0xff]
  %v54 = vld [vmem:[%s46 + $0x38] sm:$0xff]
  %s55 = scalar_lea.vmem %s0, 256
  %v56 = vld [vmem:[%s55] sm:$0xff]
  %v57 = vld [vmem:[%s55 + $0x8] sm:$0xff]
  %v58 = vld [vmem:[%s55 + $0x10] sm:$0xff]
  %v59 = vld [vmem:[%s55 + $0x18] sm:$0xff]
  %v60 = vld [vmem:[%s55 + $0x20] sm:$0xff]
  %v61 = vld [vmem:[%s55 + $0x28] sm:$0xff]
  %v62 = vld [vmem:[%s55 + $0x30] sm:$0xff]
  %v63 = vld [vmem:[%s55 + $0x38] sm:$0xff]
  %s64 = scalar_lea.vmem %s0, 320
  %v65 = vld [vmem:[%s64] sm:$0xff]
  %v66 = vld [vmem:[%s64 + $0x8] sm:$0xff]
  %v67 = vld [vmem:[%s64 + $0x10] sm:$0xff]
  %v68 = vld [vmem:[%s64 + $0x18] sm:$0xff]
  %v69 = vld [vmem:[%s64 + $0x20] sm:$0xff]
  %v70 = vld [vmem:[%s64 + $0x28] sm:$0xff]
  %v71 = vld [vmem:[%s64 + $0x30] sm:$0xff]
  %v72 = vld [vmem:[%s64 + $0x38] sm:$0xff]
  %s73 = scalar_lea.vmem %s0, 384
  %v74 = vld [vmem:[%s73] sm:$0xff]
  %v75 = vld [vmem:[%s73 + $0x8] sm:$0xff]
  %v76 = vld [vmem:[%s73 + $0x10] sm:$0xff]
  %v77 = vld [vmem:[%s73 + $0x18] sm:$0xff]
  %v78 = vld [vmem:[%s73 + $0x20] sm:$0xff]
  %v79 = vld [vmem:[%s73 + $0x28] sm:$0xff]
  %v80 = vld [vmem:[%s73 + $0x30] sm:$0xff]
  %v81 = vld [vmem:[%s73 + $0x38] sm:$0xff]
  %s82 = scalar_lea.vmem %s0, 448
  %v83 = vld [vmem:[%s82] sm:$0xff]
  %v84 = vld [vmem:[%s82 + $0x8] sm:$0xff]
  %v85 = vld [vmem:[%s82 + $0x10] sm:$0xff]
  %v86 = vld [vmem:[%s82 + $0x18] sm:$0xff]
  %v87 = vld [vmem:[%s82 + $0x20] sm:$0xff]
  %v88 = vld [vmem:[%s82 + $0x28] sm:$0xff]
  %v89 = vld [vmem:[%s82 + $0x30] sm:$0xff]
  %v90 = vld [vmem:[%s82 + $0x38] sm:$0xff]
  %v91 = vld [vmem:[%s1] sm:$0xff]
  %v92 = vld [vmem:[%s1 + $0x8] sm:$0xff]
  %v93 = vld [vmem:[%s1 + $0x10] sm:$0xff]
  %v94 = vld [vmem:[%s1 + $0x18] sm:$0xff]
  %v95 = vld [vmem:[%s1 + $0x20] sm:$0xff]
  %v96 = vld [vmem:[%s1 + $0x28] sm:$0xff]
  %v97 = vld [vmem:[%s1 + $0x30] sm:$0xff]
  %v98 = vld [vmem:[%s1 + $0x38] sm:$0xff]
  %v99 = vld [vmem:[%s1 + $0x40] sm:$0xff]
  %v100 = vld [vmem:[%s1 + $0x48] sm:$0xff]
  %v101 = vld [vmem:[%s1 + $0x50] sm:$0xff]
  %v102 = vld [vmem:[%s1 + $0x58] sm:$0xff]
  %v103 = vld [vmem:[%s2] sm:$0xff]
  %v104 = vld [vmem:[%s2 + $0x8] sm:$0xff]
  %v105 = vld [vmem:[%s2 + $0x10] sm:$0xff]
  %v106 = vld [vmem:[%s2 + $0x18] sm:$0xff]
  %v107 = vld [vmem:[%s2 + $0x20] sm:$0xff]
  %v108 = vld [vmem:[%s2 + $0x28] sm:$0xff]
  %v109 = vld [vmem:[%s2 + $0x30] sm:$0xff]
  %v110 = vld [vmem:[%s2 + $0x38] sm:$0xff]
  %v111 = vld [vmem:[%s2 + $0x40] sm:$0xff]
  %v112 = vld [vmem:[%s2 + $0x48] sm:$0xff]
  %v113 = vld [vmem:[%s2 + $0x50] sm:$0xff]
  %v114 = vld [vmem:[%s2 + $0x58] sm:$0xff]
  %116 = vset.pattern.permute.xlu0 0
  %117 = vperm.xlu0 %116, %v103
  %v118 = vpop.permute.xlu0 %117
  %121 = vset.pattern.permute.xlu0 0
  %122 = vperm.xlu0 %121, %v104
  %v123 = vpop.permute.xlu0 %122
  %126 = vset.pattern.permute.xlu0 0
  %127 = vperm.xlu0 %126, %v105
  %v128 = vpop.permute.xlu0 %127
  %131 = vset.pattern.permute.xlu0 0
  %132 = vperm.xlu0 %131, %v106
  %v133 = vpop.permute.xlu0 %132
  %136 = vset.pattern.permute.xlu0 0
  %137 = vperm.xlu0 %136, %v107
  %v138 = vpop.permute.xlu0 %137
  %141 = vset.pattern.permute.xlu0 0
  %142 = vperm.xlu0 %141, %v108
  %v143 = vpop.permute.xlu0 %142
  %146 = vset.pattern.permute.xlu0 0
  %147 = vperm.xlu0 %146, %v109
  %v148 = vpop.permute.xlu0 %147
  %151 = vset.pattern.permute.xlu0 0
  %152 = vperm.xlu0 %151, %v110
  %v153 = vpop.permute.xlu0 %152
  %156 = vset.pattern.permute.xlu0 0
  %157 = vperm.xlu0 %156, %v111
  %v158 = vpop.permute.xlu0 %157
  %161 = vset.pattern.permute.xlu0 0
  %162 = vperm.xlu0 %161, %v112
  %v163 = vpop.permute.xlu0 %162
  %166 = vset.pattern.permute.xlu0 0
  %167 = vperm.xlu0 %166, %v113
  %v168 = vpop.permute.xlu0 %167
  %171 = vset.pattern.permute.xlu0 0
  %172 = vperm.xlu0 %171, %v114
  %v173 = vpop.permute.xlu0 %172
  %vm175 = vcmask 261120
  %v177 = vsel %vm175, %v91, 0
  %v180 = vsel %vm175, %v92, 0
  %v183 = vsel %vm175, %v93, 0
  %v186 = vsel %vm175, %v94, 0
  %v189 = vsel %vm175, %v95, 0
  %v192 = vsel %vm175, %v96, 0
  %v195 = vsel %vm175, %v97, 0
  %v198 = vsel %vm175, %v98, 0
  %v201 = vsel %vm175, %v99, 0
  %v204 = vsel %vm175, %v100, 0
  %v207 = vsel %vm175, %v101, 0
  %v210 = vsel %vm175, %v102, 0
  %212 = vmatpush.msra.mxu0 0.0
  %213 = vmatpush.msra.mxu0 0.0
  %214 = vmatpush.msra.mxu0 0.0
  %215 = vmatpush.msra.mxu0 0.0
  %216 = vmatpush.msra.mxu0 0.0
  %217 = vmatpush.msra.mxu0 0.0
  %218 = vmatpush.msra.mxu0 0.0
  %219 = vmatpush.msra.mxu0 0.0
  %220 = vmatpush.msra.mxu0 0.0
  %221 = vmatpush.msra.mxu0 0.0
  %222 = vmatpush.msra.mxu0 0.0
  %223 = vmatpush.msra.mxu0 0.0
  %224 = vmatpush.msra.mxu0 %v26
  %225 = vmatpush.msra.mxu0 %v24
  %226 = vmatpush.msra.mxu0 %v22
  %227 = vmatpush.msra.mxu0 %v20
  %228 = vmatmul.f32.gmra.mxu0 %v177
  %v229 = vpop.f32.mrf.mxu0
  %v230 = vadd.f32 %v118, %v229
  %231 = vmatmul.f32.gmra.mxu0 %v180
  %v232 = vpop.f32.mrf.mxu0
  %v233 = vadd.f32 %v123, %v232
  %234 = vmatmul.f32.gmra.mxu0 %v183
  %v235 = vpop.f32.mrf.mxu0
  %v236 = vadd.f32 %v128, %v235
  %237 = vmatmul.f32.gmra.mxu0 %v186
  %v238 = vpop.f32.mrf.mxu0
  %v239 = vadd.f32 %v133, %v238
  %240 = vmatmul.f32.gmra.mxu0 %v189
  %v241 = vpop.f32.mrf.mxu0
  %v242 = vadd.f32 %v138, %v241
  %243 = vmatmul.f32.gmra.mxu0 %v192
  %v244 = vpop.f32.mrf.mxu0
  %v245 = vadd.f32 %v143, %v244
  %246 = vmatmul.f32.gmra.mxu0 %v195
  %v247 = vpop.f32.mrf.mxu0
  %v248 = vadd.f32 %v148, %v247
  %249 = vmatmul.f32.gmra.mxu0 %v198
  %v250 = vpop.f32.mrf.mxu0
  %v251 = vadd.f32 %v153, %v250
  %252 = vmatmul.f32.gmra.mxu0 %v201
  %v253 = vpop.f32.mrf.mxu0
  %v254 = vadd.f32 %v158, %v253
  %255 = vmatmul.f32.gmra.mxu0 %v204
  %v256 = vpop.f32.mrf.mxu0
  %v257 = vadd.f32 %v163, %v256
  %258 = vmatmul.f32.gmra.mxu0 %v207
  %v259 = vpop.f32.mrf.mxu0
  %v260 = vadd.f32 %v168, %v259
  %261 = vmatmul.f32.gmra.mxu0 %v210
  %v262 = vpop.f32.mrf.mxu0
  %v263 = vadd.f32 %v173, %v262
  %264 = vdwg.mxu0
  %265 = vmatpush.msra.mxu0 0.0
  %266 = vmatpush.msra.mxu0 0.0
  %267 = vmatpush.msra.mxu0 0.0
  %268 = vmatpush.msra.mxu0 0.0
  %269 = vmatpush.msra.mxu0 0.0
  %270 = vmatpush.msra.mxu0 0.0
  %271 = vmatpush.msra.mxu0 0.0
  %272 = vmatpush.msra.mxu0 0.0
  %273 = vmatpush.msra.mxu0 0.0
  %274 = vmatpush.msra.mxu0 0.0
  %275 = vmatpush.msra.mxu0 0.0
  %276 = vmatpush.msra.mxu0 0.0
  %277 = vmatpush.msra.mxu0 %v27
  %278 = vmatpush.msra.mxu0 %v25
  %279 = vmatpush.msra.mxu0 %v23
  %280 = vmatpush.msra.mxu0 %v21
  %281 = vmatmul.f32.gmra.mxu0 %v177
  %v282 = vpop.f32.mrf.mxu0
  %v283 = vadd.f32 %v118, %v282
  %284 = vmatmul.f32.gmra.mxu0 %v180
  %v285 = vpop.f32.mrf.mxu0
  %v286 = vadd.f32 %v123, %v285
  %287 = vmatmul.f32.gmra.mxu0 %v183
  %v288 = vpop.f32.mrf.mxu0
  %v289 = vadd.f32 %v128, %v288
  %290 = vmatmul.f32.gmra.mxu0 %v186
  %v291 = vpop.f32.mrf.mxu0
  %v292 = vadd.f32 %v133, %v291
  %293 = vmatmul.f32.gmra.mxu0 %v189
  %v294 = vpop.f32.mrf.mxu0
  %v295 = vadd.f32 %v138, %v294
  %296 = vmatmul.f32.gmra.mxu0 %v192
  %v297 = vpop.f32.mrf.mxu0
  %v298 = vadd.f32 %v143, %v297
  %299 = vmatmul.f32.gmra.mxu0 %v195
  %v300 = vpop.f32.mrf.mxu0
  %v301 = vadd.f32 %v148, %v300
  %302 = vmatmul.f32.gmra.mxu0 %v198
  %v303 = vpop.f32.mrf.mxu0
  %v304 = vadd.f32 %v153, %v303
  %305 = vmatmul.f32.gmra.mxu0 %v201
  %v306 = vpop.f32.mrf.mxu0
  %v307 = vadd.f32 %v158, %v306
  %308 = vmatmul.f32.gmra.mxu0 %v204
  %v309 = vpop.f32.mrf.mxu0
  %v310 = vadd.f32 %v163, %v309
  %311 = vmatmul.f32.gmra.mxu0 %v207
  %v312 = vpop.f32.mrf.mxu0
  %v313 = vadd.f32 %v168, %v312
  %314 = vmatmul.f32.gmra.mxu0 %v210
  %v315 = vpop.f32.mrf.mxu0
  %v316 = vadd.f32 %v173, %v315
  %317 = vdwg.mxu0
  %318 = vmatpush.msra.mxu0 0.0
  %319 = vmatpush.msra.mxu0 0.0
  %320 = vmatpush.msra.mxu0 0.0
  %321 = vmatpush.msra.mxu0 0.0
  %322 = vmatpush.msra.mxu0 0.0
  %323 = vmatpush.msra.mxu0 0.0
  %324 = vmatpush.msra.mxu0 0.0
  %325 = vmatpush.msra.mxu0 0.0
  %326 = vmatpush.msra.mxu0 0.0
  %327 = vmatpush.msra.mxu0 0.0
  %328 = vmatpush.msra.mxu0 0.0
  %329 = vmatpush.msra.mxu0 0.0
  %330 = vmatpush.msra.mxu0 %v35
  %331 = vmatpush.msra.mxu0 %v33
  %332 = vmatpush.msra.mxu0 %v31
  %333 = vmatpush.msra.mxu0 %v29
  %334 = vmatmul.f32.gmra.mxu0 %v177
  %v335 = vpop.f32.mrf.mxu0
  %v336 = vadd.f32 %v118, %v335
  %337 = vmatmul.f32.gmra.mxu0 %v180
  %v338 = vpop.f32.mrf.mxu0
  %v339 = vadd.f32 %v123, %v338
  %340 = vmatmul.f32.gmra.mxu0 %v183
  %v341 = vpop.f32.mrf.mxu0
  %v342 = vadd.f32 %v128, %v341
  %343 = vmatmul.f32.gmra.mxu0 %v186
  %v344 = vpop.f32.mrf.mxu0
  %v345 = vadd.f32 %v133, %v344
  %346 = vmatmul.f32.gmra.mxu0 %v189
  %v347 = vpop.f32.mrf.mxu0
  %v348 = vadd.f32 %v138, %v347
  %349 = vmatmul.f32.gmra.mxu0 %v192
  %v350 = vpop.f32.mrf.mxu0
  %v351 = vadd.f32 %v143, %v350
  %352 = vmatmul.f32.gmra.mxu0 %v195
  %v353 = vpop.f32.mrf.mxu0
  %v354 = vadd.f32 %v148, %v353
  %355 = vmatmul.f32.gmra.mxu0 %v198
  %v356 = vpop.f32.mrf.mxu0
  %v357 = vadd.f32 %v153, %v356
  %358 = vmatmul.f32.gmra.mxu0 %v201
  %v359 = vpop.f32.mrf.mxu0
  %v360 = vadd.f32 %v158, %v359
  %361 = vmatmul.f32.gmra.mxu0 %v204
  %v362 = vpop.f32.mrf.mxu0
  %v363 = vadd.f32 %v163, %v362
  %364 = vmatmul.f32.gmra.mxu0 %v207
  %v365 = vpop.f32.mrf.mxu0
  %v366 = vadd.f32 %v168, %v365
  %367 = vmatmul.f32.gmra.mxu0 %v210
  %v368 = vpop.f32.mrf.mxu0
  %v369 = vadd.f32 %v173, %v368
  %370 = vdwg.mxu0
  %371 = vmatpush.msra.mxu0 0.0
  %372 = vmatpush.msra.mxu0 0.0
  %373 = vmatpush.msra.mxu0 0.0
  %374 = vmatpush.msra.mxu0 0.0
  %375 = vmatpush.msra.mxu0 0.0
  %376 = vmatpush.msra.mxu0 0.0
  %377 = vmatpush.msra.mxu0 0.0
  %378 = vmatpush.msra.mxu0 0.0
  %379 = vmatpush.msra.mxu0 0.0
  %380 = vmatpush.msra.mxu0 0.0
  %381 = vmatpush.msra.mxu0 0.0
  %382 = vmatpush.msra.mxu0 0.0
  %383 = vmatpush.msra.mxu0 %v36
  %384 = vmatpush.msra.mxu0 %v34
  %385 = vmatpush.msra.mxu0 %v32
  %386 = vmatpush.msra.mxu0 %v30
  %387 = vmatmul.f32.gmra.mxu0 %v177
  %v388 = vpop.f32.mrf.mxu0
  %v389 = vadd.f32 %v118, %v388
  %390 = vmatmul.f32.gmra.mxu0 %v180
  %v391 = vpop.f32.mrf.mxu0
  %v392 = vadd.f32 %v123, %v391
  %393 = vmatmul.f32.gmra.mxu0 %v183
  %v394 = vpop.f32.mrf.mxu0
  %v395 = vadd.f32 %v128, %v394
  %396 = vmatmul.f32.gmra.mxu0 %v186
  %v397 = vpop.f32.mrf.mxu0
  %v398 = vadd.f32 %v133, %v397
  %399 = vmatmul.f32.gmra.mxu0 %v189
  %v400 = vpop.f32.mrf.mxu0
  %v401 = vadd.f32 %v138, %v400
  %402 = vmatmul.f32.gmra.mxu0 %v192
  %v403 = vpop.f32.mrf.mxu0
  %v404 = vadd.f32 %v143, %v403
  %405 = vmatmul.f32.gmra.mxu0 %v195
  %v406 = vpop.f32.mrf.mxu0
  %v407 = vadd.f32 %v148, %v406
  %408 = vmatmul.f32.gmra.mxu0 %v198
  %v409 = vpop.f32.mrf.mxu0
  %v410 = vadd.f32 %v153, %v409
  %411 = vmatmul.f32.gmra.mxu0 %v201
  %v412 = vpop.f32.mrf.mxu0
  %v413 = vadd.f32 %v158, %v412
  %414 = vmatmul.f32.gmra.mxu0 %v204
  %v415 = vpop.f32.mrf.mxu0
  %v416 = vadd.f32 %v163, %v415
  %417 = vmatmul.f32.gmra.mxu0 %v207
  %v418 = vpop.f32.mrf.mxu0
  %v419 = vadd.f32 %v168, %v418
  %420 = vmatmul.f32.gmra.mxu0 %v210
  %v421 = vpop.f32.mrf.mxu0
  %v422 = vadd.f32 %v173, %v421
  %423 = vdwg.mxu0
  %424 = vmatpush.msra.mxu0 0.0
  %425 = vmatpush.msra.mxu0 0.0
  %426 = vmatpush.msra.mxu0 0.0
  %427 = vmatpush.msra.mxu0 0.0
  %428 = vmatpush.msra.mxu0 0.0
  %429 = vmatpush.msra.mxu0 0.0
  %430 = vmatpush.msra.mxu0 0.0
  %431 = vmatpush.msra.mxu0 0.0
  %432 = vmatpush.msra.mxu0 0.0
  %433 = vmatpush.msra.mxu0 0.0
  %434 = vmatpush.msra.mxu0 0.0
  %435 = vmatpush.msra.mxu0 0.0
  %436 = vmatpush.msra.mxu0 %v44
  %437 = vmatpush.msra.mxu0 %v42
  %438 = vmatpush.msra.mxu0 %v40
  %439 = vmatpush.msra.mxu0 %v38
  %440 = vmatmul.f32.gmra.mxu0 %v177
  %v441 = vpop.f32.mrf.mxu0
  %v442 = vadd.f32 %v118, %v441
  %443 = vmatmul.f32.gmra.mxu0 %v180
  %v444 = vpop.f32.mrf.mxu0
  %v445 = vadd.f32 %v123, %v444
  %446 = vmatmul.f32.gmra.mxu0 %v183
  %v447 = vpop.f32.mrf.mxu0
  %v448 = vadd.f32 %v128, %v447
  %449 = vmatmul.f32.gmra.mxu0 %v186
  %v450 = vpop.f32.mrf.mxu0
  %v451 = vadd.f32 %v133, %v450
  %452 = vmatmul.f32.gmra.mxu0 %v189
  %v453 = vpop.f32.mrf.mxu0
  %v454 = vadd.f32 %v138, %v453
  %455 = vmatmul.f32.gmra.mxu0 %v192
  %v456 = vpop.f32.mrf.mxu0
  %v457 = vadd.f32 %v143, %v456
  %458 = vmatmul.f32.gmra.mxu0 %v195
  %v459 = vpop.f32.mrf.mxu0
  %v460 = vadd.f32 %v148, %v459
  %461 = vmatmul.f32.gmra.mxu0 %v198
  %v462 = vpop.f32.mrf.mxu0
  %v463 = vadd.f32 %v153, %v462
  %464 = vmatmul.f32.gmra.mxu0 %v201
  %v465 = vpop.f32.mrf.mxu0
  %v466 = vadd.f32 %v158, %v465
  %467 = vmatmul.f32.gmra.mxu0 %v204
  %v468 = vpop.f32.mrf.mxu0
  %v469 = vadd.f32 %v163, %v468
  %470 = vmatmul.f32.gmra.mxu0 %v207
  %v471 = vpop.f32.mrf.mxu0
  %v472 = vadd.f32 %v168, %v471
  %473 = vmatmul.f32.gmra.mxu0 %v210
  %v474 = vpop.f32.mrf.mxu0
  %v475 = vadd.f32 %v173, %v474
  %476 = vdwg.mxu0
  %477 = vmatpush.msra.mxu0 0.0
  %478 = vmatpush.msra.mxu0 0.0
  %479 = vmatpush.msra.mxu0 0.0
  %480 = vmatpush.msra.mxu0 0.0
  %481 = vmatpush.msra.mxu0 0.0
  %482 = vmatpush.msra.mxu0 0.0
  %483 = vmatpush.msra.mxu0 0.0
  %484 = vmatpush.msra.mxu0 0.0
  %485 = vmatpush.msra.mxu0 0.0
  %486 = vmatpush.msra.mxu0 0.0
  %487 = vmatpush.msra.mxu0 0.0
  %488 = vmatpush.msra.mxu0 0.0
  %489 = vmatpush.msra.mxu0 %v45
  %490 = vmatpush.msra.mxu0 %v43
  %491 = vmatpush.msra.mxu0 %v41
  %492 = vmatpush.msra.mxu0 %v39
  %493 = vmatmul.f32.gmra.mxu0 %v177
  %v494 = vpop.f32.mrf.mxu0
  %v495 = vadd.f32 %v118, %v494
  %496 = vmatmul.f32.gmra.mxu0 %v180
  %v497 = vpop.f32.mrf.mxu0
  %v498 = vadd.f32 %v123, %v497
  %499 = vmatmul.f32.gmra.mxu0 %v183
  %v500 = vpop.f32.mrf.mxu0
  %v501 = vadd.f32 %v128, %v500
  %502 = vmatmul.f32.gmra.mxu0 %v186
  %v503 = vpop.f32.mrf.mxu0
  %v504 = vadd.f32 %v133, %v503
  %505 = vmatmul.f32.gmra.mxu0 %v189
  %v506 = vpop.f32.mrf.mxu0
  %v507 = vadd.f32 %v138, %v506
  %508 = vmatmul.f32.gmra.mxu0 %v192
  %v509 = vpop.f32.mrf.mxu0
  %v510 = vadd.f32 %v143, %v509
  %511 = vmatmul.f32.gmra.mxu0 %v195
  %v512 = vpop.f32.mrf.mxu0
  %v513 = vadd.f32 %v148, %v512
  %514 = vmatmul.f32.gmra.mxu0 %v198
  %v515 = vpop.f32.mrf.mxu0
  %v516 = vadd.f32 %v153, %v515
  %517 = vmatmul.f32.gmra.mxu0 %v201
  %v518 = vpop.f32.mrf.mxu0
  %v519 = vadd.f32 %v158, %v518
  %520 = vmatmul.f32.gmra.mxu0 %v204
  %v521 = vpop.f32.mrf.mxu0
  %v522 = vadd.f32 %v163, %v521
  %523 = vmatmul.f32.gmra.mxu0 %v207
  %v524 = vpop.f32.mrf.mxu0
  %v525 = vadd.f32 %v168, %v524
  %526 = vmatmul.f32.gmra.mxu0 %v210
  %v527 = vpop.f32.mrf.mxu0
  %v528 = vadd.f32 %v173, %v527
  %529 = vdwg.mxu0
  %530 = vmatpush.msra.mxu0 0.0
  %531 = vmatpush.msra.mxu0 0.0
  %532 = vmatpush.msra.mxu0 0.0
  %533 = vmatpush.msra.mxu0 0.0
  %534 = vmatpush.msra.mxu0 0.0
  %535 = vmatpush.msra.mxu0 0.0
  %536 = vmatpush.msra.mxu0 0.0
  %537 = vmatpush.msra.mxu0 0.0
  %538 = vmatpush.msra.mxu0 0.0
  %539 = vmatpush.msra.mxu0 0.0
  %540 = vmatpush.msra.mxu0 0.0
  %541 = vmatpush.msra.mxu0 0.0
  %542 = vmatpush.msra.mxu0 %v53
  %543 = vmatpush.msra.mxu0 %v51
  %544 = vmatpush.msra.mxu0 %v49
  %545 = vmatpush.msra.mxu0 %v47
  %546 = vmatmul.f32.gmra.mxu0 %v177
  %v547 = vpop.f32.mrf.mxu0
  %v548 = vadd.f32 %v118, %v547
  %549 = vmatmul.f32.gmra.mxu0 %v180
  %v550 = vpop.f32.mrf.mxu0
  %v551 = vadd.f32 %v123, %v550
  %552 = vmatmul.f32.gmra.mxu0 %v183
  %v553 = vpop.f32.mrf.mxu0
  %v554 = vadd.f32 %v128, %v553
  %555 = vmatmul.f32.gmra.mxu0 %v186
  %v556 = vpop.f32.mrf.mxu0
  %v557 = vadd.f32 %v133, %v556
  %558 = vmatmul.f32.gmra.mxu0 %v189
  %v559 = vpop.f32.mrf.mxu0
  %v560 = vadd.f32 %v138, %v559
  %561 = vmatmul.f32.gmra.mxu0 %v192
  %v562 = vpop.f32.mrf.mxu0
  %v563 = vadd.f32 %v143, %v562
  %564 = vmatmul.f32.gmra.mxu0 %v195
  %v565 = vpop.f32.mrf.mxu0
  %v566 = vadd.f32 %v148, %v565
  %567 = vmatmul.f32.gmra.mxu0 %v198
  %v568 = vpop.f32.mrf.mxu0
  %v569 = vadd.f32 %v153, %v568
  %570 = vmatmul.f32.gmra.mxu0 %v201
  %v571 = vpop.f32.mrf.mxu0
  %v572 = vadd.f32 %v158, %v571
  %573 = vmatmul.f32.gmra.mxu0 %v204
  %v574 = vpop.f32.mrf.mxu0
  %v575 = vadd.f32 %v163, %v574
  %576 = vmatmul.f32.gmra.mxu0 %v207
  %v577 = vpop.f32.mrf.mxu0
  %v578 = vadd.f32 %v168, %v577
  %579 = vmatmul.f32.gmra.mxu0 %v210
  %v580 = vpop.f32.mrf.mxu0
  %v581 = vadd.f32 %v173, %v580
  %582 = vdwg.mxu0
  %583 = vmatpush.msra.mxu0 0.0
  %584 = vmatpush.msra.mxu0 0.0
  %585 = vmatpush.msra.mxu0 0.0
  %586 = vmatpush.msra.mxu0 0.0
  %587 = vmatpush.msra.mxu0 0.0
  %588 = vmatpush.msra.mxu0 0.0
  %589 = vmatpush.msra.mxu0 0.0
  %590 = vmatpush.msra.mxu0 0.0
  %591 = vmatpush.msra.mxu0 0.0
  %592 = vmatpush.msra.mxu0 0.0
  %593 = vmatpush.msra.mxu0 0.0
  %594 = vmatpush.msra.mxu0 0.0
  %595 = vmatpush.msra.mxu0 %v54
  %596 = vmatpush.msra.mxu0 %v52
  %597 = vmatpush.msra.mxu0 %v50
  %598 = vmatpush.msra.mxu0 %v48
  %599 = vmatmul.f32.gmra.mxu0 %v177
  %v600 = vpop.f32.mrf.mxu0
  %v601 = vadd.f32 %v118, %v600
  %602 = vmatmul.f32.gmra.mxu0 %v180
  %v603 = vpop.f32.mrf.mxu0
  %v604 = vadd.f32 %v123, %v603
  %605 = vmatmul.f32.gmra.mxu0 %v183
  %v606 = vpop.f32.mrf.mxu0
  %v607 = vadd.f32 %v128, %v606
  %608 = vmatmul.f32.gmra.mxu0 %v186
  %v609 = vpop.f32.mrf.mxu0
  %v610 = vadd.f32 %v133, %v609
  %611 = vmatmul.f32.gmra.mxu0 %v189
  %v612 = vpop.f32.mrf.mxu0
  %v613 = vadd.f32 %v138, %v612
  %614 = vmatmul.f32.gmra.mxu0 %v192
  %v615 = vpop.f32.mrf.mxu0
  %v616 = vadd.f32 %v143, %v615
  %617 = vmatmul.f32.gmra.mxu0 %v195
  %v618 = vpop.f32.mrf.mxu0
  %v619 = vadd.f32 %v148, %v618
  %620 = vmatmul.f32.gmra.mxu0 %v198
  %v621 = vpop.f32.mrf.mxu0
  %v622 = vadd.f32 %v153, %v621
  %623 = vmatmul.f32.gmra.mxu0 %v201
  %v624 = vpop.f32.mrf.mxu0
  %v625 = vadd.f32 %v158, %v624
  %626 = vmatmul.f32.gmra.mxu0 %v204
  %v627 = vpop.f32.mrf.mxu0
  %v628 = vadd.f32 %v163, %v627
  %629 = vmatmul.f32.gmra.mxu0 %v207
  %v630 = vpop.f32.mrf.mxu0
  %v631 = vadd.f32 %v168, %v630
  %632 = vmatmul.f32.gmra.mxu0 %v210
  %v633 = vpop.f32.mrf.mxu0
  %v634 = vadd.f32 %v173, %v633
  %635 = vdwg.mxu0
  %636 = vmatpush.msra.mxu0 0.0
  %637 = vmatpush.msra.mxu0 0.0
  %638 = vmatpush.msra.mxu0 0.0
  %639 = vmatpush.msra.mxu0 0.0
  %640 = vmatpush.msra.mxu0 0.0
  %641 = vmatpush.msra.mxu0 0.0
  %642 = vmatpush.msra.mxu0 0.0
  %643 = vmatpush.msra.mxu0 0.0
  %644 = vmatpush.msra.mxu0 0.0
  %645 = vmatpush.msra.mxu0 0.0
  %646 = vmatpush.msra.mxu0 0.0
  %647 = vmatpush.msra.mxu0 0.0
  %648 = vmatpush.msra.mxu0 %v62
  %649 = vmatpush.msra.mxu0 %v60
  %650 = vmatpush.msra.mxu0 %v58
  %651 = vmatpush.msra.mxu0 %v56
  %652 = vmatmul.f32.gmra.mxu0 %v177
  %v653 = vpop.f32.mrf.mxu0
  %v654 = vadd.f32 %v118, %v653
  %655 = vmatmul.f32.gmra.mxu0 %v180
  %v656 = vpop.f32.mrf.mxu0
  %v657 = vadd.f32 %v123, %v656
  %658 = vmatmul.f32.gmra.mxu0 %v183
  %v659 = vpop.f32.mrf.mxu0
  %v660 = vadd.f32 %v128, %v659
  %661 = vmatmul.f32.gmra.mxu0 %v186
  %v662 = vpop.f32.mrf.mxu0
  %v663 = vadd.f32 %v133, %v662
  %664 = vmatmul.f32.gmra.mxu0 %v189
  %v665 = vpop.f32.mrf.mxu0
  %v666 = vadd.f32 %v138, %v665
  %667 = vmatmul.f32.gmra.mxu0 %v192
  %v668 = vpop.f32.mrf.mxu0
  %v669 = vadd.f32 %v143, %v668
  %670 = vmatmul.f32.gmra.mxu0 %v195
  %v671 = vpop.f32.mrf.mxu0
  %v672 = vadd.f32 %v148, %v671
  %673 = vmatmul.f32.gmra.mxu0 %v198
  %v674 = vpop.f32.mrf.mxu0
  %v675 = vadd.f32 %v153, %v674
  %676 = vmatmul.f32.gmra.mxu0 %v201
  %v677 = vpop.f32.mrf.mxu0
  %v678 = vadd.f32 %v158, %v677
  %679 = vmatmul.f32.gmra.mxu0 %v204
  %v680 = vpop.f32.mrf.mxu0
  %v681 = vadd.f32 %v163, %v680
  %682 = vmatmul.f32.gmra.mxu0 %v207
  %v683 = vpop.f32.mrf.mxu0
  %v684 = vadd.f32 %v168, %v683
  %685 = vmatmul.f32.gmra.mxu0 %v210
  %v686 = vpop.f32.mrf.mxu0
  %v687 = vadd.f32 %v173, %v686
  %688 = vdwg.mxu0
  %689 = vmatpush.msra.mxu0 0.0
  %690 = vmatpush.msra.mxu0 0.0
  %691 = vmatpush.msra.mxu0 0.0
  %692 = vmatpush.msra.mxu0 0.0
  %693 = vmatpush.msra.mxu0 0.0
  %694 = vmatpush.msra.mxu0 0.0
  %695 = vmatpush.msra.mxu0 0.0
  %696 = vmatpush.msra.mxu0 0.0
  %697 = vmatpush.msra.mxu0 0.0
  %698 = vmatpush.msra.mxu0 0.0
  %699 = vmatpush.msra.mxu0 0.0
  %700 = vmatpush.msra.mxu0 0.0
  %701 = vmatpush.msra.mxu0 %v63
  %702 = vmatpush.msra.mxu0 %v61
  %703 = vmatpush.msra.mxu0 %v59
  %704 = vmatpush.msra.mxu0 %v57
  %705 = vmatmul.f32.gmra.mxu0 %v177
  %v706 = vpop.f32.mrf.mxu0
  %v707 = vadd.f32 %v118, %v706
  %708 = vmatmul.f32.gmra.mxu0 %v180
  %v709 = vpop.f32.mrf.mxu0
  %v710 = vadd.f32 %v123, %v709
  %711 = vmatmul.f32.gmra.mxu0 %v183
  %v712 = vpop.f32.mrf.mxu0
  %v713 = vadd.f32 %v128, %v712
  %714 = vmatmul.f32.gmra.mxu0 %v186
  %v715 = vpop.f32.mrf.mxu0
  %v716 = vadd.f32 %v133, %v715
  %717 = vmatmul.f32.gmra.mxu0 %v189
  %v718 = vpop.f32.mrf.mxu0
  %v719 = vadd.f32 %v138, %v718
  %720 = vmatmul.f32.gmra.mxu0 %v192
  %v721 = vpop.f32.mrf.mxu0
  %v722 = vadd.f32 %v143, %v721
  %723 = vmatmul.f32.gmra.mxu0 %v195
  %v724 = vpop.f32.mrf.mxu0
  %v725 = vadd.f32 %v148, %v724
  %726 = vmatmul.f32.gmra.mxu0 %v198
  %v727 = vpop.f32.mrf.mxu0
  %v728 = vadd.f32 %v153, %v727
  %729 = vmatmul.f32.gmra.mxu0 %v201
  %v730 = vpop.f32.mrf.mxu0
  %v731 = vadd.f32 %v158, %v730
  %732 = vmatmul.f32.gmra.mxu0 %v204
  %v733 = vpop.f32.mrf.mxu0
  %v734 = vadd.f32 %v163, %v733
  %735 = vmatmul.f32.gmra.mxu0 %v207
  %v736 = vpop.f32.mrf.mxu0
  %v737 = vadd.f32 %v168, %v736
  %738 = vmatmul.f32.gmra.mxu0 %v210
  %v739 = vpop.f32.mrf.mxu0
  %v740 = vadd.f32 %v173, %v739
  %741 = vdwg.mxu0
  %742 = vmatpush.msra.mxu0 0.0
  %743 = vmatpush.msra.mxu0 0.0
  %744 = vmatpush.msra.mxu0 0.0
  %745 = vmatpush.msra.mxu0 0.0
  %746 = vmatpush.msra.mxu0 0.0
  %747 = vmatpush.msra.mxu0 0.0
  %748 = vmatpush.msra.mxu0 0.0
  %749 = vmatpush.msra.mxu0 0.0
  %750 = vmatpush.msra.mxu0 0.0
  %751 = vmatpush.msra.mxu0 0.0
  %752 = vmatpush.msra.mxu0 0.0
  %753 = vmatpush.msra.mxu0 0.0
  %754 = vmatpush.msra.mxu0 %v71
  %755 = vmatpush.msra.mxu0 %v69
  %756 = vmatpush.msra.mxu0 %v67
  %757 = vmatpush.msra.mxu0 %v65
  %758 = vmatmul.f32.gmra.mxu0 %v177
  %v759 = vpop.f32.mrf.mxu0
  %v760 = vadd.f32 %v118, %v759
  %761 = vmatmul.f32.gmra.mxu0 %v180
  %v762 = vpop.f32.mrf.mxu0
  %v763 = vadd.f32 %v123, %v762
  %764 = vmatmul.f32.gmra.mxu0 %v183
  %v765 = vpop.f32.mrf.mxu0
  %v766 = vadd.f32 %v128, %v765
  %767 = vmatmul.f32.gmra.mxu0 %v186
  %v768 = vpop.f32.mrf.mxu0
  %v769 = vadd.f32 %v133, %v768
  %770 = vmatmul.f32.gmra.mxu0 %v189
  %v771 = vpop.f32.mrf.mxu0
  %v772 = vadd.f32 %v138, %v771
  %773 = vmatmul.f32.gmra.mxu0 %v192
  %v774 = vpop.f32.mrf.mxu0
  %v775 = vadd.f32 %v143, %v774
  %776 = vmatmul.f32.gmra.mxu0 %v195
  %v777 = vpop.f32.mrf.mxu0
  %v778 = vadd.f32 %v148, %v777
  %779 = vmatmul.f32.gmra.mxu0 %v198
  %v780 = vpop.f32.mrf.mxu0
  %v781 = vadd.f32 %v153, %v780
  %782 = vmatmul.f32.gmra.mxu0 %v201
  %v783 = vpop.f32.mrf.mxu0
  %v784 = vadd.f32 %v158, %v783
  %785 = vmatmul.f32.gmra.mxu0 %v204
  %v786 = vpop.f32.mrf.mxu0
  %v787 = vadd.f32 %v163, %v786
  %788 = vmatmul.f32.gmra.mxu0 %v207
  %v789 = vpop.f32.mrf.mxu0
  %v790 = vadd.f32 %v168, %v789
  %791 = vmatmul.f32.gmra.mxu0 %v210
  %v792 = vpop.f32.mrf.mxu0
  %v793 = vadd.f32 %v173, %v792
  %794 = vdwg.mxu0
  %795 = vmatpush.msra.mxu0 0.0
  %796 = vmatpush.msra.mxu0 0.0
  %797 = vmatpush.msra.mxu0 0.0
  %798 = vmatpush.msra.mxu0 0.0
  %799 = vmatpush.msra.mxu0 0.0
  %800 = vmatpush.msra.mxu0 0.0
  %801 = vmatpush.msra.mxu0 0.0
  %802 = vmatpush.msra.mxu0 0.0
  %803 = vmatpush.msra.mxu0 0.0
  %804 = vmatpush.msra.mxu0 0.0
  %805 = vmatpush.msra.mxu0 0.0
  %806 = vmatpush.msra.mxu0 0.0
  %807 = vmatpush.msra.mxu0 %v72
  %808 = vmatpush.msra.mxu0 %v70
  %809 = vmatpush.msra.mxu0 %v68
  %810 = vmatpush.msra.mxu0 %v66
  %811 = vmatmul.f32.gmra.mxu0 %v177
  %v812 = vpop.f32.mrf.mxu0
  %v813 = vadd.f32 %v118, %v812
  %814 = vmatmul.f32.gmra.mxu0 %v180
  %v815 = vpop.f32.mrf.mxu0
  %v816 = vadd.f32 %v123, %v815
  %817 = vmatmul.f32.gmra.mxu0 %v183
  %v818 = vpop.f32.mrf.mxu0
  %v819 = vadd.f32 %v128, %v818
  %820 = vmatmul.f32.gmra.mxu0 %v186
  %v821 = vpop.f32.mrf.mxu0
  %v822 = vadd.f32 %v133, %v821
  %823 = vmatmul.f32.gmra.mxu0 %v189
  %v824 = vpop.f32.mrf.mxu0
  %v825 = vadd.f32 %v138, %v824
  %826 = vmatmul.f32.gmra.mxu0 %v192
  %v827 = vpop.f32.mrf.mxu0
  %v828 = vadd.f32 %v143, %v827
  %829 = vmatmul.f32.gmra.mxu0 %v195
  %v830 = vpop.f32.mrf.mxu0
  %v831 = vadd.f32 %v148, %v830
  %832 = vmatmul.f32.gmra.mxu0 %v198
  %v833 = vpop.f32.mrf.mxu0
  %v834 = vadd.f32 %v153, %v833
  %835 = vmatmul.f32.gmra.mxu0 %v201
  %v836 = vpop.f32.mrf.mxu0
  %v837 = vadd.f32 %v158, %v836
  %838 = vmatmul.f32.gmra.mxu0 %v204
  %v839 = vpop.f32.mrf.mxu0
  %v840 = vadd.f32 %v163, %v839
  %841 = vmatmul.f32.gmra.mxu0 %v207
  %v842 = vpop.f32.mrf.mxu0
  %v843 = vadd.f32 %v168, %v842
  %844 = vmatmul.f32.gmra.mxu0 %v210
  %v845 = vpop.f32.mrf.mxu0
  %v846 = vadd.f32 %v173, %v845
  %847 = vdwg.mxu0
  %848 = vmatpush.msra.mxu0 0.0
  %849 = vmatpush.msra.mxu0 0.0
  %850 = vmatpush.msra.mxu0 0.0
  %851 = vmatpush.msra.mxu0 0.0
  %852 = vmatpush.msra.mxu0 0.0
  %853 = vmatpush.msra.mxu0 0.0
  %854 = vmatpush.msra.mxu0 0.0
  %855 = vmatpush.msra.mxu0 0.0
  %856 = vmatpush.msra.mxu0 0.0
  %857 = vmatpush.msra.mxu0 0.0
  %858 = vmatpush.msra.mxu0 0.0
  %859 = vmatpush.msra.mxu0 0.0
  %860 = vmatpush.msra.mxu0 %v80
  %861 = vmatpush.msra.mxu0 %v78
  %862 = vmatpush.msra.mxu0 %v76
  %863 = vmatpush.msra.mxu0 %v74
  %864 = vmatmul.f32.gmra.mxu0 %v177
  %v865 = vpop.f32.mrf.mxu0
  %v866 = vadd.f32 %v118, %v865
  %867 = vmatmul.f32.gmra.mxu0 %v180
  %v868 = vpop.f32.mrf.mxu0
  %v869 = vadd.f32 %v123, %v868
  %870 = vmatmul.f32.gmra.mxu0 %v183
  %v871 = vpop.f32.mrf.mxu0
  %v872 = vadd.f32 %v128, %v871
  %873 = vmatmul.f32.gmra.mxu0 %v186
  %v874 = vpop.f32.mrf.mxu0
  %v875 = vadd.f32 %v133, %v874
  %876 = vmatmul.f32.gmra.mxu0 %v189
  %v877 = vpop.f32.mrf.mxu0
  %v878 = vadd.f32 %v138, %v877
  %879 = vmatmul.f32.gmra.mxu0 %v192
  %v880 = vpop.f32.mrf.mxu0
  %v881 = vadd.f32 %v143, %v880
  %882 = vmatmul.f32.gmra.mxu0 %v195
  %v883 = vpop.f32.mrf.mxu0
  %v884 = vadd.f32 %v148, %v883
  %885 = vmatmul.f32.gmra.mxu0 %v198
  %v886 = vpop.f32.mrf.mxu0
  %v887 = vadd.f32 %v153, %v886
  %888 = vmatmul.f32.gmra.mxu0 %v201
  %v889 = vpop.f32.mrf.mxu0
  %v890 = vadd.f32 %v158, %v889
  %891 = vmatmul.f32.gmra.mxu0 %v204
  %v892 = vpop.f32.mrf.mxu0
  %v893 = vadd.f32 %v163, %v892
  %894 = vmatmul.f32.gmra.mxu0 %v207
  %v895 = vpop.f32.mrf.mxu0
  %v896 = vadd.f32 %v168, %v895
  %897 = vmatmul.f32.gmra.mxu0 %v210
  %v898 = vpop.f32.mrf.mxu0
  %v899 = vadd.f32 %v173, %v898
  %900 = vdwg.mxu0
  %901 = vmatpush.msra.mxu0 0.0
  %902 = vmatpush.msra.mxu0 0.0
  %903 = vmatpush.msra.mxu0 0.0
  %904 = vmatpush.msra.mxu0 0.0
  %905 = vmatpush.msra.mxu0 0.0
  %906 = vmatpush.msra.mxu0 0.0
  %907 = vmatpush.msra.mxu0 0.0
  %908 = vmatpush.msra.mxu0 0.0
  %909 = vmatpush.msra.mxu0 0.0
  %910 = vmatpush.msra.mxu0 0.0
  %911 = vmatpush.msra.mxu0 0.0
  %912 = vmatpush.msra.mxu0 0.0
  %913 = vmatpush.msra.mxu0 %v81
  %914 = vmatpush.msra.mxu0 %v79
  %915 = vmatpush.msra.mxu0 %v77
  %916 = vmatpush.msra.mxu0 %v75
  %917 = vmatmul.f32.gmra.mxu0 %v177
  %v918 = vpop.f32.mrf.mxu0
  %v919 = vadd.f32 %v118, %v918
  %920 = vmatmul.f32.gmra.mxu0 %v180
  %v921 = vpop.f32.mrf.mxu0
  %v922 = vadd.f32 %v123, %v921
  %923 = vmatmul.f32.gmra.mxu0 %v183
  %v924 = vpop.f32.mrf.mxu0
  %v925 = vadd.f32 %v128, %v924
  %926 = vmatmul.f32.gmra.mxu0 %v186
  %v927 = vpop.f32.mrf.mxu0
  %v928 = vadd.f32 %v133, %v927
  %929 = vmatmul.f32.gmra.mxu0 %v189
  %v930 = vpop.f32.mrf.mxu0
  %v931 = vadd.f32 %v138, %v930
  %932 = vmatmul.f32.gmra.mxu0 %v192
  %v933 = vpop.f32.mrf.mxu0
  %v934 = vadd.f32 %v143, %v933
  %935 = vmatmul.f32.gmra.mxu0 %v195
  %v936 = vpop.f32.mrf.mxu0
  %v937 = vadd.f32 %v148, %v936
  %938 = vmatmul.f32.gmra.mxu0 %v198
  %v939 = vpop.f32.mrf.mxu0
  %v940 = vadd.f32 %v153, %v939
  %941 = vmatmul.f32.gmra.mxu0 %v201
  %v942 = vpop.f32.mrf.mxu0
  %v943 = vadd.f32 %v158, %v942
  %944 = vmatmul.f32.gmra.mxu0 %v204
  %v945 = vpop.f32.mrf.mxu0
  %v946 = vadd.f32 %v163, %v945
  %947 = vmatmul.f32.gmra.mxu0 %v207
  %v948 = vpop.f32.mrf.mxu0
  %v949 = vadd.f32 %v168, %v948
  %950 = vmatmul.f32.gmra.mxu0 %v210
  %v951 = vpop.f32.mrf.mxu0
  %v952 = vadd.f32 %v173, %v951
  %953 = vdwg.mxu0
  %954 = vmatpush.msra.mxu0 0.0
  %955 = vmatpush.msra.mxu0 0.0
  %956 = vmatpush.msra.mxu0 0.0
  %957 = vmatpush.msra.mxu0 0.0
  %958 = vmatpush.msra.mxu0 0.0
  %959 = vmatpush.msra.mxu0 0.0
  %960 = vmatpush.msra.mxu0 0.0
  %961 = vmatpush.msra.mxu0 0.0
  %962 = vmatpush.msra.mxu0 0.0
  %963 = vmatpush.msra.mxu0 0.0
  %964 = vmatpush.msra.mxu0 0.0
  %965 = vmatpush.msra.mxu0 0.0
  %966 = vmatpush.msra.mxu0 %v89
  %967 = vmatpush.msra.mxu0 %v87
  %968 = vmatpush.msra.mxu0 %v85
  %969 = vmatpush.msra.mxu0 %v83
  %970 = vmatmul.f32.gmra.mxu0 %v177
  %v971 = vpop.f32.mrf.mxu0
  %v972 = vadd.f32 %v118, %v971
  %973 = vmatmul.f32.gmra.mxu0 %v180
  %v974 = vpop.f32.mrf.mxu0
  %v975 = vadd.f32 %v123, %v974
  %976 = vmatmul.f32.gmra.mxu0 %v183
  %v977 = vpop.f32.mrf.mxu0
  %v978 = vadd.f32 %v128, %v977
  %979 = vmatmul.f32.gmra.mxu0 %v186
  %v980 = vpop.f32.mrf.mxu0
  %v981 = vadd.f32 %v133, %v980
  %982 = vmatmul.f32.gmra.mxu0 %v189
  %v983 = vpop.f32.mrf.mxu0
  %v984 = vadd.f32 %v138, %v983
  %985 = vmatmul.f32.gmra.mxu0 %v192
  %v986 = vpop.f32.mrf.mxu0
  %v987 = vadd.f32 %v143, %v986
  %988 = vmatmul.f32.gmra.mxu0 %v195
  %v989 = vpop.f32.mrf.mxu0
  %v990 = vadd.f32 %v148, %v989
  %991 = vmatmul.f32.gmra.mxu0 %v198
  %v992 = vpop.f32.mrf.mxu0
  %v993 = vadd.f32 %v153, %v992
  %994 = vmatmul.f32.gmra.mxu0 %v201
  %v995 = vpop.f32.mrf.mxu0
  %v996 = vadd.f32 %v158, %v995
  %997 = vmatmul.f32.gmra.mxu0 %v204
  %v998 = vpop.f32.mrf.mxu0
  %v999 = vadd.f32 %v163, %v998
  %1000 = vmatmul.f32.gmra.mxu0 %v207
  %v1001 = vpop.f32.mrf.mxu0
  %v1002 = vadd.f32 %v168, %v1001
  %1003 = vmatmul.f32.gmra.mxu0 %v210
  %v1004 = vpop.f32.mrf.mxu0
  %v1005 = vadd.f32 %v173, %v1004
  %1006 = vdwg.mxu0
  %1007 = vmatpush.msra.mxu0 0.0
  %1008 = vmatpush.msra.mxu0 0.0
  %1009 = vmatpush.msra.mxu0 0.0
  %1010 = vmatpush.msra.mxu0 0.0
  %1011 = vmatpush.msra.mxu0 0.0
  %1012 = vmatpush.msra.mxu0 0.0
  %1013 = vmatpush.msra.mxu0 0.0
  %1014 = vmatpush.msra.mxu0 0.0
  %1015 = vmatpush.msra.mxu0 0.0
  %1016 = vmatpush.msra.mxu0 0.0
  %1017 = vmatpush.msra.mxu0 0.0
  %1018 = vmatpush.msra.mxu0 0.0
  %1019 = vmatpush.msra.mxu0 %v90
  %1020 = vmatpush.msra.mxu0 %v88
  %1021 = vmatpush.msra.mxu0 %v86
  %1022 = vmatpush.msra.mxu0 %v84
  %1023 = vmatmul.f32.gmra.mxu0 %v177
  %v1024 = vpop.f32.mrf.mxu0
  %v1025 = vadd.f32 %v118, %v1024
  %1026 = vmatmul.f32.gmra.mxu0 %v180
  %v1027 = vpop.f32.mrf.mxu0
  %v1028 = vadd.f32 %v123, %v1027
  %1029 = vmatmul.f32.gmra.mxu0 %v183
  %v1030 = vpop.f32.mrf.mxu0
  %v1031 = vadd.f32 %v128, %v1030
  %1032 = vmatmul.f32.gmra.mxu0 %v186
  %v1033 = vpop.f32.mrf.mxu0
  %v1034 = vadd.f32 %v133, %v1033
  %1035 = vmatmul.f32.gmra.mxu0 %v189
  %v1036 = vpop.f32.mrf.mxu0
  %v1037 = vadd.f32 %v138, %v1036
  %1038 = vmatmul.f32.gmra.mxu0 %v192
  %v1039 = vpop.f32.mrf.mxu0
  %v1040 = vadd.f32 %v143, %v1039
  %1041 = vmatmul.f32.gmra.mxu0 %v195
  %v1042 = vpop.f32.mrf.mxu0
  %v1043 = vadd.f32 %v148, %v1042
  %1044 = vmatmul.f32.gmra.mxu0 %v198
  %v1045 = vpop.f32.mrf.mxu0
  %v1046 = vadd.f32 %v153, %v1045
  %1047 = vmatmul.f32.gmra.mxu0 %v201
  %v1048 = vpop.f32.mrf.mxu0
  %v1049 = vadd.f32 %v158, %v1048
  %1050 = vmatmul.f32.gmra.mxu0 %v204
  %v1051 = vpop.f32.mrf.mxu0
  %v1052 = vadd.f32 %v163, %v1051
  %1053 = vmatmul.f32.gmra.mxu0 %v207
  %v1054 = vpop.f32.mrf.mxu0
  %v1055 = vadd.f32 %v168, %v1054
  %1056 = vmatmul.f32.gmra.mxu0 %v210
  %v1057 = vpop.f32.mrf.mxu0
  %v1058 = vadd.f32 %v173, %v1057
  %1059 = vdwg.mxu0
  %v1060 = vmul.f32 %v230, %v242
  %v1061 = vmul.f32 %v283, %v295
  %v1062 = vmul.f32 %v336, %v242
  %v1063 = vmul.f32 %v389, %v295
  %v1064 = vmul.f32 %v442, %v242
  %v1065 = vmul.f32 %v495, %v295
  %v1066 = vmul.f32 %v548, %v242
  %v1067 = vmul.f32 %v601, %v295
  %v1068 = vmul.f32 %v654, %v242
  %v1069 = vmul.f32 %v707, %v295
  %v1070 = vmul.f32 %v760, %v242
  %v1071 = vmul.f32 %v813, %v295
  %v1072 = vmul.f32 %v866, %v242
  %v1073 = vmul.f32 %v919, %v295
  %v1074 = vmul.f32 %v972, %v242
  %v1075 = vmul.f32 %v1025, %v295
  %v1076 = vrot.slane %v1060, 4
  %v1077 = vadd.f32 %v1060, %v1076
  %v1078 = vrot.slane %v1077, 2
  %v1079 = vadd.f32 %v1077, %v1078
  %v1080 = vrot.slane %v1079, 1
  %v1081 = vadd.f32 %v1079, %v1080
  %v1082 = vrot.slane %v1061, 4
  %v1083 = vadd.f32 %v1061, %v1082
  %v1084 = vrot.slane %v1083, 2
  %v1085 = vadd.f32 %v1083, %v1084
  %v1086 = vrot.slane %v1085, 1
  %v1087 = vadd.f32 %v1085, %v1086
  %v1088 = vrot.slane %v1062, 4
  %v1089 = vadd.f32 %v1062, %v1088
  %v1090 = vrot.slane %v1089, 2
  %v1091 = vadd.f32 %v1089, %v1090
  %v1092 = vrot.slane %v1091, 1
  %v1093 = vadd.f32 %v1091, %v1092
  %v1094 = vrot.slane %v1063, 4
  %v1095 = vadd.f32 %v1063, %v1094
  %v1096 = vrot.slane %v1095, 2
  %v1097 = vadd.f32 %v1095, %v1096
  %v1098 = vrot.slane %v1097, 1
  %v1099 = vadd.f32 %v1097, %v1098
  %v1100 = vrot.slane %v1064, 4
  %v1101 = vadd.f32 %v1064, %v1100
  %v1102 = vrot.slane %v1101, 2
  %v1103 = vadd.f32 %v1101, %v1102
  %v1104 = vrot.slane %v1103, 1
  %v1105 = vadd.f32 %v1103, %v1104
  %v1106 = vrot.slane %v1065, 4
  %v1107 = vadd.f32 %v1065, %v1106
  %v1108 = vrot.slane %v1107, 2
  %v1109 = vadd.f32 %v1107, %v1108
  %v1110 = vrot.slane %v1109, 1
  %v1111 = vadd.f32 %v1109, %v1110
  %v1112 = vrot.slane %v1066, 4
  %v1113 = vadd.f32 %v1066, %v1112
  %v1114 = vrot.slane %v1113, 2
  %v1115 = vadd.f32 %v1113, %v1114
  %v1116 = vrot.slane %v1115, 1
  %v1117 = vadd.f32 %v1115, %v1116
  %v1118 = vrot.slane %v1067, 4
  %v1119 = vadd.f32 %v1067, %v1118
  %v1120 = vrot.slane %v1119, 2
  %v1121 = vadd.f32 %v1119, %v1120
  %v1122 = vrot.slane %v1121, 1
  %v1123 = vadd.f32 %v1121, %v1122
  %v1124 = vrot.slane %v1068, 4
  %v1125 = vadd.f32 %v1068, %v1124
  %v1126 = vrot.slane %v1125, 2
  %v1127 = vadd.f32 %v1125, %v1126
  %v1128 = vrot.slane %v1127, 1
  %v1129 = vadd.f32 %v1127, %v1128
  %v1130 = vrot.slane %v1069, 4
  %v1131 = vadd.f32 %v1069, %v1130
  %v1132 = vrot.slane %v1131, 2
  %v1133 = vadd.f32 %v1131, %v1132
  %v1134 = vrot.slane %v1133, 1
  %v1135 = vadd.f32 %v1133, %v1134
  %v1136 = vrot.slane %v1070, 4
  %v1137 = vadd.f32 %v1070, %v1136
  %v1138 = vrot.slane %v1137, 2
  %v1139 = vadd.f32 %v1137, %v1138
  %v1140 = vrot.slane %v1139, 1
  %v1141 = vadd.f32 %v1139, %v1140
  %v1142 = vrot.slane %v1071, 4
  %v1143 = vadd.f32 %v1071, %v1142
  %v1144 = vrot.slane %v1143, 2
  %v1145 = vadd.f32 %v1143, %v1144
  %v1146 = vrot.slane %v1145, 1
  %v1147 = vadd.f32 %v1145, %v1146
  %v1148 = vrot.slane %v1072, 4
  %v1149 = vadd.f32 %v1072, %v1148
  %v1150 = vrot.slane %v1149, 2
  %v1151 = vadd.f32 %v1149, %v1150
  %v1152 = vrot.slane %v1151, 1
  %v1153 = vadd.f32 %v1151, %v1152
  %v1154 = vrot.slane %v1073, 4
  %v1155 = vadd.f32 %v1073, %v1154
  %v1156 = vrot.slane %v1155, 2
  %v1157 = vadd.f32 %v1155, %v1156
  %v1158 = vrot.slane %v1157, 1
  %v1159 = vadd.f32 %v1157, %v1158
  %v1160 = vrot.slane %v1074, 4
  %v1161 = vadd.f32 %v1074, %v1160
  %v1162 = vrot.slane %v1161, 2
  %v1163 = vadd.f32 %v1161, %v1162
  %v1164 = vrot.slane %v1163, 1
  %v1165 = vadd.f32 %v1163, %v1164
  %v1166 = vrot.slane %v1075, 4
  %v1167 = vadd.f32 %v1075, %v1166
  %v1168 = vrot.slane %v1167, 2
  %v1169 = vadd.f32 %v1167, %v1168
  %v1170 = vrot.slane %v1169, 1
  %v1171 = vadd.f32 %v1169, %v1170
  %v1172 = vmul.f32 %v230, %v348
  %v1173 = vmul.f32 %v283, %v401
  %v1174 = vmul.f32 %v336, %v348
  %v1175 = vmul.f32 %v389, %v401
  %v1176 = vmul.f32 %v442, %v348
  %v1177 = vmul.f32 %v495, %v401
  %v1178 = vmul.f32 %v548, %v348
  %v1179 = vmul.f32 %v601, %v401
  %v1180 = vmul.f32 %v654, %v348
  %v1181 = vmul.f32 %v707, %v401
  %v1182 = vmul.f32 %v760, %v348
  %v1183 = vmul.f32 %v813, %v401
  %v1184 = vmul.f32 %v866, %v348
  %v1185 = vmul.f32 %v919, %v401
  %v1186 = vmul.f32 %v972, %v348
  %v1187 = vmul.f32 %v1025, %v401
  %v1188 = vrot.slane %v1172, 4
  %v1189 = vadd.f32 %v1172, %v1188
  %v1190 = vrot.slane %v1189, 2
  %v1191 = vadd.f32 %v1189, %v1190
  %v1192 = vrot.slane %v1191, 1
  %v1193 = vadd.f32 %v1191, %v1192
  %v1194 = vrot.slane %v1173, 4
  %v1195 = vadd.f32 %v1173, %v1194
  %v1196 = vrot.slane %v1195, 2
  %v1197 = vadd.f32 %v1195, %v1196
  %v1198 = vrot.slane %v1197, 1
  %v1199 = vadd.f32 %v1197, %v1198
  %v1200 = vrot.slane %v1174, 4
  %v1201 = vadd.f32 %v1174, %v1200
  %v1202 = vrot.slane %v1201, 2
  %v1203 = vadd.f32 %v1201, %v1202
  %v1204 = vrot.slane %v1203, 1
  %v1205 = vadd.f32 %v1203, %v1204
  %v1206 = vrot.slane %v1175, 4
  %v1207 = vadd.f32 %v1175, %v1206
  %v1208 = vrot.slane %v1207, 2
  %v1209 = vadd.f32 %v1207, %v1208
  %v1210 = vrot.slane %v1209, 1
  %v1211 = vadd.f32 %v1209, %v1210
  %v1212 = vrot.slane %v1176, 4
  %v1213 = vadd.f32 %v1176, %v1212
  %v1214 = vrot.slane %v1213, 2
  %v1215 = vadd.f32 %v1213, %v1214
  %v1216 = vrot.slane %v1215, 1
  %v1217 = vadd.f32 %v1215, %v1216
  %v1218 = vrot.slane %v1177, 4
  %v1219 = vadd.f32 %v1177, %v1218
  %v1220 = vrot.slane %v1219, 2
  %v1221 = vadd.f32 %v1219, %v1220
  %v1222 = vrot.slane %v1221, 1
  %v1223 = vadd.f32 %v1221, %v1222
  %v1224 = vrot.slane %v1178, 4
  %v1225 = vadd.f32 %v1178, %v1224
  %v1226 = vrot.slane %v1225, 2
  %v1227 = vadd.f32 %v1225, %v1226
  %v1228 = vrot.slane %v1227, 1
  %v1229 = vadd.f32 %v1227, %v1228
  %v1230 = vrot.slane %v1179, 4
  %v1231 = vadd.f32 %v1179, %v1230
  %v1232 = vrot.slane %v1231, 2
  %v1233 = vadd.f32 %v1231, %v1232
  %v1234 = vrot.slane %v1233, 1
  %v1235 = vadd.f32 %v1233, %v1234
  %v1236 = vrot.slane %v1180, 4
  %v1237 = vadd.f32 %v1180, %v1236
  %v1238 = vrot.slane %v1237, 2
  %v1239 = vadd.f32 %v1237, %v1238
  %v1240 = vrot.slane %v1239, 1
  %v1241 = vadd.f32 %v1239, %v1240
  %v1242 = vrot.slane %v1181, 4
  %v1243 = vadd.f32 %v1181, %v1242
  %v1244 = vrot.slane %v1243, 2
  %v1245 = vadd.f32 %v1243, %v1244
  %v1246 = vrot.slane %v1245, 1
  %v1247 = vadd.f32 %v1245, %v1246
  %v1248 = vrot.slane %v1182, 4
  %v1249 = vadd.f32 %v1182, %v1248
  %v1250 = vrot.slane %v1249, 2
  %v1251 = vadd.f32 %v1249, %v1250
  %v1252 = vrot.slane %v1251, 1
  %v1253 = vadd.f32 %v1251, %v1252
  %v1254 = vrot.slane %v1183, 4
  %v1255 = vadd.f32 %v1183, %v1254
  %v1256 = vrot.slane %v1255, 2
  %v1257 = vadd.f32 %v1255, %v1256
  %v1258 = vrot.slane %v1257, 1
  %v1259 = vadd.f32 %v1257, %v1258
  %v1260 = vrot.slane %v1184, 4
  %v1261 = vadd.f32 %v1184, %v1260
  %v1262 = vrot.slane %v1261, 2
  %v1263 = vadd.f32 %v1261, %v1262
  %v1264 = vrot.slane %v1263, 1
  %v1265 = vadd.f32 %v1263, %v1264
  %v1266 = vrot.slane %v1185, 4
  %v1267 = vadd.f32 %v1185, %v1266
  %v1268 = vrot.slane %v1267, 2
  %v1269 = vadd.f32 %v1267, %v1268
  %v1270 = vrot.slane %v1269, 1
  %v1271 = vadd.f32 %v1269, %v1270
  %v1272 = vrot.slane %v1186, 4
  %v1273 = vadd.f32 %v1186, %v1272
  %v1274 = vrot.slane %v1273, 2
  %v1275 = vadd.f32 %v1273, %v1274
  %v1276 = vrot.slane %v1275, 1
  %v1277 = vadd.f32 %v1275, %v1276
  %v1278 = vrot.slane %v1187, 4
  %v1279 = vadd.f32 %v1187, %v1278
  %v1280 = vrot.slane %v1279, 2
  %v1281 = vadd.f32 %v1279, %v1280
  %v1282 = vrot.slane %v1281, 1
  %v1283 = vadd.f32 %v1281, %v1282
  %v1284 = vmul.f32 %v230, %v454
  %v1285 = vmul.f32 %v283, %v507
  %v1286 = vmul.f32 %v336, %v454
  %v1287 = vmul.f32 %v389, %v507
  %v1288 = vmul.f32 %v442, %v454
  %v1289 = vmul.f32 %v495, %v507
  %v1290 = vmul.f32 %v548, %v454
  %v1291 = vmul.f32 %v601, %v507
  %v1292 = vmul.f32 %v654, %v454
  %v1293 = vmul.f32 %v707, %v507
  %v1294 = vmul.f32 %v760, %v454
  %v1295 = vmul.f32 %v813, %v507
  %v1296 = vmul.f32 %v866, %v454
  %v1297 = vmul.f32 %v919, %v507
  %v1298 = vmul.f32 %v972, %v454
  %v1299 = vmul.f32 %v1025, %v507
  %v1300 = vrot.slane %v1284, 4
  %v1301 = vadd.f32 %v1284, %v1300
  %v1302 = vrot.slane %v1301, 2
  %v1303 = vadd.f32 %v1301, %v1302
  %v1304 = vrot.slane %v1303, 1
  %v1305 = vadd.f32 %v1303, %v1304
  %v1306 = vrot.slane %v1285, 4
  %v1307 = vadd.f32 %v1285, %v1306
  %v1308 = vrot.slane %v1307, 2
  %v1309 = vadd.f32 %v1307, %v1308
  %v1310 = vrot.slane %v1309, 1
  %v1311 = vadd.f32 %v1309, %v1310
  %v1312 = vrot.slane %v1286, 4
  %v1313 = vadd.f32 %v1286, %v1312
  %v1314 = vrot.slane %v1313, 2
  %v1315 = vadd.f32 %v1313, %v1314
  %v1316 = vrot.slane %v1315, 1
  %v1317 = vadd.f32 %v1315, %v1316
  %v1318 = vrot.slane %v1287, 4
  %v1319 = vadd.f32 %v1287, %v1318
  %v1320 = vrot.slane %v1319, 2
  %v1321 = vadd.f32 %v1319, %v1320
  %v1322 = vrot.slane %v1321, 1
  %v1323 = vadd.f32 %v1321, %v1322
  %v1324 = vrot.slane %v1288, 4
  %v1325 = vadd.f32 %v1288, %v1324
  %v1326 = vrot.slane %v1325, 2
  %v1327 = vadd.f32 %v1325, %v1326
  %v1328 = vrot.slane %v1327, 1
  %v1329 = vadd.f32 %v1327, %v1328
  %v1330 = vrot.slane %v1289, 4
  %v1331 = vadd.f32 %v1289, %v1330
  %v1332 = vrot.slane %v1331, 2
  %v1333 = vadd.f32 %v1331, %v1332
  %v1334 = vrot.slane %v1333, 1
  %v1335 = vadd.f32 %v1333, %v1334
  %v1336 = vrot.slane %v1290, 4
  %v1337 = vadd.f32 %v1290, %v1336
  %v1338 = vrot.slane %v1337, 2
  %v1339 = vadd.f32 %v1337, %v1338
  %v1340 = vrot.slane %v1339, 1
  %v1341 = vadd.f32 %v1339, %v1340
  %v1342 = vrot.slane %v1291, 4
  %v1343 = vadd.f32 %v1291, %v1342
  %v1344 = vrot.slane %v1343, 2
  %v1345 = vadd.f32 %v1343, %v1344
  %v1346 = vrot.slane %v1345, 1
  %v1347 = vadd.f32 %v1345, %v1346
  %v1348 = vrot.slane %v1292, 4
  %v1349 = vadd.f32 %v1292, %v1348
  %v1350 = vrot.slane %v1349, 2
  %v1351 = vadd.f32 %v1349, %v1350
  %v1352 = vrot.slane %v1351, 1
  %v1353 = vadd.f32 %v1351, %v1352
  %v1354 = vrot.slane %v1293, 4
  %v1355 = vadd.f32 %v1293, %v1354
  %v1356 = vrot.slane %v1355, 2
  %v1357 = vadd.f32 %v1355, %v1356
  %v1358 = vrot.slane %v1357, 1
  %v1359 = vadd.f32 %v1357, %v1358
  %v1360 = vrot.slane %v1294, 4
  %v1361 = vadd.f32 %v1294, %v1360
  %v1362 = vrot.slane %v1361, 2
  %v1363 = vadd.f32 %v1361, %v1362
  %v1364 = vrot.slane %v1363, 1
  %v1365 = vadd.f32 %v1363, %v1364
  %v1366 = vrot.slane %v1295, 4
  %v1367 = vadd.f32 %v1295, %v1366
  %v1368 = vrot.slane %v1367, 2
  %v1369 = vadd.f32 %v1367, %v1368
  %v1370 = vrot.slane %v1369, 1
  %v1371 = vadd.f32 %v1369, %v1370
  %v1372 = vrot.slane %v1296, 4
  %v1373 = vadd.f32 %v1296, %v1372
  %v1374 = vrot.slane %v1373, 2
  %v1375 = vadd.f32 %v1373, %v1374
  %v1376 = vrot.slane %v1375, 1
  %v1377 = vadd.f32 %v1375, %v1376
  %v1378 = vrot.slane %v1297, 4
  %v1379 = vadd.f32 %v1297, %v1378
  %v1380 = vrot.slane %v1379, 2
  %v1381 = vadd.f32 %v1379, %v1380
  %v1382 = vrot.slane %v1381, 1
  %v1383 = vadd.f32 %v1381, %v1382
  %v1384 = vrot.slane %v1298, 4
  %v1385 = vadd.f32 %v1298, %v1384
  %v1386 = vrot.slane %v1385, 2
  %v1387 = vadd.f32 %v1385, %v1386
  %v1388 = vrot.slane %v1387, 1
  %v1389 = vadd.f32 %v1387, %v1388
  %v1390 = vrot.slane %v1299, 4
  %v1391 = vadd.f32 %v1299, %v1390
  %v1392 = vrot.slane %v1391, 2
  %v1393 = vadd.f32 %v1391, %v1392
  %v1394 = vrot.slane %v1393, 1
  %v1395 = vadd.f32 %v1393, %v1394
  %v1396 = vmul.f32 %v230, %v560
  %v1397 = vmul.f32 %v283, %v613
  %v1398 = vmul.f32 %v336, %v560
  %v1399 = vmul.f32 %v389, %v613
  %v1400 = vmul.f32 %v442, %v560
  %v1401 = vmul.f32 %v495, %v613
  %v1402 = vmul.f32 %v548, %v560
  %v1403 = vmul.f32 %v601, %v613
  %v1404 = vmul.f32 %v654, %v560
  %v1405 = vmul.f32 %v707, %v613
  %v1406 = vmul.f32 %v760, %v560
  %v1407 = vmul.f32 %v813, %v613
  %v1408 = vmul.f32 %v866, %v560
  %v1409 = vmul.f32 %v919, %v613
  %v1410 = vmul.f32 %v972, %v560
  %v1411 = vmul.f32 %v1025, %v613
  %v1412 = vrot.slane %v1396, 4
  %v1413 = vadd.f32 %v1396, %v1412
  %v1414 = vrot.slane %v1413, 2
  %v1415 = vadd.f32 %v1413, %v1414
  %v1416 = vrot.slane %v1415, 1
  %v1417 = vadd.f32 %v1415, %v1416
  %v1418 = vrot.slane %v1397, 4
  %v1419 = vadd.f32 %v1397, %v1418
  %v1420 = vrot.slane %v1419, 2
  %v1421 = vadd.f32 %v1419, %v1420
  %v1422 = vrot.slane %v1421, 1
  %v1423 = vadd.f32 %v1421, %v1422
  %v1424 = vrot.slane %v1398, 4
  %v1425 = vadd.f32 %v1398, %v1424
  %v1426 = vrot.slane %v1425, 2
  %v1427 = vadd.f32 %v1425, %v1426
  %v1428 = vrot.slane %v1427, 1
  %v1429 = vadd.f32 %v1427, %v1428
  %v1430 = vrot.slane %v1399, 4
  %v1431 = vadd.f32 %v1399, %v1430
  %v1432 = vrot.slane %v1431, 2
  %v1433 = vadd.f32 %v1431, %v1432
  %v1434 = vrot.slane %v1433, 1
  %v1435 = vadd.f32 %v1433, %v1434
  %v1436 = vrot.slane %v1400, 4
  %v1437 = vadd.f32 %v1400, %v1436
  %v1438 = vrot.slane %v1437, 2
  %v1439 = vadd.f32 %v1437, %v1438
  %v1440 = vrot.slane %v1439, 1
  %v1441 = vadd.f32 %v1439, %v1440
  %v1442 = vrot.slane %v1401, 4
  %v1443 = vadd.f32 %v1401, %v1442
  %v1444 = vrot.slane %v1443, 2
  %v1445 = vadd.f32 %v1443, %v1444
  %v1446 = vrot.slane %v1445, 1
  %v1447 = vadd.f32 %v1445, %v1446
  %v1448 = vrot.slane %v1402, 4
  %v1449 = vadd.f32 %v1402, %v1448
  %v1450 = vrot.slane %v1449, 2
  %v1451 = vadd.f32 %v1449, %v1450
  %v1452 = vrot.slane %v1451, 1
  %v1453 = vadd.f32 %v1451, %v1452
  %v1454 = vrot.slane %v1403, 4
  %v1455 = vadd.f32 %v1403, %v1454
  %v1456 = vrot.slane %v1455, 2
  %v1457 = vadd.f32 %v1455, %v1456
  %v1458 = vrot.slane %v1457, 1
  %v1459 = vadd.f32 %v1457, %v1458
  %v1460 = vrot.slane %v1404, 4
  %v1461 = vadd.f32 %v1404, %v1460
  %v1462 = vrot.slane %v1461, 2
  %v1463 = vadd.f32 %v1461, %v1462
  %v1464 = vrot.slane %v1463, 1
  %v1465 = vadd.f32 %v1463, %v1464
  %v1466 = vrot.slane %v1405, 4
  %v1467 = vadd.f32 %v1405, %v1466
  %v1468 = vrot.slane %v1467, 2
  %v1469 = vadd.f32 %v1467, %v1468
  %v1470 = vrot.slane %v1469, 1
  %v1471 = vadd.f32 %v1469, %v1470
  %v1472 = vrot.slane %v1406, 4
  %v1473 = vadd.f32 %v1406, %v1472
  %v1474 = vrot.slane %v1473, 2
  %v1475 = vadd.f32 %v1473, %v1474
  %v1476 = vrot.slane %v1475, 1
  %v1477 = vadd.f32 %v1475, %v1476
  %v1478 = vrot.slane %v1407, 4
  %v1479 = vadd.f32 %v1407, %v1478
  %v1480 = vrot.slane %v1479, 2
  %v1481 = vadd.f32 %v1479, %v1480
  %v1482 = vrot.slane %v1481, 1
  %v1483 = vadd.f32 %v1481, %v1482
  %v1484 = vrot.slane %v1408, 4
  %v1485 = vadd.f32 %v1408, %v1484
  %v1486 = vrot.slane %v1485, 2
  %v1487 = vadd.f32 %v1485, %v1486
  %v1488 = vrot.slane %v1487, 1
  %v1489 = vadd.f32 %v1487, %v1488
  %v1490 = vrot.slane %v1409, 4
  %v1491 = vadd.f32 %v1409, %v1490
  %v1492 = vrot.slane %v1491, 2
  %v1493 = vadd.f32 %v1491, %v1492
  %v1494 = vrot.slane %v1493, 1
  %v1495 = vadd.f32 %v1493, %v1494
  %v1496 = vrot.slane %v1410, 4
  %v1497 = vadd.f32 %v1410, %v1496
  %v1498 = vrot.slane %v1497, 2
  %v1499 = vadd.f32 %v1497, %v1498
  %v1500 = vrot.slane %v1499, 1
  %v1501 = vadd.f32 %v1499, %v1500
  %v1502 = vrot.slane %v1411, 4
  %v1503 = vadd.f32 %v1411, %v1502
  %v1504 = vrot.slane %v1503, 2
  %v1505 = vadd.f32 %v1503, %v1504
  %v1506 = vrot.slane %v1505, 1
  %v1507 = vadd.f32 %v1505, %v1506
  %v1508 = vmul.f32 %v230, %v666
  %v1509 = vmul.f32 %v283, %v719
  %v1510 = vmul.f32 %v336, %v666
  %v1511 = vmul.f32 %v389, %v719
  %v1512 = vmul.f32 %v442, %v666
  %v1513 = vmul.f32 %v495, %v719
  %v1514 = vmul.f32 %v548, %v666
  %v1515 = vmul.f32 %v601, %v719
  %v1516 = vmul.f32 %v654, %v666
  %v1517 = vmul.f32 %v707, %v719
  %v1518 = vmul.f32 %v760, %v666
  %v1519 = vmul.f32 %v813, %v719
  %v1520 = vmul.f32 %v866, %v666
  %v1521 = vmul.f32 %v919, %v719
  %v1522 = vmul.f32 %v972, %v666
  %v1523 = vmul.f32 %v1025, %v719
  %v1524 = vrot.slane %v1508, 4
  %v1525 = vadd.f32 %v1508, %v1524
  %v1526 = vrot.slane %v1525, 2
  %v1527 = vadd.f32 %v1525, %v1526
  %v1528 = vrot.slane %v1527, 1
  %v1529 = vadd.f32 %v1527, %v1528
  %v1530 = vrot.slane %v1509, 4
  %v1531 = vadd.f32 %v1509, %v1530
  %v1532 = vrot.slane %v1531, 2
  %v1533 = vadd.f32 %v1531, %v1532
  %v1534 = vrot.slane %v1533, 1
  %v1535 = vadd.f32 %v1533, %v1534
  %v1536 = vrot.slane %v1510, 4
  %v1537 = vadd.f32 %v1510, %v1536
  %v1538 = vrot.slane %v1537, 2
  %v1539 = vadd.f32 %v1537, %v1538
  %v1540 = vrot.slane %v1539, 1
  %v1541 = vadd.f32 %v1539, %v1540
  %v1542 = vrot.slane %v1511, 4
  %v1543 = vadd.f32 %v1511, %v1542
  %v1544 = vrot.slane %v1543, 2
  %v1545 = vadd.f32 %v1543, %v1544
  %v1546 = vrot.slane %v1545, 1
  %v1547 = vadd.f32 %v1545, %v1546
  %v1548 = vrot.slane %v1512, 4
  %v1549 = vadd.f32 %v1512, %v1548
  %v1550 = vrot.slane %v1549, 2
  %v1551 = vadd.f32 %v1549, %v1550
  %v1552 = vrot.slane %v1551, 1
  %v1553 = vadd.f32 %v1551, %v1552
  %v1554 = vrot.slane %v1513, 4
  %v1555 = vadd.f32 %v1513, %v1554
  %v1556 = vrot.slane %v1555, 2
  %v1557 = vadd.f32 %v1555, %v1556
  %v1558 = vrot.slane %v1557, 1
  %v1559 = vadd.f32 %v1557, %v1558
  %v1560 = vrot.slane %v1514, 4
  %v1561 = vadd.f32 %v1514, %v1560
  %v1562 = vrot.slane %v1561, 2
  %v1563 = vadd.f32 %v1561, %v1562
  %v1564 = vrot.slane %v1563, 1
  %v1565 = vadd.f32 %v1563, %v1564
  %v1566 = vrot.slane %v1515, 4
  %v1567 = vadd.f32 %v1515, %v1566
  %v1568 = vrot.slane %v1567, 2
  %v1569 = vadd.f32 %v1567, %v1568
  %v1570 = vrot.slane %v1569, 1
  %v1571 = vadd.f32 %v1569, %v1570
  %v1572 = vrot.slane %v1516, 4
  %v1573 = vadd.f32 %v1516, %v1572
  %v1574 = vrot.slane %v1573, 2
  %v1575 = vadd.f32 %v1573, %v1574
  %v1576 = vrot.slane %v1575, 1
  %v1577 = vadd.f32 %v1575, %v1576
  %v1578 = vrot.slane %v1517, 4
  %v1579 = vadd.f32 %v1517, %v1578
  %v1580 = vrot.slane %v1579, 2
  %v1581 = vadd.f32 %v1579, %v1580
  %v1582 = vrot.slane %v1581, 1
  %v1583 = vadd.f32 %v1581, %v1582
  %v1584 = vrot.slane %v1518, 4
  %v1585 = vadd.f32 %v1518, %v1584
  %v1586 = vrot.slane %v1585, 2
  %v1587 = vadd.f32 %v1585, %v1586
  %v1588 = vrot.slane %v1587, 1
  %v1589 = vadd.f32 %v1587, %v1588
  %v1590 = vrot.slane %v1519, 4
  %v1591 = vadd.f32 %v1519, %v1590
  %v1592 = vrot.slane %v1591, 2
  %v1593 = vadd.f32 %v1591, %v1592
  %v1594 = vrot.slane %v1593, 1
  %v1595 = vadd.f32 %v1593, %v1594
  %v1596 = vrot.slane %v1520, 4
  %v1597 = vadd.f32 %v1520, %v1596
  %v1598 = vrot.slane %v1597, 2
  %v1599 = vadd.f32 %v1597, %v1598
  %v1600 = vrot.slane %v1599, 1
  %v1601 = vadd.f32 %v1599, %v1600
  %v1602 = vrot.slane %v1521, 4
  %v1603 = vadd.f32 %v1521, %v1602
  %v1604 = vrot.slane %v1603, 2
  %v1605 = vadd.f32 %v1603, %v1604
  %v1606 = vrot.slane %v1605, 1
  %v1607 = vadd.f32 %v1605, %v1606
  %v1608 = vrot.slane %v1522, 4
  %v1609 = vadd.f32 %v1522, %v1608
  %v1610 = vrot.slane %v1609, 2
  %v1611 = vadd.f32 %v1609, %v1610
  %v1612 = vrot.slane %v1611, 1
  %v1613 = vadd.f32 %v1611, %v1612
  %v1614 = vrot.slane %v1523, 4
  %v1615 = vadd.f32 %v1523, %v1614
  %v1616 = vrot.slane %v1615, 2
  %v1617 = vadd.f32 %v1615, %v1616
  %v1618 = vrot.slane %v1617, 1
  %v1619 = vadd.f32 %v1617, %v1618
  %v1620 = vmul.f32 %v230, %v772
  %v1621 = vmul.f32 %v283, %v825
  %v1622 = vmul.f32 %v336, %v772
  %v1623 = vmul.f32 %v389, %v825
  %v1624 = vmul.f32 %v442, %v772
  %v1625 = vmul.f32 %v495, %v825
  %v1626 = vmul.f32 %v548, %v772
  %v1627 = vmul.f32 %v601, %v825
  %v1628 = vmul.f32 %v654, %v772
  %v1629 = vmul.f32 %v707, %v825
  %v1630 = vmul.f32 %v760, %v772
  %v1631 = vmul.f32 %v813, %v825
  %v1632 = vmul.f32 %v866, %v772
  %v1633 = vmul.f32 %v919, %v825
  %v1634 = vmul.f32 %v972, %v772
  %v1635 = vmul.f32 %v1025, %v825
  %v1636 = vrot.slane %v1620, 4
  %v1637 = vadd.f32 %v1620, %v1636
  %v1638 = vrot.slane %v1637, 2
  %v1639 = vadd.f32 %v1637, %v1638
  %v1640 = vrot.slane %v1639, 1
  %v1641 = vadd.f32 %v1639, %v1640
  %v1642 = vrot.slane %v1621, 4
  %v1643 = vadd.f32 %v1621, %v1642
  %v1644 = vrot.slane %v1643, 2
  %v1645 = vadd.f32 %v1643, %v1644
  %v1646 = vrot.slane %v1645, 1
  %v1647 = vadd.f32 %v1645, %v1646
  %v1648 = vrot.slane %v1622, 4
  %v1649 = vadd.f32 %v1622, %v1648
  %v1650 = vrot.slane %v1649, 2
  %v1651 = vadd.f32 %v1649, %v1650
  %v1652 = vrot.slane %v1651, 1
  %v1653 = vadd.f32 %v1651, %v1652
  %v1654 = vrot.slane %v1623, 4
  %v1655 = vadd.f32 %v1623, %v1654
  %v1656 = vrot.slane %v1655, 2
  %v1657 = vadd.f32 %v1655, %v1656
  %v1658 = vrot.slane %v1657, 1
  %v1659 = vadd.f32 %v1657, %v1658
  %v1660 = vrot.slane %v1624, 4
  %v1661 = vadd.f32 %v1624, %v1660
  %v1662 = vrot.slane %v1661, 2
  %v1663 = vadd.f32 %v1661, %v1662
  %v1664 = vrot.slane %v1663, 1
  %v1665 = vadd.f32 %v1663, %v1664
  %v1666 = vrot.slane %v1625, 4
  %v1667 = vadd.f32 %v1625, %v1666
  %v1668 = vrot.slane %v1667, 2
  %v1669 = vadd.f32 %v1667, %v1668
  %v1670 = vrot.slane %v1669, 1
  %v1671 = vadd.f32 %v1669, %v1670
  %v1672 = vrot.slane %v1626, 4
  %v1673 = vadd.f32 %v1626, %v1672
  %v1674 = vrot.slane %v1673, 2
  %v1675 = vadd.f32 %v1673, %v1674
  %v1676 = vrot.slane %v1675, 1
  %v1677 = vadd.f32 %v1675, %v1676
  %v1678 = vrot.slane %v1627, 4
  %v1679 = vadd.f32 %v1627, %v1678
  %v1680 = vrot.slane %v1679, 2
  %v1681 = vadd.f32 %v1679, %v1680
  %v1682 = vrot.slane %v1681, 1
  %v1683 = vadd.f32 %v1681, %v1682
  %v1684 = vrot.slane %v1628, 4
  %v1685 = vadd.f32 %v1628, %v1684
  %v1686 = vrot.slane %v1685, 2
  %v1687 = vadd.f32 %v1685, %v1686
  %v1688 = vrot.slane %v1687, 1
  %v1689 = vadd.f32 %v1687, %v1688
  %v1690 = vrot.slane %v1629, 4
  %v1691 = vadd.f32 %v1629, %v1690
  %v1692 = vrot.slane %v1691, 2
  %v1693 = vadd.f32 %v1691, %v1692
  %v1694 = vrot.slane %v1693, 1
  %v1695 = vadd.f32 %v1693, %v1694
  %v1696 = vrot.slane %v1630, 4
  %v1697 = vadd.f32 %v1630, %v1696
  %v1698 = vrot.slane %v1697, 2
  %v1699 = vadd.f32 %v1697, %v1698
  %v1700 = vrot.slane %v1699, 1
  %v1701 = vadd.f32 %v1699, %v1700
  %v1702 = vrot.slane %v1631, 4
  %v1703 = vadd.f32 %v1631, %v1702
  %v1704 = vrot.slane %v1703, 2
  %v1705 = vadd.f32 %v1703, %v1704
  %v1706 = vrot.slane %v1705, 1
  %v1707 = vadd.f32 %v1705, %v1706
  %v1708 = vrot.slane %v1632, 4
  %v1709 = vadd.f32 %v1632, %v1708
  %v1710 = vrot.slane %v1709, 2
  %v1711 = vadd.f32 %v1709, %v1710
  %v1712 = vrot.slane %v1711, 1
  %v1713 = vadd.f32 %v1711, %v1712
  %v1714 = vrot.slane %v1633, 4
  %v1715 = vadd.f32 %v1633, %v1714
  %v1716 = vrot.slane %v1715, 2
  %v1717 = vadd.f32 %v1715, %v1716
  %v1718 = vrot.slane %v1717, 1
  %v1719 = vadd.f32 %v1717, %v1718
  %v1720 = vrot.slane %v1634, 4
  %v1721 = vadd.f32 %v1634, %v1720
  %v1722 = vrot.slane %v1721, 2
  %v1723 = vadd.f32 %v1721, %v1722
  %v1724 = vrot.slane %v1723, 1
  %v1725 = vadd.f32 %v1723, %v1724
  %v1726 = vrot.slane %v1635, 4
  %v1727 = vadd.f32 %v1635, %v1726
  %v1728 = vrot.slane %v1727, 2
  %v1729 = vadd.f32 %v1727, %v1728
  %v1730 = vrot.slane %v1729, 1
  %v1731 = vadd.f32 %v1729, %v1730
  %v1732 = vmul.f32 %v230, %v878
  %v1733 = vmul.f32 %v283, %v931
  %v1734 = vmul.f32 %v336, %v878
  %v1735 = vmul.f32 %v389, %v931
  %v1736 = vmul.f32 %v442, %v878
  %v1737 = vmul.f32 %v495, %v931
  %v1738 = vmul.f32 %v548, %v878
  %v1739 = vmul.f32 %v601, %v931
  %v1740 = vmul.f32 %v654, %v878
  %v1741 = vmul.f32 %v707, %v931
  %v1742 = vmul.f32 %v760, %v878
  %v1743 = vmul.f32 %v813, %v931
  %v1744 = vmul.f32 %v866, %v878
  %v1745 = vmul.f32 %v919, %v931
  %v1746 = vmul.f32 %v972, %v878
  %v1747 = vmul.f32 %v1025, %v931
  %v1748 = vrot.slane %v1732, 4
  %v1749 = vadd.f32 %v1732, %v1748
  %v1750 = vrot.slane %v1749, 2
  %v1751 = vadd.f32 %v1749, %v1750
  %v1752 = vrot.slane %v1751, 1
  %v1753 = vadd.f32 %v1751, %v1752
  %v1754 = vrot.slane %v1733, 4
  %v1755 = vadd.f32 %v1733, %v1754
  %v1756 = vrot.slane %v1755, 2
  %v1757 = vadd.f32 %v1755, %v1756
  %v1758 = vrot.slane %v1757, 1
  %v1759 = vadd.f32 %v1757, %v1758
  %v1760 = vrot.slane %v1734, 4
  %v1761 = vadd.f32 %v1734, %v1760
  %v1762 = vrot.slane %v1761, 2
  %v1763 = vadd.f32 %v1761, %v1762
  %v1764 = vrot.slane %v1763, 1
  %v1765 = vadd.f32 %v1763, %v1764
  %v1766 = vrot.slane %v1735, 4
  %v1767 = vadd.f32 %v1735, %v1766
  %v1768 = vrot.slane %v1767, 2
  %v1769 = vadd.f32 %v1767, %v1768
  %v1770 = vrot.slane %v1769, 1
  %v1771 = vadd.f32 %v1769, %v1770
  %v1772 = vrot.slane %v1736, 4
  %v1773 = vadd.f32 %v1736, %v1772
  %v1774 = vrot.slane %v1773, 2
  %v1775 = vadd.f32 %v1773, %v1774
  %v1776 = vrot.slane %v1775, 1
  %v1777 = vadd.f32 %v1775, %v1776
  %v1778 = vrot.slane %v1737, 4
  %v1779 = vadd.f32 %v1737, %v1778
  %v1780 = vrot.slane %v1779, 2
  %v1781 = vadd.f32 %v1779, %v1780
  %v1782 = vrot.slane %v1781, 1
  %v1783 = vadd.f32 %v1781, %v1782
  %v1784 = vrot.slane %v1738, 4
  %v1785 = vadd.f32 %v1738, %v1784
  %v1786 = vrot.slane %v1785, 2
  %v1787 = vadd.f32 %v1785, %v1786
  %v1788 = vrot.slane %v1787, 1
  %v1789 = vadd.f32 %v1787, %v1788
  %v1790 = vrot.slane %v1739, 4
  %v1791 = vadd.f32 %v1739, %v1790
  %v1792 = vrot.slane %v1791, 2
  %v1793 = vadd.f32 %v1791, %v1792
  %v1794 = vrot.slane %v1793, 1
  %v1795 = vadd.f32 %v1793, %v1794
  %v1796 = vrot.slane %v1740, 4
  %v1797 = vadd.f32 %v1740, %v1796
  %v1798 = vrot.slane %v1797, 2
  %v1799 = vadd.f32 %v1797, %v1798
  %v1800 = vrot.slane %v1799, 1
  %v1801 = vadd.f32 %v1799, %v1800
  %v1802 = vrot.slane %v1741, 4
  %v1803 = vadd.f32 %v1741, %v1802
  %v1804 = vrot.slane %v1803, 2
  %v1805 = vadd.f32 %v1803, %v1804
  %v1806 = vrot.slane %v1805, 1
  %v1807 = vadd.f32 %v1805, %v1806
  %v1808 = vrot.slane %v1742, 4
  %v1809 = vadd.f32 %v1742, %v1808
  %v1810 = vrot.slane %v1809, 2
  %v1811 = vadd.f32 %v1809, %v1810
  %v1812 = vrot.slane %v1811, 1
  %v1813 = vadd.f32 %v1811, %v1812
  %v1814 = vrot.slane %v1743, 4
  %v1815 = vadd.f32 %v1743, %v1814
  %v1816 = vrot.slane %v1815, 2
  %v1817 = vadd.f32 %v1815, %v1816
  %v1818 = vrot.slane %v1817, 1
  %v1819 = vadd.f32 %v1817, %v1818
  %v1820 = vrot.slane %v1744, 4
  %v1821 = vadd.f32 %v1744, %v1820
  %v1822 = vrot.slane %v1821, 2
  %v1823 = vadd.f32 %v1821, %v1822
  %v1824 = vrot.slane %v1823, 1
  %v1825 = vadd.f32 %v1823, %v1824
  %v1826 = vrot.slane %v1745, 4
  %v1827 = vadd.f32 %v1745, %v1826
  %v1828 = vrot.slane %v1827, 2
  %v1829 = vadd.f32 %v1827, %v1828
  %v1830 = vrot.slane %v1829, 1
  %v1831 = vadd.f32 %v1829, %v1830
  %v1832 = vrot.slane %v1746, 4
  %v1833 = vadd.f32 %v1746, %v1832
  %v1834 = vrot.slane %v1833, 2
  %v1835 = vadd.f32 %v1833, %v1834
  %v1836 = vrot.slane %v1835, 1
  %v1837 = vadd.f32 %v1835, %v1836
  %v1838 = vrot.slane %v1747, 4
  %v1839 = vadd.f32 %v1747, %v1838
  %v1840 = vrot.slane %v1839, 2
  %v1841 = vadd.f32 %v1839, %v1840
  %v1842 = vrot.slane %v1841, 1
  %v1843 = vadd.f32 %v1841, %v1842
  %v1844 = vmul.f32 %v230, %v984
  %v1845 = vmul.f32 %v283, %v1037
  %v1846 = vmul.f32 %v336, %v984
  %v1847 = vmul.f32 %v389, %v1037
  %v1848 = vmul.f32 %v442, %v984
  %v1849 = vmul.f32 %v495, %v1037
  %v1850 = vmul.f32 %v548, %v984
  %v1851 = vmul.f32 %v601, %v1037
  %v1852 = vmul.f32 %v654, %v984
  %v1853 = vmul.f32 %v707, %v1037
  %v1854 = vmul.f32 %v760, %v984
  %v1855 = vmul.f32 %v813, %v1037
  %v1856 = vmul.f32 %v866, %v984
  %v1857 = vmul.f32 %v919, %v1037
  %v1858 = vmul.f32 %v972, %v984
  %v1859 = vmul.f32 %v1025, %v1037
  %v1860 = vrot.slane %v1844, 4
  %v1861 = vadd.f32 %v1844, %v1860
  %v1862 = vrot.slane %v1861, 2
  %v1863 = vadd.f32 %v1861, %v1862
  %v1864 = vrot.slane %v1863, 1
  %v1865 = vadd.f32 %v1863, %v1864
  %v1866 = vrot.slane %v1845, 4
  %v1867 = vadd.f32 %v1845, %v1866
  %v1868 = vrot.slane %v1867, 2
  %v1869 = vadd.f32 %v1867, %v1868
  %v1870 = vrot.slane %v1869, 1
  %v1871 = vadd.f32 %v1869, %v1870
  %v1872 = vrot.slane %v1846, 4
  %v1873 = vadd.f32 %v1846, %v1872
  %v1874 = vrot.slane %v1873, 2
  %v1875 = vadd.f32 %v1873, %v1874
  %v1876 = vrot.slane %v1875, 1
  %v1877 = vadd.f32 %v1875, %v1876
  %v1878 = vrot.slane %v1847, 4
  %v1879 = vadd.f32 %v1847, %v1878
  %v1880 = vrot.slane %v1879, 2
  %v1881 = vadd.f32 %v1879, %v1880
  %v1882 = vrot.slane %v1881, 1
  %v1883 = vadd.f32 %v1881, %v1882
  %v1884 = vrot.slane %v1848, 4
  %v1885 = vadd.f32 %v1848, %v1884
  %v1886 = vrot.slane %v1885, 2
  %v1887 = vadd.f32 %v1885, %v1886
  %v1888 = vrot.slane %v1887, 1
  %v1889 = vadd.f32 %v1887, %v1888
  %v1890 = vrot.slane %v1849, 4
  %v1891 = vadd.f32 %v1849, %v1890
  %v1892 = vrot.slane %v1891, 2
  %v1893 = vadd.f32 %v1891, %v1892
  %v1894 = vrot.slane %v1893, 1
  %v1895 = vadd.f32 %v1893, %v1894
  %v1896 = vrot.slane %v1850, 4
  %v1897 = vadd.f32 %v1850, %v1896
  %v1898 = vrot.slane %v1897, 2
  %v1899 = vadd.f32 %v1897, %v1898
  %v1900 = vrot.slane %v1899, 1
  %v1901 = vadd.f32 %v1899, %v1900
  %v1902 = vrot.slane %v1851, 4
  %v1903 = vadd.f32 %v1851, %v1902
  %v1904 = vrot.slane %v1903, 2
  %v1905 = vadd.f32 %v1903, %v1904
  %v1906 = vrot.slane %v1905, 1
  %v1907 = vadd.f32 %v1905, %v1906
  %v1908 = vrot.slane %v1852, 4
  %v1909 = vadd.f32 %v1852, %v1908
  %v1910 = vrot.slane %v1909, 2
  %v1911 = vadd.f32 %v1909, %v1910
  %v1912 = vrot.slane %v1911, 1
  %v1913 = vadd.f32 %v1911, %v1912
  %v1914 = vrot.slane %v1853, 4
  %v1915 = vadd.f32 %v1853, %v1914
  %v1916 = vrot.slane %v1915, 2
  %v1917 = vadd.f32 %v1915, %v1916
  %v1918 = vrot.slane %v1917, 1
  %v1919 = vadd.f32 %v1917, %v1918
  %v1920 = vrot.slane %v1854, 4
  %v1921 = vadd.f32 %v1854, %v1920
  %v1922 = vrot.slane %v1921, 2
  %v1923 = vadd.f32 %v1921, %v1922
  %v1924 = vrot.slane %v1923, 1
  %v1925 = vadd.f32 %v1923, %v1924
  %v1926 = vrot.slane %v1855, 4
  %v1927 = vadd.f32 %v1855, %v1926
  %v1928 = vrot.slane %v1927, 2
  %v1929 = vadd.f32 %v1927, %v1928
  %v1930 = vrot.slane %v1929, 1
  %v1931 = vadd.f32 %v1929, %v1930
  %v1932 = vrot.slane %v1856, 4
  %v1933 = vadd.f32 %v1856, %v1932
  %v1934 = vrot.slane %v1933, 2
  %v1935 = vadd.f32 %v1933, %v1934
  %v1936 = vrot.slane %v1935, 1
  %v1937 = vadd.f32 %v1935, %v1936
  %v1938 = vrot.slane %v1857, 4
  %v1939 = vadd.f32 %v1857, %v1938
  %v1940 = vrot.slane %v1939, 2
  %v1941 = vadd.f32 %v1939, %v1940
  %v1942 = vrot.slane %v1941, 1
  %v1943 = vadd.f32 %v1941, %v1942
  %v1944 = vrot.slane %v1858, 4
  %v1945 = vadd.f32 %v1858, %v1944
  %v1946 = vrot.slane %v1945, 2
  %v1947 = vadd.f32 %v1945, %v1946
  %v1948 = vrot.slane %v1947, 1
  %v1949 = vadd.f32 %v1947, %v1948
  %v1950 = vrot.slane %v1859, 4
  %v1951 = vadd.f32 %v1859, %v1950
  %v1952 = vrot.slane %v1951, 2
  %v1953 = vadd.f32 %v1951, %v1952
  %v1954 = vrot.slane %v1953, 1
  %v1955 = vadd.f32 %v1953, %v1954
  %v1956 = vmax.f32 %v1081, %v1193
  %v1957 = vmax.f32 %v1087, %v1199
  %v1958 = vmax.f32 %v1093, %v1205
  %v1959 = vmax.f32 %v1099, %v1211
  %v1960 = vmax.f32 %v1105, %v1217
  %v1961 = vmax.f32 %v1111, %v1223
  %v1962 = vmax.f32 %v1117, %v1229
  %v1963 = vmax.f32 %v1123, %v1235
  %v1964 = vmax.f32 %v1129, %v1241
  %v1965 = vmax.f32 %v1135, %v1247
  %v1966 = vmax.f32 %v1141, %v1253
  %v1967 = vmax.f32 %v1147, %v1259
  %v1968 = vmax.f32 %v1153, %v1265
  %v1969 = vmax.f32 %v1159, %v1271
  %v1970 = vmax.f32 %v1165, %v1277
  %v1971 = vmax.f32 %v1171, %v1283
  %v1972 = vmax.f32 %v1956, %v1305
  %v1973 = vmax.f32 %v1957, %v1311
  %v1974 = vmax.f32 %v1958, %v1317
  %v1975 = vmax.f32 %v1959, %v1323
  %v1976 = vmax.f32 %v1960, %v1329
  %v1977 = vmax.f32 %v1961, %v1335
  %v1978 = vmax.f32 %v1962, %v1341
  %v1979 = vmax.f32 %v1963, %v1347
  %v1980 = vmax.f32 %v1964, %v1353
  %v1981 = vmax.f32 %v1965, %v1359
  %v1982 = vmax.f32 %v1966, %v1365
  %v1983 = vmax.f32 %v1967, %v1371
  %v1984 = vmax.f32 %v1968, %v1377
  %v1985 = vmax.f32 %v1969, %v1383
  %v1986 = vmax.f32 %v1970, %v1389
  %v1987 = vmax.f32 %v1971, %v1395
  %v1988 = vmax.f32 %v1972, %v1417
  %v1989 = vmax.f32 %v1973, %v1423
  %v1990 = vmax.f32 %v1974, %v1429
  %v1991 = vmax.f32 %v1975, %v1435
  %v1992 = vmax.f32 %v1976, %v1441
  %v1993 = vmax.f32 %v1977, %v1447
  %v1994 = vmax.f32 %v1978, %v1453
  %v1995 = vmax.f32 %v1979, %v1459
  %v1996 = vmax.f32 %v1980, %v1465
  %v1997 = vmax.f32 %v1981, %v1471
  %v1998 = vmax.f32 %v1982, %v1477
  %v1999 = vmax.f32 %v1983, %v1483
  %v2000 = vmax.f32 %v1984, %v1489
  %v2001 = vmax.f32 %v1985, %v1495
  %v2002 = vmax.f32 %v1986, %v1501
  %v2003 = vmax.f32 %v1987, %v1507
  %v2004 = vmax.f32 %v1988, %v1529
  %v2005 = vmax.f32 %v1989, %v1535
  %v2006 = vmax.f32 %v1990, %v1541
  %v2007 = vmax.f32 %v1991, %v1547
  %v2008 = vmax.f32 %v1992, %v1553
  %v2009 = vmax.f32 %v1993, %v1559
  %v2010 = vmax.f32 %v1994, %v1565
  %v2011 = vmax.f32 %v1995, %v1571
  %v2012 = vmax.f32 %v1996, %v1577
  %v2013 = vmax.f32 %v1997, %v1583
  %v2014 = vmax.f32 %v1998, %v1589
  %v2015 = vmax.f32 %v1999, %v1595
  %v2016 = vmax.f32 %v2000, %v1601
  %v2017 = vmax.f32 %v2001, %v1607
  %v2018 = vmax.f32 %v2002, %v1613
  %v2019 = vmax.f32 %v2003, %v1619
  %v2020 = vmax.f32 %v2004, %v1641
  %v2021 = vmax.f32 %v2005, %v1647
  %v2022 = vmax.f32 %v2006, %v1653
  %v2023 = vmax.f32 %v2007, %v1659
  %v2024 = vmax.f32 %v2008, %v1665
  %v2025 = vmax.f32 %v2009, %v1671
  %v2026 = vmax.f32 %v2010, %v1677
  %v2027 = vmax.f32 %v2011, %v1683
  %v2028 = vmax.f32 %v2012, %v1689
  %v2029 = vmax.f32 %v2013, %v1695
  %v2030 = vmax.f32 %v2014, %v1701
  %v2031 = vmax.f32 %v2015, %v1707
  %v2032 = vmax.f32 %v2016, %v1713
  %v2033 = vmax.f32 %v2017, %v1719
  %v2034 = vmax.f32 %v2018, %v1725
  %v2035 = vmax.f32 %v2019, %v1731
  %v2036 = vmax.f32 %v2020, %v1753
  %v2037 = vmax.f32 %v2021, %v1759
  %v2038 = vmax.f32 %v2022, %v1765
  %v2039 = vmax.f32 %v2023, %v1771
  %v2040 = vmax.f32 %v2024, %v1777
  %v2041 = vmax.f32 %v2025, %v1783
  %v2042 = vmax.f32 %v2026, %v1789
  %v2043 = vmax.f32 %v2027, %v1795
  %v2044 = vmax.f32 %v2028, %v1801
  %v2045 = vmax.f32 %v2029, %v1807
  %v2046 = vmax.f32 %v2030, %v1813
  %v2047 = vmax.f32 %v2031, %v1819
  %v2048 = vmax.f32 %v2032, %v1825
  %v2049 = vmax.f32 %v2033, %v1831
  %v2050 = vmax.f32 %v2034, %v1837
  %v2051 = vmax.f32 %v2035, %v1843
  %v2052 = vmax.f32 %v2036, %v1865
  %v2053 = vmax.f32 %v2037, %v1871
  %v2054 = vmax.f32 %v2038, %v1877
  %v2055 = vmax.f32 %v2039, %v1883
  %v2056 = vmax.f32 %v2040, %v1889
  %v2057 = vmax.f32 %v2041, %v1895
  %v2058 = vmax.f32 %v2042, %v1901
  %v2059 = vmax.f32 %v2043, %v1907
  %v2060 = vmax.f32 %v2044, %v1913
  %v2061 = vmax.f32 %v2045, %v1919
  %v2062 = vmax.f32 %v2046, %v1925
  %v2063 = vmax.f32 %v2047, %v1931
  %v2064 = vmax.f32 %v2048, %v1937
  %v2065 = vmax.f32 %v2049, %v1943
  %v2066 = vmax.f32 %v2050, %v1949
  %v2067 = vmax.f32 %v2051, %v1955
  %v2068 = vsub.f32 %v1081, %v2052
  %v2069 = vsub.f32 %v1087, %v2053
  %v2070 = vsub.f32 %v1093, %v2054
  %v2071 = vsub.f32 %v1099, %v2055
  %v2072 = vsub.f32 %v1105, %v2056
  %v2073 = vsub.f32 %v1111, %v2057
  %v2074 = vsub.f32 %v1117, %v2058
  %v2075 = vsub.f32 %v1123, %v2059
  %v2076 = vsub.f32 %v1129, %v2060
  %v2077 = vsub.f32 %v1135, %v2061
  %v2078 = vsub.f32 %v1141, %v2062
  %v2079 = vsub.f32 %v1147, %v2063
  %v2080 = vsub.f32 %v1153, %v2064
  %v2081 = vsub.f32 %v1159, %v2065
  %v2082 = vsub.f32 %v1165, %v2066
  %v2083 = vsub.f32 %v1171, %v2067
  %v2084 = vmul.f32 %v2068, 1.442695
  %v2085 = vpow.pop %v2084
  %v2086 = vmul.f32 %v2069, 1.442695
  %v2087 = vpow.pop %v2086
  %v2088 = vmul.f32 %v2070, 1.442695
  %v2089 = vpow.pop %v2088
  %v2090 = vmul.f32 %v2071, 1.442695
  %v2091 = vpow.pop %v2090
  %v2092 = vmul.f32 %v2072, 1.442695
  %v2093 = vpow.pop %v2092
  %v2094 = vmul.f32 %v2073, 1.442695
  %v2095 = vpow.pop %v2094
  %v2096 = vmul.f32 %v2074, 1.442695
  %v2097 = vpow.pop %v2096
  %v2098 = vmul.f32 %v2075, 1.442695
  %v2099 = vpow.pop %v2098
  %v2100 = vmul.f32 %v2076, 1.442695
  %v2101 = vpow.pop %v2100
  %v2102 = vmul.f32 %v2077, 1.442695
  %v2103 = vpow.pop %v2102
  %v2104 = vmul.f32 %v2078, 1.442695
  %v2105 = vpow.pop %v2104
  %v2106 = vmul.f32 %v2079, 1.442695
  %v2107 = vpow.pop %v2106
  %v2108 = vmul.f32 %v2080, 1.442695
  %v2109 = vpow.pop %v2108
  %v2110 = vmul.f32 %v2081, 1.442695
  %v2111 = vpow.pop %v2110
  %v2112 = vmul.f32 %v2082, 1.442695
  %v2113 = vpow.pop %v2112
  %v2114 = vmul.f32 %v2083, 1.442695
  %v2115 = vpow.pop %v2114
  %v2116 = vsub.f32 %v1193, %v2052
  %v2117 = vsub.f32 %v1199, %v2053
  %v2118 = vsub.f32 %v1205, %v2054
  %v2119 = vsub.f32 %v1211, %v2055
  %v2120 = vsub.f32 %v1217, %v2056
  %v2121 = vsub.f32 %v1223, %v2057
  %v2122 = vsub.f32 %v1229, %v2058
  %v2123 = vsub.f32 %v1235, %v2059
  %v2124 = vsub.f32 %v1241, %v2060
  %v2125 = vsub.f32 %v1247, %v2061
  %v2126 = vsub.f32 %v1253, %v2062
  %v2127 = vsub.f32 %v1259, %v2063
  %v2128 = vsub.f32 %v1265, %v2064
  %v2129 = vsub.f32 %v1271, %v2065
  %v2130 = vsub.f32 %v1277, %v2066
  %v2131 = vsub.f32 %v1283, %v2067
  %v2132 = vmul.f32 %v2116, 1.442695
  %v2133 = vpow.pop %v2132
  %v2134 = vmul.f32 %v2117, 1.442695
  %v2135 = vpow.pop %v2134
  %v2136 = vmul.f32 %v2118, 1.442695
  %v2137 = vpow.pop %v2136
  %v2138 = vmul.f32 %v2119, 1.442695
  %v2139 = vpow.pop %v2138
  %v2140 = vmul.f32 %v2120, 1.442695
  %v2141 = vpow.pop %v2140
  %v2142 = vmul.f32 %v2121, 1.442695
  %v2143 = vpow.pop %v2142
  %v2144 = vmul.f32 %v2122, 1.442695
  %v2145 = vpow.pop %v2144
  %v2146 = vmul.f32 %v2123, 1.442695
  %v2147 = vpow.pop %v2146
  %v2148 = vmul.f32 %v2124, 1.442695
  %v2149 = vpow.pop %v2148
  %v2150 = vmul.f32 %v2125, 1.442695
  %v2151 = vpow.pop %v2150
  %v2152 = vmul.f32 %v2126, 1.442695
  %v2153 = vpow.pop %v2152
  %v2154 = vmul.f32 %v2127, 1.442695
  %v2155 = vpow.pop %v2154
  %v2156 = vmul.f32 %v2128, 1.442695
  %v2157 = vpow.pop %v2156
  %v2158 = vmul.f32 %v2129, 1.442695
  %v2159 = vpow.pop %v2158
  %v2160 = vmul.f32 %v2130, 1.442695
  %v2161 = vpow.pop %v2160
  %v2162 = vmul.f32 %v2131, 1.442695
  %v2163 = vpow.pop %v2162
  %v2164 = vsub.f32 %v1305, %v2052
  %v2165 = vsub.f32 %v1311, %v2053
  %v2166 = vsub.f32 %v1317, %v2054
  %v2167 = vsub.f32 %v1323, %v2055
  %v2168 = vsub.f32 %v1329, %v2056
  %v2169 = vsub.f32 %v1335, %v2057
  %v2170 = vsub.f32 %v1341, %v2058
  %v2171 = vsub.f32 %v1347, %v2059
  %v2172 = vsub.f32 %v1353, %v2060
  %v2173 = vsub.f32 %v1359, %v2061
  %v2174 = vsub.f32 %v1365, %v2062
  %v2175 = vsub.f32 %v1371, %v2063
  %v2176 = vsub.f32 %v1377, %v2064
  %v2177 = vsub.f32 %v1383, %v2065
  %v2178 = vsub.f32 %v1389, %v2066
  %v2179 = vsub.f32 %v1395, %v2067
  %v2180 = vmul.f32 %v2164, 1.442695
  %v2181 = vpow.pop %v2180
  %v2182 = vmul.f32 %v2165, 1.442695
  %v2183 = vpow.pop %v2182
  %v2184 = vmul.f32 %v2166, 1.442695
  %v2185 = vpow.pop %v2184
  %v2186 = vmul.f32 %v2167, 1.442695
  %v2187 = vpow.pop %v2186
  %v2188 = vmul.f32 %v2168, 1.442695
  %v2189 = vpow.pop %v2188
  %v2190 = vmul.f32 %v2169, 1.442695
  %v2191 = vpow.pop %v2190
  %v2192 = vmul.f32 %v2170, 1.442695
  %v2193 = vpow.pop %v2192
  %v2194 = vmul.f32 %v2171, 1.442695
  %v2195 = vpow.pop %v2194
  %v2196 = vmul.f32 %v2172, 1.442695
  %v2197 = vpow.pop %v2196
  %v2198 = vmul.f32 %v2173, 1.442695
  %v2199 = vpow.pop %v2198
  %v2200 = vmul.f32 %v2174, 1.442695
  %v2201 = vpow.pop %v2200
  %v2202 = vmul.f32 %v2175, 1.442695
  %v2203 = vpow.pop %v2202
  %v2204 = vmul.f32 %v2176, 1.442695
  %v2205 = vpow.pop %v2204
  %v2206 = vmul.f32 %v2177, 1.442695
  %v2207 = vpow.pop %v2206
  %v2208 = vmul.f32 %v2178, 1.442695
  %v2209 = vpow.pop %v2208
  %v2210 = vmul.f32 %v2179, 1.442695
  %v2211 = vpow.pop %v2210
  %v2212 = vsub.f32 %v1417, %v2052
  %v2213 = vsub.f32 %v1423, %v2053
  %v2214 = vsub.f32 %v1429, %v2054
  %v2215 = vsub.f32 %v1435, %v2055
  %v2216 = vsub.f32 %v1441, %v2056
  %v2217 = vsub.f32 %v1447, %v2057
  %v2218 = vsub.f32 %v1453, %v2058
  %v2219 = vsub.f32 %v1459, %v2059
  %v2220 = vsub.f32 %v1465, %v2060
  %v2221 = vsub.f32 %v1471, %v2061
  %v2222 = vsub.f32 %v1477, %v2062
  %v2223 = vsub.f32 %v1483, %v2063
  %v2224 = vsub.f32 %v1489, %v2064
  %v2225 = vsub.f32 %v1495, %v2065
  %v2226 = vsub.f32 %v1501, %v2066
  %v2227 = vsub.f32 %v1507, %v2067
  %v2228 = vmul.f32 %v2212, 1.442695
  %v2229 = vpow.pop %v2228
  %v2230 = vmul.f32 %v2213, 1.442695
  %v2231 = vpow.pop %v2230
  %v2232 = vmul.f32 %v2214, 1.442695
  %v2233 = vpow.pop %v2232
  %v2234 = vmul.f32 %v2215, 1.442695
  %v2235 = vpow.pop %v2234
  %v2236 = vmul.f32 %v2216, 1.442695
  %v2237 = vpow.pop %v2236
  %v2238 = vmul.f32 %v2217, 1.442695
  %v2239 = vpow.pop %v2238
  %v2240 = vmul.f32 %v2218, 1.442695
  %v2241 = vpow.pop %v2240
  %v2242 = vmul.f32 %v2219, 1.442695
  %v2243 = vpow.pop %v2242
  %v2244 = vmul.f32 %v2220, 1.442695
  %v2245 = vpow.pop %v2244
  %v2246 = vmul.f32 %v2221, 1.442695
  %v2247 = vpow.pop %v2246
  %v2248 = vmul.f32 %v2222, 1.442695
  %v2249 = vpow.pop %v2248
  %v2250 = vmul.f32 %v2223, 1.442695
  %v2251 = vpow.pop %v2250
  %v2252 = vmul.f32 %v2224, 1.442695
  %v2253 = vpow.pop %v2252
  %v2254 = vmul.f32 %v2225, 1.442695
  %v2255 = vpow.pop %v2254
  %v2256 = vmul.f32 %v2226, 1.442695
  %v2257 = vpow.pop %v2256
  %v2258 = vmul.f32 %v2227, 1.442695
  %v2259 = vpow.pop %v2258
  %v2260 = vsub.f32 %v1529, %v2052
  %v2261 = vsub.f32 %v1535, %v2053
  %v2262 = vsub.f32 %v1541, %v2054
  %v2263 = vsub.f32 %v1547, %v2055
  %v2264 = vsub.f32 %v1553, %v2056
  %v2265 = vsub.f32 %v1559, %v2057
  %v2266 = vsub.f32 %v1565, %v2058
  %v2267 = vsub.f32 %v1571, %v2059
  %v2268 = vsub.f32 %v1577, %v2060
  %v2269 = vsub.f32 %v1583, %v2061
  %v2270 = vsub.f32 %v1589, %v2062
  %v2271 = vsub.f32 %v1595, %v2063
  %v2272 = vsub.f32 %v1601, %v2064
  %v2273 = vsub.f32 %v1607, %v2065
  %v2274 = vsub.f32 %v1613, %v2066
  %v2275 = vsub.f32 %v1619, %v2067
  %v2276 = vmul.f32 %v2260, 1.442695
  %v2277 = vpow.pop %v2276
  %v2278 = vmul.f32 %v2261, 1.442695
  %v2279 = vpow.pop %v2278
  %v2280 = vmul.f32 %v2262, 1.442695
  %v2281 = vpow.pop %v2280
  %v2282 = vmul.f32 %v2263, 1.442695
  %v2283 = vpow.pop %v2282
  %v2284 = vmul.f32 %v2264, 1.442695
  %v2285 = vpow.pop %v2284
  %v2286 = vmul.f32 %v2265, 1.442695
  %v2287 = vpow.pop %v2286
  %v2288 = vmul.f32 %v2266, 1.442695
  %v2289 = vpow.pop %v2288
  %v2290 = vmul.f32 %v2267, 1.442695
  %v2291 = vpow.pop %v2290
  %v2292 = vmul.f32 %v2268, 1.442695
  %v2293 = vpow.pop %v2292
  %v2294 = vmul.f32 %v2269, 1.442695
  %v2295 = vpow.pop %v2294
  %v2296 = vmul.f32 %v2270, 1.442695
  %v2297 = vpow.pop %v2296
  %v2298 = vmul.f32 %v2271, 1.442695
  %v2299 = vpow.pop %v2298
  %v2300 = vmul.f32 %v2272, 1.442695
  %v2301 = vpow.pop %v2300
  %v2302 = vmul.f32 %v2273, 1.442695
  %v2303 = vpow.pop %v2302
  %v2304 = vmul.f32 %v2274, 1.442695
  %v2305 = vpow.pop %v2304
  %v2306 = vmul.f32 %v2275, 1.442695
  %v2307 = vpow.pop %v2306
  %v2308 = vsub.f32 %v1641, %v2052
  %v2309 = vsub.f32 %v1647, %v2053
  %v2310 = vsub.f32 %v1653, %v2054
  %v2311 = vsub.f32 %v1659, %v2055
  %v2312 = vsub.f32 %v1665, %v2056
  %v2313 = vsub.f32 %v1671, %v2057
  %v2314 = vsub.f32 %v1677, %v2058
  %v2315 = vsub.f32 %v1683, %v2059
  %v2316 = vsub.f32 %v1689, %v2060
  %v2317 = vsub.f32 %v1695, %v2061
  %v2318 = vsub.f32 %v1701, %v2062
  %v2319 = vsub.f32 %v1707, %v2063
  %v2320 = vsub.f32 %v1713, %v2064
  %v2321 = vsub.f32 %v1719, %v2065
  %v2322 = vsub.f32 %v1725, %v2066
  %v2323 = vsub.f32 %v1731, %v2067
  %v2324 = vmul.f32 %v2308, 1.442695
  %v2325 = vpow.pop %v2324
  %v2326 = vmul.f32 %v2309, 1.442695
  %v2327 = vpow.pop %v2326
  %v2328 = vmul.f32 %v2310, 1.442695
  %v2329 = vpow.pop %v2328
  %v2330 = vmul.f32 %v2311, 1.442695
  %v2331 = vpow.pop %v2330
  %v2332 = vmul.f32 %v2312, 1.442695
  %v2333 = vpow.pop %v2332
  %v2334 = vmul.f32 %v2313, 1.442695
  %v2335 = vpow.pop %v2334
  %v2336 = vmul.f32 %v2314, 1.442695
  %v2337 = vpow.pop %v2336
  %v2338 = vmul.f32 %v2315, 1.442695
  %v2339 = vpow.pop %v2338
  %v2340 = vmul.f32 %v2316, 1.442695
  %v2341 = vpow.pop %v2340
  %v2342 = vmul.f32 %v2317, 1.442695
  %v2343 = vpow.pop %v2342
  %v2344 = vmul.f32 %v2318, 1.442695
  %v2345 = vpow.pop %v2344
  %v2346 = vmul.f32 %v2319, 1.442695
  %v2347 = vpow.pop %v2346
  %v2348 = vmul.f32 %v2320, 1.442695
  %v2349 = vpow.pop %v2348
  %v2350 = vmul.f32 %v2321, 1.442695
  %v2351 = vpow.pop %v2350
  %v2352 = vmul.f32 %v2322, 1.442695
  %v2353 = vpow.pop %v2352
  %v2354 = vmul.f32 %v2323, 1.442695
  %v2355 = vpow.pop %v2354
  %v2356 = vsub.f32 %v1753, %v2052
  %v2357 = vsub.f32 %v1759, %v2053
  %v2358 = vsub.f32 %v1765, %v2054
  %v2359 = vsub.f32 %v1771, %v2055
  %v2360 = vsub.f32 %v1777, %v2056
  %v2361 = vsub.f32 %v1783, %v2057
  %v2362 = vsub.f32 %v1789, %v2058
  %v2363 = vsub.f32 %v1795, %v2059
  %v2364 = vsub.f32 %v1801, %v2060
  %v2365 = vsub.f32 %v1807, %v2061
  %v2366 = vsub.f32 %v1813, %v2062
  %v2367 = vsub.f32 %v1819, %v2063
  %v2368 = vsub.f32 %v1825, %v2064
  %v2369 = vsub.f32 %v1831, %v2065
  %v2370 = vsub.f32 %v1837, %v2066
  %v2371 = vsub.f32 %v1843, %v2067
  %v2372 = vmul.f32 %v2356, 1.442695
  %v2373 = vpow.pop %v2372
  %v2374 = vmul.f32 %v2357, 1.442695
  %v2375 = vpow.pop %v2374
  %v2376 = vmul.f32 %v2358, 1.442695
  %v2377 = vpow.pop %v2376
  %v2378 = vmul.f32 %v2359, 1.442695
  %v2379 = vpow.pop %v2378
  %v2380 = vmul.f32 %v2360, 1.442695
  %v2381 = vpow.pop %v2380
  %v2382 = vmul.f32 %v2361, 1.442695
  %v2383 = vpow.pop %v2382
  %v2384 = vmul.f32 %v2362, 1.442695
  %v2385 = vpow.pop %v2384
  %v2386 = vmul.f32 %v2363, 1.442695
  %v2387 = vpow.pop %v2386
  %v2388 = vmul.f32 %v2364, 1.442695
  %v2389 = vpow.pop %v2388
  %v2390 = vmul.f32 %v2365, 1.442695
  %v2391 = vpow.pop %v2390
  %v2392 = vmul.f32 %v2366, 1.442695
  %v2393 = vpow.pop %v2392
  %v2394 = vmul.f32 %v2367, 1.442695
  %v2395 = vpow.pop %v2394
  %v2396 = vmul.f32 %v2368, 1.442695
  %v2397 = vpow.pop %v2396
  %v2398 = vmul.f32 %v2369, 1.442695
  %v2399 = vpow.pop %v2398
  %v2400 = vmul.f32 %v2370, 1.442695
  %v2401 = vpow.pop %v2400
  %v2402 = vmul.f32 %v2371, 1.442695
  %v2403 = vpow.pop %v2402
  %v2404 = vsub.f32 %v1865, %v2052
  %v2405 = vsub.f32 %v1871, %v2053
  %v2406 = vsub.f32 %v1877, %v2054
  %v2407 = vsub.f32 %v1883, %v2055
  %v2408 = vsub.f32 %v1889, %v2056
  %v2409 = vsub.f32 %v1895, %v2057
  %v2410 = vsub.f32 %v1901, %v2058
  %v2411 = vsub.f32 %v1907, %v2059
  %v2412 = vsub.f32 %v1913, %v2060
  %v2413 = vsub.f32 %v1919, %v2061
  %v2414 = vsub.f32 %v1925, %v2062
  %v2415 = vsub.f32 %v1931, %v2063
  %v2416 = vsub.f32 %v1937, %v2064
  %v2417 = vsub.f32 %v1943, %v2065
  %v2418 = vsub.f32 %v1949, %v2066
  %v2419 = vsub.f32 %v1955, %v2067
  %v2420 = vmul.f32 %v2404, 1.442695
  %v2421 = vpow.pop %v2420
  %v2422 = vmul.f32 %v2405, 1.442695
  %v2423 = vpow.pop %v2422
  %v2424 = vmul.f32 %v2406, 1.442695
  %v2425 = vpow.pop %v2424
  %v2426 = vmul.f32 %v2407, 1.442695
  %v2427 = vpow.pop %v2426
  %v2428 = vmul.f32 %v2408, 1.442695
  %v2429 = vpow.pop %v2428
  %v2430 = vmul.f32 %v2409, 1.442695
  %v2431 = vpow.pop %v2430
  %v2432 = vmul.f32 %v2410, 1.442695
  %v2433 = vpow.pop %v2432
  %v2434 = vmul.f32 %v2411, 1.442695
  %v2435 = vpow.pop %v2434
  %v2436 = vmul.f32 %v2412, 1.442695
  %v2437 = vpow.pop %v2436
  %v2438 = vmul.f32 %v2413, 1.442695
  %v2439 = vpow.pop %v2438
  %v2440 = vmul.f32 %v2414, 1.442695
  %v2441 = vpow.pop %v2440
  %v2442 = vmul.f32 %v2415, 1.442695
  %v2443 = vpow.pop %v2442
  %v2444 = vmul.f32 %v2416, 1.442695
  %v2445 = vpow.pop %v2444
  %v2446 = vmul.f32 %v2417, 1.442695
  %v2447 = vpow.pop %v2446
  %v2448 = vmul.f32 %v2418, 1.442695
  %v2449 = vpow.pop %v2448
  %v2450 = vmul.f32 %v2419, 1.442695
  %v2451 = vpow.pop %v2450
  %v2452 = vadd.f32 %v2085, %v2133
  %v2453 = vadd.f32 %v2087, %v2135
  %v2454 = vadd.f32 %v2089, %v2137
  %v2455 = vadd.f32 %v2091, %v2139
  %v2456 = vadd.f32 %v2093, %v2141
  %v2457 = vadd.f32 %v2095, %v2143
  %v2458 = vadd.f32 %v2097, %v2145
  %v2459 = vadd.f32 %v2099, %v2147
  %v2460 = vadd.f32 %v2101, %v2149
  %v2461 = vadd.f32 %v2103, %v2151
  %v2462 = vadd.f32 %v2105, %v2153
  %v2463 = vadd.f32 %v2107, %v2155
  %v2464 = vadd.f32 %v2109, %v2157
  %v2465 = vadd.f32 %v2111, %v2159
  %v2466 = vadd.f32 %v2113, %v2161
  %v2467 = vadd.f32 %v2115, %v2163
  %v2468 = vadd.f32 %v2452, %v2181
  %v2469 = vadd.f32 %v2453, %v2183
  %v2470 = vadd.f32 %v2454, %v2185
  %v2471 = vadd.f32 %v2455, %v2187
  %v2472 = vadd.f32 %v2456, %v2189
  %v2473 = vadd.f32 %v2457, %v2191
  %v2474 = vadd.f32 %v2458, %v2193
  %v2475 = vadd.f32 %v2459, %v2195
  %v2476 = vadd.f32 %v2460, %v2197
  %v2477 = vadd.f32 %v2461, %v2199
  %v2478 = vadd.f32 %v2462, %v2201
  %v2479 = vadd.f32 %v2463, %v2203
  %v2480 = vadd.f32 %v2464, %v2205
  %v2481 = vadd.f32 %v2465, %v2207
  %v2482 = vadd.f32 %v2466, %v2209
  %v2483 = vadd.f32 %v2467, %v2211
  %v2484 = vadd.f32 %v2468, %v2229
  %v2485 = vadd.f32 %v2469, %v2231
  %v2486 = vadd.f32 %v2470, %v2233
  %v2487 = vadd.f32 %v2471, %v2235
  %v2488 = vadd.f32 %v2472, %v2237
  %v2489 = vadd.f32 %v2473, %v2239
  %v2490 = vadd.f32 %v2474, %v2241
  %v2491 = vadd.f32 %v2475, %v2243
  %v2492 = vadd.f32 %v2476, %v2245
  %v2493 = vadd.f32 %v2477, %v2247
  %v2494 = vadd.f32 %v2478, %v2249
  %v2495 = vadd.f32 %v2479, %v2251
  %v2496 = vadd.f32 %v2480, %v2253
  %v2497 = vadd.f32 %v2481, %v2255
  %v2498 = vadd.f32 %v2482, %v2257
  %v2499 = vadd.f32 %v2483, %v2259
  %v2500 = vadd.f32 %v2484, %v2277
  %v2501 = vadd.f32 %v2485, %v2279
  %v2502 = vadd.f32 %v2486, %v2281
  %v2503 = vadd.f32 %v2487, %v2283
  %v2504 = vadd.f32 %v2488, %v2285
  %v2505 = vadd.f32 %v2489, %v2287
  %v2506 = vadd.f32 %v2490, %v2289
  %v2507 = vadd.f32 %v2491, %v2291
  %v2508 = vadd.f32 %v2492, %v2293
  %v2509 = vadd.f32 %v2493, %v2295
  %v2510 = vadd.f32 %v2494, %v2297
  %v2511 = vadd.f32 %v2495, %v2299
  %v2512 = vadd.f32 %v2496, %v2301
  %v2513 = vadd.f32 %v2497, %v2303
  %v2514 = vadd.f32 %v2498, %v2305
  %v2515 = vadd.f32 %v2499, %v2307
  %v2516 = vadd.f32 %v2500, %v2325
  %v2517 = vadd.f32 %v2501, %v2327
  %v2518 = vadd.f32 %v2502, %v2329
  %v2519 = vadd.f32 %v2503, %v2331
  %v2520 = vadd.f32 %v2504, %v2333
  %v2521 = vadd.f32 %v2505, %v2335
  %v2522 = vadd.f32 %v2506, %v2337
  %v2523 = vadd.f32 %v2507, %v2339
  %v2524 = vadd.f32 %v2508, %v2341
  %v2525 = vadd.f32 %v2509, %v2343
  %v2526 = vadd.f32 %v2510, %v2345
  %v2527 = vadd.f32 %v2511, %v2347
  %v2528 = vadd.f32 %v2512, %v2349
  %v2529 = vadd.f32 %v2513, %v2351
  %v2530 = vadd.f32 %v2514, %v2353
  %v2531 = vadd.f32 %v2515, %v2355
  %v2532 = vadd.f32 %v2516, %v2373
  %v2533 = vadd.f32 %v2517, %v2375
  %v2534 = vadd.f32 %v2518, %v2377
  %v2535 = vadd.f32 %v2519, %v2379
  %v2536 = vadd.f32 %v2520, %v2381
  %v2537 = vadd.f32 %v2521, %v2383
  %v2538 = vadd.f32 %v2522, %v2385
  %v2539 = vadd.f32 %v2523, %v2387
  %v2540 = vadd.f32 %v2524, %v2389
  %v2541 = vadd.f32 %v2525, %v2391
  %v2542 = vadd.f32 %v2526, %v2393
  %v2543 = vadd.f32 %v2527, %v2395
  %v2544 = vadd.f32 %v2528, %v2397
  %v2545 = vadd.f32 %v2529, %v2399
  %v2546 = vadd.f32 %v2530, %v2401
  %v2547 = vadd.f32 %v2531, %v2403
  %v2548 = vadd.f32 %v2532, %v2421
  %v2549 = vadd.f32 %v2533, %v2423
  %v2550 = vadd.f32 %v2534, %v2425
  %v2551 = vadd.f32 %v2535, %v2427
  %v2552 = vadd.f32 %v2536, %v2429
  %v2553 = vadd.f32 %v2537, %v2431
  %v2554 = vadd.f32 %v2538, %v2433
  %v2555 = vadd.f32 %v2539, %v2435
  %v2556 = vadd.f32 %v2540, %v2437
  %v2557 = vadd.f32 %v2541, %v2439
  %v2558 = vadd.f32 %v2542, %v2441
  %v2559 = vadd.f32 %v2543, %v2443
  %v2560 = vadd.f32 %v2544, %v2445
  %v2561 = vadd.f32 %v2545, %v2447
  %v2562 = vadd.f32 %v2546, %v2449
  %v2563 = vadd.f32 %v2547, %v2451
  %v2564 = vrcp.pop %v2548
  %v2565 = vmul.f32 %v2548, %v2564
  %v2566 = vsub.f32 1.0, %v2565
  %v2567 = vmul.f32 %v2564, %v2566
  %v2568 = vadd.f32 %v2564, %v2567
  %vm2569 = vweird.f32 %v2548
  %vm2570 = vweird.f32 %v2564
  %vm2571 = vmor %vm2569, %vm2570
  %v2572 = vsel %vm2571, %v2564, %v2568
  %v2573 = vand.u32 2147483647, %v2548
  %vm2574 = vcmp.eq.f32.partialorder %v2573, 8.507059e+37
  %v2575 = vand.u32 %v2548, 2147483648
  %v2576 = vor.u32 1.1754944e-38, %v2575
  %v2577 = vsel %vm2574, %v2576, %v2572
  %v2578 = vmul.f32 1.0, %v2577
  %v2579 = vrcp.pop %v2549
  %v2580 = vmul.f32 %v2549, %v2579
  %v2581 = vsub.f32 1.0, %v2580
  %v2582 = vmul.f32 %v2579, %v2581
  %v2583 = vadd.f32 %v2579, %v2582
  %vm2584 = vweird.f32 %v2549
  %vm2585 = vweird.f32 %v2579
  %vm2586 = vmor %vm2584, %vm2585
  %v2587 = vsel %vm2586, %v2579, %v2583
  %v2588 = vand.u32 2147483647, %v2549
  %vm2589 = vcmp.eq.f32.partialorder %v2588, 8.507059e+37
  %v2590 = vand.u32 %v2549, 2147483648
  %v2591 = vor.u32 1.1754944e-38, %v2590
  %v2592 = vsel %vm2589, %v2591, %v2587
  %v2593 = vmul.f32 1.0, %v2592
  %v2594 = vrcp.pop %v2550
  %v2595 = vmul.f32 %v2550, %v2594
  %v2596 = vsub.f32 1.0, %v2595
  %v2597 = vmul.f32 %v2594, %v2596
  %v2598 = vadd.f32 %v2594, %v2597
  %vm2599 = vweird.f32 %v2550
  %vm2600 = vweird.f32 %v2594
  %vm2601 = vmor %vm2599, %vm2600
  %v2602 = vsel %vm2601, %v2594, %v2598
  %v2603 = vand.u32 2147483647, %v2550
  %vm2604 = vcmp.eq.f32.partialorder %v2603, 8.507059e+37
  %v2605 = vand.u32 %v2550, 2147483648
  %v2606 = vor.u32 1.1754944e-38, %v2605
  %v2607 = vsel %vm2604, %v2606, %v2602
  %v2608 = vmul.f32 1.0, %v2607
  %v2609 = vrcp.pop %v2551
  %v2610 = vmul.f32 %v2551, %v2609
  %v2611 = vsub.f32 1.0, %v2610
  %v2612 = vmul.f32 %v2609, %v2611
  %v2613 = vadd.f32 %v2609, %v2612
  %vm2614 = vweird.f32 %v2551
  %vm2615 = vweird.f32 %v2609
  %vm2616 = vmor %vm2614, %vm2615
  %v2617 = vsel %vm2616, %v2609, %v2613
  %v2618 = vand.u32 2147483647, %v2551
  %vm2619 = vcmp.eq.f32.partialorder %v2618, 8.507059e+37
  %v2620 = vand.u32 %v2551, 2147483648
  %v2621 = vor.u32 1.1754944e-38, %v2620
  %v2622 = vsel %vm2619, %v2621, %v2617
  %v2623 = vmul.f32 1.0, %v2622
  %v2624 = vrcp.pop %v2552
  %v2625 = vmul.f32 %v2552, %v2624
  %v2626 = vsub.f32 1.0, %v2625
  %v2627 = vmul.f32 %v2624, %v2626
  %v2628 = vadd.f32 %v2624, %v2627
  %vm2629 = vweird.f32 %v2552
  %vm2630 = vweird.f32 %v2624
  %vm2631 = vmor %vm2629, %vm2630
  %v2632 = vsel %vm2631, %v2624, %v2628
  %v2633 = vand.u32 2147483647, %v2552
  %vm2634 = vcmp.eq.f32.partialorder %v2633, 8.507059e+37
  %v2635 = vand.u32 %v2552, 2147483648
  %v2636 = vor.u32 1.1754944e-38, %v2635
  %v2637 = vsel %vm2634, %v2636, %v2632
  %v2638 = vmul.f32 1.0, %v2637
  %v2639 = vrcp.pop %v2553
  %v2640 = vmul.f32 %v2553, %v2639
  %v2641 = vsub.f32 1.0, %v2640
  %v2642 = vmul.f32 %v2639, %v2641
  %v2643 = vadd.f32 %v2639, %v2642
  %vm2644 = vweird.f32 %v2553
  %vm2645 = vweird.f32 %v2639
  %vm2646 = vmor %vm2644, %vm2645
  %v2647 = vsel %vm2646, %v2639, %v2643
  %v2648 = vand.u32 2147483647, %v2553
  %vm2649 = vcmp.eq.f32.partialorder %v2648, 8.507059e+37
  %v2650 = vand.u32 %v2553, 2147483648
  %v2651 = vor.u32 1.1754944e-38, %v2650
  %v2652 = vsel %vm2649, %v2651, %v2647
  %v2653 = vmul.f32 1.0, %v2652
  %v2654 = vrcp.pop %v2554
  %v2655 = vmul.f32 %v2554, %v2654
  %v2656 = vsub.f32 1.0, %v2655
  %v2657 = vmul.f32 %v2654, %v2656
  %v2658 = vadd.f32 %v2654, %v2657
  %vm2659 = vweird.f32 %v2554
  %vm2660 = vweird.f32 %v2654
  %vm2661 = vmor %vm2659, %vm2660
  %v2662 = vsel %vm2661, %v2654, %v2658
  %v2663 = vand.u32 2147483647, %v2554
  %vm2664 = vcmp.eq.f32.partialorder %v2663, 8.507059e+37
  %v2665 = vand.u32 %v2554, 2147483648
  %v2666 = vor.u32 1.1754944e-38, %v2665
  %v2667 = vsel %vm2664, %v2666, %v2662
  %v2668 = vmul.f32 1.0, %v2667
  %v2669 = vrcp.pop %v2555
  %v2670 = vmul.f32 %v2555, %v2669
  %v2671 = vsub.f32 1.0, %v2670
  %v2672 = vmul.f32 %v2669, %v2671
  %v2673 = vadd.f32 %v2669, %v2672
  %vm2674 = vweird.f32 %v2555
  %vm2675 = vweird.f32 %v2669
  %vm2676 = vmor %vm2674, %vm2675
  %v2677 = vsel %vm2676, %v2669, %v2673
  %v2678 = vand.u32 2147483647, %v2555
  %vm2679 = vcmp.eq.f32.partialorder %v2678, 8.507059e+37
  %v2680 = vand.u32 %v2555, 2147483648
  %v2681 = vor.u32 1.1754944e-38, %v2680
  %v2682 = vsel %vm2679, %v2681, %v2677
  %v2683 = vmul.f32 1.0, %v2682
  %v2684 = vrcp.pop %v2556
  %v2685 = vmul.f32 %v2556, %v2684
  %v2686 = vsub.f32 1.0, %v2685
  %v2687 = vmul.f32 %v2684, %v2686
  %v2688 = vadd.f32 %v2684, %v2687
  %vm2689 = vweird.f32 %v2556
  %vm2690 = vweird.f32 %v2684
  %vm2691 = vmor %vm2689, %vm2690
  %v2692 = vsel %vm2691, %v2684, %v2688
  %v2693 = vand.u32 2147483647, %v2556
  %vm2694 = vcmp.eq.f32.partialorder %v2693, 8.507059e+37
  %v2695 = vand.u32 %v2556, 2147483648
  %v2696 = vor.u32 1.1754944e-38, %v2695
  %v2697 = vsel %vm2694, %v2696, %v2692
  %v2698 = vmul.f32 1.0, %v2697
  %v2699 = vrcp.pop %v2557
  %v2700 = vmul.f32 %v2557, %v2699
  %v2701 = vsub.f32 1.0, %v2700
  %v2702 = vmul.f32 %v2699, %v2701
  %v2703 = vadd.f32 %v2699, %v2702
  %vm2704 = vweird.f32 %v2557
  %vm2705 = vweird.f32 %v2699
  %vm2706 = vmor %vm2704, %vm2705
  %v2707 = vsel %vm2706, %v2699, %v2703
  %v2708 = vand.u32 2147483647, %v2557
  %vm2709 = vcmp.eq.f32.partialorder %v2708, 8.507059e+37
  %v2710 = vand.u32 %v2557, 2147483648
  %v2711 = vor.u32 1.1754944e-38, %v2710
  %v2712 = vsel %vm2709, %v2711, %v2707
  %v2713 = vmul.f32 1.0, %v2712
  %v2714 = vrcp.pop %v2558
  %v2715 = vmul.f32 %v2558, %v2714
  %v2716 = vsub.f32 1.0, %v2715
  %v2717 = vmul.f32 %v2714, %v2716
  %v2718 = vadd.f32 %v2714, %v2717
  %vm2719 = vweird.f32 %v2558
  %vm2720 = vweird.f32 %v2714
  %vm2721 = vmor %vm2719, %vm2720
  %v2722 = vsel %vm2721, %v2714, %v2718
  %v2723 = vand.u32 2147483647, %v2558
  %vm2724 = vcmp.eq.f32.partialorder %v2723, 8.507059e+37
  %v2725 = vand.u32 %v2558, 2147483648
  %v2726 = vor.u32 1.1754944e-38, %v2725
  %v2727 = vsel %vm2724, %v2726, %v2722
  %v2728 = vmul.f32 1.0, %v2727
  %v2729 = vrcp.pop %v2559
  %v2730 = vmul.f32 %v2559, %v2729
  %v2731 = vsub.f32 1.0, %v2730
  %v2732 = vmul.f32 %v2729, %v2731
  %v2733 = vadd.f32 %v2729, %v2732
  %vm2734 = vweird.f32 %v2559
  %vm2735 = vweird.f32 %v2729
  %vm2736 = vmor %vm2734, %vm2735
  %v2737 = vsel %vm2736, %v2729, %v2733
  %v2738 = vand.u32 2147483647, %v2559
  %vm2739 = vcmp.eq.f32.partialorder %v2738, 8.507059e+37
  %v2740 = vand.u32 %v2559, 2147483648
  %v2741 = vor.u32 1.1754944e-38, %v2740
  %v2742 = vsel %vm2739, %v2741, %v2737
  %v2743 = vmul.f32 1.0, %v2742
  %v2744 = vrcp.pop %v2560
  %v2745 = vmul.f32 %v2560, %v2744
  %v2746 = vsub.f32 1.0, %v2745
  %v2747 = vmul.f32 %v2744, %v2746
  %v2748 = vadd.f32 %v2744, %v2747
  %vm2749 = vweird.f32 %v2560
  %vm2750 = vweird.f32 %v2744
  %vm2751 = vmor %vm2749, %vm2750
  %v2752 = vsel %vm2751, %v2744, %v2748
  %v2753 = vand.u32 2147483647, %v2560
  %vm2754 = vcmp.eq.f32.partialorder %v2753, 8.507059e+37
  %v2755 = vand.u32 %v2560, 2147483648
  %v2756 = vor.u32 1.1754944e-38, %v2755
  %v2757 = vsel %vm2754, %v2756, %v2752
  %v2758 = vmul.f32 1.0, %v2757
  %v2759 = vrcp.pop %v2561
  %v2760 = vmul.f32 %v2561, %v2759
  %v2761 = vsub.f32 1.0, %v2760
  %v2762 = vmul.f32 %v2759, %v2761
  %v2763 = vadd.f32 %v2759, %v2762
  %vm2764 = vweird.f32 %v2561
  %vm2765 = vweird.f32 %v2759
  %vm2766 = vmor %vm2764, %vm2765
  %v2767 = vsel %vm2766, %v2759, %v2763
  %v2768 = vand.u32 2147483647, %v2561
  %vm2769 = vcmp.eq.f32.partialorder %v2768, 8.507059e+37
  %v2770 = vand.u32 %v2561, 2147483648
  %v2771 = vor.u32 1.1754944e-38, %v2770
  %v2772 = vsel %vm2769, %v2771, %v2767
  %v2773 = vmul.f32 1.0, %v2772
  %v2774 = vrcp.pop %v2562
  %v2775 = vmul.f32 %v2562, %v2774
  %v2776 = vsub.f32 1.0, %v2775
  %v2777 = vmul.f32 %v2774, %v2776
  %v2778 = vadd.f32 %v2774, %v2777
  %vm2779 = vweird.f32 %v2562
  %vm2780 = vweird.f32 %v2774
  %vm2781 = vmor %vm2779, %vm2780
  %v2782 = vsel %vm2781, %v2774, %v2778
  %v2783 = vand.u32 2147483647, %v2562
  %vm2784 = vcmp.eq.f32.partialorder %v2783, 8.507059e+37
  %v2785 = vand.u32 %v2562, 2147483648
  %v2786 = vor.u32 1.1754944e-38, %v2785
  %v2787 = vsel %vm2784, %v2786, %v2782
  %v2788 = vmul.f32 1.0, %v2787
  %v2789 = vrcp.pop %v2563
  %v2790 = vmul.f32 %v2563, %v2789
  %v2791 = vsub.f32 1.0, %v2790
  %v2792 = vmul.f32 %v2789, %v2791
  %v2793 = vadd.f32 %v2789, %v2792
  %vm2794 = vweird.f32 %v2563
  %vm2795 = vweird.f32 %v2789
  %vm2796 = vmor %vm2794, %vm2795
  %v2797 = vsel %vm2796, %v2789, %v2793
  %v2798 = vand.u32 2147483647, %v2563
  %vm2799 = vcmp.eq.f32.partialorder %v2798, 8.507059e+37
  %v2800 = vand.u32 %v2563, 2147483648
  %v2801 = vor.u32 1.1754944e-38, %v2800
  %v2802 = vsel %vm2799, %v2801, %v2797
  %v2803 = vmul.f32 1.0, %v2802
  %v2804 = vmul.f32 %v254, %v2085
  %v2805 = vmul.f32 %v307, %v2087
  %v2806 = vmul.f32 %v254, %v2089
  %v2807 = vmul.f32 %v307, %v2091
  %v2808 = vmul.f32 %v254, %v2093
  %v2809 = vmul.f32 %v307, %v2095
  %v2810 = vmul.f32 %v254, %v2097
  %v2811 = vmul.f32 %v307, %v2099
  %v2812 = vmul.f32 %v254, %v2101
  %v2813 = vmul.f32 %v307, %v2103
  %v2814 = vmul.f32 %v254, %v2105
  %v2815 = vmul.f32 %v307, %v2107
  %v2816 = vmul.f32 %v254, %v2109
  %v2817 = vmul.f32 %v307, %v2111
  %v2818 = vmul.f32 %v254, %v2113
  %v2819 = vmul.f32 %v307, %v2115
  %v2820 = vmul.f32 %v360, %v2133
  %v2821 = vmul.f32 %v413, %v2135
  %v2822 = vmul.f32 %v360, %v2137
  %v2823 = vmul.f32 %v413, %v2139
  %v2824 = vmul.f32 %v360, %v2141
  %v2825 = vmul.f32 %v413, %v2143
  %v2826 = vmul.f32 %v360, %v2145
  %v2827 = vmul.f32 %v413, %v2147
  %v2828 = vmul.f32 %v360, %v2149
  %v2829 = vmul.f32 %v413, %v2151
  %v2830 = vmul.f32 %v360, %v2153
  %v2831 = vmul.f32 %v413, %v2155
  %v2832 = vmul.f32 %v360, %v2157
  %v2833 = vmul.f32 %v413, %v2159
  %v2834 = vmul.f32 %v360, %v2161
  %v2835 = vmul.f32 %v413, %v2163
  %v2836 = vadd.f32 %v2804, %v2820
  %v2837 = vadd.f32 %v2805, %v2821
  %v2838 = vadd.f32 %v2806, %v2822
  %v2839 = vadd.f32 %v2807, %v2823
  %v2840 = vadd.f32 %v2808, %v2824
  %v2841 = vadd.f32 %v2809, %v2825
  %v2842 = vadd.f32 %v2810, %v2826
  %v2843 = vadd.f32 %v2811, %v2827
  %v2844 = vadd.f32 %v2812, %v2828
  %v2845 = vadd.f32 %v2813, %v2829
  %v2846 = vadd.f32 %v2814, %v2830
  %v2847 = vadd.f32 %v2815, %v2831
  %v2848 = vadd.f32 %v2816, %v2832
  %v2849 = vadd.f32 %v2817, %v2833
  %v2850 = vadd.f32 %v2818, %v2834
  %v2851 = vadd.f32 %v2819, %v2835
  %v2852 = vmul.f32 %v466, %v2181
  %v2853 = vmul.f32 %v519, %v2183
  %v2854 = vmul.f32 %v466, %v2185
  %v2855 = vmul.f32 %v519, %v2187
  %v2856 = vmul.f32 %v466, %v2189
  %v2857 = vmul.f32 %v519, %v2191
  %v2858 = vmul.f32 %v466, %v2193
  %v2859 = vmul.f32 %v519, %v2195
  %v2860 = vmul.f32 %v466, %v2197
  %v2861 = vmul.f32 %v519, %v2199
  %v2862 = vmul.f32 %v466, %v2201
  %v2863 = vmul.f32 %v519, %v2203
  %v2864 = vmul.f32 %v466, %v2205
  %v2865 = vmul.f32 %v519, %v2207
  %v2866 = vmul.f32 %v466, %v2209
  %v2867 = vmul.f32 %v519, %v2211
  %v2868 = vadd.f32 %v2836, %v2852
  %v2869 = vadd.f32 %v2837, %v2853
  %v2870 = vadd.f32 %v2838, %v2854
  %v2871 = vadd.f32 %v2839, %v2855
  %v2872 = vadd.f32 %v2840, %v2856
  %v2873 = vadd.f32 %v2841, %v2857
  %v2874 = vadd.f32 %v2842, %v2858
  %v2875 = vadd.f32 %v2843, %v2859
  %v2876 = vadd.f32 %v2844, %v2860
  %v2877 = vadd.f32 %v2845, %v2861
  %v2878 = vadd.f32 %v2846, %v2862
  %v2879 = vadd.f32 %v2847, %v2863
  %v2880 = vadd.f32 %v2848, %v2864
  %v2881 = vadd.f32 %v2849, %v2865
  %v2882 = vadd.f32 %v2850, %v2866
  %v2883 = vadd.f32 %v2851, %v2867
  %v2884 = vmul.f32 %v572, %v2229
  %v2885 = vmul.f32 %v625, %v2231
  %v2886 = vmul.f32 %v572, %v2233
  %v2887 = vmul.f32 %v625, %v2235
  %v2888 = vmul.f32 %v572, %v2237
  %v2889 = vmul.f32 %v625, %v2239
  %v2890 = vmul.f32 %v572, %v2241
  %v2891 = vmul.f32 %v625, %v2243
  %v2892 = vmul.f32 %v572, %v2245
  %v2893 = vmul.f32 %v625, %v2247
  %v2894 = vmul.f32 %v572, %v2249
  %v2895 = vmul.f32 %v625, %v2251
  %v2896 = vmul.f32 %v572, %v2253
  %v2897 = vmul.f32 %v625, %v2255
  %v2898 = vmul.f32 %v572, %v2257
  %v2899 = vmul.f32 %v625, %v2259
  %v2900 = vadd.f32 %v2868, %v2884
  %v2901 = vadd.f32 %v2869, %v2885
  %v2902 = vadd.f32 %v2870, %v2886
  %v2903 = vadd.f32 %v2871, %v2887
  %v2904 = vadd.f32 %v2872, %v2888
  %v2905 = vadd.f32 %v2873, %v2889
  %v2906 = vadd.f32 %v2874, %v2890
  %v2907 = vadd.f32 %v2875, %v2891
  %v2908 = vadd.f32 %v2876, %v2892
  %v2909 = vadd.f32 %v2877, %v2893
  %v2910 = vadd.f32 %v2878, %v2894
  %v2911 = vadd.f32 %v2879, %v2895
  %v2912 = vadd.f32 %v2880, %v2896
  %v2913 = vadd.f32 %v2881, %v2897
  %v2914 = vadd.f32 %v2882, %v2898
  %v2915 = vadd.f32 %v2883, %v2899
  %v2916 = vmul.f32 %v678, %v2277
  %v2917 = vmul.f32 %v731, %v2279
  %v2918 = vmul.f32 %v678, %v2281
  %v2919 = vmul.f32 %v731, %v2283
  %v2920 = vmul.f32 %v678, %v2285
  %v2921 = vmul.f32 %v731, %v2287
  %v2922 = vmul.f32 %v678, %v2289
  %v2923 = vmul.f32 %v731, %v2291
  %v2924 = vmul.f32 %v678, %v2293
  %v2925 = vmul.f32 %v731, %v2295
  %v2926 = vmul.f32 %v678, %v2297
  %v2927 = vmul.f32 %v731, %v2299
  %v2928 = vmul.f32 %v678, %v2301
  %v2929 = vmul.f32 %v731, %v2303
  %v2930 = vmul.f32 %v678, %v2305
  %v2931 = vmul.f32 %v731, %v2307
  %v2932 = vadd.f32 %v2900, %v2916
  %v2933 = vadd.f32 %v2901, %v2917
  %v2934 = vadd.f32 %v2902, %v2918
  %v2935 = vadd.f32 %v2903, %v2919
  %v2936 = vadd.f32 %v2904, %v2920
  %v2937 = vadd.f32 %v2905, %v2921
  %v2938 = vadd.f32 %v2906, %v2922
  %v2939 = vadd.f32 %v2907, %v2923
  %v2940 = vadd.f32 %v2908, %v2924
  %v2941 = vadd.f32 %v2909, %v2925
  %v2942 = vadd.f32 %v2910, %v2926
  %v2943 = vadd.f32 %v2911, %v2927
  %v2944 = vadd.f32 %v2912, %v2928
  %v2945 = vadd.f32 %v2913, %v2929
  %v2946 = vadd.f32 %v2914, %v2930
  %v2947 = vadd.f32 %v2915, %v2931
  %v2948 = vmul.f32 %v784, %v2325
  %v2949 = vmul.f32 %v837, %v2327
  %v2950 = vmul.f32 %v784, %v2329
  %v2951 = vmul.f32 %v837, %v2331
  %v2952 = vmul.f32 %v784, %v2333
  %v2953 = vmul.f32 %v837, %v2335
  %v2954 = vmul.f32 %v784, %v2337
  %v2955 = vmul.f32 %v837, %v2339
  %v2956 = vmul.f32 %v784, %v2341
  %v2957 = vmul.f32 %v837, %v2343
  %v2958 = vmul.f32 %v784, %v2345
  %v2959 = vmul.f32 %v837, %v2347
  %v2960 = vmul.f32 %v784, %v2349
  %v2961 = vmul.f32 %v837, %v2351
  %v2962 = vmul.f32 %v784, %v2353
  %v2963 = vmul.f32 %v837, %v2355
  %v2964 = vadd.f32 %v2932, %v2948
  %v2965 = vadd.f32 %v2933, %v2949
  %v2966 = vadd.f32 %v2934, %v2950
  %v2967 = vadd.f32 %v2935, %v2951
  %v2968 = vadd.f32 %v2936, %v2952
  %v2969 = vadd.f32 %v2937, %v2953
  %v2970 = vadd.f32 %v2938, %v2954
  %v2971 = vadd.f32 %v2939, %v2955
  %v2972 = vadd.f32 %v2940, %v2956
  %v2973 = vadd.f32 %v2941, %v2957
  %v2974 = vadd.f32 %v2942, %v2958
  %v2975 = vadd.f32 %v2943, %v2959
  %v2976 = vadd.f32 %v2944, %v2960
  %v2977 = vadd.f32 %v2945, %v2961
  %v2978 = vadd.f32 %v2946, %v2962
  %v2979 = vadd.f32 %v2947, %v2963
  %v2980 = vmul.f32 %v890, %v2373
  %v2981 = vmul.f32 %v943, %v2375
  %v2982 = vmul.f32 %v890, %v2377
  %v2983 = vmul.f32 %v943, %v2379
  %v2984 = vmul.f32 %v890, %v2381
  %v2985 = vmul.f32 %v943, %v2383
  %v2986 = vmul.f32 %v890, %v2385
  %v2987 = vmul.f32 %v943, %v2387
  %v2988 = vmul.f32 %v890, %v2389
  %v2989 = vmul.f32 %v943, %v2391
  %v2990 = vmul.f32 %v890, %v2393
  %v2991 = vmul.f32 %v943, %v2395
  %v2992 = vmul.f32 %v890, %v2397
  %v2993 = vmul.f32 %v943, %v2399
  %v2994 = vmul.f32 %v890, %v2401
  %v2995 = vmul.f32 %v943, %v2403
  %v2996 = vadd.f32 %v2964, %v2980
  %v2997 = vadd.f32 %v2965, %v2981
  %v2998 = vadd.f32 %v2966, %v2982
  %v2999 = vadd.f32 %v2967, %v2983
  %v3000 = vadd.f32 %v2968, %v2984
  %v3001 = vadd.f32 %v2969, %v2985
  %v3002 = vadd.f32 %v2970, %v2986
  %v3003 = vadd.f32 %v2971, %v2987
  %v3004 = vadd.f32 %v2972, %v2988
  %v3005 = vadd.f32 %v2973, %v2989
  %v3006 = vadd.f32 %v2974, %v2990
  %v3007 = vadd.f32 %v2975, %v2991
  %v3008 = vadd.f32 %v2976, %v2992
  %v3009 = vadd.f32 %v2977, %v2993
  %v3010 = vadd.f32 %v2978, %v2994
  %v3011 = vadd.f32 %v2979, %v2995
  %v3012 = vmul.f32 %v996, %v2421
  %v3013 = vmul.f32 %v1049, %v2423
  %v3014 = vmul.f32 %v996, %v2425
  %v3015 = vmul.f32 %v1049, %v2427
  %v3016 = vmul.f32 %v996, %v2429
  %v3017 = vmul.f32 %v1049, %v2431
  %v3018 = vmul.f32 %v996, %v2433
  %v3019 = vmul.f32 %v1049, %v2435
  %v3020 = vmul.f32 %v996, %v2437
  %v3021 = vmul.f32 %v1049, %v2439
  %v3022 = vmul.f32 %v996, %v2441
  %v3023 = vmul.f32 %v1049, %v2443
  %v3024 = vmul.f32 %v996, %v2445
  %v3025 = vmul.f32 %v1049, %v2447
  %v3026 = vmul.f32 %v996, %v2449
  %v3027 = vmul.f32 %v1049, %v2451
  %v3028 = vadd.f32 %v2996, %v3012
  %v3029 = vadd.f32 %v2997, %v3013
  %v3030 = vadd.f32 %v2998, %v3014
  %v3031 = vadd.f32 %v2999, %v3015
  %v3032 = vadd.f32 %v3000, %v3016
  %v3033 = vadd.f32 %v3001, %v3017
  %v3034 = vadd.f32 %v3002, %v3018
  %v3035 = vadd.f32 %v3003, %v3019
  %v3036 = vadd.f32 %v3004, %v3020
  %v3037 = vadd.f32 %v3005, %v3021
  %v3038 = vadd.f32 %v3006, %v3022
  %v3039 = vadd.f32 %v3007, %v3023
  %v3040 = vadd.f32 %v3008, %v3024
  %v3041 = vadd.f32 %v3009, %v3025
  %v3042 = vadd.f32 %v3010, %v3026
  %v3043 = vadd.f32 %v3011, %v3027
  %v3044 = vmul.f32 %v3028, %v2578
  %v3045 = vmul.f32 %v3029, %v2593
  %v3046 = vmul.f32 %v3030, %v2608
  %v3047 = vmul.f32 %v3031, %v2623
  %v3048 = vmul.f32 %v3032, %v2638
  %v3049 = vmul.f32 %v3033, %v2653
  %v3050 = vmul.f32 %v3034, %v2668
  %v3051 = vmul.f32 %v3035, %v2683
  %v3052 = vmul.f32 %v3036, %v2698
  %v3053 = vmul.f32 %v3037, %v2713
  %v3054 = vmul.f32 %v3038, %v2728
  %v3055 = vmul.f32 %v3039, %v2743
  %v3056 = vmul.f32 %v3040, %v2758
  %v3057 = vmul.f32 %v3041, %v2773
  %v3058 = vmul.f32 %v3042, %v2788
  %v3059 = vmul.f32 %v3043, %v2803
  %v3060 = vmul.f32 %v233, %v245
  %v3061 = vmul.f32 %v286, %v298
  %v3062 = vmul.f32 %v339, %v245
  %v3063 = vmul.f32 %v392, %v298
  %v3064 = vmul.f32 %v445, %v245
  %v3065 = vmul.f32 %v498, %v298
  %v3066 = vmul.f32 %v551, %v245
  %v3067 = vmul.f32 %v604, %v298
  %v3068 = vmul.f32 %v657, %v245
  %v3069 = vmul.f32 %v710, %v298
  %v3070 = vmul.f32 %v763, %v245
  %v3071 = vmul.f32 %v816, %v298
  %v3072 = vmul.f32 %v869, %v245
  %v3073 = vmul.f32 %v922, %v298
  %v3074 = vmul.f32 %v975, %v245
  %v3075 = vmul.f32 %v1028, %v298
  %v3076 = vrot.slane %v3060, 4
  %v3077 = vadd.f32 %v3060, %v3076
  %v3078 = vrot.slane %v3077, 2
  %v3079 = vadd.f32 %v3077, %v3078
  %v3080 = vrot.slane %v3079, 1
  %v3081 = vadd.f32 %v3079, %v3080
  %v3082 = vrot.slane %v3061, 4
  %v3083 = vadd.f32 %v3061, %v3082
  %v3084 = vrot.slane %v3083, 2
  %v3085 = vadd.f32 %v3083, %v3084
  %v3086 = vrot.slane %v3085, 1
  %v3087 = vadd.f32 %v3085, %v3086
  %v3088 = vrot.slane %v3062, 4
  %v3089 = vadd.f32 %v3062, %v3088
  %v3090 = vrot.slane %v3089, 2
  %v3091 = vadd.f32 %v3089, %v3090
  %v3092 = vrot.slane %v3091, 1
  %v3093 = vadd.f32 %v3091, %v3092
  %v3094 = vrot.slane %v3063, 4
  %v3095 = vadd.f32 %v3063, %v3094
  %v3096 = vrot.slane %v3095, 2
  %v3097 = vadd.f32 %v3095, %v3096
  %v3098 = vrot.slane %v3097, 1
  %v3099 = vadd.f32 %v3097, %v3098
  %v3100 = vrot.slane %v3064, 4
  %v3101 = vadd.f32 %v3064, %v3100
  %v3102 = vrot.slane %v3101, 2
  %v3103 = vadd.f32 %v3101, %v3102
  %v3104 = vrot.slane %v3103, 1
  %v3105 = vadd.f32 %v3103, %v3104
  %v3106 = vrot.slane %v3065, 4
  %v3107 = vadd.f32 %v3065, %v3106
  %v3108 = vrot.slane %v3107, 2
  %v3109 = vadd.f32 %v3107, %v3108
  %v3110 = vrot.slane %v3109, 1
  %v3111 = vadd.f32 %v3109, %v3110
  %v3112 = vrot.slane %v3066, 4
  %v3113 = vadd.f32 %v3066, %v3112
  %v3114 = vrot.slane %v3113, 2
  %v3115 = vadd.f32 %v3113, %v3114
  %v3116 = vrot.slane %v3115, 1
  %v3117 = vadd.f32 %v3115, %v3116
  %v3118 = vrot.slane %v3067, 4
  %v3119 = vadd.f32 %v3067, %v3118
  %v3120 = vrot.slane %v3119, 2
  %v3121 = vadd.f32 %v3119, %v3120
  %v3122 = vrot.slane %v3121, 1
  %v3123 = vadd.f32 %v3121, %v3122
  %v3124 = vrot.slane %v3068, 4
  %v3125 = vadd.f32 %v3068, %v3124
  %v3126 = vrot.slane %v3125, 2
  %v3127 = vadd.f32 %v3125, %v3126
  %v3128 = vrot.slane %v3127, 1
  %v3129 = vadd.f32 %v3127, %v3128
  %v3130 = vrot.slane %v3069, 4
  %v3131 = vadd.f32 %v3069, %v3130
  %v3132 = vrot.slane %v3131, 2
  %v3133 = vadd.f32 %v3131, %v3132
  %v3134 = vrot.slane %v3133, 1
  %v3135 = vadd.f32 %v3133, %v3134
  %v3136 = vrot.slane %v3070, 4
  %v3137 = vadd.f32 %v3070, %v3136
  %v3138 = vrot.slane %v3137, 2
  %v3139 = vadd.f32 %v3137, %v3138
  %v3140 = vrot.slane %v3139, 1
  %v3141 = vadd.f32 %v3139, %v3140
  %v3142 = vrot.slane %v3071, 4
  %v3143 = vadd.f32 %v3071, %v3142
  %v3144 = vrot.slane %v3143, 2
  %v3145 = vadd.f32 %v3143, %v3144
  %v3146 = vrot.slane %v3145, 1
  %v3147 = vadd.f32 %v3145, %v3146
  %v3148 = vrot.slane %v3072, 4
  %v3149 = vadd.f32 %v3072, %v3148
  %v3150 = vrot.slane %v3149, 2
  %v3151 = vadd.f32 %v3149, %v3150
  %v3152 = vrot.slane %v3151, 1
  %v3153 = vadd.f32 %v3151, %v3152
  %v3154 = vrot.slane %v3073, 4
  %v3155 = vadd.f32 %v3073, %v3154
  %v3156 = vrot.slane %v3155, 2
  %v3157 = vadd.f32 %v3155, %v3156
  %v3158 = vrot.slane %v3157, 1
  %v3159 = vadd.f32 %v3157, %v3158
  %v3160 = vrot.slane %v3074, 4
  %v3161 = vadd.f32 %v3074, %v3160
  %v3162 = vrot.slane %v3161, 2
  %v3163 = vadd.f32 %v3161, %v3162
  %v3164 = vrot.slane %v3163, 1
  %v3165 = vadd.f32 %v3163, %v3164
  %v3166 = vrot.slane %v3075, 4
  %v3167 = vadd.f32 %v3075, %v3166
  %v3168 = vrot.slane %v3167, 2
  %v3169 = vadd.f32 %v3167, %v3168
  %v3170 = vrot.slane %v3169, 1
  %v3171 = vadd.f32 %v3169, %v3170
  %v3172 = vmul.f32 %v233, %v351
  %v3173 = vmul.f32 %v286, %v404
  %v3174 = vmul.f32 %v339, %v351
  %v3175 = vmul.f32 %v392, %v404
  %v3176 = vmul.f32 %v445, %v351
  %v3177 = vmul.f32 %v498, %v404
  %v3178 = vmul.f32 %v551, %v351
  %v3179 = vmul.f32 %v604, %v404
  %v3180 = vmul.f32 %v657, %v351
  %v3181 = vmul.f32 %v710, %v404
  %v3182 = vmul.f32 %v763, %v351
  %v3183 = vmul.f32 %v816, %v404
  %v3184 = vmul.f32 %v869, %v351
  %v3185 = vmul.f32 %v922, %v404
  %v3186 = vmul.f32 %v975, %v351
  %v3187 = vmul.f32 %v1028, %v404
  %v3188 = vrot.slane %v3172, 4
  %v3189 = vadd.f32 %v3172, %v3188
  %v3190 = vrot.slane %v3189, 2
  %v3191 = vadd.f32 %v3189, %v3190
  %v3192 = vrot.slane %v3191, 1
  %v3193 = vadd.f32 %v3191, %v3192
  %v3194 = vrot.slane %v3173, 4
  %v3195 = vadd.f32 %v3173, %v3194
  %v3196 = vrot.slane %v3195, 2
  %v3197 = vadd.f32 %v3195, %v3196
  %v3198 = vrot.slane %v3197, 1
  %v3199 = vadd.f32 %v3197, %v3198
  %v3200 = vrot.slane %v3174, 4
  %v3201 = vadd.f32 %v3174, %v3200
  %v3202 = vrot.slane %v3201, 2
  %v3203 = vadd.f32 %v3201, %v3202
  %v3204 = vrot.slane %v3203, 1
  %v3205 = vadd.f32 %v3203, %v3204
  %v3206 = vrot.slane %v3175, 4
  %v3207 = vadd.f32 %v3175, %v3206
  %v3208 = vrot.slane %v3207, 2
  %v3209 = vadd.f32 %v3207, %v3208
  %v3210 = vrot.slane %v3209, 1
  %v3211 = vadd.f32 %v3209, %v3210
  %v3212 = vrot.slane %v3176, 4
  %v3213 = vadd.f32 %v3176, %v3212
  %v3214 = vrot.slane %v3213, 2
  %v3215 = vadd.f32 %v3213, %v3214
  %v3216 = vrot.slane %v3215, 1
  %v3217 = vadd.f32 %v3215, %v3216
  %v3218 = vrot.slane %v3177, 4
  %v3219 = vadd.f32 %v3177, %v3218
  %v3220 = vrot.slane %v3219, 2
  %v3221 = vadd.f32 %v3219, %v3220
  %v3222 = vrot.slane %v3221, 1
  %v3223 = vadd.f32 %v3221, %v3222
  %v3224 = vrot.slane %v3178, 4
  %v3225 = vadd.f32 %v3178, %v3224
  %v3226 = vrot.slane %v3225, 2
  %v3227 = vadd.f32 %v3225, %v3226
  %v3228 = vrot.slane %v3227, 1
  %v3229 = vadd.f32 %v3227, %v3228
  %v3230 = vrot.slane %v3179, 4
  %v3231 = vadd.f32 %v3179, %v3230
  %v3232 = vrot.slane %v3231, 2
  %v3233 = vadd.f32 %v3231, %v3232
  %v3234 = vrot.slane %v3233, 1
  %v3235 = vadd.f32 %v3233, %v3234
  %v3236 = vrot.slane %v3180, 4
  %v3237 = vadd.f32 %v3180, %v3236
  %v3238 = vrot.slane %v3237, 2
  %v3239 = vadd.f32 %v3237, %v3238
  %v3240 = vrot.slane %v3239, 1
  %v3241 = vadd.f32 %v3239, %v3240
  %v3242 = vrot.slane %v3181, 4
  %v3243 = vadd.f32 %v3181, %v3242
  %v3244 = vrot.slane %v3243, 2
  %v3245 = vadd.f32 %v3243, %v3244
  %v3246 = vrot.slane %v3245, 1
  %v3247 = vadd.f32 %v3245, %v3246
  %v3248 = vrot.slane %v3182, 4
  %v3249 = vadd.f32 %v3182, %v3248
  %v3250 = vrot.slane %v3249, 2
  %v3251 = vadd.f32 %v3249, %v3250
  %v3252 = vrot.slane %v3251, 1
  %v3253 = vadd.f32 %v3251, %v3252
  %v3254 = vrot.slane %v3183, 4
  %v3255 = vadd.f32 %v3183, %v3254
  %v3256 = vrot.slane %v3255, 2
  %v3257 = vadd.f32 %v3255, %v3256
  %v3258 = vrot.slane %v3257, 1
  %v3259 = vadd.f32 %v3257, %v3258
  %v3260 = vrot.slane %v3184, 4
  %v3261 = vadd.f32 %v3184, %v3260
  %v3262 = vrot.slane %v3261, 2
  %v3263 = vadd.f32 %v3261, %v3262
  %v3264 = vrot.slane %v3263, 1
  %v3265 = vadd.f32 %v3263, %v3264
  %v3266 = vrot.slane %v3185, 4
  %v3267 = vadd.f32 %v3185, %v3266
  %v3268 = vrot.slane %v3267, 2
  %v3269 = vadd.f32 %v3267, %v3268
  %v3270 = vrot.slane %v3269, 1
  %v3271 = vadd.f32 %v3269, %v3270
  %v3272 = vrot.slane %v3186, 4
  %v3273 = vadd.f32 %v3186, %v3272
  %v3274 = vrot.slane %v3273, 2
  %v3275 = vadd.f32 %v3273, %v3274
  %v3276 = vrot.slane %v3275, 1
  %v3277 = vadd.f32 %v3275, %v3276
  %v3278 = vrot.slane %v3187, 4
  %v3279 = vadd.f32 %v3187, %v3278
  %v3280 = vrot.slane %v3279, 2
  %v3281 = vadd.f32 %v3279, %v3280
  %v3282 = vrot.slane %v3281, 1
  %v3283 = vadd.f32 %v3281, %v3282
  %v3284 = vmul.f32 %v233, %v457
  %v3285 = vmul.f32 %v286, %v510
  %v3286 = vmul.f32 %v339, %v457
  %v3287 = vmul.f32 %v392, %v510
  %v3288 = vmul.f32 %v445, %v457
  %v3289 = vmul.f32 %v498, %v510
  %v3290 = vmul.f32 %v551, %v457
  %v3291 = vmul.f32 %v604, %v510
  %v3292 = vmul.f32 %v657, %v457
  %v3293 = vmul.f32 %v710, %v510
  %v3294 = vmul.f32 %v763, %v457
  %v3295 = vmul.f32 %v816, %v510
  %v3296 = vmul.f32 %v869, %v457
  %v3297 = vmul.f32 %v922, %v510
  %v3298 = vmul.f32 %v975, %v457
  %v3299 = vmul.f32 %v1028, %v510
  %v3300 = vrot.slane %v3284, 4
  %v3301 = vadd.f32 %v3284, %v3300
  %v3302 = vrot.slane %v3301, 2
  %v3303 = vadd.f32 %v3301, %v3302
  %v3304 = vrot.slane %v3303, 1
  %v3305 = vadd.f32 %v3303, %v3304
  %v3306 = vrot.slane %v3285, 4
  %v3307 = vadd.f32 %v3285, %v3306
  %v3308 = vrot.slane %v3307, 2
  %v3309 = vadd.f32 %v3307, %v3308
  %v3310 = vrot.slane %v3309, 1
  %v3311 = vadd.f32 %v3309, %v3310
  %v3312 = vrot.slane %v3286, 4
  %v3313 = vadd.f32 %v3286, %v3312
  %v3314 = vrot.slane %v3313, 2
  %v3315 = vadd.f32 %v3313, %v3314
  %v3316 = vrot.slane %v3315, 1
  %v3317 = vadd.f32 %v3315, %v3316
  %v3318 = vrot.slane %v3287, 4
  %v3319 = vadd.f32 %v3287, %v3318
  %v3320 = vrot.slane %v3319, 2
  %v3321 = vadd.f32 %v3319, %v3320
  %v3322 = vrot.slane %v3321, 1
  %v3323 = vadd.f32 %v3321, %v3322
  %v3324 = vrot.slane %v3288, 4
  %v3325 = vadd.f32 %v3288, %v3324
  %v3326 = vrot.slane %v3325, 2
  %v3327 = vadd.f32 %v3325, %v3326
  %v3328 = vrot.slane %v3327, 1
  %v3329 = vadd.f32 %v3327, %v3328
  %v3330 = vrot.slane %v3289, 4
  %v3331 = vadd.f32 %v3289, %v3330
  %v3332 = vrot.slane %v3331, 2
  %v3333 = vadd.f32 %v3331, %v3332
  %v3334 = vrot.slane %v3333, 1
  %v3335 = vadd.f32 %v3333, %v3334
  %v3336 = vrot.slane %v3290, 4
  %v3337 = vadd.f32 %v3290, %v3336
  %v3338 = vrot.slane %v3337, 2
  %v3339 = vadd.f32 %v3337, %v3338
  %v3340 = vrot.slane %v3339, 1
  %v3341 = vadd.f32 %v3339, %v3340
  %v3342 = vrot.slane %v3291, 4
  %v3343 = vadd.f32 %v3291, %v3342
  %v3344 = vrot.slane %v3343, 2
  %v3345 = vadd.f32 %v3343, %v3344
  %v3346 = vrot.slane %v3345, 1
  %v3347 = vadd.f32 %v3345, %v3346
  %v3348 = vrot.slane %v3292, 4
  %v3349 = vadd.f32 %v3292, %v3348
  %v3350 = vrot.slane %v3349, 2
  %v3351 = vadd.f32 %v3349, %v3350
  %v3352 = vrot.slane %v3351, 1
  %v3353 = vadd.f32 %v3351, %v3352
  %v3354 = vrot.slane %v3293, 4
  %v3355 = vadd.f32 %v3293, %v3354
  %v3356 = vrot.slane %v3355, 2
  %v3357 = vadd.f32 %v3355, %v3356
  %v3358 = vrot.slane %v3357, 1
  %v3359 = vadd.f32 %v3357, %v3358
  %v3360 = vrot.slane %v3294, 4
  %v3361 = vadd.f32 %v3294, %v3360
  %v3362 = vrot.slane %v3361, 2
  %v3363 = vadd.f32 %v3361, %v3362
  %v3364 = vrot.slane %v3363, 1
  %v3365 = vadd.f32 %v3363, %v3364
  %v3366 = vrot.slane %v3295, 4
  %v3367 = vadd.f32 %v3295, %v3366
  %v3368 = vrot.slane %v3367, 2
  %v3369 = vadd.f32 %v3367, %v3368
  %v3370 = vrot.slane %v3369, 1
  %v3371 = vadd.f32 %v3369, %v3370
  %v3372 = vrot.slane %v3296, 4
  %v3373 = vadd.f32 %v3296, %v3372
  %v3374 = vrot.slane %v3373, 2
  %v3375 = vadd.f32 %v3373, %v3374
  %v3376 = vrot.slane %v3375, 1
  %v3377 = vadd.f32 %v3375, %v3376
  %v3378 = vrot.slane %v3297, 4
  %v3379 = vadd.f32 %v3297, %v3378
  %v3380 = vrot.slane %v3379, 2
  %v3381 = vadd.f32 %v3379, %v3380
  %v3382 = vrot.slane %v3381, 1
  %v3383 = vadd.f32 %v3381, %v3382
  %v3384 = vrot.slane %v3298, 4
  %v3385 = vadd.f32 %v3298, %v3384
  %v3386 = vrot.slane %v3385, 2
  %v3387 = vadd.f32 %v3385, %v3386
  %v3388 = vrot.slane %v3387, 1
  %v3389 = vadd.f32 %v3387, %v3388
  %v3390 = vrot.slane %v3299, 4
  %v3391 = vadd.f32 %v3299, %v3390
  %v3392 = vrot.slane %v3391, 2
  %v3393 = vadd.f32 %v3391, %v3392
  %v3394 = vrot.slane %v3393, 1
  %v3395 = vadd.f32 %v3393, %v3394
  %v3396 = vmul.f32 %v233, %v563
  %v3397 = vmul.f32 %v286, %v616
  %v3398 = vmul.f32 %v339, %v563
  %v3399 = vmul.f32 %v392, %v616
  %v3400 = vmul.f32 %v445, %v563
  %v3401 = vmul.f32 %v498, %v616
  %v3402 = vmul.f32 %v551, %v563
  %v3403 = vmul.f32 %v604, %v616
  %v3404 = vmul.f32 %v657, %v563
  %v3405 = vmul.f32 %v710, %v616
  %v3406 = vmul.f32 %v763, %v563
  %v3407 = vmul.f32 %v816, %v616
  %v3408 = vmul.f32 %v869, %v563
  %v3409 = vmul.f32 %v922, %v616
  %v3410 = vmul.f32 %v975, %v563
  %v3411 = vmul.f32 %v1028, %v616
  %v3412 = vrot.slane %v3396, 4
  %v3413 = vadd.f32 %v3396, %v3412
  %v3414 = vrot.slane %v3413, 2
  %v3415 = vadd.f32 %v3413, %v3414
  %v3416 = vrot.slane %v3415, 1
  %v3417 = vadd.f32 %v3415, %v3416
  %v3418 = vrot.slane %v3397, 4
  %v3419 = vadd.f32 %v3397, %v3418
  %v3420 = vrot.slane %v3419, 2
  %v3421 = vadd.f32 %v3419, %v3420
  %v3422 = vrot.slane %v3421, 1
  %v3423 = vadd.f32 %v3421, %v3422
  %v3424 = vrot.slane %v3398, 4
  %v3425 = vadd.f32 %v3398, %v3424
  %v3426 = vrot.slane %v3425, 2
  %v3427 = vadd.f32 %v3425, %v3426
  %v3428 = vrot.slane %v3427, 1
  %v3429 = vadd.f32 %v3427, %v3428
  %v3430 = vrot.slane %v3399, 4
  %v3431 = vadd.f32 %v3399, %v3430
  %v3432 = vrot.slane %v3431, 2
  %v3433 = vadd.f32 %v3431, %v3432
  %v3434 = vrot.slane %v3433, 1
  %v3435 = vadd.f32 %v3433, %v3434
  %v3436 = vrot.slane %v3400, 4
  %v3437 = vadd.f32 %v3400, %v3436
  %v3438 = vrot.slane %v3437, 2
  %v3439 = vadd.f32 %v3437, %v3438
  %v3440 = vrot.slane %v3439, 1
  %v3441 = vadd.f32 %v3439, %v3440
  %v3442 = vrot.slane %v3401, 4
  %v3443 = vadd.f32 %v3401, %v3442
  %v3444 = vrot.slane %v3443, 2
  %v3445 = vadd.f32 %v3443, %v3444
  %v3446 = vrot.slane %v3445, 1
  %v3447 = vadd.f32 %v3445, %v3446
  %v3448 = vrot.slane %v3402, 4
  %v3449 = vadd.f32 %v3402, %v3448
  %v3450 = vrot.slane %v3449, 2
  %v3451 = vadd.f32 %v3449, %v3450
  %v3452 = vrot.slane %v3451, 1
  %v3453 = vadd.f32 %v3451, %v3452
  %v3454 = vrot.slane %v3403, 4
  %v3455 = vadd.f32 %v3403, %v3454
  %v3456 = vrot.slane %v3455, 2
  %v3457 = vadd.f32 %v3455, %v3456
  %v3458 = vrot.slane %v3457, 1
  %v3459 = vadd.f32 %v3457, %v3458
  %v3460 = vrot.slane %v3404, 4
  %v3461 = vadd.f32 %v3404, %v3460
  %v3462 = vrot.slane %v3461, 2
  %v3463 = vadd.f32 %v3461, %v3462
  %v3464 = vrot.slane %v3463, 1
  %v3465 = vadd.f32 %v3463, %v3464
  %v3466 = vrot.slane %v3405, 4
  %v3467 = vadd.f32 %v3405, %v3466
  %v3468 = vrot.slane %v3467, 2
  %v3469 = vadd.f32 %v3467, %v3468
  %v3470 = vrot.slane %v3469, 1
  %v3471 = vadd.f32 %v3469, %v3470
  %v3472 = vrot.slane %v3406, 4
  %v3473 = vadd.f32 %v3406, %v3472
  %v3474 = vrot.slane %v3473, 2
  %v3475 = vadd.f32 %v3473, %v3474
  %v3476 = vrot.slane %v3475, 1
  %v3477 = vadd.f32 %v3475, %v3476
  %v3478 = vrot.slane %v3407, 4
  %v3479 = vadd.f32 %v3407, %v3478
  %v3480 = vrot.slane %v3479, 2
  %v3481 = vadd.f32 %v3479, %v3480
  %v3482 = vrot.slane %v3481, 1
  %v3483 = vadd.f32 %v3481, %v3482
  %v3484 = vrot.slane %v3408, 4
  %v3485 = vadd.f32 %v3408, %v3484
  %v3486 = vrot.slane %v3485, 2
  %v3487 = vadd.f32 %v3485, %v3486
  %v3488 = vrot.slane %v3487, 1
  %v3489 = vadd.f32 %v3487, %v3488
  %v3490 = vrot.slane %v3409, 4
  %v3491 = vadd.f32 %v3409, %v3490
  %v3492 = vrot.slane %v3491, 2
  %v3493 = vadd.f32 %v3491, %v3492
  %v3494 = vrot.slane %v3493, 1
  %v3495 = vadd.f32 %v3493, %v3494
  %v3496 = vrot.slane %v3410, 4
  %v3497 = vadd.f32 %v3410, %v3496
  %v3498 = vrot.slane %v3497, 2
  %v3499 = vadd.f32 %v3497, %v3498
  %v3500 = vrot.slane %v3499, 1
  %v3501 = vadd.f32 %v3499, %v3500
  %v3502 = vrot.slane %v3411, 4
  %v3503 = vadd.f32 %v3411, %v3502
  %v3504 = vrot.slane %v3503, 2
  %v3505 = vadd.f32 %v3503, %v3504
  %v3506 = vrot.slane %v3505, 1
  %v3507 = vadd.f32 %v3505, %v3506
  %v3508 = vmul.f32 %v233, %v669
  %v3509 = vmul.f32 %v286, %v722
  %v3510 = vmul.f32 %v339, %v669
  %v3511 = vmul.f32 %v392, %v722
  %v3512 = vmul.f32 %v445, %v669
  %v3513 = vmul.f32 %v498, %v722
  %v3514 = vmul.f32 %v551, %v669
  %v3515 = vmul.f32 %v604, %v722
  %v3516 = vmul.f32 %v657, %v669
  %v3517 = vmul.f32 %v710, %v722
  %v3518 = vmul.f32 %v763, %v669
  %v3519 = vmul.f32 %v816, %v722
  %v3520 = vmul.f32 %v869, %v669
  %v3521 = vmul.f32 %v922, %v722
  %v3522 = vmul.f32 %v975, %v669
  %v3523 = vmul.f32 %v1028, %v722
  %v3524 = vrot.slane %v3508, 4
  %v3525 = vadd.f32 %v3508, %v3524
  %v3526 = vrot.slane %v3525, 2
  %v3527 = vadd.f32 %v3525, %v3526
  %v3528 = vrot.slane %v3527, 1
  %v3529 = vadd.f32 %v3527, %v3528
  %v3530 = vrot.slane %v3509, 4
  %v3531 = vadd.f32 %v3509, %v3530
  %v3532 = vrot.slane %v3531, 2
  %v3533 = vadd.f32 %v3531, %v3532
  %v3534 = vrot.slane %v3533, 1
  %v3535 = vadd.f32 %v3533, %v3534
  %v3536 = vrot.slane %v3510, 4
  %v3537 = vadd.f32 %v3510, %v3536
  %v3538 = vrot.slane %v3537, 2
  %v3539 = vadd.f32 %v3537, %v3538
  %v3540 = vrot.slane %v3539, 1
  %v3541 = vadd.f32 %v3539, %v3540
  %v3542 = vrot.slane %v3511, 4
  %v3543 = vadd.f32 %v3511, %v3542
  %v3544 = vrot.slane %v3543, 2
  %v3545 = vadd.f32 %v3543, %v3544
  %v3546 = vrot.slane %v3545, 1
  %v3547 = vadd.f32 %v3545, %v3546
  %v3548 = vrot.slane %v3512, 4
  %v3549 = vadd.f32 %v3512, %v3548
  %v3550 = vrot.slane %v3549, 2
  %v3551 = vadd.f32 %v3549, %v3550
  %v3552 = vrot.slane %v3551, 1
  %v3553 = vadd.f32 %v3551, %v3552
  %v3554 = vrot.slane %v3513, 4
  %v3555 = vadd.f32 %v3513, %v3554
  %v3556 = vrot.slane %v3555, 2
  %v3557 = vadd.f32 %v3555, %v3556
  %v3558 = vrot.slane %v3557, 1
  %v3559 = vadd.f32 %v3557, %v3558
  %v3560 = vrot.slane %v3514, 4
  %v3561 = vadd.f32 %v3514, %v3560
  %v3562 = vrot.slane %v3561, 2
  %v3563 = vadd.f32 %v3561, %v3562
  %v3564 = vrot.slane %v3563, 1
  %v3565 = vadd.f32 %v3563, %v3564
  %v3566 = vrot.slane %v3515, 4
  %v3567 = vadd.f32 %v3515, %v3566
  %v3568 = vrot.slane %v3567, 2
  %v3569 = vadd.f32 %v3567, %v3568
  %v3570 = vrot.slane %v3569, 1
  %v3571 = vadd.f32 %v3569, %v3570
  %v3572 = vrot.slane %v3516, 4
  %v3573 = vadd.f32 %v3516, %v3572
  %v3574 = vrot.slane %v3573, 2
  %v3575 = vadd.f32 %v3573, %v3574
  %v3576 = vrot.slane %v3575, 1
  %v3577 = vadd.f32 %v3575, %v3576
  %v3578 = vrot.slane %v3517, 4
  %v3579 = vadd.f32 %v3517, %v3578
  %v3580 = vrot.slane %v3579, 2
  %v3581 = vadd.f32 %v3579, %v3580
  %v3582 = vrot.slane %v3581, 1
  %v3583 = vadd.f32 %v3581, %v3582
  %v3584 = vrot.slane %v3518, 4
  %v3585 = vadd.f32 %v3518, %v3584
  %v3586 = vrot.slane %v3585, 2
  %v3587 = vadd.f32 %v3585, %v3586
  %v3588 = vrot.slane %v3587, 1
  %v3589 = vadd.f32 %v3587, %v3588
  %v3590 = vrot.slane %v3519, 4
  %v3591 = vadd.f32 %v3519, %v3590
  %v3592 = vrot.slane %v3591, 2
  %v3593 = vadd.f32 %v3591, %v3592
  %v3594 = vrot.slane %v3593, 1
  %v3595 = vadd.f32 %v3593, %v3594
  %v3596 = vrot.slane %v3520, 4
  %v3597 = vadd.f32 %v3520, %v3596
  %v3598 = vrot.slane %v3597, 2
  %v3599 = vadd.f32 %v3597, %v3598
  %v3600 = vrot.slane %v3599, 1
  %v3601 = vadd.f32 %v3599, %v3600
  %v3602 = vrot.slane %v3521, 4
  %v3603 = vadd.f32 %v3521, %v3602
  %v3604 = vrot.slane %v3603, 2
  %v3605 = vadd.f32 %v3603, %v3604
  %v3606 = vrot.slane %v3605, 1
  %v3607 = vadd.f32 %v3605, %v3606
  %v3608 = vrot.slane %v3522, 4
  %v3609 = vadd.f32 %v3522, %v3608
  %v3610 = vrot.slane %v3609, 2
  %v3611 = vadd.f32 %v3609, %v3610
  %v3612 = vrot.slane %v3611, 1
  %v3613 = vadd.f32 %v3611, %v3612
  %v3614 = vrot.slane %v3523, 4
  %v3615 = vadd.f32 %v3523, %v3614
  %v3616 = vrot.slane %v3615, 2
  %v3617 = vadd.f32 %v3615, %v3616
  %v3618 = vrot.slane %v3617, 1
  %v3619 = vadd.f32 %v3617, %v3618
  %v3620 = vmul.f32 %v233, %v775
  %v3621 = vmul.f32 %v286, %v828
  %v3622 = vmul.f32 %v339, %v775
  %v3623 = vmul.f32 %v392, %v828
  %v3624 = vmul.f32 %v445, %v775
  %v3625 = vmul.f32 %v498, %v828
  %v3626 = vmul.f32 %v551, %v775
  %v3627 = vmul.f32 %v604, %v828
  %v3628 = vmul.f32 %v657, %v775
  %v3629 = vmul.f32 %v710, %v828
  %v3630 = vmul.f32 %v763, %v775
  %v3631 = vmul.f32 %v816, %v828
  %v3632 = vmul.f32 %v869, %v775
  %v3633 = vmul.f32 %v922, %v828
  %v3634 = vmul.f32 %v975, %v775
  %v3635 = vmul.f32 %v1028, %v828
  %v3636 = vrot.slane %v3620, 4
  %v3637 = vadd.f32 %v3620, %v3636
  %v3638 = vrot.slane %v3637, 2
  %v3639 = vadd.f32 %v3637, %v3638
  %v3640 = vrot.slane %v3639, 1
  %v3641 = vadd.f32 %v3639, %v3640
  %v3642 = vrot.slane %v3621, 4
  %v3643 = vadd.f32 %v3621, %v3642
  %v3644 = vrot.slane %v3643, 2
  %v3645 = vadd.f32 %v3643, %v3644
  %v3646 = vrot.slane %v3645, 1
  %v3647 = vadd.f32 %v3645, %v3646
  %v3648 = vrot.slane %v3622, 4
  %v3649 = vadd.f32 %v3622, %v3648
  %v3650 = vrot.slane %v3649, 2
  %v3651 = vadd.f32 %v3649, %v3650
  %v3652 = vrot.slane %v3651, 1
  %v3653 = vadd.f32 %v3651, %v3652
  %v3654 = vrot.slane %v3623, 4
  %v3655 = vadd.f32 %v3623, %v3654
  %v3656 = vrot.slane %v3655, 2
  %v3657 = vadd.f32 %v3655, %v3656
  %v3658 = vrot.slane %v3657, 1
  %v3659 = vadd.f32 %v3657, %v3658
  %v3660 = vrot.slane %v3624, 4
  %v3661 = vadd.f32 %v3624, %v3660
  %v3662 = vrot.slane %v3661, 2
  %v3663 = vadd.f32 %v3661, %v3662
  %v3664 = vrot.slane %v3663, 1
  %v3665 = vadd.f32 %v3663, %v3664
  %v3666 = vrot.slane %v3625, 4
  %v3667 = vadd.f32 %v3625, %v3666
  %v3668 = vrot.slane %v3667, 2
  %v3669 = vadd.f32 %v3667, %v3668
  %v3670 = vrot.slane %v3669, 1
  %v3671 = vadd.f32 %v3669, %v3670
  %v3672 = vrot.slane %v3626, 4
  %v3673 = vadd.f32 %v3626, %v3672
  %v3674 = vrot.slane %v3673, 2
  %v3675 = vadd.f32 %v3673, %v3674
  %v3676 = vrot.slane %v3675, 1
  %v3677 = vadd.f32 %v3675, %v3676
  %v3678 = vrot.slane %v3627, 4
  %v3679 = vadd.f32 %v3627, %v3678
  %v3680 = vrot.slane %v3679, 2
  %v3681 = vadd.f32 %v3679, %v3680
  %v3682 = vrot.slane %v3681, 1
  %v3683 = vadd.f32 %v3681, %v3682
  %v3684 = vrot.slane %v3628, 4
  %v3685 = vadd.f32 %v3628, %v3684
  %v3686 = vrot.slane %v3685, 2
  %v3687 = vadd.f32 %v3685, %v3686
  %v3688 = vrot.slane %v3687, 1
  %v3689 = vadd.f32 %v3687, %v3688
  %v3690 = vrot.slane %v3629, 4
  %v3691 = vadd.f32 %v3629, %v3690
  %v3692 = vrot.slane %v3691, 2
  %v3693 = vadd.f32 %v3691, %v3692
  %v3694 = vrot.slane %v3693, 1
  %v3695 = vadd.f32 %v3693, %v3694
  %v3696 = vrot.slane %v3630, 4
  %v3697 = vadd.f32 %v3630, %v3696
  %v3698 = vrot.slane %v3697, 2
  %v3699 = vadd.f32 %v3697, %v3698
  %v3700 = vrot.slane %v3699, 1
  %v3701 = vadd.f32 %v3699, %v3700
  %v3702 = vrot.slane %v3631, 4
  %v3703 = vadd.f32 %v3631, %v3702
  %v3704 = vrot.slane %v3703, 2
  %v3705 = vadd.f32 %v3703, %v3704
  %v3706 = vrot.slane %v3705, 1
  %v3707 = vadd.f32 %v3705, %v3706
  %v3708 = vrot.slane %v3632, 4
  %v3709 = vadd.f32 %v3632, %v3708
  %v3710 = vrot.slane %v3709, 2
  %v3711 = vadd.f32 %v3709, %v3710
  %v3712 = vrot.slane %v3711, 1
  %v3713 = vadd.f32 %v3711, %v3712
  %v3714 = vrot.slane %v3633, 4
  %v3715 = vadd.f32 %v3633, %v3714
  %v3716 = vrot.slane %v3715, 2
  %v3717 = vadd.f32 %v3715, %v3716
  %v3718 = vrot.slane %v3717, 1
  %v3719 = vadd.f32 %v3717, %v3718
  %v3720 = vrot.slane %v3634, 4
  %v3721 = vadd.f32 %v3634, %v3720
  %v3722 = vrot.slane %v3721, 2
  %v3723 = vadd.f32 %v3721, %v3722
  %v3724 = vrot.slane %v3723, 1
  %v3725 = vadd.f32 %v3723, %v3724
  %v3726 = vrot.slane %v3635, 4
  %v3727 = vadd.f32 %v3635, %v3726
  %v3728 = vrot.slane %v3727, 2
  %v3729 = vadd.f32 %v3727, %v3728
  %v3730 = vrot.slane %v3729, 1
  %v3731 = vadd.f32 %v3729, %v3730
  %v3732 = vmul.f32 %v233, %v881
  %v3733 = vmul.f32 %v286, %v934
  %v3734 = vmul.f32 %v339, %v881
  %v3735 = vmul.f32 %v392, %v934
  %v3736 = vmul.f32 %v445, %v881
  %v3737 = vmul.f32 %v498, %v934
  %v3738 = vmul.f32 %v551, %v881
  %v3739 = vmul.f32 %v604, %v934
  %v3740 = vmul.f32 %v657, %v881
  %v3741 = vmul.f32 %v710, %v934
  %v3742 = vmul.f32 %v763, %v881
  %v3743 = vmul.f32 %v816, %v934
  %v3744 = vmul.f32 %v869, %v881
  %v3745 = vmul.f32 %v922, %v934
  %v3746 = vmul.f32 %v975, %v881
  %v3747 = vmul.f32 %v1028, %v934
  %v3748 = vrot.slane %v3732, 4
  %v3749 = vadd.f32 %v3732, %v3748
  %v3750 = vrot.slane %v3749, 2
  %v3751 = vadd.f32 %v3749, %v3750
  %v3752 = vrot.slane %v3751, 1
  %v3753 = vadd.f32 %v3751, %v3752
  %v3754 = vrot.slane %v3733, 4
  %v3755 = vadd.f32 %v3733, %v3754
  %v3756 = vrot.slane %v3755, 2
  %v3757 = vadd.f32 %v3755, %v3756
  %v3758 = vrot.slane %v3757, 1
  %v3759 = vadd.f32 %v3757, %v3758
  %v3760 = vrot.slane %v3734, 4
  %v3761 = vadd.f32 %v3734, %v3760
  %v3762 = vrot.slane %v3761, 2
  %v3763 = vadd.f32 %v3761, %v3762
  %v3764 = vrot.slane %v3763, 1
  %v3765 = vadd.f32 %v3763, %v3764
  %v3766 = vrot.slane %v3735, 4
  %v3767 = vadd.f32 %v3735, %v3766
  %v3768 = vrot.slane %v3767, 2
  %v3769 = vadd.f32 %v3767, %v3768
  %v3770 = vrot.slane %v3769, 1
  %v3771 = vadd.f32 %v3769, %v3770
  %v3772 = vrot.slane %v3736, 4
  %v3773 = vadd.f32 %v3736, %v3772
  %v3774 = vrot.slane %v3773, 2
  %v3775 = vadd.f32 %v3773, %v3774
  %v3776 = vrot.slane %v3775, 1
  %v3777 = vadd.f32 %v3775, %v3776
  %v3778 = vrot.slane %v3737, 4
  %v3779 = vadd.f32 %v3737, %v3778
  %v3780 = vrot.slane %v3779, 2
  %v3781 = vadd.f32 %v3779, %v3780
  %v3782 = vrot.slane %v3781, 1
  %v3783 = vadd.f32 %v3781, %v3782
  %v3784 = vrot.slane %v3738, 4
  %v3785 = vadd.f32 %v3738, %v3784
  %v3786 = vrot.slane %v3785, 2
  %v3787 = vadd.f32 %v3785, %v3786
  %v3788 = vrot.slane %v3787, 1
  %v3789 = vadd.f32 %v3787, %v3788
  %v3790 = vrot.slane %v3739, 4
  %v3791 = vadd.f32 %v3739, %v3790
  %v3792 = vrot.slane %v3791, 2
  %v3793 = vadd.f32 %v3791, %v3792
  %v3794 = vrot.slane %v3793, 1
  %v3795 = vadd.f32 %v3793, %v3794
  %v3796 = vrot.slane %v3740, 4
  %v3797 = vadd.f32 %v3740, %v3796
  %v3798 = vrot.slane %v3797, 2
  %v3799 = vadd.f32 %v3797, %v3798
  %v3800 = vrot.slane %v3799, 1
  %v3801 = vadd.f32 %v3799, %v3800
  %v3802 = vrot.slane %v3741, 4
  %v3803 = vadd.f32 %v3741, %v3802
  %v3804 = vrot.slane %v3803, 2
  %v3805 = vadd.f32 %v3803, %v3804
  %v3806 = vrot.slane %v3805, 1
  %v3807 = vadd.f32 %v3805, %v3806
  %v3808 = vrot.slane %v3742, 4
  %v3809 = vadd.f32 %v3742, %v3808
  %v3810 = vrot.slane %v3809, 2
  %v3811 = vadd.f32 %v3809, %v3810
  %v3812 = vrot.slane %v3811, 1
  %v3813 = vadd.f32 %v3811, %v3812
  %v3814 = vrot.slane %v3743, 4
  %v3815 = vadd.f32 %v3743, %v3814
  %v3816 = vrot.slane %v3815, 2
  %v3817 = vadd.f32 %v3815, %v3816
  %v3818 = vrot.slane %v3817, 1
  %v3819 = vadd.f32 %v3817, %v3818
  %v3820 = vrot.slane %v3744, 4
  %v3821 = vadd.f32 %v3744, %v3820
  %v3822 = vrot.slane %v3821, 2
  %v3823 = vadd.f32 %v3821, %v3822
  %v3824 = vrot.slane %v3823, 1
  %v3825 = vadd.f32 %v3823, %v3824
  %v3826 = vrot.slane %v3745, 4
  %v3827 = vadd.f32 %v3745, %v3826
  %v3828 = vrot.slane %v3827, 2
  %v3829 = vadd.f32 %v3827, %v3828
  %v3830 = vrot.slane %v3829, 1
  %v3831 = vadd.f32 %v3829, %v3830
  %v3832 = vrot.slane %v3746, 4
  %v3833 = vadd.f32 %v3746, %v3832
  %v3834 = vrot.slane %v3833, 2
  %v3835 = vadd.f32 %v3833, %v3834
  %v3836 = vrot.slane %v3835, 1
  %v3837 = vadd.f32 %v3835, %v3836
  %v3838 = vrot.slane %v3747, 4
  %v3839 = vadd.f32 %v3747, %v3838
  %v3840 = vrot.slane %v3839, 2
  %v3841 = vadd.f32 %v3839, %v3840
  %v3842 = vrot.slane %v3841, 1
  %v3843 = vadd.f32 %v3841, %v3842
  %v3844 = vmul.f32 %v233, %v987
  %v3845 = vmul.f32 %v286, %v1040
  %v3846 = vmul.f32 %v339, %v987
  %v3847 = vmul.f32 %v392, %v1040
  %v3848 = vmul.f32 %v445, %v987
  %v3849 = vmul.f32 %v498, %v1040
  %v3850 = vmul.f32 %v551, %v987
  %v3851 = vmul.f32 %v604, %v1040
  %v3852 = vmul.f32 %v657, %v987
  %v3853 = vmul.f32 %v710, %v1040
  %v3854 = vmul.f32 %v763, %v987
  %v3855 = vmul.f32 %v816, %v1040
  %v3856 = vmul.f32 %v869, %v987
  %v3857 = vmul.f32 %v922, %v1040
  %v3858 = vmul.f32 %v975, %v987
  %v3859 = vmul.f32 %v1028, %v1040
  %v3860 = vrot.slane %v3844, 4
  %v3861 = vadd.f32 %v3844, %v3860
  %v3862 = vrot.slane %v3861, 2
  %v3863 = vadd.f32 %v3861, %v3862
  %v3864 = vrot.slane %v3863, 1
  %v3865 = vadd.f32 %v3863, %v3864
  %v3866 = vrot.slane %v3845, 4
  %v3867 = vadd.f32 %v3845, %v3866
  %v3868 = vrot.slane %v3867, 2
  %v3869 = vadd.f32 %v3867, %v3868
  %v3870 = vrot.slane %v3869, 1
  %v3871 = vadd.f32 %v3869, %v3870
  %v3872 = vrot.slane %v3846, 4
  %v3873 = vadd.f32 %v3846, %v3872
  %v3874 = vrot.slane %v3873, 2
  %v3875 = vadd.f32 %v3873, %v3874
  %v3876 = vrot.slane %v3875, 1
  %v3877 = vadd.f32 %v3875, %v3876
  %v3878 = vrot.slane %v3847, 4
  %v3879 = vadd.f32 %v3847, %v3878
  %v3880 = vrot.slane %v3879, 2
  %v3881 = vadd.f32 %v3879, %v3880
  %v3882 = vrot.slane %v3881, 1
  %v3883 = vadd.f32 %v3881, %v3882
  %v3884 = vrot.slane %v3848, 4
  %v3885 = vadd.f32 %v3848, %v3884
  %v3886 = vrot.slane %v3885, 2
  %v3887 = vadd.f32 %v3885, %v3886
  %v3888 = vrot.slane %v3887, 1
  %v3889 = vadd.f32 %v3887, %v3888
  %v3890 = vrot.slane %v3849, 4
  %v3891 = vadd.f32 %v3849, %v3890
  %v3892 = vrot.slane %v3891, 2
  %v3893 = vadd.f32 %v3891, %v3892
  %v3894 = vrot.slane %v3893, 1
  %v3895 = vadd.f32 %v3893, %v3894
  %v3896 = vrot.slane %v3850, 4
  %v3897 = vadd.f32 %v3850, %v3896
  %v3898 = vrot.slane %v3897, 2
  %v3899 = vadd.f32 %v3897, %v3898
  %v3900 = vrot.slane %v3899, 1
  %v3901 = vadd.f32 %v3899, %v3900
  %v3902 = vrot.slane %v3851, 4
  %v3903 = vadd.f32 %v3851, %v3902
  %v3904 = vrot.slane %v3903, 2
  %v3905 = vadd.f32 %v3903, %v3904
  %v3906 = vrot.slane %v3905, 1
  %v3907 = vadd.f32 %v3905, %v3906
  %v3908 = vrot.slane %v3852, 4
  %v3909 = vadd.f32 %v3852, %v3908
  %v3910 = vrot.slane %v3909, 2
  %v3911 = vadd.f32 %v3909, %v3910
  %v3912 = vrot.slane %v3911, 1
  %v3913 = vadd.f32 %v3911, %v3912
  %v3914 = vrot.slane %v3853, 4
  %v3915 = vadd.f32 %v3853, %v3914
  %v3916 = vrot.slane %v3915, 2
  %v3917 = vadd.f32 %v3915, %v3916
  %v3918 = vrot.slane %v3917, 1
  %v3919 = vadd.f32 %v3917, %v3918
  %v3920 = vrot.slane %v3854, 4
  %v3921 = vadd.f32 %v3854, %v3920
  %v3922 = vrot.slane %v3921, 2
  %v3923 = vadd.f32 %v3921, %v3922
  %v3924 = vrot.slane %v3923, 1
  %v3925 = vadd.f32 %v3923, %v3924
  %v3926 = vrot.slane %v3855, 4
  %v3927 = vadd.f32 %v3855, %v3926
  %v3928 = vrot.slane %v3927, 2
  %v3929 = vadd.f32 %v3927, %v3928
  %v3930 = vrot.slane %v3929, 1
  %v3931 = vadd.f32 %v3929, %v3930
  %v3932 = vrot.slane %v3856, 4
  %v3933 = vadd.f32 %v3856, %v3932
  %v3934 = vrot.slane %v3933, 2
  %v3935 = vadd.f32 %v3933, %v3934
  %v3936 = vrot.slane %v3935, 1
  %v3937 = vadd.f32 %v3935, %v3936
  %v3938 = vrot.slane %v3857, 4
  %v3939 = vadd.f32 %v3857, %v3938
  %v3940 = vrot.slane %v3939, 2
  %v3941 = vadd.f32 %v3939, %v3940
  %v3942 = vrot.slane %v3941, 1
  %v3943 = vadd.f32 %v3941, %v3942
  %v3944 = vrot.slane %v3858, 4
  %v3945 = vadd.f32 %v3858, %v3944
  %v3946 = vrot.slane %v3945, 2
  %v3947 = vadd.f32 %v3945, %v3946
  %v3948 = vrot.slane %v3947, 1
  %v3949 = vadd.f32 %v3947, %v3948
  %v3950 = vrot.slane %v3859, 4
  %v3951 = vadd.f32 %v3859, %v3950
  %v3952 = vrot.slane %v3951, 2
  %v3953 = vadd.f32 %v3951, %v3952
  %v3954 = vrot.slane %v3953, 1
  %v3955 = vadd.f32 %v3953, %v3954
  %v3956 = vmax.f32 %v3081, %v3193
  %v3957 = vmax.f32 %v3087, %v3199
  %v3958 = vmax.f32 %v3093, %v3205
  %v3959 = vmax.f32 %v3099, %v3211
  %v3960 = vmax.f32 %v3105, %v3217
  %v3961 = vmax.f32 %v3111, %v3223
  %v3962 = vmax.f32 %v3117, %v3229
  %v3963 = vmax.f32 %v3123, %v3235
  %v3964 = vmax.f32 %v3129, %v3241
  %v3965 = vmax.f32 %v3135, %v3247
  %v3966 = vmax.f32 %v3141, %v3253
  %v3967 = vmax.f32 %v3147, %v3259
  %v3968 = vmax.f32 %v3153, %v3265
  %v3969 = vmax.f32 %v3159, %v3271
  %v3970 = vmax.f32 %v3165, %v3277
  %v3971 = vmax.f32 %v3171, %v3283
  %v3972 = vmax.f32 %v3956, %v3305
  %v3973 = vmax.f32 %v3957, %v3311
  %v3974 = vmax.f32 %v3958, %v3317
  %v3975 = vmax.f32 %v3959, %v3323
  %v3976 = vmax.f32 %v3960, %v3329
  %v3977 = vmax.f32 %v3961, %v3335
  %v3978 = vmax.f32 %v3962, %v3341
  %v3979 = vmax.f32 %v3963, %v3347
  %v3980 = vmax.f32 %v3964, %v3353
  %v3981 = vmax.f32 %v3965, %v3359
  %v3982 = vmax.f32 %v3966, %v3365
  %v3983 = vmax.f32 %v3967, %v3371
  %v3984 = vmax.f32 %v3968, %v3377
  %v3985 = vmax.f32 %v3969, %v3383
  %v3986 = vmax.f32 %v3970, %v3389
  %v3987 = vmax.f32 %v3971, %v3395
  %v3988 = vmax.f32 %v3972, %v3417
  %v3989 = vmax.f32 %v3973, %v3423
  %v3990 = vmax.f32 %v3974, %v3429
  %v3991 = vmax.f32 %v3975, %v3435
  %v3992 = vmax.f32 %v3976, %v3441
  %v3993 = vmax.f32 %v3977, %v3447
  %v3994 = vmax.f32 %v3978, %v3453
  %v3995 = vmax.f32 %v3979, %v3459
  %v3996 = vmax.f32 %v3980, %v3465
  %v3997 = vmax.f32 %v3981, %v3471
  %v3998 = vmax.f32 %v3982, %v3477
  %v3999 = vmax.f32 %v3983, %v3483
  %v4000 = vmax.f32 %v3984, %v3489
  %v4001 = vmax.f32 %v3985, %v3495
  %v4002 = vmax.f32 %v3986, %v3501
  %v4003 = vmax.f32 %v3987, %v3507
  %v4004 = vmax.f32 %v3988, %v3529
  %v4005 = vmax.f32 %v3989, %v3535
  %v4006 = vmax.f32 %v3990, %v3541
  %v4007 = vmax.f32 %v3991, %v3547
  %v4008 = vmax.f32 %v3992, %v3553
  %v4009 = vmax.f32 %v3993, %v3559
  %v4010 = vmax.f32 %v3994, %v3565
  %v4011 = vmax.f32 %v3995, %v3571
  %v4012 = vmax.f32 %v3996, %v3577
  %v4013 = vmax.f32 %v3997, %v3583
  %v4014 = vmax.f32 %v3998, %v3589
  %v4015 = vmax.f32 %v3999, %v3595
  %v4016 = vmax.f32 %v4000, %v3601
  %v4017 = vmax.f32 %v4001, %v3607
  %v4018 = vmax.f32 %v4002, %v3613
  %v4019 = vmax.f32 %v4003, %v3619
  %v4020 = vmax.f32 %v4004, %v3641
  %v4021 = vmax.f32 %v4005, %v3647
  %v4022 = vmax.f32 %v4006, %v3653
  %v4023 = vmax.f32 %v4007, %v3659
  %v4024 = vmax.f32 %v4008, %v3665
  %v4025 = vmax.f32 %v4009, %v3671
  %v4026 = vmax.f32 %v4010, %v3677
  %v4027 = vmax.f32 %v4011, %v3683
  %v4028 = vmax.f32 %v4012, %v3689
  %v4029 = vmax.f32 %v4013, %v3695
  %v4030 = vmax.f32 %v4014, %v3701
  %v4031 = vmax.f32 %v4015, %v3707
  %v4032 = vmax.f32 %v4016, %v3713
  %v4033 = vmax.f32 %v4017, %v3719
  %v4034 = vmax.f32 %v4018, %v3725
  %v4035 = vmax.f32 %v4019, %v3731
  %v4036 = vmax.f32 %v4020, %v3753
  %v4037 = vmax.f32 %v4021, %v3759
  %v4038 = vmax.f32 %v4022, %v3765
  %v4039 = vmax.f32 %v4023, %v3771
  %v4040 = vmax.f32 %v4024, %v3777
  %v4041 = vmax.f32 %v4025, %v3783
  %v4042 = vmax.f32 %v4026, %v3789
  %v4043 = vmax.f32 %v4027, %v3795
  %v4044 = vmax.f32 %v4028, %v3801
  %v4045 = vmax.f32 %v4029, %v3807
  %v4046 = vmax.f32 %v4030, %v3813
  %v4047 = vmax.f32 %v4031, %v3819
  %v4048 = vmax.f32 %v4032, %v3825
  %v4049 = vmax.f32 %v4033, %v3831
  %v4050 = vmax.f32 %v4034, %v3837
  %v4051 = vmax.f32 %v4035, %v3843
  %v4052 = vmax.f32 %v4036, %v3865
  %v4053 = vmax.f32 %v4037, %v3871
  %v4054 = vmax.f32 %v4038, %v3877
  %v4055 = vmax.f32 %v4039, %v3883
  %v4056 = vmax.f32 %v4040, %v3889
  %v4057 = vmax.f32 %v4041, %v3895
  %v4058 = vmax.f32 %v4042, %v3901
  %v4059 = vmax.f32 %v4043, %v3907
  %v4060 = vmax.f32 %v4044, %v3913
  %v4061 = vmax.f32 %v4045, %v3919
  %v4062 = vmax.f32 %v4046, %v3925
  %v4063 = vmax.f32 %v4047, %v3931
  %v4064 = vmax.f32 %v4048, %v3937
  %v4065 = vmax.f32 %v4049, %v3943
  %v4066 = vmax.f32 %v4050, %v3949
  %v4067 = vmax.f32 %v4051, %v3955
  %v4068 = vsub.f32 %v3081, %v4052
  %v4069 = vsub.f32 %v3087, %v4053
  %v4070 = vsub.f32 %v3093, %v4054
  %v4071 = vsub.f32 %v3099, %v4055
  %v4072 = vsub.f32 %v3105, %v4056
  %v4073 = vsub.f32 %v3111, %v4057
  %v4074 = vsub.f32 %v3117, %v4058
  %v4075 = vsub.f32 %v3123, %v4059
  %v4076 = vsub.f32 %v3129, %v4060
  %v4077 = vsub.f32 %v3135, %v4061
  %v4078 = vsub.f32 %v3141, %v4062
  %v4079 = vsub.f32 %v3147, %v4063
  %v4080 = vsub.f32 %v3153, %v4064
  %v4081 = vsub.f32 %v3159, %v4065
  %v4082 = vsub.f32 %v3165, %v4066
  %v4083 = vsub.f32 %v3171, %v4067
  %v4084 = vmul.f32 %v4068, 1.442695
  %v4085 = vpow.pop %v4084
  %v4086 = vmul.f32 %v4069, 1.442695
  %v4087 = vpow.pop %v4086
  %v4088 = vmul.f32 %v4070, 1.442695
  %v4089 = vpow.pop %v4088
  %v4090 = vmul.f32 %v4071, 1.442695
  %v4091 = vpow.pop %v4090
  %v4092 = vmul.f32 %v4072, 1.442695
  %v4093 = vpow.pop %v4092
  %v4094 = vmul.f32 %v4073, 1.442695
  %v4095 = vpow.pop %v4094
  %v4096 = vmul.f32 %v4074, 1.442695
  %v4097 = vpow.pop %v4096
  %v4098 = vmul.f32 %v4075, 1.442695
  %v4099 = vpow.pop %v4098
  %v4100 = vmul.f32 %v4076, 1.442695
  %v4101 = vpow.pop %v4100
  %v4102 = vmul.f32 %v4077, 1.442695
  %v4103 = vpow.pop %v4102
  %v4104 = vmul.f32 %v4078, 1.442695
  %v4105 = vpow.pop %v4104
  %v4106 = vmul.f32 %v4079, 1.442695
  %v4107 = vpow.pop %v4106
  %v4108 = vmul.f32 %v4080, 1.442695
  %v4109 = vpow.pop %v4108
  %v4110 = vmul.f32 %v4081, 1.442695
  %v4111 = vpow.pop %v4110
  %v4112 = vmul.f32 %v4082, 1.442695
  %v4113 = vpow.pop %v4112
  %v4114 = vmul.f32 %v4083, 1.442695
  %v4115 = vpow.pop %v4114
  %v4116 = vsub.f32 %v3193, %v4052
  %v4117 = vsub.f32 %v3199, %v4053
  %v4118 = vsub.f32 %v3205, %v4054
  %v4119 = vsub.f32 %v3211, %v4055
  %v4120 = vsub.f32 %v3217, %v4056
  %v4121 = vsub.f32 %v3223, %v4057
  %v4122 = vsub.f32 %v3229, %v4058
  %v4123 = vsub.f32 %v3235, %v4059
  %v4124 = vsub.f32 %v3241, %v4060
  %v4125 = vsub.f32 %v3247, %v4061
  %v4126 = vsub.f32 %v3253, %v4062
  %v4127 = vsub.f32 %v3259, %v4063
  %v4128 = vsub.f32 %v3265, %v4064
  %v4129 = vsub.f32 %v3271, %v4065
  %v4130 = vsub.f32 %v3277, %v4066
  %v4131 = vsub.f32 %v3283, %v4067
  %v4132 = vmul.f32 %v4116, 1.442695
  %v4133 = vpow.pop %v4132
  %v4134 = vmul.f32 %v4117, 1.442695
  %v4135 = vpow.pop %v4134
  %v4136 = vmul.f32 %v4118, 1.442695
  %v4137 = vpow.pop %v4136
  %v4138 = vmul.f32 %v4119, 1.442695
  %v4139 = vpow.pop %v4138
  %v4140 = vmul.f32 %v4120, 1.442695
  %v4141 = vpow.pop %v4140
  %v4142 = vmul.f32 %v4121, 1.442695
  %v4143 = vpow.pop %v4142
  %v4144 = vmul.f32 %v4122, 1.442695
  %v4145 = vpow.pop %v4144
  %v4146 = vmul.f32 %v4123, 1.442695
  %v4147 = vpow.pop %v4146
  %v4148 = vmul.f32 %v4124, 1.442695
  %v4149 = vpow.pop %v4148
  %v4150 = vmul.f32 %v4125, 1.442695
  %v4151 = vpow.pop %v4150
  %v4152 = vmul.f32 %v4126, 1.442695
  %v4153 = vpow.pop %v4152
  %v4154 = vmul.f32 %v4127, 1.442695
  %v4155 = vpow.pop %v4154
  %v4156 = vmul.f32 %v4128, 1.442695
  %v4157 = vpow.pop %v4156
  %v4158 = vmul.f32 %v4129, 1.442695
  %v4159 = vpow.pop %v4158
  %v4160 = vmul.f32 %v4130, 1.442695
  %v4161 = vpow.pop %v4160
  %v4162 = vmul.f32 %v4131, 1.442695
  %v4163 = vpow.pop %v4162
  %v4164 = vsub.f32 %v3305, %v4052
  %v4165 = vsub.f32 %v3311, %v4053
  %v4166 = vsub.f32 %v3317, %v4054
  %v4167 = vsub.f32 %v3323, %v4055
  %v4168 = vsub.f32 %v3329, %v4056
  %v4169 = vsub.f32 %v3335, %v4057
  %v4170 = vsub.f32 %v3341, %v4058
  %v4171 = vsub.f32 %v3347, %v4059
  %v4172 = vsub.f32 %v3353, %v4060
  %v4173 = vsub.f32 %v3359, %v4061
  %v4174 = vsub.f32 %v3365, %v4062
  %v4175 = vsub.f32 %v3371, %v4063
  %v4176 = vsub.f32 %v3377, %v4064
  %v4177 = vsub.f32 %v3383, %v4065
  %v4178 = vsub.f32 %v3389, %v4066
  %v4179 = vsub.f32 %v3395, %v4067
  %v4180 = vmul.f32 %v4164, 1.442695
  %v4181 = vpow.pop %v4180
  %v4182 = vmul.f32 %v4165, 1.442695
  %v4183 = vpow.pop %v4182
  %v4184 = vmul.f32 %v4166, 1.442695
  %v4185 = vpow.pop %v4184
  %v4186 = vmul.f32 %v4167, 1.442695
  %v4187 = vpow.pop %v4186
  %v4188 = vmul.f32 %v4168, 1.442695
  %v4189 = vpow.pop %v4188
  %v4190 = vmul.f32 %v4169, 1.442695
  %v4191 = vpow.pop %v4190
  %v4192 = vmul.f32 %v4170, 1.442695
  %v4193 = vpow.pop %v4192
  %v4194 = vmul.f32 %v4171, 1.442695
  %v4195 = vpow.pop %v4194
  %v4196 = vmul.f32 %v4172, 1.442695
  %v4197 = vpow.pop %v4196
  %v4198 = vmul.f32 %v4173, 1.442695
  %v4199 = vpow.pop %v4198
  %v4200 = vmul.f32 %v4174, 1.442695
  %v4201 = vpow.pop %v4200
  %v4202 = vmul.f32 %v4175, 1.442695
  %v4203 = vpow.pop %v4202
  %v4204 = vmul.f32 %v4176, 1.442695
  %v4205 = vpow.pop %v4204
  %v4206 = vmul.f32 %v4177, 1.442695
  %v4207 = vpow.pop %v4206
  %v4208 = vmul.f32 %v4178, 1.442695
  %v4209 = vpow.pop %v4208
  %v4210 = vmul.f32 %v4179, 1.442695
  %v4211 = vpow.pop %v4210
  %v4212 = vsub.f32 %v3417, %v4052
  %v4213 = vsub.f32 %v3423, %v4053
  %v4214 = vsub.f32 %v3429, %v4054
  %v4215 = vsub.f32 %v3435, %v4055
  %v4216 = vsub.f32 %v3441, %v4056
  %v4217 = vsub.f32 %v3447, %v4057
  %v4218 = vsub.f32 %v3453, %v4058
  %v4219 = vsub.f32 %v3459, %v4059
  %v4220 = vsub.f32 %v3465, %v4060
  %v4221 = vsub.f32 %v3471, %v4061
  %v4222 = vsub.f32 %v3477, %v4062
  %v4223 = vsub.f32 %v3483, %v4063
  %v4224 = vsub.f32 %v3489, %v4064
  %v4225 = vsub.f32 %v3495, %v4065
  %v4226 = vsub.f32 %v3501, %v4066
  %v4227 = vsub.f32 %v3507, %v4067
  %v4228 = vmul.f32 %v4212, 1.442695
  %v4229 = vpow.pop %v4228
  %v4230 = vmul.f32 %v4213, 1.442695
  %v4231 = vpow.pop %v4230
  %v4232 = vmul.f32 %v4214, 1.442695
  %v4233 = vpow.pop %v4232
  %v4234 = vmul.f32 %v4215, 1.442695
  %v4235 = vpow.pop %v4234
  %v4236 = vmul.f32 %v4216, 1.442695
  %v4237 = vpow.pop %v4236
  %v4238 = vmul.f32 %v4217, 1.442695
  %v4239 = vpow.pop %v4238
  %v4240 = vmul.f32 %v4218, 1.442695
  %v4241 = vpow.pop %v4240
  %v4242 = vmul.f32 %v4219, 1.442695
  %v4243 = vpow.pop %v4242
  %v4244 = vmul.f32 %v4220, 1.442695
  %v4245 = vpow.pop %v4244
  %v4246 = vmul.f32 %v4221, 1.442695
  %v4247 = vpow.pop %v4246
  %v4248 = vmul.f32 %v4222, 1.442695
  %v4249 = vpow.pop %v4248
  %v4250 = vmul.f32 %v4223, 1.442695
  %v4251 = vpow.pop %v4250
  %v4252 = vmul.f32 %v4224, 1.442695
  %v4253 = vpow.pop %v4252
  %v4254 = vmul.f32 %v4225, 1.442695
  %v4255 = vpow.pop %v4254
  %v4256 = vmul.f32 %v4226, 1.442695
  %v4257 = vpow.pop %v4256
  %v4258 = vmul.f32 %v4227, 1.442695
  %v4259 = vpow.pop %v4258
  %v4260 = vsub.f32 %v3529, %v4052
  %v4261 = vsub.f32 %v3535, %v4053
  %v4262 = vsub.f32 %v3541, %v4054
  %v4263 = vsub.f32 %v3547, %v4055
  %v4264 = vsub.f32 %v3553, %v4056
  %v4265 = vsub.f32 %v3559, %v4057
  %v4266 = vsub.f32 %v3565, %v4058
  %v4267 = vsub.f32 %v3571, %v4059
  %v4268 = vsub.f32 %v3577, %v4060
  %v4269 = vsub.f32 %v3583, %v4061
  %v4270 = vsub.f32 %v3589, %v4062
  %v4271 = vsub.f32 %v3595, %v4063
  %v4272 = vsub.f32 %v3601, %v4064
  %v4273 = vsub.f32 %v3607, %v4065
  %v4274 = vsub.f32 %v3613, %v4066
  %v4275 = vsub.f32 %v3619, %v4067
  %v4276 = vmul.f32 %v4260, 1.442695
  %v4277 = vpow.pop %v4276
  %v4278 = vmul.f32 %v4261, 1.442695
  %v4279 = vpow.pop %v4278
  %v4280 = vmul.f32 %v4262, 1.442695
  %v4281 = vpow.pop %v4280
  %v4282 = vmul.f32 %v4263, 1.442695
  %v4283 = vpow.pop %v4282
  %v4284 = vmul.f32 %v4264, 1.442695
  %v4285 = vpow.pop %v4284
  %v4286 = vmul.f32 %v4265, 1.442695
  %v4287 = vpow.pop %v4286
  %v4288 = vmul.f32 %v4266, 1.442695
  %v4289 = vpow.pop %v4288
  %v4290 = vmul.f32 %v4267, 1.442695
  %v4291 = vpow.pop %v4290
  %v4292 = vmul.f32 %v4268, 1.442695
  %v4293 = vpow.pop %v4292
  %v4294 = vmul.f32 %v4269, 1.442695
  %v4295 = vpow.pop %v4294
  %v4296 = vmul.f32 %v4270, 1.442695
  %v4297 = vpow.pop %v4296
  %v4298 = vmul.f32 %v4271, 1.442695
  %v4299 = vpow.pop %v4298
  %v4300 = vmul.f32 %v4272, 1.442695
  %v4301 = vpow.pop %v4300
  %v4302 = vmul.f32 %v4273, 1.442695
  %v4303 = vpow.pop %v4302
  %v4304 = vmul.f32 %v4274, 1.442695
  %v4305 = vpow.pop %v4304
  %v4306 = vmul.f32 %v4275, 1.442695
  %v4307 = vpow.pop %v4306
  %v4308 = vsub.f32 %v3641, %v4052
  %v4309 = vsub.f32 %v3647, %v4053
  %v4310 = vsub.f32 %v3653, %v4054
  %v4311 = vsub.f32 %v3659, %v4055
  %v4312 = vsub.f32 %v3665, %v4056
  %v4313 = vsub.f32 %v3671, %v4057
  %v4314 = vsub.f32 %v3677, %v4058
  %v4315 = vsub.f32 %v3683, %v4059
  %v4316 = vsub.f32 %v3689, %v4060
  %v4317 = vsub.f32 %v3695, %v4061
  %v4318 = vsub.f32 %v3701, %v4062
  %v4319 = vsub.f32 %v3707, %v4063
  %v4320 = vsub.f32 %v3713, %v4064
  %v4321 = vsub.f32 %v3719, %v4065
  %v4322 = vsub.f32 %v3725, %v4066
  %v4323 = vsub.f32 %v3731, %v4067
  %v4324 = vmul.f32 %v4308, 1.442695
  %v4325 = vpow.pop %v4324
  %v4326 = vmul.f32 %v4309, 1.442695
  %v4327 = vpow.pop %v4326
  %v4328 = vmul.f32 %v4310, 1.442695
  %v4329 = vpow.pop %v4328
  %v4330 = vmul.f32 %v4311, 1.442695
  %v4331 = vpow.pop %v4330
  %v4332 = vmul.f32 %v4312, 1.442695
  %v4333 = vpow.pop %v4332
  %v4334 = vmul.f32 %v4313, 1.442695
  %v4335 = vpow.pop %v4334
  %v4336 = vmul.f32 %v4314, 1.442695
  %v4337 = vpow.pop %v4336
  %v4338 = vmul.f32 %v4315, 1.442695
  %v4339 = vpow.pop %v4338
  %v4340 = vmul.f32 %v4316, 1.442695
  %v4341 = vpow.pop %v4340
  %v4342 = vmul.f32 %v4317, 1.442695
  %v4343 = vpow.pop %v4342
  %v4344 = vmul.f32 %v4318, 1.442695
  %v4345 = vpow.pop %v4344
  %v4346 = vmul.f32 %v4319, 1.442695
  %v4347 = vpow.pop %v4346
  %v4348 = vmul.f32 %v4320, 1.442695
  %v4349 = vpow.pop %v4348
  %v4350 = vmul.f32 %v4321, 1.442695
  %v4351 = vpow.pop %v4350
  %v4352 = vmul.f32 %v4322, 1.442695
  %v4353 = vpow.pop %v4352
  %v4354 = vmul.f32 %v4323, 1.442695
  %v4355 = vpow.pop %v4354
  %v4356 = vsub.f32 %v3753, %v4052
  %v4357 = vsub.f32 %v3759, %v4053
  %v4358 = vsub.f32 %v3765, %v4054
  %v4359 = vsub.f32 %v3771, %v4055
  %v4360 = vsub.f32 %v3777, %v4056
  %v4361 = vsub.f32 %v3783, %v4057
  %v4362 = vsub.f32 %v3789, %v4058
  %v4363 = vsub.f32 %v3795, %v4059
  %v4364 = vsub.f32 %v3801, %v4060
  %v4365 = vsub.f32 %v3807, %v4061
  %v4366 = vsub.f32 %v3813, %v4062
  %v4367 = vsub.f32 %v3819, %v4063
  %v4368 = vsub.f32 %v3825, %v4064
  %v4369 = vsub.f32 %v3831, %v4065
  %v4370 = vsub.f32 %v3837, %v4066
  %v4371 = vsub.f32 %v3843, %v4067
  %v4372 = vmul.f32 %v4356, 1.442695
  %v4373 = vpow.pop %v4372
  %v4374 = vmul.f32 %v4357, 1.442695
  %v4375 = vpow.pop %v4374
  %v4376 = vmul.f32 %v4358, 1.442695
  %v4377 = vpow.pop %v4376
  %v4378 = vmul.f32 %v4359, 1.442695
  %v4379 = vpow.pop %v4378
  %v4380 = vmul.f32 %v4360, 1.442695
  %v4381 = vpow.pop %v4380
  %v4382 = vmul.f32 %v4361, 1.442695
  %v4383 = vpow.pop %v4382
  %v4384 = vmul.f32 %v4362, 1.442695
  %v4385 = vpow.pop %v4384
  %v4386 = vmul.f32 %v4363, 1.442695
  %v4387 = vpow.pop %v4386
  %v4388 = vmul.f32 %v4364, 1.442695
  %v4389 = vpow.pop %v4388
  %v4390 = vmul.f32 %v4365, 1.442695
  %v4391 = vpow.pop %v4390
  %v4392 = vmul.f32 %v4366, 1.442695
  %v4393 = vpow.pop %v4392
  %v4394 = vmul.f32 %v4367, 1.442695
  %v4395 = vpow.pop %v4394
  %v4396 = vmul.f32 %v4368, 1.442695
  %v4397 = vpow.pop %v4396
  %v4398 = vmul.f32 %v4369, 1.442695
  %v4399 = vpow.pop %v4398
  %v4400 = vmul.f32 %v4370, 1.442695
  %v4401 = vpow.pop %v4400
  %v4402 = vmul.f32 %v4371, 1.442695
  %v4403 = vpow.pop %v4402
  %v4404 = vsub.f32 %v3865, %v4052
  %v4405 = vsub.f32 %v3871, %v4053
  %v4406 = vsub.f32 %v3877, %v4054
  %v4407 = vsub.f32 %v3883, %v4055
  %v4408 = vsub.f32 %v3889, %v4056
  %v4409 = vsub.f32 %v3895, %v4057
  %v4410 = vsub.f32 %v3901, %v4058
  %v4411 = vsub.f32 %v3907, %v4059
  %v4412 = vsub.f32 %v3913, %v4060
  %v4413 = vsub.f32 %v3919, %v4061
  %v4414 = vsub.f32 %v3925, %v4062
  %v4415 = vsub.f32 %v3931, %v4063
  %v4416 = vsub.f32 %v3937, %v4064
  %v4417 = vsub.f32 %v3943, %v4065
  %v4418 = vsub.f32 %v3949, %v4066
  %v4419 = vsub.f32 %v3955, %v4067
  %v4420 = vmul.f32 %v4404, 1.442695
  %v4421 = vpow.pop %v4420
  %v4422 = vmul.f32 %v4405, 1.442695
  %v4423 = vpow.pop %v4422
  %v4424 = vmul.f32 %v4406, 1.442695
  %v4425 = vpow.pop %v4424
  %v4426 = vmul.f32 %v4407, 1.442695
  %v4427 = vpow.pop %v4426
  %v4428 = vmul.f32 %v4408, 1.442695
  %v4429 = vpow.pop %v4428
  %v4430 = vmul.f32 %v4409, 1.442695
  %v4431 = vpow.pop %v4430
  %v4432 = vmul.f32 %v4410, 1.442695
  %v4433 = vpow.pop %v4432
  %v4434 = vmul.f32 %v4411, 1.442695
  %v4435 = vpow.pop %v4434
  %v4436 = vmul.f32 %v4412, 1.442695
  %v4437 = vpow.pop %v4436
  %v4438 = vmul.f32 %v4413, 1.442695
  %v4439 = vpow.pop %v4438
  %v4440 = vmul.f32 %v4414, 1.442695
  %v4441 = vpow.pop %v4440
  %v4442 = vmul.f32 %v4415, 1.442695
  %v4443 = vpow.pop %v4442
  %v4444 = vmul.f32 %v4416, 1.442695
  %v4445 = vpow.pop %v4444
  %v4446 = vmul.f32 %v4417, 1.442695
  %v4447 = vpow.pop %v4446
  %v4448 = vmul.f32 %v4418, 1.442695
  %v4449 = vpow.pop %v4448
  %v4450 = vmul.f32 %v4419, 1.442695
  %v4451 = vpow.pop %v4450
  %v4452 = vadd.f32 %v4085, %v4133
  %v4453 = vadd.f32 %v4087, %v4135
  %v4454 = vadd.f32 %v4089, %v4137
  %v4455 = vadd.f32 %v4091, %v4139
  %v4456 = vadd.f32 %v4093, %v4141
  %v4457 = vadd.f32 %v4095, %v4143
  %v4458 = vadd.f32 %v4097, %v4145
  %v4459 = vadd.f32 %v4099, %v4147
  %v4460 = vadd.f32 %v4101, %v4149
  %v4461 = vadd.f32 %v4103, %v4151
  %v4462 = vadd.f32 %v4105, %v4153
  %v4463 = vadd.f32 %v4107, %v4155
  %v4464 = vadd.f32 %v4109, %v4157
  %v4465 = vadd.f32 %v4111, %v4159
  %v4466 = vadd.f32 %v4113, %v4161
  %v4467 = vadd.f32 %v4115, %v4163
  %v4468 = vadd.f32 %v4452, %v4181
  %v4469 = vadd.f32 %v4453, %v4183
  %v4470 = vadd.f32 %v4454, %v4185
  %v4471 = vadd.f32 %v4455, %v4187
  %v4472 = vadd.f32 %v4456, %v4189
  %v4473 = vadd.f32 %v4457, %v4191
  %v4474 = vadd.f32 %v4458, %v4193
  %v4475 = vadd.f32 %v4459, %v4195
  %v4476 = vadd.f32 %v4460, %v4197
  %v4477 = vadd.f32 %v4461, %v4199
  %v4478 = vadd.f32 %v4462, %v4201
  %v4479 = vadd.f32 %v4463, %v4203
  %v4480 = vadd.f32 %v4464, %v4205
  %v4481 = vadd.f32 %v4465, %v4207
  %v4482 = vadd.f32 %v4466, %v4209
  %v4483 = vadd.f32 %v4467, %v4211
  %v4484 = vadd.f32 %v4468, %v4229
  %v4485 = vadd.f32 %v4469, %v4231
  %v4486 = vadd.f32 %v4470, %v4233
  %v4487 = vadd.f32 %v4471, %v4235
  %v4488 = vadd.f32 %v4472, %v4237
  %v4489 = vadd.f32 %v4473, %v4239
  %v4490 = vadd.f32 %v4474, %v4241
  %v4491 = vadd.f32 %v4475, %v4243
  %v4492 = vadd.f32 %v4476, %v4245
  %v4493 = vadd.f32 %v4477, %v4247
  %v4494 = vadd.f32 %v4478, %v4249
  %v4495 = vadd.f32 %v4479, %v4251
  %v4496 = vadd.f32 %v4480, %v4253
  %v4497 = vadd.f32 %v4481, %v4255
  %v4498 = vadd.f32 %v4482, %v4257
  %v4499 = vadd.f32 %v4483, %v4259
  %v4500 = vadd.f32 %v4484, %v4277
  %v4501 = vadd.f32 %v4485, %v4279
  %v4502 = vadd.f32 %v4486, %v4281
  %v4503 = vadd.f32 %v4487, %v4283
  %v4504 = vadd.f32 %v4488, %v4285
  %v4505 = vadd.f32 %v4489, %v4287
  %v4506 = vadd.f32 %v4490, %v4289
  %v4507 = vadd.f32 %v4491, %v4291
  %v4508 = vadd.f32 %v4492, %v4293
  %v4509 = vadd.f32 %v4493, %v4295
  %v4510 = vadd.f32 %v4494, %v4297
  %v4511 = vadd.f32 %v4495, %v4299
  %v4512 = vadd.f32 %v4496, %v4301
  %v4513 = vadd.f32 %v4497, %v4303
  %v4514 = vadd.f32 %v4498, %v4305
  %v4515 = vadd.f32 %v4499, %v4307
  %v4516 = vadd.f32 %v4500, %v4325
  %v4517 = vadd.f32 %v4501, %v4327
  %v4518 = vadd.f32 %v4502, %v4329
  %v4519 = vadd.f32 %v4503, %v4331
  %v4520 = vadd.f32 %v4504, %v4333
  %v4521 = vadd.f32 %v4505, %v4335
  %v4522 = vadd.f32 %v4506, %v4337
  %v4523 = vadd.f32 %v4507, %v4339
  %v4524 = vadd.f32 %v4508, %v4341
  %v4525 = vadd.f32 %v4509, %v4343
  %v4526 = vadd.f32 %v4510, %v4345
  %v4527 = vadd.f32 %v4511, %v4347
  %v4528 = vadd.f32 %v4512, %v4349
  %v4529 = vadd.f32 %v4513, %v4351
  %v4530 = vadd.f32 %v4514, %v4353
  %v4531 = vadd.f32 %v4515, %v4355
  %v4532 = vadd.f32 %v4516, %v4373
  %v4533 = vadd.f32 %v4517, %v4375
  %v4534 = vadd.f32 %v4518, %v4377
  %v4535 = vadd.f32 %v4519, %v4379
  %v4536 = vadd.f32 %v4520, %v4381
  %v4537 = vadd.f32 %v4521, %v4383
  %v4538 = vadd.f32 %v4522, %v4385
  %v4539 = vadd.f32 %v4523, %v4387
  %v4540 = vadd.f32 %v4524, %v4389
  %v4541 = vadd.f32 %v4525, %v4391
  %v4542 = vadd.f32 %v4526, %v4393
  %v4543 = vadd.f32 %v4527, %v4395
  %v4544 = vadd.f32 %v4528, %v4397
  %v4545 = vadd.f32 %v4529, %v4399
  %v4546 = vadd.f32 %v4530, %v4401
  %v4547 = vadd.f32 %v4531, %v4403
  %v4548 = vadd.f32 %v4532, %v4421
  %v4549 = vadd.f32 %v4533, %v4423
  %v4550 = vadd.f32 %v4534, %v4425
  %v4551 = vadd.f32 %v4535, %v4427
  %v4552 = vadd.f32 %v4536, %v4429
  %v4553 = vadd.f32 %v4537, %v4431
  %v4554 = vadd.f32 %v4538, %v4433
  %v4555 = vadd.f32 %v4539, %v4435
  %v4556 = vadd.f32 %v4540, %v4437
  %v4557 = vadd.f32 %v4541, %v4439
  %v4558 = vadd.f32 %v4542, %v4441
  %v4559 = vadd.f32 %v4543, %v4443
  %v4560 = vadd.f32 %v4544, %v4445
  %v4561 = vadd.f32 %v4545, %v4447
  %v4562 = vadd.f32 %v4546, %v4449
  %v4563 = vadd.f32 %v4547, %v4451
  %v4564 = vrcp.pop %v4548
  %v4565 = vmul.f32 %v4548, %v4564
  %v4566 = vsub.f32 1.0, %v4565
  %v4567 = vmul.f32 %v4564, %v4566
  %v4568 = vadd.f32 %v4564, %v4567
  %vm4569 = vweird.f32 %v4548
  %vm4570 = vweird.f32 %v4564
  %vm4571 = vmor %vm4569, %vm4570
  %v4572 = vsel %vm4571, %v4564, %v4568
  %v4573 = vand.u32 2147483647, %v4548
  %vm4574 = vcmp.eq.f32.partialorder %v4573, 8.507059e+37
  %v4575 = vand.u32 %v4548, 2147483648
  %v4576 = vor.u32 1.1754944e-38, %v4575
  %v4577 = vsel %vm4574, %v4576, %v4572
  %v4578 = vmul.f32 1.0, %v4577
  %v4579 = vrcp.pop %v4549
  %v4580 = vmul.f32 %v4549, %v4579
  %v4581 = vsub.f32 1.0, %v4580
  %v4582 = vmul.f32 %v4579, %v4581
  %v4583 = vadd.f32 %v4579, %v4582
  %vm4584 = vweird.f32 %v4549
  %vm4585 = vweird.f32 %v4579
  %vm4586 = vmor %vm4584, %vm4585
  %v4587 = vsel %vm4586, %v4579, %v4583
  %v4588 = vand.u32 2147483647, %v4549
  %vm4589 = vcmp.eq.f32.partialorder %v4588, 8.507059e+37
  %v4590 = vand.u32 %v4549, 2147483648
  %v4591 = vor.u32 1.1754944e-38, %v4590
  %v4592 = vsel %vm4589, %v4591, %v4587
  %v4593 = vmul.f32 1.0, %v4592
  %v4594 = vrcp.pop %v4550
  %v4595 = vmul.f32 %v4550, %v4594
  %v4596 = vsub.f32 1.0, %v4595
  %v4597 = vmul.f32 %v4594, %v4596
  %v4598 = vadd.f32 %v4594, %v4597
  %vm4599 = vweird.f32 %v4550
  %vm4600 = vweird.f32 %v4594
  %vm4601 = vmor %vm4599, %vm4600
  %v4602 = vsel %vm4601, %v4594, %v4598
  %v4603 = vand.u32 2147483647, %v4550
  %vm4604 = vcmp.eq.f32.partialorder %v4603, 8.507059e+37
  %v4605 = vand.u32 %v4550, 2147483648
  %v4606 = vor.u32 1.1754944e-38, %v4605
  %v4607 = vsel %vm4604, %v4606, %v4602
  %v4608 = vmul.f32 1.0, %v4607
  %v4609 = vrcp.pop %v4551
  %v4610 = vmul.f32 %v4551, %v4609
  %v4611 = vsub.f32 1.0, %v4610
  %v4612 = vmul.f32 %v4609, %v4611
  %v4613 = vadd.f32 %v4609, %v4612
  %vm4614 = vweird.f32 %v4551
  %vm4615 = vweird.f32 %v4609
  %vm4616 = vmor %vm4614, %vm4615
  %v4617 = vsel %vm4616, %v4609, %v4613
  %v4618 = vand.u32 2147483647, %v4551
  %vm4619 = vcmp.eq.f32.partialorder %v4618, 8.507059e+37
  %v4620 = vand.u32 %v4551, 2147483648
  %v4621 = vor.u32 1.1754944e-38, %v4620
  %v4622 = vsel %vm4619, %v4621, %v4617
  %v4623 = vmul.f32 1.0, %v4622
  %v4624 = vrcp.pop %v4552
  %v4625 = vmul.f32 %v4552, %v4624
  %v4626 = vsub.f32 1.0, %v4625
  %v4627 = vmul.f32 %v4624, %v4626
  %v4628 = vadd.f32 %v4624, %v4627
  %vm4629 = vweird.f32 %v4552
  %vm4630 = vweird.f32 %v4624
  %vm4631 = vmor %vm4629, %vm4630
  %v4632 = vsel %vm4631, %v4624, %v4628
  %v4633 = vand.u32 2147483647, %v4552
  %vm4634 = vcmp.eq.f32.partialorder %v4633, 8.507059e+37
  %v4635 = vand.u32 %v4552, 2147483648
  %v4636 = vor.u32 1.1754944e-38, %v4635
  %v4637 = vsel %vm4634, %v4636, %v4632
  %v4638 = vmul.f32 1.0, %v4637
  %v4639 = vrcp.pop %v4553
  %v4640 = vmul.f32 %v4553, %v4639
  %v4641 = vsub.f32 1.0, %v4640
  %v4642 = vmul.f32 %v4639, %v4641
  %v4643 = vadd.f32 %v4639, %v4642
  %vm4644 = vweird.f32 %v4553
  %vm4645 = vweird.f32 %v4639
  %vm4646 = vmor %vm4644, %vm4645
  %v4647 = vsel %vm4646, %v4639, %v4643
  %v4648 = vand.u32 2147483647, %v4553
  %vm4649 = vcmp.eq.f32.partialorder %v4648, 8.507059e+37
  %v4650 = vand.u32 %v4553, 2147483648
  %v4651 = vor.u32 1.1754944e-38, %v4650
  %v4652 = vsel %vm4649, %v4651, %v4647
  %v4653 = vmul.f32 1.0, %v4652
  %v4654 = vrcp.pop %v4554
  %v4655 = vmul.f32 %v4554, %v4654
  %v4656 = vsub.f32 1.0, %v4655
  %v4657 = vmul.f32 %v4654, %v4656
  %v4658 = vadd.f32 %v4654, %v4657
  %vm4659 = vweird.f32 %v4554
  %vm4660 = vweird.f32 %v4654
  %vm4661 = vmor %vm4659, %vm4660
  %v4662 = vsel %vm4661, %v4654, %v4658
  %v4663 = vand.u32 2147483647, %v4554
  %vm4664 = vcmp.eq.f32.partialorder %v4663, 8.507059e+37
  %v4665 = vand.u32 %v4554, 2147483648
  %v4666 = vor.u32 1.1754944e-38, %v4665
  %v4667 = vsel %vm4664, %v4666, %v4662
  %v4668 = vmul.f32 1.0, %v4667
  %v4669 = vrcp.pop %v4555
  %v4670 = vmul.f32 %v4555, %v4669
  %v4671 = vsub.f32 1.0, %v4670
  %v4672 = vmul.f32 %v4669, %v4671
  %v4673 = vadd.f32 %v4669, %v4672
  %vm4674 = vweird.f32 %v4555
  %vm4675 = vweird.f32 %v4669
  %vm4676 = vmor %vm4674, %vm4675
  %v4677 = vsel %vm4676, %v4669, %v4673
  %v4678 = vand.u32 2147483647, %v4555
  %vm4679 = vcmp.eq.f32.partialorder %v4678, 8.507059e+37
  %v4680 = vand.u32 %v4555, 2147483648
  %v4681 = vor.u32 1.1754944e-38, %v4680
  %v4682 = vsel %vm4679, %v4681, %v4677
  %v4683 = vmul.f32 1.0, %v4682
  %v4684 = vrcp.pop %v4556
  %v4685 = vmul.f32 %v4556, %v4684
  %v4686 = vsub.f32 1.0, %v4685
  %v4687 = vmul.f32 %v4684, %v4686
  %v4688 = vadd.f32 %v4684, %v4687
  %vm4689 = vweird.f32 %v4556
  %vm4690 = vweird.f32 %v4684
  %vm4691 = vmor %vm4689, %vm4690
  %v4692 = vsel %vm4691, %v4684, %v4688
  %v4693 = vand.u32 2147483647, %v4556
  %vm4694 = vcmp.eq.f32.partialorder %v4693, 8.507059e+37
  %v4695 = vand.u32 %v4556, 2147483648
  %v4696 = vor.u32 1.1754944e-38, %v4695
  %v4697 = vsel %vm4694, %v4696, %v4692
  %v4698 = vmul.f32 1.0, %v4697
  %v4699 = vrcp.pop %v4557
  %v4700 = vmul.f32 %v4557, %v4699
  %v4701 = vsub.f32 1.0, %v4700
  %v4702 = vmul.f32 %v4699, %v4701
  %v4703 = vadd.f32 %v4699, %v4702
  %vm4704 = vweird.f32 %v4557
  %vm4705 = vweird.f32 %v4699
  %vm4706 = vmor %vm4704, %vm4705
  %v4707 = vsel %vm4706, %v4699, %v4703
  %v4708 = vand.u32 2147483647, %v4557
  %vm4709 = vcmp.eq.f32.partialorder %v4708, 8.507059e+37
  %v4710 = vand.u32 %v4557, 2147483648
  %v4711 = vor.u32 1.1754944e-38, %v4710
  %v4712 = vsel %vm4709, %v4711, %v4707
  %v4713 = vmul.f32 1.0, %v4712
  %v4714 = vrcp.pop %v4558
  %v4715 = vmul.f32 %v4558, %v4714
  %v4716 = vsub.f32 1.0, %v4715
  %v4717 = vmul.f32 %v4714, %v4716
  %v4718 = vadd.f32 %v4714, %v4717
  %vm4719 = vweird.f32 %v4558
  %vm4720 = vweird.f32 %v4714
  %vm4721 = vmor %vm4719, %vm4720
  %v4722 = vsel %vm4721, %v4714, %v4718
  %v4723 = vand.u32 2147483647, %v4558
  %vm4724 = vcmp.eq.f32.partialorder %v4723, 8.507059e+37
  %v4725 = vand.u32 %v4558, 2147483648
  %v4726 = vor.u32 1.1754944e-38, %v4725
  %v4727 = vsel %vm4724, %v4726, %v4722
  %v4728 = vmul.f32 1.0, %v4727
  %v4729 = vrcp.pop %v4559
  %v4730 = vmul.f32 %v4559, %v4729
  %v4731 = vsub.f32 1.0, %v4730
  %v4732 = vmul.f32 %v4729, %v4731
  %v4733 = vadd.f32 %v4729, %v4732
  %vm4734 = vweird.f32 %v4559
  %vm4735 = vweird.f32 %v4729
  %vm4736 = vmor %vm4734, %vm4735
  %v4737 = vsel %vm4736, %v4729, %v4733
  %v4738 = vand.u32 2147483647, %v4559
  %vm4739 = vcmp.eq.f32.partialorder %v4738, 8.507059e+37
  %v4740 = vand.u32 %v4559, 2147483648
  %v4741 = vor.u32 1.1754944e-38, %v4740
  %v4742 = vsel %vm4739, %v4741, %v4737
  %v4743 = vmul.f32 1.0, %v4742
  %v4744 = vrcp.pop %v4560
  %v4745 = vmul.f32 %v4560, %v4744
  %v4746 = vsub.f32 1.0, %v4745
  %v4747 = vmul.f32 %v4744, %v4746
  %v4748 = vadd.f32 %v4744, %v4747
  %vm4749 = vweird.f32 %v4560
  %vm4750 = vweird.f32 %v4744
  %vm4751 = vmor %vm4749, %vm4750
  %v4752 = vsel %vm4751, %v4744, %v4748
  %v4753 = vand.u32 2147483647, %v4560
  %vm4754 = vcmp.eq.f32.partialorder %v4753, 8.507059e+37
  %v4755 = vand.u32 %v4560, 2147483648
  %v4756 = vor.u32 1.1754944e-38, %v4755
  %v4757 = vsel %vm4754, %v4756, %v4752
  %v4758 = vmul.f32 1.0, %v4757
  %v4759 = vrcp.pop %v4561
  %v4760 = vmul.f32 %v4561, %v4759
  %v4761 = vsub.f32 1.0, %v4760
  %v4762 = vmul.f32 %v4759, %v4761
  %v4763 = vadd.f32 %v4759, %v4762
  %vm4764 = vweird.f32 %v4561
  %vm4765 = vweird.f32 %v4759
  %vm4766 = vmor %vm4764, %vm4765
  %v4767 = vsel %vm4766, %v4759, %v4763
  %v4768 = vand.u32 2147483647, %v4561
  %vm4769 = vcmp.eq.f32.partialorder %v4768, 8.507059e+37
  %v4770 = vand.u32 %v4561, 2147483648
  %v4771 = vor.u32 1.1754944e-38, %v4770
  %v4772 = vsel %vm4769, %v4771, %v4767
  %v4773 = vmul.f32 1.0, %v4772
  %v4774 = vrcp.pop %v4562
  %v4775 = vmul.f32 %v4562, %v4774
  %v4776 = vsub.f32 1.0, %v4775
  %v4777 = vmul.f32 %v4774, %v4776
  %v4778 = vadd.f32 %v4774, %v4777
  %vm4779 = vweird.f32 %v4562
  %vm4780 = vweird.f32 %v4774
  %vm4781 = vmor %vm4779, %vm4780
  %v4782 = vsel %vm4781, %v4774, %v4778
  %v4783 = vand.u32 2147483647, %v4562
  %vm4784 = vcmp.eq.f32.partialorder %v4783, 8.507059e+37
  %v4785 = vand.u32 %v4562, 2147483648
  %v4786 = vor.u32 1.1754944e-38, %v4785
  %v4787 = vsel %vm4784, %v4786, %v4782
  %v4788 = vmul.f32 1.0, %v4787
  %v4789 = vrcp.pop %v4563
  %v4790 = vmul.f32 %v4563, %v4789
  %v4791 = vsub.f32 1.0, %v4790
  %v4792 = vmul.f32 %v4789, %v4791
  %v4793 = vadd.f32 %v4789, %v4792
  %vm4794 = vweird.f32 %v4563
  %vm4795 = vweird.f32 %v4789
  %vm4796 = vmor %vm4794, %vm4795
  %v4797 = vsel %vm4796, %v4789, %v4793
  %v4798 = vand.u32 2147483647, %v4563
  %vm4799 = vcmp.eq.f32.partialorder %v4798, 8.507059e+37
  %v4800 = vand.u32 %v4563, 2147483648
  %v4801 = vor.u32 1.1754944e-38, %v4800
  %v4802 = vsel %vm4799, %v4801, %v4797
  %v4803 = vmul.f32 1.0, %v4802
  %v4804 = vmul.f32 %v257, %v4085
  %v4805 = vmul.f32 %v310, %v4087
  %v4806 = vmul.f32 %v257, %v4089
  %v4807 = vmul.f32 %v310, %v4091
  %v4808 = vmul.f32 %v257, %v4093
  %v4809 = vmul.f32 %v310, %v4095
  %v4810 = vmul.f32 %v257, %v4097
  %v4811 = vmul.f32 %v310, %v4099
  %v4812 = vmul.f32 %v257, %v4101
  %v4813 = vmul.f32 %v310, %v4103
  %v4814 = vmul.f32 %v257, %v4105
  %v4815 = vmul.f32 %v310, %v4107
  %v4816 = vmul.f32 %v257, %v4109
  %v4817 = vmul.f32 %v310, %v4111
  %v4818 = vmul.f32 %v257, %v4113
  %v4819 = vmul.f32 %v310, %v4115
  %v4820 = vmul.f32 %v363, %v4133
  %v4821 = vmul.f32 %v416, %v4135
  %v4822 = vmul.f32 %v363, %v4137
  %v4823 = vmul.f32 %v416, %v4139
  %v4824 = vmul.f32 %v363, %v4141
  %v4825 = vmul.f32 %v416, %v4143
  %v4826 = vmul.f32 %v363, %v4145
  %v4827 = vmul.f32 %v416, %v4147
  %v4828 = vmul.f32 %v363, %v4149
  %v4829 = vmul.f32 %v416, %v4151
  %v4830 = vmul.f32 %v363, %v4153
  %v4831 = vmul.f32 %v416, %v4155
  %v4832 = vmul.f32 %v363, %v4157
  %v4833 = vmul.f32 %v416, %v4159
  %v4834 = vmul.f32 %v363, %v4161
  %v4835 = vmul.f32 %v416, %v4163
  %v4836 = vadd.f32 %v4804, %v4820
  %v4837 = vadd.f32 %v4805, %v4821
  %v4838 = vadd.f32 %v4806, %v4822
  %v4839 = vadd.f32 %v4807, %v4823
  %v4840 = vadd.f32 %v4808, %v4824
  %v4841 = vadd.f32 %v4809, %v4825
  %v4842 = vadd.f32 %v4810, %v4826
  %v4843 = vadd.f32 %v4811, %v4827
  %v4844 = vadd.f32 %v4812, %v4828
  %v4845 = vadd.f32 %v4813, %v4829
  %v4846 = vadd.f32 %v4814, %v4830
  %v4847 = vadd.f32 %v4815, %v4831
  %v4848 = vadd.f32 %v4816, %v4832
  %v4849 = vadd.f32 %v4817, %v4833
  %v4850 = vadd.f32 %v4818, %v4834
  %v4851 = vadd.f32 %v4819, %v4835
  %v4852 = vmul.f32 %v469, %v4181
  %v4853 = vmul.f32 %v522, %v4183
  %v4854 = vmul.f32 %v469, %v4185
  %v4855 = vmul.f32 %v522, %v4187
  %v4856 = vmul.f32 %v469, %v4189
  %v4857 = vmul.f32 %v522, %v4191
  %v4858 = vmul.f32 %v469, %v4193
  %v4859 = vmul.f32 %v522, %v4195
  %v4860 = vmul.f32 %v469, %v4197
  %v4861 = vmul.f32 %v522, %v4199
  %v4862 = vmul.f32 %v469, %v4201
  %v4863 = vmul.f32 %v522, %v4203
  %v4864 = vmul.f32 %v469, %v4205
  %v4865 = vmul.f32 %v522, %v4207
  %v4866 = vmul.f32 %v469, %v4209
  %v4867 = vmul.f32 %v522, %v4211
  %v4868 = vadd.f32 %v4836, %v4852
  %v4869 = vadd.f32 %v4837, %v4853
  %v4870 = vadd.f32 %v4838, %v4854
  %v4871 = vadd.f32 %v4839, %v4855
  %v4872 = vadd.f32 %v4840, %v4856
  %v4873 = vadd.f32 %v4841, %v4857
  %v4874 = vadd.f32 %v4842, %v4858
  %v4875 = vadd.f32 %v4843, %v4859
  %v4876 = vadd.f32 %v4844, %v4860
  %v4877 = vadd.f32 %v4845, %v4861
  %v4878 = vadd.f32 %v4846, %v4862
  %v4879 = vadd.f32 %v4847, %v4863
  %v4880 = vadd.f32 %v4848, %v4864
  %v4881 = vadd.f32 %v4849, %v4865
  %v4882 = vadd.f32 %v4850, %v4866
  %v4883 = vadd.f32 %v4851, %v4867
  %v4884 = vmul.f32 %v575, %v4229
  %v4885 = vmul.f32 %v628, %v4231
  %v4886 = vmul.f32 %v575, %v4233
  %v4887 = vmul.f32 %v628, %v4235
  %v4888 = vmul.f32 %v575, %v4237
  %v4889 = vmul.f32 %v628, %v4239
  %v4890 = vmul.f32 %v575, %v4241
  %v4891 = vmul.f32 %v628, %v4243
  %v4892 = vmul.f32 %v575, %v4245
  %v4893 = vmul.f32 %v628, %v4247
  %v4894 = vmul.f32 %v575, %v4249
  %v4895 = vmul.f32 %v628, %v4251
  %v4896 = vmul.f32 %v575, %v4253
  %v4897 = vmul.f32 %v628, %v4255
  %v4898 = vmul.f32 %v575, %v4257
  %v4899 = vmul.f32 %v628, %v4259
  %v4900 = vadd.f32 %v4868, %v4884
  %v4901 = vadd.f32 %v4869, %v4885
  %v4902 = vadd.f32 %v4870, %v4886
  %v4903 = vadd.f32 %v4871, %v4887
  %v4904 = vadd.f32 %v4872, %v4888
  %v4905 = vadd.f32 %v4873, %v4889
  %v4906 = vadd.f32 %v4874, %v4890
  %v4907 = vadd.f32 %v4875, %v4891
  %v4908 = vadd.f32 %v4876, %v4892
  %v4909 = vadd.f32 %v4877, %v4893
  %v4910 = vadd.f32 %v4878, %v4894
  %v4911 = vadd.f32 %v4879, %v4895
  %v4912 = vadd.f32 %v4880, %v4896
  %v4913 = vadd.f32 %v4881, %v4897
  %v4914 = vadd.f32 %v4882, %v4898
  %v4915 = vadd.f32 %v4883, %v4899
  %v4916 = vmul.f32 %v681, %v4277
  %v4917 = vmul.f32 %v734, %v4279
  %v4918 = vmul.f32 %v681, %v4281
  %v4919 = vmul.f32 %v734, %v4283
  %v4920 = vmul.f32 %v681, %v4285
  %v4921 = vmul.f32 %v734, %v4287
  %v4922 = vmul.f32 %v681, %v4289
  %v4923 = vmul.f32 %v734, %v4291
  %v4924 = vmul.f32 %v681, %v4293
  %v4925 = vmul.f32 %v734, %v4295
  %v4926 = vmul.f32 %v681, %v4297
  %v4927 = vmul.f32 %v734, %v4299
  %v4928 = vmul.f32 %v681, %v4301
  %v4929 = vmul.f32 %v734, %v4303
  %v4930 = vmul.f32 %v681, %v4305
  %v4931 = vmul.f32 %v734, %v4307
  %v4932 = vadd.f32 %v4900, %v4916
  %v4933 = vadd.f32 %v4901, %v4917
  %v4934 = vadd.f32 %v4902, %v4918
  %v4935 = vadd.f32 %v4903, %v4919
  %v4936 = vadd.f32 %v4904, %v4920
  %v4937 = vadd.f32 %v4905, %v4921
  %v4938 = vadd.f32 %v4906, %v4922
  %v4939 = vadd.f32 %v4907, %v4923
  %v4940 = vadd.f32 %v4908, %v4924
  %v4941 = vadd.f32 %v4909, %v4925
  %v4942 = vadd.f32 %v4910, %v4926
  %v4943 = vadd.f32 %v4911, %v4927
  %v4944 = vadd.f32 %v4912, %v4928
  %v4945 = vadd.f32 %v4913, %v4929
  %v4946 = vadd.f32 %v4914, %v4930
  %v4947 = vadd.f32 %v4915, %v4931
  %v4948 = vmul.f32 %v787, %v4325
  %v4949 = vmul.f32 %v840, %v4327
  %v4950 = vmul.f32 %v787, %v4329
  %v4951 = vmul.f32 %v840, %v4331
  %v4952 = vmul.f32 %v787, %v4333
  %v4953 = vmul.f32 %v840, %v4335
  %v4954 = vmul.f32 %v787, %v4337
  %v4955 = vmul.f32 %v840, %v4339
  %v4956 = vmul.f32 %v787, %v4341
  %v4957 = vmul.f32 %v840, %v4343
  %v4958 = vmul.f32 %v787, %v4345
  %v4959 = vmul.f32 %v840, %v4347
  %v4960 = vmul.f32 %v787, %v4349
  %v4961 = vmul.f32 %v840, %v4351
  %v4962 = vmul.f32 %v787, %v4353
  %v4963 = vmul.f32 %v840, %v4355
  %v4964 = vadd.f32 %v4932, %v4948
  %v4965 = vadd.f32 %v4933, %v4949
  %v4966 = vadd.f32 %v4934, %v4950
  %v4967 = vadd.f32 %v4935, %v4951
  %v4968 = vadd.f32 %v4936, %v4952
  %v4969 = vadd.f32 %v4937, %v4953
  %v4970 = vadd.f32 %v4938, %v4954
  %v4971 = vadd.f32 %v4939, %v4955
  %v4972 = vadd.f32 %v4940, %v4956
  %v4973 = vadd.f32 %v4941, %v4957
  %v4974 = vadd.f32 %v4942, %v4958
  %v4975 = vadd.f32 %v4943, %v4959
  %v4976 = vadd.f32 %v4944, %v4960
  %v4977 = vadd.f32 %v4945, %v4961
  %v4978 = vadd.f32 %v4946, %v4962
  %v4979 = vadd.f32 %v4947, %v4963
  %v4980 = vmul.f32 %v893, %v4373
  %v4981 = vmul.f32 %v946, %v4375
  %v4982 = vmul.f32 %v893, %v4377
  %v4983 = vmul.f32 %v946, %v4379
  %v4984 = vmul.f32 %v893, %v4381
  %v4985 = vmul.f32 %v946, %v4383
  %v4986 = vmul.f32 %v893, %v4385
  %v4987 = vmul.f32 %v946, %v4387
  %v4988 = vmul.f32 %v893, %v4389
  %v4989 = vmul.f32 %v946, %v4391
  %v4990 = vmul.f32 %v893, %v4393
  %v4991 = vmul.f32 %v946, %v4395
  %v4992 = vmul.f32 %v893, %v4397
  %v4993 = vmul.f32 %v946, %v4399
  %v4994 = vmul.f32 %v893, %v4401
  %v4995 = vmul.f32 %v946, %v4403
  %v4996 = vadd.f32 %v4964, %v4980
  %v4997 = vadd.f32 %v4965, %v4981
  %v4998 = vadd.f32 %v4966, %v4982
  %v4999 = vadd.f32 %v4967, %v4983
  %v5000 = vadd.f32 %v4968, %v4984
  %v5001 = vadd.f32 %v4969, %v4985
  %v5002 = vadd.f32 %v4970, %v4986
  %v5003 = vadd.f32 %v4971, %v4987
  %v5004 = vadd.f32 %v4972, %v4988
  %v5005 = vadd.f32 %v4973, %v4989
  %v5006 = vadd.f32 %v4974, %v4990
  %v5007 = vadd.f32 %v4975, %v4991
  %v5008 = vadd.f32 %v4976, %v4992
  %v5009 = vadd.f32 %v4977, %v4993
  %v5010 = vadd.f32 %v4978, %v4994
  %v5011 = vadd.f32 %v4979, %v4995
  %v5012 = vmul.f32 %v999, %v4421
  %v5013 = vmul.f32 %v1052, %v4423
  %v5014 = vmul.f32 %v999, %v4425
  %v5015 = vmul.f32 %v1052, %v4427
  %v5016 = vmul.f32 %v999, %v4429
  %v5017 = vmul.f32 %v1052, %v4431
  %v5018 = vmul.f32 %v999, %v4433
  %v5019 = vmul.f32 %v1052, %v4435
  %v5020 = vmul.f32 %v999, %v4437
  %v5021 = vmul.f32 %v1052, %v4439
  %v5022 = vmul.f32 %v999, %v4441
  %v5023 = vmul.f32 %v1052, %v4443
  %v5024 = vmul.f32 %v999, %v4445
  %v5025 = vmul.f32 %v1052, %v4447
  %v5026 = vmul.f32 %v999, %v4449
  %v5027 = vmul.f32 %v1052, %v4451
  %v5028 = vadd.f32 %v4996, %v5012
  %v5029 = vadd.f32 %v4997, %v5013
  %v5030 = vadd.f32 %v4998, %v5014
  %v5031 = vadd.f32 %v4999, %v5015
  %v5032 = vadd.f32 %v5000, %v5016
  %v5033 = vadd.f32 %v5001, %v5017
  %v5034 = vadd.f32 %v5002, %v5018
  %v5035 = vadd.f32 %v5003, %v5019
  %v5036 = vadd.f32 %v5004, %v5020
  %v5037 = vadd.f32 %v5005, %v5021
  %v5038 = vadd.f32 %v5006, %v5022
  %v5039 = vadd.f32 %v5007, %v5023
  %v5040 = vadd.f32 %v5008, %v5024
  %v5041 = vadd.f32 %v5009, %v5025
  %v5042 = vadd.f32 %v5010, %v5026
  %v5043 = vadd.f32 %v5011, %v5027
  %v5044 = vmul.f32 %v5028, %v4578
  %v5045 = vmul.f32 %v5029, %v4593
  %v5046 = vmul.f32 %v5030, %v4608
  %v5047 = vmul.f32 %v5031, %v4623
  %v5048 = vmul.f32 %v5032, %v4638
  %v5049 = vmul.f32 %v5033, %v4653
  %v5050 = vmul.f32 %v5034, %v4668
  %v5051 = vmul.f32 %v5035, %v4683
  %v5052 = vmul.f32 %v5036, %v4698
  %v5053 = vmul.f32 %v5037, %v4713
  %v5054 = vmul.f32 %v5038, %v4728
  %v5055 = vmul.f32 %v5039, %v4743
  %v5056 = vmul.f32 %v5040, %v4758
  %v5057 = vmul.f32 %v5041, %v4773
  %v5058 = vmul.f32 %v5042, %v4788
  %v5059 = vmul.f32 %v5043, %v4803
  %v5060 = vmul.f32 %v236, %v248
  %v5061 = vmul.f32 %v289, %v301
  %v5062 = vmul.f32 %v342, %v248
  %v5063 = vmul.f32 %v395, %v301
  %v5064 = vmul.f32 %v448, %v248
  %v5065 = vmul.f32 %v501, %v301
  %v5066 = vmul.f32 %v554, %v248
  %v5067 = vmul.f32 %v607, %v301
  %v5068 = vmul.f32 %v660, %v248
  %v5069 = vmul.f32 %v713, %v301
  %v5070 = vmul.f32 %v766, %v248
  %v5071 = vmul.f32 %v819, %v301
  %v5072 = vmul.f32 %v872, %v248
  %v5073 = vmul.f32 %v925, %v301
  %v5074 = vmul.f32 %v978, %v248
  %v5075 = vmul.f32 %v1031, %v301
  %v5076 = vrot.slane %v5060, 4
  %v5077 = vadd.f32 %v5060, %v5076
  %v5078 = vrot.slane %v5077, 2
  %v5079 = vadd.f32 %v5077, %v5078
  %v5080 = vrot.slane %v5079, 1
  %v5081 = vadd.f32 %v5079, %v5080
  %v5082 = vrot.slane %v5061, 4
  %v5083 = vadd.f32 %v5061, %v5082
  %v5084 = vrot.slane %v5083, 2
  %v5085 = vadd.f32 %v5083, %v5084
  %v5086 = vrot.slane %v5085, 1
  %v5087 = vadd.f32 %v5085, %v5086
  %v5088 = vrot.slane %v5062, 4
  %v5089 = vadd.f32 %v5062, %v5088
  %v5090 = vrot.slane %v5089, 2
  %v5091 = vadd.f32 %v5089, %v5090
  %v5092 = vrot.slane %v5091, 1
  %v5093 = vadd.f32 %v5091, %v5092
  %v5094 = vrot.slane %v5063, 4
  %v5095 = vadd.f32 %v5063, %v5094
  %v5096 = vrot.slane %v5095, 2
  %v5097 = vadd.f32 %v5095, %v5096
  %v5098 = vrot.slane %v5097, 1
  %v5099 = vadd.f32 %v5097, %v5098
  %v5100 = vrot.slane %v5064, 4
  %v5101 = vadd.f32 %v5064, %v5100
  %v5102 = vrot.slane %v5101, 2
  %v5103 = vadd.f32 %v5101, %v5102
  %v5104 = vrot.slane %v5103, 1
  %v5105 = vadd.f32 %v5103, %v5104
  %v5106 = vrot.slane %v5065, 4
  %v5107 = vadd.f32 %v5065, %v5106
  %v5108 = vrot.slane %v5107, 2
  %v5109 = vadd.f32 %v5107, %v5108
  %v5110 = vrot.slane %v5109, 1
  %v5111 = vadd.f32 %v5109, %v5110
  %v5112 = vrot.slane %v5066, 4
  %v5113 = vadd.f32 %v5066, %v5112
  %v5114 = vrot.slane %v5113, 2
  %v5115 = vadd.f32 %v5113, %v5114
  %v5116 = vrot.slane %v5115, 1
  %v5117 = vadd.f32 %v5115, %v5116
  %v5118 = vrot.slane %v5067, 4
  %v5119 = vadd.f32 %v5067, %v5118
  %v5120 = vrot.slane %v5119, 2
  %v5121 = vadd.f32 %v5119, %v5120
  %v5122 = vrot.slane %v5121, 1
  %v5123 = vadd.f32 %v5121, %v5122
  %v5124 = vrot.slane %v5068, 4
  %v5125 = vadd.f32 %v5068, %v5124
  %v5126 = vrot.slane %v5125, 2
  %v5127 = vadd.f32 %v5125, %v5126
  %v5128 = vrot.slane %v5127, 1
  %v5129 = vadd.f32 %v5127, %v5128
  %v5130 = vrot.slane %v5069, 4
  %v5131 = vadd.f32 %v5069, %v5130
  %v5132 = vrot.slane %v5131, 2
  %v5133 = vadd.f32 %v5131, %v5132
  %v5134 = vrot.slane %v5133, 1
  %v5135 = vadd.f32 %v5133, %v5134
  %v5136 = vrot.slane %v5070, 4
  %v5137 = vadd.f32 %v5070, %v5136
  %v5138 = vrot.slane %v5137, 2
  %v5139 = vadd.f32 %v5137, %v5138
  %v5140 = vrot.slane %v5139, 1
  %v5141 = vadd.f32 %v5139, %v5140
  %v5142 = vrot.slane %v5071, 4
  %v5143 = vadd.f32 %v5071, %v5142
  %v5144 = vrot.slane %v5143, 2
  %v5145 = vadd.f32 %v5143, %v5144
  %v5146 = vrot.slane %v5145, 1
  %v5147 = vadd.f32 %v5145, %v5146
  %v5148 = vrot.slane %v5072, 4
  %v5149 = vadd.f32 %v5072, %v5148
  %v5150 = vrot.slane %v5149, 2
  %v5151 = vadd.f32 %v5149, %v5150
  %v5152 = vrot.slane %v5151, 1
  %v5153 = vadd.f32 %v5151, %v5152
  %v5154 = vrot.slane %v5073, 4
  %v5155 = vadd.f32 %v5073, %v5154
  %v5156 = vrot.slane %v5155, 2
  %v5157 = vadd.f32 %v5155, %v5156
  %v5158 = vrot.slane %v5157, 1
  %v5159 = vadd.f32 %v5157, %v5158
  %v5160 = vrot.slane %v5074, 4
  %v5161 = vadd.f32 %v5074, %v5160
  %v5162 = vrot.slane %v5161, 2
  %v5163 = vadd.f32 %v5161, %v5162
  %v5164 = vrot.slane %v5163, 1
  %v5165 = vadd.f32 %v5163, %v5164
  %v5166 = vrot.slane %v5075, 4
  %v5167 = vadd.f32 %v5075, %v5166
  %v5168 = vrot.slane %v5167, 2
  %v5169 = vadd.f32 %v5167, %v5168
  %v5170 = vrot.slane %v5169, 1
  %v5171 = vadd.f32 %v5169, %v5170
  %v5172 = vmul.f32 %v236, %v354
  %v5173 = vmul.f32 %v289, %v407
  %v5174 = vmul.f32 %v342, %v354
  %v5175 = vmul.f32 %v395, %v407
  %v5176 = vmul.f32 %v448, %v354
  %v5177 = vmul.f32 %v501, %v407
  %v5178 = vmul.f32 %v554, %v354
  %v5179 = vmul.f32 %v607, %v407
  %v5180 = vmul.f32 %v660, %v354
  %v5181 = vmul.f32 %v713, %v407
  %v5182 = vmul.f32 %v766, %v354
  %v5183 = vmul.f32 %v819, %v407
  %v5184 = vmul.f32 %v872, %v354
  %v5185 = vmul.f32 %v925, %v407
  %v5186 = vmul.f32 %v978, %v354
  %v5187 = vmul.f32 %v1031, %v407
  %v5188 = vrot.slane %v5172, 4
  %v5189 = vadd.f32 %v5172, %v5188
  %v5190 = vrot.slane %v5189, 2
  %v5191 = vadd.f32 %v5189, %v5190
  %v5192 = vrot.slane %v5191, 1
  %v5193 = vadd.f32 %v5191, %v5192
  %v5194 = vrot.slane %v5173, 4
  %v5195 = vadd.f32 %v5173, %v5194
  %v5196 = vrot.slane %v5195, 2
  %v5197 = vadd.f32 %v5195, %v5196
  %v5198 = vrot.slane %v5197, 1
  %v5199 = vadd.f32 %v5197, %v5198
  %v5200 = vrot.slane %v5174, 4
  %v5201 = vadd.f32 %v5174, %v5200
  %v5202 = vrot.slane %v5201, 2
  %v5203 = vadd.f32 %v5201, %v5202
  %v5204 = vrot.slane %v5203, 1
  %v5205 = vadd.f32 %v5203, %v5204
  %v5206 = vrot.slane %v5175, 4
  %v5207 = vadd.f32 %v5175, %v5206
  %v5208 = vrot.slane %v5207, 2
  %v5209 = vadd.f32 %v5207, %v5208
  %v5210 = vrot.slane %v5209, 1
  %v5211 = vadd.f32 %v5209, %v5210
  %v5212 = vrot.slane %v5176, 4
  %v5213 = vadd.f32 %v5176, %v5212
  %v5214 = vrot.slane %v5213, 2
  %v5215 = vadd.f32 %v5213, %v5214
  %v5216 = vrot.slane %v5215, 1
  %v5217 = vadd.f32 %v5215, %v5216
  %v5218 = vrot.slane %v5177, 4
  %v5219 = vadd.f32 %v5177, %v5218
  %v5220 = vrot.slane %v5219, 2
  %v5221 = vadd.f32 %v5219, %v5220
  %v5222 = vrot.slane %v5221, 1
  %v5223 = vadd.f32 %v5221, %v5222
  %v5224 = vrot.slane %v5178, 4
  %v5225 = vadd.f32 %v5178, %v5224
  %v5226 = vrot.slane %v5225, 2
  %v5227 = vadd.f32 %v5225, %v5226
  %v5228 = vrot.slane %v5227, 1
  %v5229 = vadd.f32 %v5227, %v5228
  %v5230 = vrot.slane %v5179, 4
  %v5231 = vadd.f32 %v5179, %v5230
  %v5232 = vrot.slane %v5231, 2
  %v5233 = vadd.f32 %v5231, %v5232
  %v5234 = vrot.slane %v5233, 1
  %v5235 = vadd.f32 %v5233, %v5234
  %v5236 = vrot.slane %v5180, 4
  %v5237 = vadd.f32 %v5180, %v5236
  %v5238 = vrot.slane %v5237, 2
  %v5239 = vadd.f32 %v5237, %v5238
  %v5240 = vrot.slane %v5239, 1
  %v5241 = vadd.f32 %v5239, %v5240
  %v5242 = vrot.slane %v5181, 4
  %v5243 = vadd.f32 %v5181, %v5242
  %v5244 = vrot.slane %v5243, 2
  %v5245 = vadd.f32 %v5243, %v5244
  %v5246 = vrot.slane %v5245, 1
  %v5247 = vadd.f32 %v5245, %v5246
  %v5248 = vrot.slane %v5182, 4
  %v5249 = vadd.f32 %v5182, %v5248
  %v5250 = vrot.slane %v5249, 2
  %v5251 = vadd.f32 %v5249, %v5250
  %v5252 = vrot.slane %v5251, 1
  %v5253 = vadd.f32 %v5251, %v5252
  %v5254 = vrot.slane %v5183, 4
  %v5255 = vadd.f32 %v5183, %v5254
  %v5256 = vrot.slane %v5255, 2
  %v5257 = vadd.f32 %v5255, %v5256
  %v5258 = vrot.slane %v5257, 1
  %v5259 = vadd.f32 %v5257, %v5258
  %v5260 = vrot.slane %v5184, 4
  %v5261 = vadd.f32 %v5184, %v5260
  %v5262 = vrot.slane %v5261, 2
  %v5263 = vadd.f32 %v5261, %v5262
  %v5264 = vrot.slane %v5263, 1
  %v5265 = vadd.f32 %v5263, %v5264
  %v5266 = vrot.slane %v5185, 4
  %v5267 = vadd.f32 %v5185, %v5266
  %v5268 = vrot.slane %v5267, 2
  %v5269 = vadd.f32 %v5267, %v5268
  %v5270 = vrot.slane %v5269, 1
  %v5271 = vadd.f32 %v5269, %v5270
  %v5272 = vrot.slane %v5186, 4
  %v5273 = vadd.f32 %v5186, %v5272
  %v5274 = vrot.slane %v5273, 2
  %v5275 = vadd.f32 %v5273, %v5274
  %v5276 = vrot.slane %v5275, 1
  %v5277 = vadd.f32 %v5275, %v5276
  %v5278 = vrot.slane %v5187, 4
  %v5279 = vadd.f32 %v5187, %v5278
  %v5280 = vrot.slane %v5279, 2
  %v5281 = vadd.f32 %v5279, %v5280
  %v5282 = vrot.slane %v5281, 1
  %v5283 = vadd.f32 %v5281, %v5282
  %v5284 = vmul.f32 %v236, %v460
  %v5285 = vmul.f32 %v289, %v513
  %v5286 = vmul.f32 %v342, %v460
  %v5287 = vmul.f32 %v395, %v513
  %v5288 = vmul.f32 %v448, %v460
  %v5289 = vmul.f32 %v501, %v513
  %v5290 = vmul.f32 %v554, %v460
  %v5291 = vmul.f32 %v607, %v513
  %v5292 = vmul.f32 %v660, %v460
  %v5293 = vmul.f32 %v713, %v513
  %v5294 = vmul.f32 %v766, %v460
  %v5295 = vmul.f32 %v819, %v513
  %v5296 = vmul.f32 %v872, %v460
  %v5297 = vmul.f32 %v925, %v513
  %v5298 = vmul.f32 %v978, %v460
  %v5299 = vmul.f32 %v1031, %v513
  %v5300 = vrot.slane %v5284, 4
  %v5301 = vadd.f32 %v5284, %v5300
  %v5302 = vrot.slane %v5301, 2
  %v5303 = vadd.f32 %v5301, %v5302
  %v5304 = vrot.slane %v5303, 1
  %v5305 = vadd.f32 %v5303, %v5304
  %v5306 = vrot.slane %v5285, 4
  %v5307 = vadd.f32 %v5285, %v5306
  %v5308 = vrot.slane %v5307, 2
  %v5309 = vadd.f32 %v5307, %v5308
  %v5310 = vrot.slane %v5309, 1
  %v5311 = vadd.f32 %v5309, %v5310
  %v5312 = vrot.slane %v5286, 4
  %v5313 = vadd.f32 %v5286, %v5312
  %v5314 = vrot.slane %v5313, 2
  %v5315 = vadd.f32 %v5313, %v5314
  %v5316 = vrot.slane %v5315, 1
  %v5317 = vadd.f32 %v5315, %v5316
  %v5318 = vrot.slane %v5287, 4
  %v5319 = vadd.f32 %v5287, %v5318
  %v5320 = vrot.slane %v5319, 2
  %v5321 = vadd.f32 %v5319, %v5320
  %v5322 = vrot.slane %v5321, 1
  %v5323 = vadd.f32 %v5321, %v5322
  %v5324 = vrot.slane %v5288, 4
  %v5325 = vadd.f32 %v5288, %v5324
  %v5326 = vrot.slane %v5325, 2
  %v5327 = vadd.f32 %v5325, %v5326
  %v5328 = vrot.slane %v5327, 1
  %v5329 = vadd.f32 %v5327, %v5328
  %v5330 = vrot.slane %v5289, 4
  %v5331 = vadd.f32 %v5289, %v5330
  %v5332 = vrot.slane %v5331, 2
  %v5333 = vadd.f32 %v5331, %v5332
  %v5334 = vrot.slane %v5333, 1
  %v5335 = vadd.f32 %v5333, %v5334
  %v5336 = vrot.slane %v5290, 4
  %v5337 = vadd.f32 %v5290, %v5336
  %v5338 = vrot.slane %v5337, 2
  %v5339 = vadd.f32 %v5337, %v5338
  %v5340 = vrot.slane %v5339, 1
  %v5341 = vadd.f32 %v5339, %v5340
  %v5342 = vrot.slane %v5291, 4
  %v5343 = vadd.f32 %v5291, %v5342
  %v5344 = vrot.slane %v5343, 2
  %v5345 = vadd.f32 %v5343, %v5344
  %v5346 = vrot.slane %v5345, 1
  %v5347 = vadd.f32 %v5345, %v5346
  %v5348 = vrot.slane %v5292, 4
  %v5349 = vadd.f32 %v5292, %v5348
  %v5350 = vrot.slane %v5349, 2
  %v5351 = vadd.f32 %v5349, %v5350
  %v5352 = vrot.slane %v5351, 1
  %v5353 = vadd.f32 %v5351, %v5352
  %v5354 = vrot.slane %v5293, 4
  %v5355 = vadd.f32 %v5293, %v5354
  %v5356 = vrot.slane %v5355, 2
  %v5357 = vadd.f32 %v5355, %v5356
  %v5358 = vrot.slane %v5357, 1
  %v5359 = vadd.f32 %v5357, %v5358
  %v5360 = vrot.slane %v5294, 4
  %v5361 = vadd.f32 %v5294, %v5360
  %v5362 = vrot.slane %v5361, 2
  %v5363 = vadd.f32 %v5361, %v5362
  %v5364 = vrot.slane %v5363, 1
  %v5365 = vadd.f32 %v5363, %v5364
  %v5366 = vrot.slane %v5295, 4
  %v5367 = vadd.f32 %v5295, %v5366
  %v5368 = vrot.slane %v5367, 2
  %v5369 = vadd.f32 %v5367, %v5368
  %v5370 = vrot.slane %v5369, 1
  %v5371 = vadd.f32 %v5369, %v5370
  %v5372 = vrot.slane %v5296, 4
  %v5373 = vadd.f32 %v5296, %v5372
  %v5374 = vrot.slane %v5373, 2
  %v5375 = vadd.f32 %v5373, %v5374
  %v5376 = vrot.slane %v5375, 1
  %v5377 = vadd.f32 %v5375, %v5376
  %v5378 = vrot.slane %v5297, 4
  %v5379 = vadd.f32 %v5297, %v5378
  %v5380 = vrot.slane %v5379, 2
  %v5381 = vadd.f32 %v5379, %v5380
  %v5382 = vrot.slane %v5381, 1
  %v5383 = vadd.f32 %v5381, %v5382
  %v5384 = vrot.slane %v5298, 4
  %v5385 = vadd.f32 %v5298, %v5384
  %v5386 = vrot.slane %v5385, 2
  %v5387 = vadd.f32 %v5385, %v5386
  %v5388 = vrot.slane %v5387, 1
  %v5389 = vadd.f32 %v5387, %v5388
  %v5390 = vrot.slane %v5299, 4
  %v5391 = vadd.f32 %v5299, %v5390
  %v5392 = vrot.slane %v5391, 2
  %v5393 = vadd.f32 %v5391, %v5392
  %v5394 = vrot.slane %v5393, 1
  %v5395 = vadd.f32 %v5393, %v5394
  %v5396 = vmul.f32 %v236, %v566
  %v5397 = vmul.f32 %v289, %v619
  %v5398 = vmul.f32 %v342, %v566
  %v5399 = vmul.f32 %v395, %v619
  %v5400 = vmul.f32 %v448, %v566
  %v5401 = vmul.f32 %v501, %v619
  %v5402 = vmul.f32 %v554, %v566
  %v5403 = vmul.f32 %v607, %v619
  %v5404 = vmul.f32 %v660, %v566
  %v5405 = vmul.f32 %v713, %v619
  %v5406 = vmul.f32 %v766, %v566
  %v5407 = vmul.f32 %v819, %v619
  %v5408 = vmul.f32 %v872, %v566
  %v5409 = vmul.f32 %v925, %v619
  %v5410 = vmul.f32 %v978, %v566
  %v5411 = vmul.f32 %v1031, %v619
  %v5412 = vrot.slane %v5396, 4
  %v5413 = vadd.f32 %v5396, %v5412
  %v5414 = vrot.slane %v5413, 2
  %v5415 = vadd.f32 %v5413, %v5414
  %v5416 = vrot.slane %v5415, 1
  %v5417 = vadd.f32 %v5415, %v5416
  %v5418 = vrot.slane %v5397, 4
  %v5419 = vadd.f32 %v5397, %v5418
  %v5420 = vrot.slane %v5419, 2
  %v5421 = vadd.f32 %v5419, %v5420
  %v5422 = vrot.slane %v5421, 1
  %v5423 = vadd.f32 %v5421, %v5422
  %v5424 = vrot.slane %v5398, 4
  %v5425 = vadd.f32 %v5398, %v5424
  %v5426 = vrot.slane %v5425, 2
  %v5427 = vadd.f32 %v5425, %v5426
  %v5428 = vrot.slane %v5427, 1
  %v5429 = vadd.f32 %v5427, %v5428
  %v5430 = vrot.slane %v5399, 4
  %v5431 = vadd.f32 %v5399, %v5430
  %v5432 = vrot.slane %v5431, 2
  %v5433 = vadd.f32 %v5431, %v5432
  %v5434 = vrot.slane %v5433, 1
  %v5435 = vadd.f32 %v5433, %v5434
  %v5436 = vrot.slane %v5400, 4
  %v5437 = vadd.f32 %v5400, %v5436
  %v5438 = vrot.slane %v5437, 2
  %v5439 = vadd.f32 %v5437, %v5438
  %v5440 = vrot.slane %v5439, 1
  %v5441 = vadd.f32 %v5439, %v5440
  %v5442 = vrot.slane %v5401, 4
  %v5443 = vadd.f32 %v5401, %v5442
  %v5444 = vrot.slane %v5443, 2
  %v5445 = vadd.f32 %v5443, %v5444
  %v5446 = vrot.slane %v5445, 1
  %v5447 = vadd.f32 %v5445, %v5446
  %v5448 = vrot.slane %v5402, 4
  %v5449 = vadd.f32 %v5402, %v5448
  %v5450 = vrot.slane %v5449, 2
  %v5451 = vadd.f32 %v5449, %v5450
  %v5452 = vrot.slane %v5451, 1
  %v5453 = vadd.f32 %v5451, %v5452
  %v5454 = vrot.slane %v5403, 4
  %v5455 = vadd.f32 %v5403, %v5454
  %v5456 = vrot.slane %v5455, 2
  %v5457 = vadd.f32 %v5455, %v5456
  %v5458 = vrot.slane %v5457, 1
  %v5459 = vadd.f32 %v5457, %v5458
  %v5460 = vrot.slane %v5404, 4
  %v5461 = vadd.f32 %v5404, %v5460
  %v5462 = vrot.slane %v5461, 2
  %v5463 = vadd.f32 %v5461, %v5462
  %v5464 = vrot.slane %v5463, 1
  %v5465 = vadd.f32 %v5463, %v5464
  %v5466 = vrot.slane %v5405, 4
  %v5467 = vadd.f32 %v5405, %v5466
  %v5468 = vrot.slane %v5467, 2
  %v5469 = vadd.f32 %v5467, %v5468
  %v5470 = vrot.slane %v5469, 1
  %v5471 = vadd.f32 %v5469, %v5470
  %v5472 = vrot.slane %v5406, 4
  %v5473 = vadd.f32 %v5406, %v5472
  %v5474 = vrot.slane %v5473, 2
  %v5475 = vadd.f32 %v5473, %v5474
  %v5476 = vrot.slane %v5475, 1
  %v5477 = vadd.f32 %v5475, %v5476
  %v5478 = vrot.slane %v5407, 4
  %v5479 = vadd.f32 %v5407, %v5478
  %v5480 = vrot.slane %v5479, 2
  %v5481 = vadd.f32 %v5479, %v5480
  %v5482 = vrot.slane %v5481, 1
  %v5483 = vadd.f32 %v5481, %v5482
  %v5484 = vrot.slane %v5408, 4
  %v5485 = vadd.f32 %v5408, %v5484
  %v5486 = vrot.slane %v5485, 2
  %v5487 = vadd.f32 %v5485, %v5486
  %v5488 = vrot.slane %v5487, 1
  %v5489 = vadd.f32 %v5487, %v5488
  %v5490 = vrot.slane %v5409, 4
  %v5491 = vadd.f32 %v5409, %v5490
  %v5492 = vrot.slane %v5491, 2
  %v5493 = vadd.f32 %v5491, %v5492
  %v5494 = vrot.slane %v5493, 1
  %v5495 = vadd.f32 %v5493, %v5494
  %v5496 = vrot.slane %v5410, 4
  %v5497 = vadd.f32 %v5410, %v5496
  %v5498 = vrot.slane %v5497, 2
  %v5499 = vadd.f32 %v5497, %v5498
  %v5500 = vrot.slane %v5499, 1
  %v5501 = vadd.f32 %v5499, %v5500
  %v5502 = vrot.slane %v5411, 4
  %v5503 = vadd.f32 %v5411, %v5502
  %v5504 = vrot.slane %v5503, 2
  %v5505 = vadd.f32 %v5503, %v5504
  %v5506 = vrot.slane %v5505, 1
  %v5507 = vadd.f32 %v5505, %v5506
  %v5508 = vmul.f32 %v236, %v672
  %v5509 = vmul.f32 %v289, %v725
  %v5510 = vmul.f32 %v342, %v672
  %v5511 = vmul.f32 %v395, %v725
  %v5512 = vmul.f32 %v448, %v672
  %v5513 = vmul.f32 %v501, %v725
  %v5514 = vmul.f32 %v554, %v672
  %v5515 = vmul.f32 %v607, %v725
  %v5516 = vmul.f32 %v660, %v672
  %v5517 = vmul.f32 %v713, %v725
  %v5518 = vmul.f32 %v766, %v672
  %v5519 = vmul.f32 %v819, %v725
  %v5520 = vmul.f32 %v872, %v672
  %v5521 = vmul.f32 %v925, %v725
  %v5522 = vmul.f32 %v978, %v672
  %v5523 = vmul.f32 %v1031, %v725
  %v5524 = vrot.slane %v5508, 4
  %v5525 = vadd.f32 %v5508, %v5524
  %v5526 = vrot.slane %v5525, 2
  %v5527 = vadd.f32 %v5525, %v5526
  %v5528 = vrot.slane %v5527, 1
  %v5529 = vadd.f32 %v5527, %v5528
  %v5530 = vrot.slane %v5509, 4
  %v5531 = vadd.f32 %v5509, %v5530
  %v5532 = vrot.slane %v5531, 2
  %v5533 = vadd.f32 %v5531, %v5532
  %v5534 = vrot.slane %v5533, 1
  %v5535 = vadd.f32 %v5533, %v5534
  %v5536 = vrot.slane %v5510, 4
  %v5537 = vadd.f32 %v5510, %v5536
  %v5538 = vrot.slane %v5537, 2
  %v5539 = vadd.f32 %v5537, %v5538
  %v5540 = vrot.slane %v5539, 1
  %v5541 = vadd.f32 %v5539, %v5540
  %v5542 = vrot.slane %v5511, 4
  %v5543 = vadd.f32 %v5511, %v5542
  %v5544 = vrot.slane %v5543, 2
  %v5545 = vadd.f32 %v5543, %v5544
  %v5546 = vrot.slane %v5545, 1
  %v5547 = vadd.f32 %v5545, %v5546
  %v5548 = vrot.slane %v5512, 4
  %v5549 = vadd.f32 %v5512, %v5548
  %v5550 = vrot.slane %v5549, 2
  %v5551 = vadd.f32 %v5549, %v5550
  %v5552 = vrot.slane %v5551, 1
  %v5553 = vadd.f32 %v5551, %v5552
  %v5554 = vrot.slane %v5513, 4
  %v5555 = vadd.f32 %v5513, %v5554
  %v5556 = vrot.slane %v5555, 2
  %v5557 = vadd.f32 %v5555, %v5556
  %v5558 = vrot.slane %v5557, 1
  %v5559 = vadd.f32 %v5557, %v5558
  %v5560 = vrot.slane %v5514, 4
  %v5561 = vadd.f32 %v5514, %v5560
  %v5562 = vrot.slane %v5561, 2
  %v5563 = vadd.f32 %v5561, %v5562
  %v5564 = vrot.slane %v5563, 1
  %v5565 = vadd.f32 %v5563, %v5564
  %v5566 = vrot.slane %v5515, 4
  %v5567 = vadd.f32 %v5515, %v5566
  %v5568 = vrot.slane %v5567, 2
  %v5569 = vadd.f32 %v5567, %v5568
  %v5570 = vrot.slane %v5569, 1
  %v5571 = vadd.f32 %v5569, %v5570
  %v5572 = vrot.slane %v5516, 4
  %v5573 = vadd.f32 %v5516, %v5572
  %v5574 = vrot.slane %v5573, 2
  %v5575 = vadd.f32 %v5573, %v5574
  %v5576 = vrot.slane %v5575, 1
  %v5577 = vadd.f32 %v5575, %v5576
  %v5578 = vrot.slane %v5517, 4
  %v5579 = vadd.f32 %v5517, %v5578
  %v5580 = vrot.slane %v5579, 2
  %v5581 = vadd.f32 %v5579, %v5580
  %v5582 = vrot.slane %v5581, 1
  %v5583 = vadd.f32 %v5581, %v5582
  %v5584 = vrot.slane %v5518, 4
  %v5585 = vadd.f32 %v5518, %v5584
  %v5586 = vrot.slane %v5585, 2
  %v5587 = vadd.f32 %v5585, %v5586
  %v5588 = vrot.slane %v5587, 1
  %v5589 = vadd.f32 %v5587, %v5588
  %v5590 = vrot.slane %v5519, 4
  %v5591 = vadd.f32 %v5519, %v5590
  %v5592 = vrot.slane %v5591, 2
  %v5593 = vadd.f32 %v5591, %v5592
  %v5594 = vrot.slane %v5593, 1
  %v5595 = vadd.f32 %v5593, %v5594
  %v5596 = vrot.slane %v5520, 4
  %v5597 = vadd.f32 %v5520, %v5596
  %v5598 = vrot.slane %v5597, 2
  %v5599 = vadd.f32 %v5597, %v5598
  %v5600 = vrot.slane %v5599, 1
  %v5601 = vadd.f32 %v5599, %v5600
  %v5602 = vrot.slane %v5521, 4
  %v5603 = vadd.f32 %v5521, %v5602
  %v5604 = vrot.slane %v5603, 2
  %v5605 = vadd.f32 %v5603, %v5604
  %v5606 = vrot.slane %v5605, 1
  %v5607 = vadd.f32 %v5605, %v5606
  %v5608 = vrot.slane %v5522, 4
  %v5609 = vadd.f32 %v5522, %v5608
  %v5610 = vrot.slane %v5609, 2
  %v5611 = vadd.f32 %v5609, %v5610
  %v5612 = vrot.slane %v5611, 1
  %v5613 = vadd.f32 %v5611, %v5612
  %v5614 = vrot.slane %v5523, 4
  %v5615 = vadd.f32 %v5523, %v5614
  %v5616 = vrot.slane %v5615, 2
  %v5617 = vadd.f32 %v5615, %v5616
  %v5618 = vrot.slane %v5617, 1
  %v5619 = vadd.f32 %v5617, %v5618
  %v5620 = vmul.f32 %v236, %v778
  %v5621 = vmul.f32 %v289, %v831
  %v5622 = vmul.f32 %v342, %v778
  %v5623 = vmul.f32 %v395, %v831
  %v5624 = vmul.f32 %v448, %v778
  %v5625 = vmul.f32 %v501, %v831
  %v5626 = vmul.f32 %v554, %v778
  %v5627 = vmul.f32 %v607, %v831
  %v5628 = vmul.f32 %v660, %v778
  %v5629 = vmul.f32 %v713, %v831
  %v5630 = vmul.f32 %v766, %v778
  %v5631 = vmul.f32 %v819, %v831
  %v5632 = vmul.f32 %v872, %v778
  %v5633 = vmul.f32 %v925, %v831
  %v5634 = vmul.f32 %v978, %v778
  %v5635 = vmul.f32 %v1031, %v831
  %v5636 = vrot.slane %v5620, 4
  %v5637 = vadd.f32 %v5620, %v5636
  %v5638 = vrot.slane %v5637, 2
  %v5639 = vadd.f32 %v5637, %v5638
  %v5640 = vrot.slane %v5639, 1
  %v5641 = vadd.f32 %v5639, %v5640
  %v5642 = vrot.slane %v5621, 4
  %v5643 = vadd.f32 %v5621, %v5642
  %v5644 = vrot.slane %v5643, 2
  %v5645 = vadd.f32 %v5643, %v5644
  %v5646 = vrot.slane %v5645, 1
  %v5647 = vadd.f32 %v5645, %v5646
  %v5648 = vrot.slane %v5622, 4
  %v5649 = vadd.f32 %v5622, %v5648
  %v5650 = vrot.slane %v5649, 2
  %v5651 = vadd.f32 %v5649, %v5650
  %v5652 = vrot.slane %v5651, 1
  %v5653 = vadd.f32 %v5651, %v5652
  %v5654 = vrot.slane %v5623, 4
  %v5655 = vadd.f32 %v5623, %v5654
  %v5656 = vrot.slane %v5655, 2
  %v5657 = vadd.f32 %v5655, %v5656
  %v5658 = vrot.slane %v5657, 1
  %v5659 = vadd.f32 %v5657, %v5658
  %v5660 = vrot.slane %v5624, 4
  %v5661 = vadd.f32 %v5624, %v5660
  %v5662 = vrot.slane %v5661, 2
  %v5663 = vadd.f32 %v5661, %v5662
  %v5664 = vrot.slane %v5663, 1
  %v5665 = vadd.f32 %v5663, %v5664
  %v5666 = vrot.slane %v5625, 4
  %v5667 = vadd.f32 %v5625, %v5666
  %v5668 = vrot.slane %v5667, 2
  %v5669 = vadd.f32 %v5667, %v5668
  %v5670 = vrot.slane %v5669, 1
  %v5671 = vadd.f32 %v5669, %v5670
  %v5672 = vrot.slane %v5626, 4
  %v5673 = vadd.f32 %v5626, %v5672
  %v5674 = vrot.slane %v5673, 2
  %v5675 = vadd.f32 %v5673, %v5674
  %v5676 = vrot.slane %v5675, 1
  %v5677 = vadd.f32 %v5675, %v5676
  %v5678 = vrot.slane %v5627, 4
  %v5679 = vadd.f32 %v5627, %v5678
  %v5680 = vrot.slane %v5679, 2
  %v5681 = vadd.f32 %v5679, %v5680
  %v5682 = vrot.slane %v5681, 1
  %v5683 = vadd.f32 %v5681, %v5682
  %v5684 = vrot.slane %v5628, 4
  %v5685 = vadd.f32 %v5628, %v5684
  %v5686 = vrot.slane %v5685, 2
  %v5687 = vadd.f32 %v5685, %v5686
  %v5688 = vrot.slane %v5687, 1
  %v5689 = vadd.f32 %v5687, %v5688
  %v5690 = vrot.slane %v5629, 4
  %v5691 = vadd.f32 %v5629, %v5690
  %v5692 = vrot.slane %v5691, 2
  %v5693 = vadd.f32 %v5691, %v5692
  %v5694 = vrot.slane %v5693, 1
  %v5695 = vadd.f32 %v5693, %v5694
  %v5696 = vrot.slane %v5630, 4
  %v5697 = vadd.f32 %v5630, %v5696
  %v5698 = vrot.slane %v5697, 2
  %v5699 = vadd.f32 %v5697, %v5698
  %v5700 = vrot.slane %v5699, 1
  %v5701 = vadd.f32 %v5699, %v5700
  %v5702 = vrot.slane %v5631, 4
  %v5703 = vadd.f32 %v5631, %v5702
  %v5704 = vrot.slane %v5703, 2
  %v5705 = vadd.f32 %v5703, %v5704
  %v5706 = vrot.slane %v5705, 1
  %v5707 = vadd.f32 %v5705, %v5706
  %v5708 = vrot.slane %v5632, 4
  %v5709 = vadd.f32 %v5632, %v5708
  %v5710 = vrot.slane %v5709, 2
  %v5711 = vadd.f32 %v5709, %v5710
  %v5712 = vrot.slane %v5711, 1
  %v5713 = vadd.f32 %v5711, %v5712
  %v5714 = vrot.slane %v5633, 4
  %v5715 = vadd.f32 %v5633, %v5714
  %v5716 = vrot.slane %v5715, 2
  %v5717 = vadd.f32 %v5715, %v5716
  %v5718 = vrot.slane %v5717, 1
  %v5719 = vadd.f32 %v5717, %v5718
  %v5720 = vrot.slane %v5634, 4
  %v5721 = vadd.f32 %v5634, %v5720
  %v5722 = vrot.slane %v5721, 2
  %v5723 = vadd.f32 %v5721, %v5722
  %v5724 = vrot.slane %v5723, 1
  %v5725 = vadd.f32 %v5723, %v5724
  %v5726 = vrot.slane %v5635, 4
  %v5727 = vadd.f32 %v5635, %v5726
  %v5728 = vrot.slane %v5727, 2
  %v5729 = vadd.f32 %v5727, %v5728
  %v5730 = vrot.slane %v5729, 1
  %v5731 = vadd.f32 %v5729, %v5730
  %v5732 = vmul.f32 %v236, %v884
  %v5733 = vmul.f32 %v289, %v937
  %v5734 = vmul.f32 %v342, %v884
  %v5735 = vmul.f32 %v395, %v937
  %v5736 = vmul.f32 %v448, %v884
  %v5737 = vmul.f32 %v501, %v937
  %v5738 = vmul.f32 %v554, %v884
  %v5739 = vmul.f32 %v607, %v937
  %v5740 = vmul.f32 %v660, %v884
  %v5741 = vmul.f32 %v713, %v937
  %v5742 = vmul.f32 %v766, %v884
  %v5743 = vmul.f32 %v819, %v937
  %v5744 = vmul.f32 %v872, %v884
  %v5745 = vmul.f32 %v925, %v937
  %v5746 = vmul.f32 %v978, %v884
  %v5747 = vmul.f32 %v1031, %v937
  %v5748 = vrot.slane %v5732, 4
  %v5749 = vadd.f32 %v5732, %v5748
  %v5750 = vrot.slane %v5749, 2
  %v5751 = vadd.f32 %v5749, %v5750
  %v5752 = vrot.slane %v5751, 1
  %v5753 = vadd.f32 %v5751, %v5752
  %v5754 = vrot.slane %v5733, 4
  %v5755 = vadd.f32 %v5733, %v5754
  %v5756 = vrot.slane %v5755, 2
  %v5757 = vadd.f32 %v5755, %v5756
  %v5758 = vrot.slane %v5757, 1
  %v5759 = vadd.f32 %v5757, %v5758
  %v5760 = vrot.slane %v5734, 4
  %v5761 = vadd.f32 %v5734, %v5760
  %v5762 = vrot.slane %v5761, 2
  %v5763 = vadd.f32 %v5761, %v5762
  %v5764 = vrot.slane %v5763, 1
  %v5765 = vadd.f32 %v5763, %v5764
  %v5766 = vrot.slane %v5735, 4
  %v5767 = vadd.f32 %v5735, %v5766
  %v5768 = vrot.slane %v5767, 2
  %v5769 = vadd.f32 %v5767, %v5768
  %v5770 = vrot.slane %v5769, 1
  %v5771 = vadd.f32 %v5769, %v5770
  %v5772 = vrot.slane %v5736, 4
  %v5773 = vadd.f32 %v5736, %v5772
  %v5774 = vrot.slane %v5773, 2
  %v5775 = vadd.f32 %v5773, %v5774
  %v5776 = vrot.slane %v5775, 1
  %v5777 = vadd.f32 %v5775, %v5776
  %v5778 = vrot.slane %v5737, 4
  %v5779 = vadd.f32 %v5737, %v5778
  %v5780 = vrot.slane %v5779, 2
  %v5781 = vadd.f32 %v5779, %v5780
  %v5782 = vrot.slane %v5781, 1
  %v5783 = vadd.f32 %v5781, %v5782
  %v5784 = vrot.slane %v5738, 4
  %v5785 = vadd.f32 %v5738, %v5784
  %v5786 = vrot.slane %v5785, 2
  %v5787 = vadd.f32 %v5785, %v5786
  %v5788 = vrot.slane %v5787, 1
  %v5789 = vadd.f32 %v5787, %v5788
  %v5790 = vrot.slane %v5739, 4
  %v5791 = vadd.f32 %v5739, %v5790
  %v5792 = vrot.slane %v5791, 2
  %v5793 = vadd.f32 %v5791, %v5792
  %v5794 = vrot.slane %v5793, 1
  %v5795 = vadd.f32 %v5793, %v5794
  %v5796 = vrot.slane %v5740, 4
  %v5797 = vadd.f32 %v5740, %v5796
  %v5798 = vrot.slane %v5797, 2
  %v5799 = vadd.f32 %v5797, %v5798
  %v5800 = vrot.slane %v5799, 1
  %v5801 = vadd.f32 %v5799, %v5800
  %v5802 = vrot.slane %v5741, 4
  %v5803 = vadd.f32 %v5741, %v5802
  %v5804 = vrot.slane %v5803, 2
  %v5805 = vadd.f32 %v5803, %v5804
  %v5806 = vrot.slane %v5805, 1
  %v5807 = vadd.f32 %v5805, %v5806
  %v5808 = vrot.slane %v5742, 4
  %v5809 = vadd.f32 %v5742, %v5808
  %v5810 = vrot.slane %v5809, 2
  %v5811 = vadd.f32 %v5809, %v5810
  %v5812 = vrot.slane %v5811, 1
  %v5813 = vadd.f32 %v5811, %v5812
  %v5814 = vrot.slane %v5743, 4
  %v5815 = vadd.f32 %v5743, %v5814
  %v5816 = vrot.slane %v5815, 2
  %v5817 = vadd.f32 %v5815, %v5816
  %v5818 = vrot.slane %v5817, 1
  %v5819 = vadd.f32 %v5817, %v5818
  %v5820 = vrot.slane %v5744, 4
  %v5821 = vadd.f32 %v5744, %v5820
  %v5822 = vrot.slane %v5821, 2
  %v5823 = vadd.f32 %v5821, %v5822
  %v5824 = vrot.slane %v5823, 1
  %v5825 = vadd.f32 %v5823, %v5824
  %v5826 = vrot.slane %v5745, 4
  %v5827 = vadd.f32 %v5745, %v5826
  %v5828 = vrot.slane %v5827, 2
  %v5829 = vadd.f32 %v5827, %v5828
  %v5830 = vrot.slane %v5829, 1
  %v5831 = vadd.f32 %v5829, %v5830
  %v5832 = vrot.slane %v5746, 4
  %v5833 = vadd.f32 %v5746, %v5832
  %v5834 = vrot.slane %v5833, 2
  %v5835 = vadd.f32 %v5833, %v5834
  %v5836 = vrot.slane %v5835, 1
  %v5837 = vadd.f32 %v5835, %v5836
  %v5838 = vrot.slane %v5747, 4
  %v5839 = vadd.f32 %v5747, %v5838
  %v5840 = vrot.slane %v5839, 2
  %v5841 = vadd.f32 %v5839, %v5840
  %v5842 = vrot.slane %v5841, 1
  %v5843 = vadd.f32 %v5841, %v5842
  %v5844 = vmul.f32 %v236, %v990
  %v5845 = vmul.f32 %v289, %v1043
  %v5846 = vmul.f32 %v342, %v990
  %v5847 = vmul.f32 %v395, %v1043
  %v5848 = vmul.f32 %v448, %v990
  %v5849 = vmul.f32 %v501, %v1043
  %v5850 = vmul.f32 %v554, %v990
  %v5851 = vmul.f32 %v607, %v1043
  %v5852 = vmul.f32 %v660, %v990
  %v5853 = vmul.f32 %v713, %v1043
  %v5854 = vmul.f32 %v766, %v990
  %v5855 = vmul.f32 %v819, %v1043
  %v5856 = vmul.f32 %v872, %v990
  %v5857 = vmul.f32 %v925, %v1043
  %v5858 = vmul.f32 %v978, %v990
  %v5859 = vmul.f32 %v1031, %v1043
  %v5860 = vrot.slane %v5844, 4
  %v5861 = vadd.f32 %v5844, %v5860
  %v5862 = vrot.slane %v5861, 2
  %v5863 = vadd.f32 %v5861, %v5862
  %v5864 = vrot.slane %v5863, 1
  %v5865 = vadd.f32 %v5863, %v5864
  %v5866 = vrot.slane %v5845, 4
  %v5867 = vadd.f32 %v5845, %v5866
  %v5868 = vrot.slane %v5867, 2
  %v5869 = vadd.f32 %v5867, %v5868
  %v5870 = vrot.slane %v5869, 1
  %v5871 = vadd.f32 %v5869, %v5870
  %v5872 = vrot.slane %v5846, 4
  %v5873 = vadd.f32 %v5846, %v5872
  %v5874 = vrot.slane %v5873, 2
  %v5875 = vadd.f32 %v5873, %v5874
  %v5876 = vrot.slane %v5875, 1
  %v5877 = vadd.f32 %v5875, %v5876
  %v5878 = vrot.slane %v5847, 4
  %v5879 = vadd.f32 %v5847, %v5878
  %v5880 = vrot.slane %v5879, 2
  %v5881 = vadd.f32 %v5879, %v5880
  %v5882 = vrot.slane %v5881, 1
  %v5883 = vadd.f32 %v5881, %v5882
  %v5884 = vrot.slane %v5848, 4
  %v5885 = vadd.f32 %v5848, %v5884
  %v5886 = vrot.slane %v5885, 2
  %v5887 = vadd.f32 %v5885, %v5886
  %v5888 = vrot.slane %v5887, 1
  %v5889 = vadd.f32 %v5887, %v5888
  %v5890 = vrot.slane %v5849, 4
  %v5891 = vadd.f32 %v5849, %v5890
  %v5892 = vrot.slane %v5891, 2
  %v5893 = vadd.f32 %v5891, %v5892
  %v5894 = vrot.slane %v5893, 1
  %v5895 = vadd.f32 %v5893, %v5894
  %v5896 = vrot.slane %v5850, 4
  %v5897 = vadd.f32 %v5850, %v5896
  %v5898 = vrot.slane %v5897, 2
  %v5899 = vadd.f32 %v5897, %v5898
  %v5900 = vrot.slane %v5899, 1
  %v5901 = vadd.f32 %v5899, %v5900
  %v5902 = vrot.slane %v5851, 4
  %v5903 = vadd.f32 %v5851, %v5902
  %v5904 = vrot.slane %v5903, 2
  %v5905 = vadd.f32 %v5903, %v5904
  %v5906 = vrot.slane %v5905, 1
  %v5907 = vadd.f32 %v5905, %v5906
  %v5908 = vrot.slane %v5852, 4
  %v5909 = vadd.f32 %v5852, %v5908
  %v5910 = vrot.slane %v5909, 2
  %v5911 = vadd.f32 %v5909, %v5910
  %v5912 = vrot.slane %v5911, 1
  %v5913 = vadd.f32 %v5911, %v5912
  %v5914 = vrot.slane %v5853, 4
  %v5915 = vadd.f32 %v5853, %v5914
  %v5916 = vrot.slane %v5915, 2
  %v5917 = vadd.f32 %v5915, %v5916
  %v5918 = vrot.slane %v5917, 1
  %v5919 = vadd.f32 %v5917, %v5918
  %v5920 = vrot.slane %v5854, 4
  %v5921 = vadd.f32 %v5854, %v5920
  %v5922 = vrot.slane %v5921, 2
  %v5923 = vadd.f32 %v5921, %v5922
  %v5924 = vrot.slane %v5923, 1
  %v5925 = vadd.f32 %v5923, %v5924
  %v5926 = vrot.slane %v5855, 4
  %v5927 = vadd.f32 %v5855, %v5926
  %v5928 = vrot.slane %v5927, 2
  %v5929 = vadd.f32 %v5927, %v5928
  %v5930 = vrot.slane %v5929, 1
  %v5931 = vadd.f32 %v5929, %v5930
  %v5932 = vrot.slane %v5856, 4
  %v5933 = vadd.f32 %v5856, %v5932
  %v5934 = vrot.slane %v5933, 2
  %v5935 = vadd.f32 %v5933, %v5934
  %v5936 = vrot.slane %v5935, 1
  %v5937 = vadd.f32 %v5935, %v5936
  %v5938 = vrot.slane %v5857, 4
  %v5939 = vadd.f32 %v5857, %v5938
  %v5940 = vrot.slane %v5939, 2
  %v5941 = vadd.f32 %v5939, %v5940
  %v5942 = vrot.slane %v5941, 1
  %v5943 = vadd.f32 %v5941, %v5942
  %v5944 = vrot.slane %v5858, 4
  %v5945 = vadd.f32 %v5858, %v5944
  %v5946 = vrot.slane %v5945, 2
  %v5947 = vadd.f32 %v5945, %v5946
  %v5948 = vrot.slane %v5947, 1
  %v5949 = vadd.f32 %v5947, %v5948
  %v5950 = vrot.slane %v5859, 4
  %v5951 = vadd.f32 %v5859, %v5950
  %v5952 = vrot.slane %v5951, 2
  %v5953 = vadd.f32 %v5951, %v5952
  %v5954 = vrot.slane %v5953, 1
  %v5955 = vadd.f32 %v5953, %v5954
  %v5956 = vmax.f32 %v5081, %v5193
  %v5957 = vmax.f32 %v5087, %v5199
  %v5958 = vmax.f32 %v5093, %v5205
  %v5959 = vmax.f32 %v5099, %v5211
  %v5960 = vmax.f32 %v5105, %v5217
  %v5961 = vmax.f32 %v5111, %v5223
  %v5962 = vmax.f32 %v5117, %v5229
  %v5963 = vmax.f32 %v5123, %v5235
  %v5964 = vmax.f32 %v5129, %v5241
  %v5965 = vmax.f32 %v5135, %v5247
  %v5966 = vmax.f32 %v5141, %v5253
  %v5967 = vmax.f32 %v5147, %v5259
  %v5968 = vmax.f32 %v5153, %v5265
  %v5969 = vmax.f32 %v5159, %v5271
  %v5970 = vmax.f32 %v5165, %v5277
  %v5971 = vmax.f32 %v5171, %v5283
  %v5972 = vmax.f32 %v5956, %v5305
  %v5973 = vmax.f32 %v5957, %v5311
  %v5974 = vmax.f32 %v5958, %v5317
  %v5975 = vmax.f32 %v5959, %v5323
  %v5976 = vmax.f32 %v5960, %v5329
  %v5977 = vmax.f32 %v5961, %v5335
  %v5978 = vmax.f32 %v5962, %v5341
  %v5979 = vmax.f32 %v5963, %v5347
  %v5980 = vmax.f32 %v5964, %v5353
  %v5981 = vmax.f32 %v5965, %v5359
  %v5982 = vmax.f32 %v5966, %v5365
  %v5983 = vmax.f32 %v5967, %v5371
  %v5984 = vmax.f32 %v5968, %v5377
  %v5985 = vmax.f32 %v5969, %v5383
  %v5986 = vmax.f32 %v5970, %v5389
  %v5987 = vmax.f32 %v5971, %v5395
  %v5988 = vmax.f32 %v5972, %v5417
  %v5989 = vmax.f32 %v5973, %v5423
  %v5990 = vmax.f32 %v5974, %v5429
  %v5991 = vmax.f32 %v5975, %v5435
  %v5992 = vmax.f32 %v5976, %v5441
  %v5993 = vmax.f32 %v5977, %v5447
  %v5994 = vmax.f32 %v5978, %v5453
  %v5995 = vmax.f32 %v5979, %v5459
  %v5996 = vmax.f32 %v5980, %v5465
  %v5997 = vmax.f32 %v5981, %v5471
  %v5998 = vmax.f32 %v5982, %v5477
  %v5999 = vmax.f32 %v5983, %v5483
  %v6000 = vmax.f32 %v5984, %v5489
  %v6001 = vmax.f32 %v5985, %v5495
  %v6002 = vmax.f32 %v5986, %v5501
  %v6003 = vmax.f32 %v5987, %v5507
  %v6004 = vmax.f32 %v5988, %v5529
  %v6005 = vmax.f32 %v5989, %v5535
  %v6006 = vmax.f32 %v5990, %v5541
  %v6007 = vmax.f32 %v5991, %v5547
  %v6008 = vmax.f32 %v5992, %v5553
  %v6009 = vmax.f32 %v5993, %v5559
  %v6010 = vmax.f32 %v5994, %v5565
  %v6011 = vmax.f32 %v5995, %v5571
  %v6012 = vmax.f32 %v5996, %v5577
  %v6013 = vmax.f32 %v5997, %v5583
  %v6014 = vmax.f32 %v5998, %v5589
  %v6015 = vmax.f32 %v5999, %v5595
  %v6016 = vmax.f32 %v6000, %v5601
  %v6017 = vmax.f32 %v6001, %v5607
  %v6018 = vmax.f32 %v6002, %v5613
  %v6019 = vmax.f32 %v6003, %v5619
  %v6020 = vmax.f32 %v6004, %v5641
  %v6021 = vmax.f32 %v6005, %v5647
  %v6022 = vmax.f32 %v6006, %v5653
  %v6023 = vmax.f32 %v6007, %v5659
  %v6024 = vmax.f32 %v6008, %v5665
  %v6025 = vmax.f32 %v6009, %v5671
  %v6026 = vmax.f32 %v6010, %v5677
  %v6027 = vmax.f32 %v6011, %v5683
  %v6028 = vmax.f32 %v6012, %v5689
  %v6029 = vmax.f32 %v6013, %v5695
  %v6030 = vmax.f32 %v6014, %v5701
  %v6031 = vmax.f32 %v6015, %v5707
  %v6032 = vmax.f32 %v6016, %v5713
  %v6033 = vmax.f32 %v6017, %v5719
  %v6034 = vmax.f32 %v6018, %v5725
  %v6035 = vmax.f32 %v6019, %v5731
  %v6036 = vmax.f32 %v6020, %v5753
  %v6037 = vmax.f32 %v6021, %v5759
  %v6038 = vmax.f32 %v6022, %v5765
  %v6039 = vmax.f32 %v6023, %v5771
  %v6040 = vmax.f32 %v6024, %v5777
  %v6041 = vmax.f32 %v6025, %v5783
  %v6042 = vmax.f32 %v6026, %v5789
  %v6043 = vmax.f32 %v6027, %v5795
  %v6044 = vmax.f32 %v6028, %v5801
  %v6045 = vmax.f32 %v6029, %v5807
  %v6046 = vmax.f32 %v6030, %v5813
  %v6047 = vmax.f32 %v6031, %v5819
  %v6048 = vmax.f32 %v6032, %v5825
  %v6049 = vmax.f32 %v6033, %v5831
  %v6050 = vmax.f32 %v6034, %v5837
  %v6051 = vmax.f32 %v6035, %v5843
  %v6052 = vmax.f32 %v6036, %v5865
  %v6053 = vmax.f32 %v6037, %v5871
  %v6054 = vmax.f32 %v6038, %v5877
  %v6055 = vmax.f32 %v6039, %v5883
  %v6056 = vmax.f32 %v6040, %v5889
  %v6057 = vmax.f32 %v6041, %v5895
  %v6058 = vmax.f32 %v6042, %v5901
  %v6059 = vmax.f32 %v6043, %v5907
  %v6060 = vmax.f32 %v6044, %v5913
  %v6061 = vmax.f32 %v6045, %v5919
  %v6062 = vmax.f32 %v6046, %v5925
  %v6063 = vmax.f32 %v6047, %v5931
  %v6064 = vmax.f32 %v6048, %v5937
  %v6065 = vmax.f32 %v6049, %v5943
  %v6066 = vmax.f32 %v6050, %v5949
  %v6067 = vmax.f32 %v6051, %v5955
  %v6068 = vsub.f32 %v5081, %v6052
  %v6069 = vsub.f32 %v5087, %v6053
  %v6070 = vsub.f32 %v5093, %v6054
  %v6071 = vsub.f32 %v5099, %v6055
  %v6072 = vsub.f32 %v5105, %v6056
  %v6073 = vsub.f32 %v5111, %v6057
  %v6074 = vsub.f32 %v5117, %v6058
  %v6075 = vsub.f32 %v5123, %v6059
  %v6076 = vsub.f32 %v5129, %v6060
  %v6077 = vsub.f32 %v5135, %v6061
  %v6078 = vsub.f32 %v5141, %v6062
  %v6079 = vsub.f32 %v5147, %v6063
  %v6080 = vsub.f32 %v5153, %v6064
  %v6081 = vsub.f32 %v5159, %v6065
  %v6082 = vsub.f32 %v5165, %v6066
  %v6083 = vsub.f32 %v5171, %v6067
  %v6084 = vmul.f32 %v6068, 1.442695
  %v6085 = vpow.pop %v6084
  %v6086 = vmul.f32 %v6069, 1.442695
  %v6087 = vpow.pop %v6086
  %v6088 = vmul.f32 %v6070, 1.442695
  %v6089 = vpow.pop %v6088
  %v6090 = vmul.f32 %v6071, 1.442695
  %v6091 = vpow.pop %v6090
  %v6092 = vmul.f32 %v6072, 1.442695
  %v6093 = vpow.pop %v6092
  %v6094 = vmul.f32 %v6073, 1.442695
  %v6095 = vpow.pop %v6094
  %v6096 = vmul.f32 %v6074, 1.442695
  %v6097 = vpow.pop %v6096
  %v6098 = vmul.f32 %v6075, 1.442695
  %v6099 = vpow.pop %v6098
  %v6100 = vmul.f32 %v6076, 1.442695
  %v6101 = vpow.pop %v6100
  %v6102 = vmul.f32 %v6077, 1.442695
  %v6103 = vpow.pop %v6102
  %v6104 = vmul.f32 %v6078, 1.442695
  %v6105 = vpow.pop %v6104
  %v6106 = vmul.f32 %v6079, 1.442695
  %v6107 = vpow.pop %v6106
  %v6108 = vmul.f32 %v6080, 1.442695
  %v6109 = vpow.pop %v6108
  %v6110 = vmul.f32 %v6081, 1.442695
  %v6111 = vpow.pop %v6110
  %v6112 = vmul.f32 %v6082, 1.442695
  %v6113 = vpow.pop %v6112
  %v6114 = vmul.f32 %v6083, 1.442695
  %v6115 = vpow.pop %v6114
  %v6116 = vsub.f32 %v5193, %v6052
  %v6117 = vsub.f32 %v5199, %v6053
  %v6118 = vsub.f32 %v5205, %v6054
  %v6119 = vsub.f32 %v5211, %v6055
  %v6120 = vsub.f32 %v5217, %v6056
  %v6121 = vsub.f32 %v5223, %v6057
  %v6122 = vsub.f32 %v5229, %v6058
  %v6123 = vsub.f32 %v5235, %v6059
  %v6124 = vsub.f32 %v5241, %v6060
  %v6125 = vsub.f32 %v5247, %v6061
  %v6126 = vsub.f32 %v5253, %v6062
  %v6127 = vsub.f32 %v5259, %v6063
  %v6128 = vsub.f32 %v5265, %v6064
  %v6129 = vsub.f32 %v5271, %v6065
  %v6130 = vsub.f32 %v5277, %v6066
  %v6131 = vsub.f32 %v5283, %v6067
  %v6132 = vmul.f32 %v6116, 1.442695
  %v6133 = vpow.pop %v6132
  %v6134 = vmul.f32 %v6117, 1.442695
  %v6135 = vpow.pop %v6134
  %v6136 = vmul.f32 %v6118, 1.442695
  %v6137 = vpow.pop %v6136
  %v6138 = vmul.f32 %v6119, 1.442695
  %v6139 = vpow.pop %v6138
  %v6140 = vmul.f32 %v6120, 1.442695
  %v6141 = vpow.pop %v6140
  %v6142 = vmul.f32 %v6121, 1.442695
  %v6143 = vpow.pop %v6142
  %v6144 = vmul.f32 %v6122, 1.442695
  %v6145 = vpow.pop %v6144
  %v6146 = vmul.f32 %v6123, 1.442695
  %v6147 = vpow.pop %v6146
  %v6148 = vmul.f32 %v6124, 1.442695
  %v6149 = vpow.pop %v6148
  %v6150 = vmul.f32 %v6125, 1.442695
  %v6151 = vpow.pop %v6150
  %v6152 = vmul.f32 %v6126, 1.442695
  %v6153 = vpow.pop %v6152
  %v6154 = vmul.f32 %v6127, 1.442695
  %v6155 = vpow.pop %v6154
  %v6156 = vmul.f32 %v6128, 1.442695
  %v6157 = vpow.pop %v6156
  %v6158 = vmul.f32 %v6129, 1.442695
  %v6159 = vpow.pop %v6158
  %v6160 = vmul.f32 %v6130, 1.442695
  %v6161 = vpow.pop %v6160
  %v6162 = vmul.f32 %v6131, 1.442695
  %v6163 = vpow.pop %v6162
  %v6164 = vsub.f32 %v5305, %v6052
  %v6165 = vsub.f32 %v5311, %v6053
  %v6166 = vsub.f32 %v5317, %v6054
  %v6167 = vsub.f32 %v5323, %v6055
  %v6168 = vsub.f32 %v5329, %v6056
  %v6169 = vsub.f32 %v5335, %v6057
  %v6170 = vsub.f32 %v5341, %v6058
  %v6171 = vsub.f32 %v5347, %v6059
  %v6172 = vsub.f32 %v5353, %v6060
  %v6173 = vsub.f32 %v5359, %v6061
  %v6174 = vsub.f32 %v5365, %v6062
  %v6175 = vsub.f32 %v5371, %v6063
  %v6176 = vsub.f32 %v5377, %v6064
  %v6177 = vsub.f32 %v5383, %v6065
  %v6178 = vsub.f32 %v5389, %v6066
  %v6179 = vsub.f32 %v5395, %v6067
  %v6180 = vmul.f32 %v6164, 1.442695
  %v6181 = vpow.pop %v6180
  %v6182 = vmul.f32 %v6165, 1.442695
  %v6183 = vpow.pop %v6182
  %v6184 = vmul.f32 %v6166, 1.442695
  %v6185 = vpow.pop %v6184
  %v6186 = vmul.f32 %v6167, 1.442695
  %v6187 = vpow.pop %v6186
  %v6188 = vmul.f32 %v6168, 1.442695
  %v6189 = vpow.pop %v6188
  %v6190 = vmul.f32 %v6169, 1.442695
  %v6191 = vpow.pop %v6190
  %v6192 = vmul.f32 %v6170, 1.442695
  %v6193 = vpow.pop %v6192
  %v6194 = vmul.f32 %v6171, 1.442695
  %v6195 = vpow.pop %v6194
  %v6196 = vmul.f32 %v6172, 1.442695
  %v6197 = vpow.pop %v6196
  %v6198 = vmul.f32 %v6173, 1.442695
  %v6199 = vpow.pop %v6198
  %v6200 = vmul.f32 %v6174, 1.442695
  %v6201 = vpow.pop %v6200
  %v6202 = vmul.f32 %v6175, 1.442695
  %v6203 = vpow.pop %v6202
  %v6204 = vmul.f32 %v6176, 1.442695
  %v6205 = vpow.pop %v6204
  %v6206 = vmul.f32 %v6177, 1.442695
  %v6207 = vpow.pop %v6206
  %v6208 = vmul.f32 %v6178, 1.442695
  %v6209 = vpow.pop %v6208
  %v6210 = vmul.f32 %v6179, 1.442695
  %v6211 = vpow.pop %v6210
  %v6212 = vsub.f32 %v5417, %v6052
  %v6213 = vsub.f32 %v5423, %v6053
  %v6214 = vsub.f32 %v5429, %v6054
  %v6215 = vsub.f32 %v5435, %v6055
  %v6216 = vsub.f32 %v5441, %v6056
  %v6217 = vsub.f32 %v5447, %v6057
  %v6218 = vsub.f32 %v5453, %v6058
  %v6219 = vsub.f32 %v5459, %v6059
  %v6220 = vsub.f32 %v5465, %v6060
  %v6221 = vsub.f32 %v5471, %v6061
  %v6222 = vsub.f32 %v5477, %v6062
  %v6223 = vsub.f32 %v5483, %v6063
  %v6224 = vsub.f32 %v5489, %v6064
  %v6225 = vsub.f32 %v5495, %v6065
  %v6226 = vsub.f32 %v5501, %v6066
  %v6227 = vsub.f32 %v5507, %v6067
  %v6228 = vmul.f32 %v6212, 1.442695
  %v6229 = vpow.pop %v6228
  %v6230 = vmul.f32 %v6213, 1.442695
  %v6231 = vpow.pop %v6230
  %v6232 = vmul.f32 %v6214, 1.442695
  %v6233 = vpow.pop %v6232
  %v6234 = vmul.f32 %v6215, 1.442695
  %v6235 = vpow.pop %v6234
  %v6236 = vmul.f32 %v6216, 1.442695
  %v6237 = vpow.pop %v6236
  %v6238 = vmul.f32 %v6217, 1.442695
  %v6239 = vpow.pop %v6238
  %v6240 = vmul.f32 %v6218, 1.442695
  %v6241 = vpow.pop %v6240
  %v6242 = vmul.f32 %v6219, 1.442695
  %v6243 = vpow.pop %v6242
  %v6244 = vmul.f32 %v6220, 1.442695
  %v6245 = vpow.pop %v6244
  %v6246 = vmul.f32 %v6221, 1.442695
  %v6247 = vpow.pop %v6246
  %v6248 = vmul.f32 %v6222, 1.442695
  %v6249 = vpow.pop %v6248
  %v6250 = vmul.f32 %v6223, 1.442695
  %v6251 = vpow.pop %v6250
  %v6252 = vmul.f32 %v6224, 1.442695
  %v6253 = vpow.pop %v6252
  %v6254 = vmul.f32 %v6225, 1.442695
  %v6255 = vpow.pop %v6254
  %v6256 = vmul.f32 %v6226, 1.442695
  %v6257 = vpow.pop %v6256
  %v6258 = vmul.f32 %v6227, 1.442695
  %v6259 = vpow.pop %v6258
  %v6260 = vsub.f32 %v5529, %v6052
  %v6261 = vsub.f32 %v5535, %v6053
  %v6262 = vsub.f32 %v5541, %v6054
  %v6263 = vsub.f32 %v5547, %v6055
  %v6264 = vsub.f32 %v5553, %v6056
  %v6265 = vsub.f32 %v5559, %v6057
  %v6266 = vsub.f32 %v5565, %v6058
  %v6267 = vsub.f32 %v5571, %v6059
  %v6268 = vsub.f32 %v5577, %v6060
  %v6269 = vsub.f32 %v5583, %v6061
  %v6270 = vsub.f32 %v5589, %v6062
  %v6271 = vsub.f32 %v5595, %v6063
  %v6272 = vsub.f32 %v5601, %v6064
  %v6273 = vsub.f32 %v5607, %v6065
  %v6274 = vsub.f32 %v5613, %v6066
  %v6275 = vsub.f32 %v5619, %v6067
  %v6276 = vmul.f32 %v6260, 1.442695
  %v6277 = vpow.pop %v6276
  %v6278 = vmul.f32 %v6261, 1.442695
  %v6279 = vpow.pop %v6278
  %v6280 = vmul.f32 %v6262, 1.442695
  %v6281 = vpow.pop %v6280
  %v6282 = vmul.f32 %v6263, 1.442695
  %v6283 = vpow.pop %v6282
  %v6284 = vmul.f32 %v6264, 1.442695
  %v6285 = vpow.pop %v6284
  %v6286 = vmul.f32 %v6265, 1.442695
  %v6287 = vpow.pop %v6286
  %v6288 = vmul.f32 %v6266, 1.442695
  %v6289 = vpow.pop %v6288
  %v6290 = vmul.f32 %v6267, 1.442695
  %v6291 = vpow.pop %v6290
  %v6292 = vmul.f32 %v6268, 1.442695
  %v6293 = vpow.pop %v6292
  %v6294 = vmul.f32 %v6269, 1.442695
  %v6295 = vpow.pop %v6294
  %v6296 = vmul.f32 %v6270, 1.442695
  %v6297 = vpow.pop %v6296
  %v6298 = vmul.f32 %v6271, 1.442695
  %v6299 = vpow.pop %v6298
  %v6300 = vmul.f32 %v6272, 1.442695
  %v6301 = vpow.pop %v6300
  %v6302 = vmul.f32 %v6273, 1.442695
  %v6303 = vpow.pop %v6302
  %v6304 = vmul.f32 %v6274, 1.442695
  %v6305 = vpow.pop %v6304
  %v6306 = vmul.f32 %v6275, 1.442695
  %v6307 = vpow.pop %v6306
  %v6308 = vsub.f32 %v5641, %v6052
  %v6309 = vsub.f32 %v5647, %v6053
  %v6310 = vsub.f32 %v5653, %v6054
  %v6311 = vsub.f32 %v5659, %v6055
  %v6312 = vsub.f32 %v5665, %v6056
  %v6313 = vsub.f32 %v5671, %v6057
  %v6314 = vsub.f32 %v5677, %v6058
  %v6315 = vsub.f32 %v5683, %v6059
  %v6316 = vsub.f32 %v5689, %v6060
  %v6317 = vsub.f32 %v5695, %v6061
  %v6318 = vsub.f32 %v5701, %v6062
  %v6319 = vsub.f32 %v5707, %v6063
  %v6320 = vsub.f32 %v5713, %v6064
  %v6321 = vsub.f32 %v5719, %v6065
  %v6322 = vsub.f32 %v5725, %v6066
  %v6323 = vsub.f32 %v5731, %v6067
  %v6324 = vmul.f32 %v6308, 1.442695
  %v6325 = vpow.pop %v6324
  %v6326 = vmul.f32 %v6309, 1.442695
  %v6327 = vpow.pop %v6326
  %v6328 = vmul.f32 %v6310, 1.442695
  %v6329 = vpow.pop %v6328
  %v6330 = vmul.f32 %v6311, 1.442695
  %v6331 = vpow.pop %v6330
  %v6332 = vmul.f32 %v6312, 1.442695
  %v6333 = vpow.pop %v6332
  %v6334 = vmul.f32 %v6313, 1.442695
  %v6335 = vpow.pop %v6334
  %v6336 = vmul.f32 %v6314, 1.442695
  %v6337 = vpow.pop %v6336
  %v6338 = vmul.f32 %v6315, 1.442695
  %v6339 = vpow.pop %v6338
  %v6340 = vmul.f32 %v6316, 1.442695
  %v6341 = vpow.pop %v6340
  %v6342 = vmul.f32 %v6317, 1.442695
  %v6343 = vpow.pop %v6342
  %v6344 = vmul.f32 %v6318, 1.442695
  %v6345 = vpow.pop %v6344
  %v6346 = vmul.f32 %v6319, 1.442695
  %v6347 = vpow.pop %v6346
  %v6348 = vmul.f32 %v6320, 1.442695
  %v6349 = vpow.pop %v6348
  %v6350 = vmul.f32 %v6321, 1.442695
  %v6351 = vpow.pop %v6350
  %v6352 = vmul.f32 %v6322, 1.442695
  %v6353 = vpow.pop %v6352
  %v6354 = vmul.f32 %v6323, 1.442695
  %v6355 = vpow.pop %v6354
  %v6356 = vsub.f32 %v5753, %v6052
  %v6357 = vsub.f32 %v5759, %v6053
  %v6358 = vsub.f32 %v5765, %v6054
  %v6359 = vsub.f32 %v5771, %v6055
  %v6360 = vsub.f32 %v5777, %v6056
  %v6361 = vsub.f32 %v5783, %v6057
  %v6362 = vsub.f32 %v5789, %v6058
  %v6363 = vsub.f32 %v5795, %v6059
  %v6364 = vsub.f32 %v5801, %v6060
  %v6365 = vsub.f32 %v5807, %v6061
  %v6366 = vsub.f32 %v5813, %v6062
  %v6367 = vsub.f32 %v5819, %v6063
  %v6368 = vsub.f32 %v5825, %v6064
  %v6369 = vsub.f32 %v5831, %v6065
  %v6370 = vsub.f32 %v5837, %v6066
  %v6371 = vsub.f32 %v5843, %v6067
  %v6372 = vmul.f32 %v6356, 1.442695
  %v6373 = vpow.pop %v6372
  %v6374 = vmul.f32 %v6357, 1.442695
  %v6375 = vpow.pop %v6374
  %v6376 = vmul.f32 %v6358, 1.442695
  %v6377 = vpow.pop %v6376
  %v6378 = vmul.f32 %v6359, 1.442695
  %v6379 = vpow.pop %v6378
  %v6380 = vmul.f32 %v6360, 1.442695
  %v6381 = vpow.pop %v6380
  %v6382 = vmul.f32 %v6361, 1.442695
  %v6383 = vpow.pop %v6382
  %v6384 = vmul.f32 %v6362, 1.442695
  %v6385 = vpow.pop %v6384
  %v6386 = vmul.f32 %v6363, 1.442695
  %v6387 = vpow.pop %v6386
  %v6388 = vmul.f32 %v6364, 1.442695
  %v6389 = vpow.pop %v6388
  %v6390 = vmul.f32 %v6365, 1.442695
  %v6391 = vpow.pop %v6390
  %v6392 = vmul.f32 %v6366, 1.442695
  %v6393 = vpow.pop %v6392
  %v6394 = vmul.f32 %v6367, 1.442695
  %v6395 = vpow.pop %v6394
  %v6396 = vmul.f32 %v6368, 1.442695
  %v6397 = vpow.pop %v6396
  %v6398 = vmul.f32 %v6369, 1.442695
  %v6399 = vpow.pop %v6398
  %v6400 = vmul.f32 %v6370, 1.442695
  %v6401 = vpow.pop %v6400
  %v6402 = vmul.f32 %v6371, 1.442695
  %v6403 = vpow.pop %v6402
  %v6404 = vsub.f32 %v5865, %v6052
  %v6405 = vsub.f32 %v5871, %v6053
  %v6406 = vsub.f32 %v5877, %v6054
  %v6407 = vsub.f32 %v5883, %v6055
  %v6408 = vsub.f32 %v5889, %v6056
  %v6409 = vsub.f32 %v5895, %v6057
  %v6410 = vsub.f32 %v5901, %v6058
  %v6411 = vsub.f32 %v5907, %v6059
  %v6412 = vsub.f32 %v5913, %v6060
  %v6413 = vsub.f32 %v5919, %v6061
  %v6414 = vsub.f32 %v5925, %v6062
  %v6415 = vsub.f32 %v5931, %v6063
  %v6416 = vsub.f32 %v5937, %v6064
  %v6417 = vsub.f32 %v5943, %v6065
  %v6418 = vsub.f32 %v5949, %v6066
  %v6419 = vsub.f32 %v5955, %v6067
  %v6420 = vmul.f32 %v6404, 1.442695
  %v6421 = vpow.pop %v6420
  %v6422 = vmul.f32 %v6405, 1.442695
  %v6423 = vpow.pop %v6422
  %v6424 = vmul.f32 %v6406, 1.442695
  %v6425 = vpow.pop %v6424
  %v6426 = vmul.f32 %v6407, 1.442695
  %v6427 = vpow.pop %v6426
  %v6428 = vmul.f32 %v6408, 1.442695
  %v6429 = vpow.pop %v6428
  %v6430 = vmul.f32 %v6409, 1.442695
  %v6431 = vpow.pop %v6430
  %v6432 = vmul.f32 %v6410, 1.442695
  %v6433 = vpow.pop %v6432
  %v6434 = vmul.f32 %v6411, 1.442695
  %v6435 = vpow.pop %v6434
  %v6436 = vmul.f32 %v6412, 1.442695
  %v6437 = vpow.pop %v6436
  %v6438 = vmul.f32 %v6413, 1.442695
  %v6439 = vpow.pop %v6438
  %v6440 = vmul.f32 %v6414, 1.442695
  %v6441 = vpow.pop %v6440
  %v6442 = vmul.f32 %v6415, 1.442695
  %v6443 = vpow.pop %v6442
  %v6444 = vmul.f32 %v6416, 1.442695
  %v6445 = vpow.pop %v6444
  %v6446 = vmul.f32 %v6417, 1.442695
  %v6447 = vpow.pop %v6446
  %v6448 = vmul.f32 %v6418, 1.442695
  %v6449 = vpow.pop %v6448
  %v6450 = vmul.f32 %v6419, 1.442695
  %v6451 = vpow.pop %v6450
  %v6452 = vadd.f32 %v6085, %v6133
  %v6453 = vadd.f32 %v6087, %v6135
  %v6454 = vadd.f32 %v6089, %v6137
  %v6455 = vadd.f32 %v6091, %v6139
  %v6456 = vadd.f32 %v6093, %v6141
  %v6457 = vadd.f32 %v6095, %v6143
  %v6458 = vadd.f32 %v6097, %v6145
  %v6459 = vadd.f32 %v6099, %v6147
  %v6460 = vadd.f32 %v6101, %v6149
  %v6461 = vadd.f32 %v6103, %v6151
  %v6462 = vadd.f32 %v6105, %v6153
  %v6463 = vadd.f32 %v6107, %v6155
  %v6464 = vadd.f32 %v6109, %v6157
  %v6465 = vadd.f32 %v6111, %v6159
  %v6466 = vadd.f32 %v6113, %v6161
  %v6467 = vadd.f32 %v6115, %v6163
  %v6468 = vadd.f32 %v6452, %v6181
  %v6469 = vadd.f32 %v6453, %v6183
  %v6470 = vadd.f32 %v6454, %v6185
  %v6471 = vadd.f32 %v6455, %v6187
  %v6472 = vadd.f32 %v6456, %v6189
  %v6473 = vadd.f32 %v6457, %v6191
  %v6474 = vadd.f32 %v6458, %v6193
  %v6475 = vadd.f32 %v6459, %v6195
  %v6476 = vadd.f32 %v6460, %v6197
  %v6477 = vadd.f32 %v6461, %v6199
  %v6478 = vadd.f32 %v6462, %v6201
  %v6479 = vadd.f32 %v6463, %v6203
  %v6480 = vadd.f32 %v6464, %v6205
  %v6481 = vadd.f32 %v6465, %v6207
  %v6482 = vadd.f32 %v6466, %v6209
  %v6483 = vadd.f32 %v6467, %v6211
  %v6484 = vadd.f32 %v6468, %v6229
  %v6485 = vadd.f32 %v6469, %v6231
  %v6486 = vadd.f32 %v6470, %v6233
  %v6487 = vadd.f32 %v6471, %v6235
  %v6488 = vadd.f32 %v6472, %v6237
  %v6489 = vadd.f32 %v6473, %v6239
  %v6490 = vadd.f32 %v6474, %v6241
  %v6491 = vadd.f32 %v6475, %v6243
  %v6492 = vadd.f32 %v6476, %v6245
  %v6493 = vadd.f32 %v6477, %v6247
  %v6494 = vadd.f32 %v6478, %v6249
  %v6495 = vadd.f32 %v6479, %v6251
  %v6496 = vadd.f32 %v6480, %v6253
  %v6497 = vadd.f32 %v6481, %v6255
  %v6498 = vadd.f32 %v6482, %v6257
  %v6499 = vadd.f32 %v6483, %v6259
  %v6500 = vadd.f32 %v6484, %v6277
  %v6501 = vadd.f32 %v6485, %v6279
  %v6502 = vadd.f32 %v6486, %v6281
  %v6503 = vadd.f32 %v6487, %v6283
  %v6504 = vadd.f32 %v6488, %v6285
  %v6505 = vadd.f32 %v6489, %v6287
  %v6506 = vadd.f32 %v6490, %v6289
  %v6507 = vadd.f32 %v6491, %v6291
  %v6508 = vadd.f32 %v6492, %v6293
  %v6509 = vadd.f32 %v6493, %v6295
  %v6510 = vadd.f32 %v6494, %v6297
  %v6511 = vadd.f32 %v6495, %v6299
  %v6512 = vadd.f32 %v6496, %v6301
  %v6513 = vadd.f32 %v6497, %v6303
  %v6514 = vadd.f32 %v6498, %v6305
  %v6515 = vadd.f32 %v6499, %v6307
  %v6516 = vadd.f32 %v6500, %v6325
  %v6517 = vadd.f32 %v6501, %v6327
  %v6518 = vadd.f32 %v6502, %v6329
  %v6519 = vadd.f32 %v6503, %v6331
  %v6520 = vadd.f32 %v6504, %v6333
  %v6521 = vadd.f32 %v6505, %v6335
  %v6522 = vadd.f32 %v6506, %v6337
  %v6523 = vadd.f32 %v6507, %v6339
  %v6524 = vadd.f32 %v6508, %v6341
  %v6525 = vadd.f32 %v6509, %v6343
  %v6526 = vadd.f32 %v6510, %v6345
  %v6527 = vadd.f32 %v6511, %v6347
  %v6528 = vadd.f32 %v6512, %v6349
  %v6529 = vadd.f32 %v6513, %v6351
  %v6530 = vadd.f32 %v6514, %v6353
  %v6531 = vadd.f32 %v6515, %v6355
  %v6532 = vadd.f32 %v6516, %v6373
  %v6533 = vadd.f32 %v6517, %v6375
  %v6534 = vadd.f32 %v6518, %v6377
  %v6535 = vadd.f32 %v6519, %v6379
  %v6536 = vadd.f32 %v6520, %v6381
  %v6537 = vadd.f32 %v6521, %v6383
  %v6538 = vadd.f32 %v6522, %v6385
  %v6539 = vadd.f32 %v6523, %v6387
  %v6540 = vadd.f32 %v6524, %v6389
  %v6541 = vadd.f32 %v6525, %v6391
  %v6542 = vadd.f32 %v6526, %v6393
  %v6543 = vadd.f32 %v6527, %v6395
  %v6544 = vadd.f32 %v6528, %v6397
  %v6545 = vadd.f32 %v6529, %v6399
  %v6546 = vadd.f32 %v6530, %v6401
  %v6547 = vadd.f32 %v6531, %v6403
  %v6548 = vadd.f32 %v6532, %v6421
  %v6549 = vadd.f32 %v6533, %v6423
  %v6550 = vadd.f32 %v6534, %v6425
  %v6551 = vadd.f32 %v6535, %v6427
  %v6552 = vadd.f32 %v6536, %v6429
  %v6553 = vadd.f32 %v6537, %v6431
  %v6554 = vadd.f32 %v6538, %v6433
  %v6555 = vadd.f32 %v6539, %v6435
  %v6556 = vadd.f32 %v6540, %v6437
  %v6557 = vadd.f32 %v6541, %v6439
  %v6558 = vadd.f32 %v6542, %v6441
  %v6559 = vadd.f32 %v6543, %v6443
  %v6560 = vadd.f32 %v6544, %v6445
  %v6561 = vadd.f32 %v6545, %v6447
  %v6562 = vadd.f32 %v6546, %v6449
  %v6563 = vadd.f32 %v6547, %v6451
  %v6564 = vrcp.pop %v6548
  %v6565 = vmul.f32 %v6548, %v6564
  %v6566 = vsub.f32 1.0, %v6565
  %v6567 = vmul.f32 %v6564, %v6566
  %v6568 = vadd.f32 %v6564, %v6567
  %vm6569 = vweird.f32 %v6548
  %vm6570 = vweird.f32 %v6564
  %vm6571 = vmor %vm6569, %vm6570
  %v6572 = vsel %vm6571, %v6564, %v6568
  %v6573 = vand.u32 2147483647, %v6548
  %vm6574 = vcmp.eq.f32.partialorder %v6573, 8.507059e+37
  %v6575 = vand.u32 %v6548, 2147483648
  %v6576 = vor.u32 1.1754944e-38, %v6575
  %v6577 = vsel %vm6574, %v6576, %v6572
  %v6578 = vmul.f32 1.0, %v6577
  %v6579 = vrcp.pop %v6549
  %v6580 = vmul.f32 %v6549, %v6579
  %v6581 = vsub.f32 1.0, %v6580
  %v6582 = vmul.f32 %v6579, %v6581
  %v6583 = vadd.f32 %v6579, %v6582
  %vm6584 = vweird.f32 %v6549
  %vm6585 = vweird.f32 %v6579
  %vm6586 = vmor %vm6584, %vm6585
  %v6587 = vsel %vm6586, %v6579, %v6583
  %v6588 = vand.u32 2147483647, %v6549
  %vm6589 = vcmp.eq.f32.partialorder %v6588, 8.507059e+37
  %v6590 = vand.u32 %v6549, 2147483648
  %v6591 = vor.u32 1.1754944e-38, %v6590
  %v6592 = vsel %vm6589, %v6591, %v6587
  %v6593 = vmul.f32 1.0, %v6592
  %v6594 = vrcp.pop %v6550
  %v6595 = vmul.f32 %v6550, %v6594
  %v6596 = vsub.f32 1.0, %v6595
  %v6597 = vmul.f32 %v6594, %v6596
  %v6598 = vadd.f32 %v6594, %v6597
  %vm6599 = vweird.f32 %v6550
  %vm6600 = vweird.f32 %v6594
  %vm6601 = vmor %vm6599, %vm6600
  %v6602 = vsel %vm6601, %v6594, %v6598
  %v6603 = vand.u32 2147483647, %v6550
  %vm6604 = vcmp.eq.f32.partialorder %v6603, 8.507059e+37
  %v6605 = vand.u32 %v6550, 2147483648
  %v6606 = vor.u32 1.1754944e-38, %v6605
  %v6607 = vsel %vm6604, %v6606, %v6602
  %v6608 = vmul.f32 1.0, %v6607
  %v6609 = vrcp.pop %v6551
  %v6610 = vmul.f32 %v6551, %v6609
  %v6611 = vsub.f32 1.0, %v6610
  %v6612 = vmul.f32 %v6609, %v6611
  %v6613 = vadd.f32 %v6609, %v6612
  %vm6614 = vweird.f32 %v6551
  %vm6615 = vweird.f32 %v6609
  %vm6616 = vmor %vm6614, %vm6615
  %v6617 = vsel %vm6616, %v6609, %v6613
  %v6618 = vand.u32 2147483647, %v6551
  %vm6619 = vcmp.eq.f32.partialorder %v6618, 8.507059e+37
  %v6620 = vand.u32 %v6551, 2147483648
  %v6621 = vor.u32 1.1754944e-38, %v6620
  %v6622 = vsel %vm6619, %v6621, %v6617
  %v6623 = vmul.f32 1.0, %v6622
  %v6624 = vrcp.pop %v6552
  %v6625 = vmul.f32 %v6552, %v6624
  %v6626 = vsub.f32 1.0, %v6625
  %v6627 = vmul.f32 %v6624, %v6626
  %v6628 = vadd.f32 %v6624, %v6627
  %vm6629 = vweird.f32 %v6552
  %vm6630 = vweird.f32 %v6624
  %vm6631 = vmor %vm6629, %vm6630
  %v6632 = vsel %vm6631, %v6624, %v6628
  %v6633 = vand.u32 2147483647, %v6552
  %vm6634 = vcmp.eq.f32.partialorder %v6633, 8.507059e+37
  %v6635 = vand.u32 %v6552, 2147483648
  %v6636 = vor.u32 1.1754944e-38, %v6635
  %v6637 = vsel %vm6634, %v6636, %v6632
  %v6638 = vmul.f32 1.0, %v6637
  %v6639 = vrcp.pop %v6553
  %v6640 = vmul.f32 %v6553, %v6639
  %v6641 = vsub.f32 1.0, %v6640
  %v6642 = vmul.f32 %v6639, %v6641
  %v6643 = vadd.f32 %v6639, %v6642
  %vm6644 = vweird.f32 %v6553
  %vm6645 = vweird.f32 %v6639
  %vm6646 = vmor %vm6644, %vm6645
  %v6647 = vsel %vm6646, %v6639, %v6643
  %v6648 = vand.u32 2147483647, %v6553
  %vm6649 = vcmp.eq.f32.partialorder %v6648, 8.507059e+37
  %v6650 = vand.u32 %v6553, 2147483648
  %v6651 = vor.u32 1.1754944e-38, %v6650
  %v6652 = vsel %vm6649, %v6651, %v6647
  %v6653 = vmul.f32 1.0, %v6652
  %v6654 = vrcp.pop %v6554
  %v6655 = vmul.f32 %v6554, %v6654
  %v6656 = vsub.f32 1.0, %v6655
  %v6657 = vmul.f32 %v6654, %v6656
  %v6658 = vadd.f32 %v6654, %v6657
  %vm6659 = vweird.f32 %v6554
  %vm6660 = vweird.f32 %v6654
  %vm6661 = vmor %vm6659, %vm6660
  %v6662 = vsel %vm6661, %v6654, %v6658
  %v6663 = vand.u32 2147483647, %v6554
  %vm6664 = vcmp.eq.f32.partialorder %v6663, 8.507059e+37
  %v6665 = vand.u32 %v6554, 2147483648
  %v6666 = vor.u32 1.1754944e-38, %v6665
  %v6667 = vsel %vm6664, %v6666, %v6662
  %v6668 = vmul.f32 1.0, %v6667
  %v6669 = vrcp.pop %v6555
  %v6670 = vmul.f32 %v6555, %v6669
  %v6671 = vsub.f32 1.0, %v6670
  %v6672 = vmul.f32 %v6669, %v6671
  %v6673 = vadd.f32 %v6669, %v6672
  %vm6674 = vweird.f32 %v6555
  %vm6675 = vweird.f32 %v6669
  %vm6676 = vmor %vm6674, %vm6675
  %v6677 = vsel %vm6676, %v6669, %v6673
  %v6678 = vand.u32 2147483647, %v6555
  %vm6679 = vcmp.eq.f32.partialorder %v6678, 8.507059e+37
  %v6680 = vand.u32 %v6555, 2147483648
  %v6681 = vor.u32 1.1754944e-38, %v6680
  %v6682 = vsel %vm6679, %v6681, %v6677
  %v6683 = vmul.f32 1.0, %v6682
  %v6684 = vrcp.pop %v6556
  %v6685 = vmul.f32 %v6556, %v6684
  %v6686 = vsub.f32 1.0, %v6685
  %v6687 = vmul.f32 %v6684, %v6686
  %v6688 = vadd.f32 %v6684, %v6687
  %vm6689 = vweird.f32 %v6556
  %vm6690 = vweird.f32 %v6684
  %vm6691 = vmor %vm6689, %vm6690
  %v6692 = vsel %vm6691, %v6684, %v6688
  %v6693 = vand.u32 2147483647, %v6556
  %vm6694 = vcmp.eq.f32.partialorder %v6693, 8.507059e+37
  %v6695 = vand.u32 %v6556, 2147483648
  %v6696 = vor.u32 1.1754944e-38, %v6695
  %v6697 = vsel %vm6694, %v6696, %v6692
  %v6698 = vmul.f32 1.0, %v6697
  %v6699 = vrcp.pop %v6557
  %v6700 = vmul.f32 %v6557, %v6699
  %v6701 = vsub.f32 1.0, %v6700
  %v6702 = vmul.f32 %v6699, %v6701
  %v6703 = vadd.f32 %v6699, %v6702
  %vm6704 = vweird.f32 %v6557
  %vm6705 = vweird.f32 %v6699
  %vm6706 = vmor %vm6704, %vm6705
  %v6707 = vsel %vm6706, %v6699, %v6703
  %v6708 = vand.u32 2147483647, %v6557
  %vm6709 = vcmp.eq.f32.partialorder %v6708, 8.507059e+37
  %v6710 = vand.u32 %v6557, 2147483648
  %v6711 = vor.u32 1.1754944e-38, %v6710
  %v6712 = vsel %vm6709, %v6711, %v6707
  %v6713 = vmul.f32 1.0, %v6712
  %v6714 = vrcp.pop %v6558
  %v6715 = vmul.f32 %v6558, %v6714
  %v6716 = vsub.f32 1.0, %v6715
  %v6717 = vmul.f32 %v6714, %v6716
  %v6718 = vadd.f32 %v6714, %v6717
  %vm6719 = vweird.f32 %v6558
  %vm6720 = vweird.f32 %v6714
  %vm6721 = vmor %vm6719, %vm6720
  %v6722 = vsel %vm6721, %v6714, %v6718
  %v6723 = vand.u32 2147483647, %v6558
  %vm6724 = vcmp.eq.f32.partialorder %v6723, 8.507059e+37
  %v6725 = vand.u32 %v6558, 2147483648
  %v6726 = vor.u32 1.1754944e-38, %v6725
  %v6727 = vsel %vm6724, %v6726, %v6722
  %v6728 = vmul.f32 1.0, %v6727
  %v6729 = vrcp.pop %v6559
  %v6730 = vmul.f32 %v6559, %v6729
  %v6731 = vsub.f32 1.0, %v6730
  %v6732 = vmul.f32 %v6729, %v6731
  %v6733 = vadd.f32 %v6729, %v6732
  %vm6734 = vweird.f32 %v6559
  %vm6735 = vweird.f32 %v6729
  %vm6736 = vmor %vm6734, %vm6735
  %v6737 = vsel %vm6736, %v6729, %v6733
  %v6738 = vand.u32 2147483647, %v6559
  %vm6739 = vcmp.eq.f32.partialorder %v6738, 8.507059e+37
  %v6740 = vand.u32 %v6559, 2147483648
  %v6741 = vor.u32 1.1754944e-38, %v6740
  %v6742 = vsel %vm6739, %v6741, %v6737
  %v6743 = vmul.f32 1.0, %v6742
  %v6744 = vrcp.pop %v6560
  %v6745 = vmul.f32 %v6560, %v6744
  %v6746 = vsub.f32 1.0, %v6745
  %v6747 = vmul.f32 %v6744, %v6746
  %v6748 = vadd.f32 %v6744, %v6747
  %vm6749 = vweird.f32 %v6560
  %vm6750 = vweird.f32 %v6744
  %vm6751 = vmor %vm6749, %vm6750
  %v6752 = vsel %vm6751, %v6744, %v6748
  %v6753 = vand.u32 2147483647, %v6560
  %vm6754 = vcmp.eq.f32.partialorder %v6753, 8.507059e+37
  %v6755 = vand.u32 %v6560, 2147483648
  %v6756 = vor.u32 1.1754944e-38, %v6755
  %v6757 = vsel %vm6754, %v6756, %v6752
  %v6758 = vmul.f32 1.0, %v6757
  %v6759 = vrcp.pop %v6561
  %v6760 = vmul.f32 %v6561, %v6759
  %v6761 = vsub.f32 1.0, %v6760
  %v6762 = vmul.f32 %v6759, %v6761
  %v6763 = vadd.f32 %v6759, %v6762
  %vm6764 = vweird.f32 %v6561
  %vm6765 = vweird.f32 %v6759
  %vm6766 = vmor %vm6764, %vm6765
  %v6767 = vsel %vm6766, %v6759, %v6763
  %v6768 = vand.u32 2147483647, %v6561
  %vm6769 = vcmp.eq.f32.partialorder %v6768, 8.507059e+37
  %v6770 = vand.u32 %v6561, 2147483648
  %v6771 = vor.u32 1.1754944e-38, %v6770
  %v6772 = vsel %vm6769, %v6771, %v6767
  %v6773 = vmul.f32 1.0, %v6772
  %v6774 = vrcp.pop %v6562
  %v6775 = vmul.f32 %v6562, %v6774
  %v6776 = vsub.f32 1.0, %v6775
  %v6777 = vmul.f32 %v6774, %v6776
  %v6778 = vadd.f32 %v6774, %v6777
  %vm6779 = vweird.f32 %v6562
  %vm6780 = vweird.f32 %v6774
  %vm6781 = vmor %vm6779, %vm6780
  %v6782 = vsel %vm6781, %v6774, %v6778
  %v6783 = vand.u32 2147483647, %v6562
  %vm6784 = vcmp.eq.f32.partialorder %v6783, 8.507059e+37
  %v6785 = vand.u32 %v6562, 2147483648
  %v6786 = vor.u32 1.1754944e-38, %v6785
  %v6787 = vsel %vm6784, %v6786, %v6782
  %v6788 = vmul.f32 1.0, %v6787
  %v6789 = vrcp.pop %v6563
  %v6790 = vmul.f32 %v6563, %v6789
  %v6791 = vsub.f32 1.0, %v6790
  %v6792 = vmul.f32 %v6789, %v6791
  %v6793 = vadd.f32 %v6789, %v6792
  %vm6794 = vweird.f32 %v6563
  %vm6795 = vweird.f32 %v6789
  %vm6796 = vmor %vm6794, %vm6795
  %v6797 = vsel %vm6796, %v6789, %v6793
  %v6798 = vand.u32 2147483647, %v6563
  %vm6799 = vcmp.eq.f32.partialorder %v6798, 8.507059e+37
  %v6800 = vand.u32 %v6563, 2147483648
  %v6801 = vor.u32 1.1754944e-38, %v6800
  %v6802 = vsel %vm6799, %v6801, %v6797
  %v6803 = vmul.f32 1.0, %v6802
  %v6804 = vmul.f32 %v260, %v6085
  %v6805 = vmul.f32 %v313, %v6087
  %v6806 = vmul.f32 %v260, %v6089
  %v6807 = vmul.f32 %v313, %v6091
  %v6808 = vmul.f32 %v260, %v6093
  %v6809 = vmul.f32 %v313, %v6095
  %v6810 = vmul.f32 %v260, %v6097
  %v6811 = vmul.f32 %v313, %v6099
  %v6812 = vmul.f32 %v260, %v6101
  %v6813 = vmul.f32 %v313, %v6103
  %v6814 = vmul.f32 %v260, %v6105
  %v6815 = vmul.f32 %v313, %v6107
  %v6816 = vmul.f32 %v260, %v6109
  %v6817 = vmul.f32 %v313, %v6111
  %v6818 = vmul.f32 %v260, %v6113
  %v6819 = vmul.f32 %v313, %v6115
  %v6820 = vmul.f32 %v366, %v6133
  %v6821 = vmul.f32 %v419, %v6135
  %v6822 = vmul.f32 %v366, %v6137
  %v6823 = vmul.f32 %v419, %v6139
  %v6824 = vmul.f32 %v366, %v6141
  %v6825 = vmul.f32 %v419, %v6143
  %v6826 = vmul.f32 %v366, %v6145
  %v6827 = vmul.f32 %v419, %v6147
  %v6828 = vmul.f32 %v366, %v6149
  %v6829 = vmul.f32 %v419, %v6151
  %v6830 = vmul.f32 %v366, %v6153
  %v6831 = vmul.f32 %v419, %v6155
  %v6832 = vmul.f32 %v366, %v6157
  %v6833 = vmul.f32 %v419, %v6159
  %v6834 = vmul.f32 %v366, %v6161
  %v6835 = vmul.f32 %v419, %v6163
  %v6836 = vadd.f32 %v6804, %v6820
  %v6837 = vadd.f32 %v6805, %v6821
  %v6838 = vadd.f32 %v6806, %v6822
  %v6839 = vadd.f32 %v6807, %v6823
  %v6840 = vadd.f32 %v6808, %v6824
  %v6841 = vadd.f32 %v6809, %v6825
  %v6842 = vadd.f32 %v6810, %v6826
  %v6843 = vadd.f32 %v6811, %v6827
  %v6844 = vadd.f32 %v6812, %v6828
  %v6845 = vadd.f32 %v6813, %v6829
  %v6846 = vadd.f32 %v6814, %v6830
  %v6847 = vadd.f32 %v6815, %v6831
  %v6848 = vadd.f32 %v6816, %v6832
  %v6849 = vadd.f32 %v6817, %v6833
  %v6850 = vadd.f32 %v6818, %v6834
  %v6851 = vadd.f32 %v6819, %v6835
  %v6852 = vmul.f32 %v472, %v6181
  %v6853 = vmul.f32 %v525, %v6183
  %v6854 = vmul.f32 %v472, %v6185
  %v6855 = vmul.f32 %v525, %v6187
  %v6856 = vmul.f32 %v472, %v6189
  %v6857 = vmul.f32 %v525, %v6191
  %v6858 = vmul.f32 %v472, %v6193
  %v6859 = vmul.f32 %v525, %v6195
  %v6860 = vmul.f32 %v472, %v6197
  %v6861 = vmul.f32 %v525, %v6199
  %v6862 = vmul.f32 %v472, %v6201
  %v6863 = vmul.f32 %v525, %v6203
  %v6864 = vmul.f32 %v472, %v6205
  %v6865 = vmul.f32 %v525, %v6207
  %v6866 = vmul.f32 %v472, %v6209
  %v6867 = vmul.f32 %v525, %v6211
  %v6868 = vadd.f32 %v6836, %v6852
  %v6869 = vadd.f32 %v6837, %v6853
  %v6870 = vadd.f32 %v6838, %v6854
  %v6871 = vadd.f32 %v6839, %v6855
  %v6872 = vadd.f32 %v6840, %v6856
  %v6873 = vadd.f32 %v6841, %v6857
  %v6874 = vadd.f32 %v6842, %v6858
  %v6875 = vadd.f32 %v6843, %v6859
  %v6876 = vadd.f32 %v6844, %v6860
  %v6877 = vadd.f32 %v6845, %v6861
  %v6878 = vadd.f32 %v6846, %v6862
  %v6879 = vadd.f32 %v6847, %v6863
  %v6880 = vadd.f32 %v6848, %v6864
  %v6881 = vadd.f32 %v6849, %v6865
  %v6882 = vadd.f32 %v6850, %v6866
  %v6883 = vadd.f32 %v6851, %v6867
  %v6884 = vmul.f32 %v578, %v6229
  %v6885 = vmul.f32 %v631, %v6231
  %v6886 = vmul.f32 %v578, %v6233
  %v6887 = vmul.f32 %v631, %v6235
  %v6888 = vmul.f32 %v578, %v6237
  %v6889 = vmul.f32 %v631, %v6239
  %v6890 = vmul.f32 %v578, %v6241
  %v6891 = vmul.f32 %v631, %v6243
  %v6892 = vmul.f32 %v578, %v6245
  %v6893 = vmul.f32 %v631, %v6247
  %v6894 = vmul.f32 %v578, %v6249
  %v6895 = vmul.f32 %v631, %v6251
  %v6896 = vmul.f32 %v578, %v6253
  %v6897 = vmul.f32 %v631, %v6255
  %v6898 = vmul.f32 %v578, %v6257
  %v6899 = vmul.f32 %v631, %v6259
  %v6900 = vadd.f32 %v6868, %v6884
  %v6901 = vadd.f32 %v6869, %v6885
  %v6902 = vadd.f32 %v6870, %v6886
  %v6903 = vadd.f32 %v6871, %v6887
  %v6904 = vadd.f32 %v6872, %v6888
  %v6905 = vadd.f32 %v6873, %v6889
  %v6906 = vadd.f32 %v6874, %v6890
  %v6907 = vadd.f32 %v6875, %v6891
  %v6908 = vadd.f32 %v6876, %v6892
  %v6909 = vadd.f32 %v6877, %v6893
  %v6910 = vadd.f32 %v6878, %v6894
  %v6911 = vadd.f32 %v6879, %v6895
  %v6912 = vadd.f32 %v6880, %v6896
  %v6913 = vadd.f32 %v6881, %v6897
  %v6914 = vadd.f32 %v6882, %v6898
  %v6915 = vadd.f32 %v6883, %v6899
  %v6916 = vmul.f32 %v684, %v6277
  %v6917 = vmul.f32 %v737, %v6279
  %v6918 = vmul.f32 %v684, %v6281
  %v6919 = vmul.f32 %v737, %v6283
  %v6920 = vmul.f32 %v684, %v6285
  %v6921 = vmul.f32 %v737, %v6287
  %v6922 = vmul.f32 %v684, %v6289
  %v6923 = vmul.f32 %v737, %v6291
  %v6924 = vmul.f32 %v684, %v6293
  %v6925 = vmul.f32 %v737, %v6295
  %v6926 = vmul.f32 %v684, %v6297
  %v6927 = vmul.f32 %v737, %v6299
  %v6928 = vmul.f32 %v684, %v6301
  %v6929 = vmul.f32 %v737, %v6303
  %v6930 = vmul.f32 %v684, %v6305
  %v6931 = vmul.f32 %v737, %v6307
  %v6932 = vadd.f32 %v6900, %v6916
  %v6933 = vadd.f32 %v6901, %v6917
  %v6934 = vadd.f32 %v6902, %v6918
  %v6935 = vadd.f32 %v6903, %v6919
  %v6936 = vadd.f32 %v6904, %v6920
  %v6937 = vadd.f32 %v6905, %v6921
  %v6938 = vadd.f32 %v6906, %v6922
  %v6939 = vadd.f32 %v6907, %v6923
  %v6940 = vadd.f32 %v6908, %v6924
  %v6941 = vadd.f32 %v6909, %v6925
  %v6942 = vadd.f32 %v6910, %v6926
  %v6943 = vadd.f32 %v6911, %v6927
  %v6944 = vadd.f32 %v6912, %v6928
  %v6945 = vadd.f32 %v6913, %v6929
  %v6946 = vadd.f32 %v6914, %v6930
  %v6947 = vadd.f32 %v6915, %v6931
  %v6948 = vmul.f32 %v790, %v6325
  %v6949 = vmul.f32 %v843, %v6327
  %v6950 = vmul.f32 %v790, %v6329
  %v6951 = vmul.f32 %v843, %v6331
  %v6952 = vmul.f32 %v790, %v6333
  %v6953 = vmul.f32 %v843, %v6335
  %v6954 = vmul.f32 %v790, %v6337
  %v6955 = vmul.f32 %v843, %v6339
  %v6956 = vmul.f32 %v790, %v6341
  %v6957 = vmul.f32 %v843, %v6343
  %v6958 = vmul.f32 %v790, %v6345
  %v6959 = vmul.f32 %v843, %v6347
  %v6960 = vmul.f32 %v790, %v6349
  %v6961 = vmul.f32 %v843, %v6351
  %v6962 = vmul.f32 %v790, %v6353
  %v6963 = vmul.f32 %v843, %v6355
  %v6964 = vadd.f32 %v6932, %v6948
  %v6965 = vadd.f32 %v6933, %v6949
  %v6966 = vadd.f32 %v6934, %v6950
  %v6967 = vadd.f32 %v6935, %v6951
  %v6968 = vadd.f32 %v6936, %v6952
  %v6969 = vadd.f32 %v6937, %v6953
  %v6970 = vadd.f32 %v6938, %v6954
  %v6971 = vadd.f32 %v6939, %v6955
  %v6972 = vadd.f32 %v6940, %v6956
  %v6973 = vadd.f32 %v6941, %v6957
  %v6974 = vadd.f32 %v6942, %v6958
  %v6975 = vadd.f32 %v6943, %v6959
  %v6976 = vadd.f32 %v6944, %v6960
  %v6977 = vadd.f32 %v6945, %v6961
  %v6978 = vadd.f32 %v6946, %v6962
  %v6979 = vadd.f32 %v6947, %v6963
  %v6980 = vmul.f32 %v896, %v6373
  %v6981 = vmul.f32 %v949, %v6375
  %v6982 = vmul.f32 %v896, %v6377
  %v6983 = vmul.f32 %v949, %v6379
  %v6984 = vmul.f32 %v896, %v6381
  %v6985 = vmul.f32 %v949, %v6383
  %v6986 = vmul.f32 %v896, %v6385
  %v6987 = vmul.f32 %v949, %v6387
  %v6988 = vmul.f32 %v896, %v6389
  %v6989 = vmul.f32 %v949, %v6391
  %v6990 = vmul.f32 %v896, %v6393
  %v6991 = vmul.f32 %v949, %v6395
  %v6992 = vmul.f32 %v896, %v6397
  %v6993 = vmul.f32 %v949, %v6399
  %v6994 = vmul.f32 %v896, %v6401
  %v6995 = vmul.f32 %v949, %v6403
  %v6996 = vadd.f32 %v6964, %v6980
  %v6997 = vadd.f32 %v6965, %v6981
  %v6998 = vadd.f32 %v6966, %v6982
  %v6999 = vadd.f32 %v6967, %v6983
  %v7000 = vadd.f32 %v6968, %v6984
  %v7001 = vadd.f32 %v6969, %v6985
  %v7002 = vadd.f32 %v6970, %v6986
  %v7003 = vadd.f32 %v6971, %v6987
  %v7004 = vadd.f32 %v6972, %v6988
  %v7005 = vadd.f32 %v6973, %v6989
  %v7006 = vadd.f32 %v6974, %v6990
  %v7007 = vadd.f32 %v6975, %v6991
  %v7008 = vadd.f32 %v6976, %v6992
  %v7009 = vadd.f32 %v6977, %v6993
  %v7010 = vadd.f32 %v6978, %v6994
  %v7011 = vadd.f32 %v6979, %v6995
  %v7012 = vmul.f32 %v1002, %v6421
  %v7013 = vmul.f32 %v1055, %v6423
  %v7014 = vmul.f32 %v1002, %v6425
  %v7015 = vmul.f32 %v1055, %v6427
  %v7016 = vmul.f32 %v1002, %v6429
  %v7017 = vmul.f32 %v1055, %v6431
  %v7018 = vmul.f32 %v1002, %v6433
  %v7019 = vmul.f32 %v1055, %v6435
  %v7020 = vmul.f32 %v1002, %v6437
  %v7021 = vmul.f32 %v1055, %v6439
  %v7022 = vmul.f32 %v1002, %v6441
  %v7023 = vmul.f32 %v1055, %v6443
  %v7024 = vmul.f32 %v1002, %v6445
  %v7025 = vmul.f32 %v1055, %v6447
  %v7026 = vmul.f32 %v1002, %v6449
  %v7027 = vmul.f32 %v1055, %v6451
  %v7028 = vadd.f32 %v6996, %v7012
  %v7029 = vadd.f32 %v6997, %v7013
  %v7030 = vadd.f32 %v6998, %v7014
  %v7031 = vadd.f32 %v6999, %v7015
  %v7032 = vadd.f32 %v7000, %v7016
  %v7033 = vadd.f32 %v7001, %v7017
  %v7034 = vadd.f32 %v7002, %v7018
  %v7035 = vadd.f32 %v7003, %v7019
  %v7036 = vadd.f32 %v7004, %v7020
  %v7037 = vadd.f32 %v7005, %v7021
  %v7038 = vadd.f32 %v7006, %v7022
  %v7039 = vadd.f32 %v7007, %v7023
  %v7040 = vadd.f32 %v7008, %v7024
  %v7041 = vadd.f32 %v7009, %v7025
  %v7042 = vadd.f32 %v7010, %v7026
  %v7043 = vadd.f32 %v7011, %v7027
  %v7044 = vmul.f32 %v7028, %v6578
  %v7045 = vmul.f32 %v7029, %v6593
  %v7046 = vmul.f32 %v7030, %v6608
  %v7047 = vmul.f32 %v7031, %v6623
  %v7048 = vmul.f32 %v7032, %v6638
  %v7049 = vmul.f32 %v7033, %v6653
  %v7050 = vmul.f32 %v7034, %v6668
  %v7051 = vmul.f32 %v7035, %v6683
  %v7052 = vmul.f32 %v7036, %v6698
  %v7053 = vmul.f32 %v7037, %v6713
  %v7054 = vmul.f32 %v7038, %v6728
  %v7055 = vmul.f32 %v7039, %v6743
  %v7056 = vmul.f32 %v7040, %v6758
  %v7057 = vmul.f32 %v7041, %v6773
  %v7058 = vmul.f32 %v7042, %v6788
  %v7059 = vmul.f32 %v7043, %v6803
  %v7060 = vmul.f32 %v239, %v251
  %v7061 = vmul.f32 %v292, %v304
  %v7062 = vmul.f32 %v345, %v251
  %v7063 = vmul.f32 %v398, %v304
  %v7064 = vmul.f32 %v451, %v251
  %v7065 = vmul.f32 %v504, %v304
  %v7066 = vmul.f32 %v557, %v251
  %v7067 = vmul.f32 %v610, %v304
  %v7068 = vmul.f32 %v663, %v251
  %v7069 = vmul.f32 %v716, %v304
  %v7070 = vmul.f32 %v769, %v251
  %v7071 = vmul.f32 %v822, %v304
  %v7072 = vmul.f32 %v875, %v251
  %v7073 = vmul.f32 %v928, %v304
  %v7074 = vmul.f32 %v981, %v251
  %v7075 = vmul.f32 %v1034, %v304
  %v7076 = vrot.slane %v7060, 4
  %v7077 = vadd.f32 %v7060, %v7076
  %v7078 = vrot.slane %v7077, 2
  %v7079 = vadd.f32 %v7077, %v7078
  %v7080 = vrot.slane %v7079, 1
  %v7081 = vadd.f32 %v7079, %v7080
  %v7082 = vrot.slane %v7061, 4
  %v7083 = vadd.f32 %v7061, %v7082
  %v7084 = vrot.slane %v7083, 2
  %v7085 = vadd.f32 %v7083, %v7084
  %v7086 = vrot.slane %v7085, 1
  %v7087 = vadd.f32 %v7085, %v7086
  %v7088 = vrot.slane %v7062, 4
  %v7089 = vadd.f32 %v7062, %v7088
  %v7090 = vrot.slane %v7089, 2
  %v7091 = vadd.f32 %v7089, %v7090
  %v7092 = vrot.slane %v7091, 1
  %v7093 = vadd.f32 %v7091, %v7092
  %v7094 = vrot.slane %v7063, 4
  %v7095 = vadd.f32 %v7063, %v7094
  %v7096 = vrot.slane %v7095, 2
  %v7097 = vadd.f32 %v7095, %v7096
  %v7098 = vrot.slane %v7097, 1
  %v7099 = vadd.f32 %v7097, %v7098
  %v7100 = vrot.slane %v7064, 4
  %v7101 = vadd.f32 %v7064, %v7100
  %v7102 = vrot.slane %v7101, 2
  %v7103 = vadd.f32 %v7101, %v7102
  %v7104 = vrot.slane %v7103, 1
  %v7105 = vadd.f32 %v7103, %v7104
  %v7106 = vrot.slane %v7065, 4
  %v7107 = vadd.f32 %v7065, %v7106
  %v7108 = vrot.slane %v7107, 2
  %v7109 = vadd.f32 %v7107, %v7108
  %v7110 = vrot.slane %v7109, 1
  %v7111 = vadd.f32 %v7109, %v7110
  %v7112 = vrot.slane %v7066, 4
  %v7113 = vadd.f32 %v7066, %v7112
  %v7114 = vrot.slane %v7113, 2
  %v7115 = vadd.f32 %v7113, %v7114
  %v7116 = vrot.slane %v7115, 1
  %v7117 = vadd.f32 %v7115, %v7116
  %v7118 = vrot.slane %v7067, 4
  %v7119 = vadd.f32 %v7067, %v7118
  %v7120 = vrot.slane %v7119, 2
  %v7121 = vadd.f32 %v7119, %v7120
  %v7122 = vrot.slane %v7121, 1
  %v7123 = vadd.f32 %v7121, %v7122
  %v7124 = vrot.slane %v7068, 4
  %v7125 = vadd.f32 %v7068, %v7124
  %v7126 = vrot.slane %v7125, 2
  %v7127 = vadd.f32 %v7125, %v7126
  %v7128 = vrot.slane %v7127, 1
  %v7129 = vadd.f32 %v7127, %v7128
  %v7130 = vrot.slane %v7069, 4
  %v7131 = vadd.f32 %v7069, %v7130
  %v7132 = vrot.slane %v7131, 2
  %v7133 = vadd.f32 %v7131, %v7132
  %v7134 = vrot.slane %v7133, 1
  %v7135 = vadd.f32 %v7133, %v7134
  %v7136 = vrot.slane %v7070, 4
  %v7137 = vadd.f32 %v7070, %v7136
  %v7138 = vrot.slane %v7137, 2
  %v7139 = vadd.f32 %v7137, %v7138
  %v7140 = vrot.slane %v7139, 1
  %v7141 = vadd.f32 %v7139, %v7140
  %v7142 = vrot.slane %v7071, 4
  %v7143 = vadd.f32 %v7071, %v7142
  %v7144 = vrot.slane %v7143, 2
  %v7145 = vadd.f32 %v7143, %v7144
  %v7146 = vrot.slane %v7145, 1
  %v7147 = vadd.f32 %v7145, %v7146
  %v7148 = vrot.slane %v7072, 4
  %v7149 = vadd.f32 %v7072, %v7148
  %v7150 = vrot.slane %v7149, 2
  %v7151 = vadd.f32 %v7149, %v7150
  %v7152 = vrot.slane %v7151, 1
  %v7153 = vadd.f32 %v7151, %v7152
  %v7154 = vrot.slane %v7073, 4
  %v7155 = vadd.f32 %v7073, %v7154
  %v7156 = vrot.slane %v7155, 2
  %v7157 = vadd.f32 %v7155, %v7156
  %v7158 = vrot.slane %v7157, 1
  %v7159 = vadd.f32 %v7157, %v7158
  %v7160 = vrot.slane %v7074, 4
  %v7161 = vadd.f32 %v7074, %v7160
  %v7162 = vrot.slane %v7161, 2
  %v7163 = vadd.f32 %v7161, %v7162
  %v7164 = vrot.slane %v7163, 1
  %v7165 = vadd.f32 %v7163, %v7164
  %v7166 = vrot.slane %v7075, 4
  %v7167 = vadd.f32 %v7075, %v7166
  %v7168 = vrot.slane %v7167, 2
  %v7169 = vadd.f32 %v7167, %v7168
  %v7170 = vrot.slane %v7169, 1
  %v7171 = vadd.f32 %v7169, %v7170
  %v7172 = vmul.f32 %v239, %v357
  %v7173 = vmul.f32 %v292, %v410
  %v7174 = vmul.f32 %v345, %v357
  %v7175 = vmul.f32 %v398, %v410
  %v7176 = vmul.f32 %v451, %v357
  %v7177 = vmul.f32 %v504, %v410
  %v7178 = vmul.f32 %v557, %v357
  %v7179 = vmul.f32 %v610, %v410
  %v7180 = vmul.f32 %v663, %v357
  %v7181 = vmul.f32 %v716, %v410
  %v7182 = vmul.f32 %v769, %v357
  %v7183 = vmul.f32 %v822, %v410
  %v7184 = vmul.f32 %v875, %v357
  %v7185 = vmul.f32 %v928, %v410
  %v7186 = vmul.f32 %v981, %v357
  %v7187 = vmul.f32 %v1034, %v410
  %v7188 = vrot.slane %v7172, 4
  %v7189 = vadd.f32 %v7172, %v7188
  %v7190 = vrot.slane %v7189, 2
  %v7191 = vadd.f32 %v7189, %v7190
  %v7192 = vrot.slane %v7191, 1
  %v7193 = vadd.f32 %v7191, %v7192
  %v7194 = vrot.slane %v7173, 4
  %v7195 = vadd.f32 %v7173, %v7194
  %v7196 = vrot.slane %v7195, 2
  %v7197 = vadd.f32 %v7195, %v7196
  %v7198 = vrot.slane %v7197, 1
  %v7199 = vadd.f32 %v7197, %v7198
  %v7200 = vrot.slane %v7174, 4
  %v7201 = vadd.f32 %v7174, %v7200
  %v7202 = vrot.slane %v7201, 2
  %v7203 = vadd.f32 %v7201, %v7202
  %v7204 = vrot.slane %v7203, 1
  %v7205 = vadd.f32 %v7203, %v7204
  %v7206 = vrot.slane %v7175, 4
  %v7207 = vadd.f32 %v7175, %v7206
  %v7208 = vrot.slane %v7207, 2
  %v7209 = vadd.f32 %v7207, %v7208
  %v7210 = vrot.slane %v7209, 1
  %v7211 = vadd.f32 %v7209, %v7210
  %v7212 = vrot.slane %v7176, 4
  %v7213 = vadd.f32 %v7176, %v7212
  %v7214 = vrot.slane %v7213, 2
  %v7215 = vadd.f32 %v7213, %v7214
  %v7216 = vrot.slane %v7215, 1
  %v7217 = vadd.f32 %v7215, %v7216
  %v7218 = vrot.slane %v7177, 4
  %v7219 = vadd.f32 %v7177, %v7218
  %v7220 = vrot.slane %v7219, 2
  %v7221 = vadd.f32 %v7219, %v7220
  %v7222 = vrot.slane %v7221, 1
  %v7223 = vadd.f32 %v7221, %v7222
  %v7224 = vrot.slane %v7178, 4
  %v7225 = vadd.f32 %v7178, %v7224
  %v7226 = vrot.slane %v7225, 2
  %v7227 = vadd.f32 %v7225, %v7226
  %v7228 = vrot.slane %v7227, 1
  %v7229 = vadd.f32 %v7227, %v7228
  %v7230 = vrot.slane %v7179, 4
  %v7231 = vadd.f32 %v7179, %v7230
  %v7232 = vrot.slane %v7231, 2
  %v7233 = vadd.f32 %v7231, %v7232
  %v7234 = vrot.slane %v7233, 1
  %v7235 = vadd.f32 %v7233, %v7234
  %v7236 = vrot.slane %v7180, 4
  %v7237 = vadd.f32 %v7180, %v7236
  %v7238 = vrot.slane %v7237, 2
  %v7239 = vadd.f32 %v7237, %v7238
  %v7240 = vrot.slane %v7239, 1
  %v7241 = vadd.f32 %v7239, %v7240
  %v7242 = vrot.slane %v7181, 4
  %v7243 = vadd.f32 %v7181, %v7242
  %v7244 = vrot.slane %v7243, 2
  %v7245 = vadd.f32 %v7243, %v7244
  %v7246 = vrot.slane %v7245, 1
  %v7247 = vadd.f32 %v7245, %v7246
  %v7248 = vrot.slane %v7182, 4
  %v7249 = vadd.f32 %v7182, %v7248
  %v7250 = vrot.slane %v7249, 2
  %v7251 = vadd.f32 %v7249, %v7250
  %v7252 = vrot.slane %v7251, 1
  %v7253 = vadd.f32 %v7251, %v7252
  %v7254 = vrot.slane %v7183, 4
  %v7255 = vadd.f32 %v7183, %v7254
  %v7256 = vrot.slane %v7255, 2
  %v7257 = vadd.f32 %v7255, %v7256
  %v7258 = vrot.slane %v7257, 1
  %v7259 = vadd.f32 %v7257, %v7258
  %v7260 = vrot.slane %v7184, 4
  %v7261 = vadd.f32 %v7184, %v7260
  %v7262 = vrot.slane %v7261, 2
  %v7263 = vadd.f32 %v7261, %v7262
  %v7264 = vrot.slane %v7263, 1
  %v7265 = vadd.f32 %v7263, %v7264
  %v7266 = vrot.slane %v7185, 4
  %v7267 = vadd.f32 %v7185, %v7266
  %v7268 = vrot.slane %v7267, 2
  %v7269 = vadd.f32 %v7267, %v7268
  %v7270 = vrot.slane %v7269, 1
  %v7271 = vadd.f32 %v7269, %v7270
  %v7272 = vrot.slane %v7186, 4
  %v7273 = vadd.f32 %v7186, %v7272
  %v7274 = vrot.slane %v7273, 2
  %v7275 = vadd.f32 %v7273, %v7274
  %v7276 = vrot.slane %v7275, 1
  %v7277 = vadd.f32 %v7275, %v7276
  %v7278 = vrot.slane %v7187, 4
  %v7279 = vadd.f32 %v7187, %v7278
  %v7280 = vrot.slane %v7279, 2
  %v7281 = vadd.f32 %v7279, %v7280
  %v7282 = vrot.slane %v7281, 1
  %v7283 = vadd.f32 %v7281, %v7282
  %v7284 = vmul.f32 %v239, %v463
  %v7285 = vmul.f32 %v292, %v516
  %v7286 = vmul.f32 %v345, %v463
  %v7287 = vmul.f32 %v398, %v516
  %v7288 = vmul.f32 %v451, %v463
  %v7289 = vmul.f32 %v504, %v516
  %v7290 = vmul.f32 %v557, %v463
  %v7291 = vmul.f32 %v610, %v516
  %v7292 = vmul.f32 %v663, %v463
  %v7293 = vmul.f32 %v716, %v516
  %v7294 = vmul.f32 %v769, %v463
  %v7295 = vmul.f32 %v822, %v516
  %v7296 = vmul.f32 %v875, %v463
  %v7297 = vmul.f32 %v928, %v516
  %v7298 = vmul.f32 %v981, %v463
  %v7299 = vmul.f32 %v1034, %v516
  %v7300 = vrot.slane %v7284, 4
  %v7301 = vadd.f32 %v7284, %v7300
  %v7302 = vrot.slane %v7301, 2
  %v7303 = vadd.f32 %v7301, %v7302
  %v7304 = vrot.slane %v7303, 1
  %v7305 = vadd.f32 %v7303, %v7304
  %v7306 = vrot.slane %v7285, 4
  %v7307 = vadd.f32 %v7285, %v7306
  %v7308 = vrot.slane %v7307, 2
  %v7309 = vadd.f32 %v7307, %v7308
  %v7310 = vrot.slane %v7309, 1
  %v7311 = vadd.f32 %v7309, %v7310
  %v7312 = vrot.slane %v7286, 4
  %v7313 = vadd.f32 %v7286, %v7312
  %v7314 = vrot.slane %v7313, 2
  %v7315 = vadd.f32 %v7313, %v7314
  %v7316 = vrot.slane %v7315, 1
  %v7317 = vadd.f32 %v7315, %v7316
  %v7318 = vrot.slane %v7287, 4
  %v7319 = vadd.f32 %v7287, %v7318
  %v7320 = vrot.slane %v7319, 2
  %v7321 = vadd.f32 %v7319, %v7320
  %v7322 = vrot.slane %v7321, 1
  %v7323 = vadd.f32 %v7321, %v7322
  %v7324 = vrot.slane %v7288, 4
  %v7325 = vadd.f32 %v7288, %v7324
  %v7326 = vrot.slane %v7325, 2
  %v7327 = vadd.f32 %v7325, %v7326
  %v7328 = vrot.slane %v7327, 1
  %v7329 = vadd.f32 %v7327, %v7328
  %v7330 = vrot.slane %v7289, 4
  %v7331 = vadd.f32 %v7289, %v7330
  %v7332 = vrot.slane %v7331, 2
  %v7333 = vadd.f32 %v7331, %v7332
  %v7334 = vrot.slane %v7333, 1
  %v7335 = vadd.f32 %v7333, %v7334
  %v7336 = vrot.slane %v7290, 4
  %v7337 = vadd.f32 %v7290, %v7336
  %v7338 = vrot.slane %v7337, 2
  %v7339 = vadd.f32 %v7337, %v7338
  %v7340 = vrot.slane %v7339, 1
  %v7341 = vadd.f32 %v7339, %v7340
  %v7342 = vrot.slane %v7291, 4
  %v7343 = vadd.f32 %v7291, %v7342
  %v7344 = vrot.slane %v7343, 2
  %v7345 = vadd.f32 %v7343, %v7344
  %v7346 = vrot.slane %v7345, 1
  %v7347 = vadd.f32 %v7345, %v7346
  %v7348 = vrot.slane %v7292, 4
  %v7349 = vadd.f32 %v7292, %v7348
  %v7350 = vrot.slane %v7349, 2
  %v7351 = vadd.f32 %v7349, %v7350
  %v7352 = vrot.slane %v7351, 1
  %v7353 = vadd.f32 %v7351, %v7352
  %v7354 = vrot.slane %v7293, 4
  %v7355 = vadd.f32 %v7293, %v7354
  %v7356 = vrot.slane %v7355, 2
  %v7357 = vadd.f32 %v7355, %v7356
  %v7358 = vrot.slane %v7357, 1
  %v7359 = vadd.f32 %v7357, %v7358
  %v7360 = vrot.slane %v7294, 4
  %v7361 = vadd.f32 %v7294, %v7360
  %v7362 = vrot.slane %v7361, 2
  %v7363 = vadd.f32 %v7361, %v7362
  %v7364 = vrot.slane %v7363, 1
  %v7365 = vadd.f32 %v7363, %v7364
  %v7366 = vrot.slane %v7295, 4
  %v7367 = vadd.f32 %v7295, %v7366
  %v7368 = vrot.slane %v7367, 2
  %v7369 = vadd.f32 %v7367, %v7368
  %v7370 = vrot.slane %v7369, 1
  %v7371 = vadd.f32 %v7369, %v7370
  %v7372 = vrot.slane %v7296, 4
  %v7373 = vadd.f32 %v7296, %v7372
  %v7374 = vrot.slane %v7373, 2
  %v7375 = vadd.f32 %v7373, %v7374
  %v7376 = vrot.slane %v7375, 1
  %v7377 = vadd.f32 %v7375, %v7376
  %v7378 = vrot.slane %v7297, 4
  %v7379 = vadd.f32 %v7297, %v7378
  %v7380 = vrot.slane %v7379, 2
  %v7381 = vadd.f32 %v7379, %v7380
  %v7382 = vrot.slane %v7381, 1
  %v7383 = vadd.f32 %v7381, %v7382
  %v7384 = vrot.slane %v7298, 4
  %v7385 = vadd.f32 %v7298, %v7384
  %v7386 = vrot.slane %v7385, 2
  %v7387 = vadd.f32 %v7385, %v7386
  %v7388 = vrot.slane %v7387, 1
  %v7389 = vadd.f32 %v7387, %v7388
  %v7390 = vrot.slane %v7299, 4
  %v7391 = vadd.f32 %v7299, %v7390
  %v7392 = vrot.slane %v7391, 2
  %v7393 = vadd.f32 %v7391, %v7392
  %v7394 = vrot.slane %v7393, 1
  %v7395 = vadd.f32 %v7393, %v7394
  %v7396 = vmul.f32 %v239, %v569
  %v7397 = vmul.f32 %v292, %v622
  %v7398 = vmul.f32 %v345, %v569
  %v7399 = vmul.f32 %v398, %v622
  %v7400 = vmul.f32 %v451, %v569
  %v7401 = vmul.f32 %v504, %v622
  %v7402 = vmul.f32 %v557, %v569
  %v7403 = vmul.f32 %v610, %v622
  %v7404 = vmul.f32 %v663, %v569
  %v7405 = vmul.f32 %v716, %v622
  %v7406 = vmul.f32 %v769, %v569
  %v7407 = vmul.f32 %v822, %v622
  %v7408 = vmul.f32 %v875, %v569
  %v7409 = vmul.f32 %v928, %v622
  %v7410 = vmul.f32 %v981, %v569
  %v7411 = vmul.f32 %v1034, %v622
  %v7412 = vrot.slane %v7396, 4
  %v7413 = vadd.f32 %v7396, %v7412
  %v7414 = vrot.slane %v7413, 2
  %v7415 = vadd.f32 %v7413, %v7414
  %v7416 = vrot.slane %v7415, 1
  %v7417 = vadd.f32 %v7415, %v7416
  %v7418 = vrot.slane %v7397, 4
  %v7419 = vadd.f32 %v7397, %v7418
  %v7420 = vrot.slane %v7419, 2
  %v7421 = vadd.f32 %v7419, %v7420
  %v7422 = vrot.slane %v7421, 1
  %v7423 = vadd.f32 %v7421, %v7422
  %v7424 = vrot.slane %v7398, 4
  %v7425 = vadd.f32 %v7398, %v7424
  %v7426 = vrot.slane %v7425, 2
  %v7427 = vadd.f32 %v7425, %v7426
  %v7428 = vrot.slane %v7427, 1
  %v7429 = vadd.f32 %v7427, %v7428
  %v7430 = vrot.slane %v7399, 4
  %v7431 = vadd.f32 %v7399, %v7430
  %v7432 = vrot.slane %v7431, 2
  %v7433 = vadd.f32 %v7431, %v7432
  %v7434 = vrot.slane %v7433, 1
  %v7435 = vadd.f32 %v7433, %v7434
  %v7436 = vrot.slane %v7400, 4
  %v7437 = vadd.f32 %v7400, %v7436
  %v7438 = vrot.slane %v7437, 2
  %v7439 = vadd.f32 %v7437, %v7438
  %v7440 = vrot.slane %v7439, 1
  %v7441 = vadd.f32 %v7439, %v7440
  %v7442 = vrot.slane %v7401, 4
  %v7443 = vadd.f32 %v7401, %v7442
  %v7444 = vrot.slane %v7443, 2
  %v7445 = vadd.f32 %v7443, %v7444
  %v7446 = vrot.slane %v7445, 1
  %v7447 = vadd.f32 %v7445, %v7446
  %v7448 = vrot.slane %v7402, 4
  %v7449 = vadd.f32 %v7402, %v7448
  %v7450 = vrot.slane %v7449, 2
  %v7451 = vadd.f32 %v7449, %v7450
  %v7452 = vrot.slane %v7451, 1
  %v7453 = vadd.f32 %v7451, %v7452
  %v7454 = vrot.slane %v7403, 4
  %v7455 = vadd.f32 %v7403, %v7454
  %v7456 = vrot.slane %v7455, 2
  %v7457 = vadd.f32 %v7455, %v7456
  %v7458 = vrot.slane %v7457, 1
  %v7459 = vadd.f32 %v7457, %v7458
  %v7460 = vrot.slane %v7404, 4
  %v7461 = vadd.f32 %v7404, %v7460
  %v7462 = vrot.slane %v7461, 2
  %v7463 = vadd.f32 %v7461, %v7462
  %v7464 = vrot.slane %v7463, 1
  %v7465 = vadd.f32 %v7463, %v7464
  %v7466 = vrot.slane %v7405, 4
  %v7467 = vadd.f32 %v7405, %v7466
  %v7468 = vrot.slane %v7467, 2
  %v7469 = vadd.f32 %v7467, %v7468
  %v7470 = vrot.slane %v7469, 1
  %v7471 = vadd.f32 %v7469, %v7470
  %v7472 = vrot.slane %v7406, 4
  %v7473 = vadd.f32 %v7406, %v7472
  %v7474 = vrot.slane %v7473, 2
  %v7475 = vadd.f32 %v7473, %v7474
  %v7476 = vrot.slane %v7475, 1
  %v7477 = vadd.f32 %v7475, %v7476
  %v7478 = vrot.slane %v7407, 4
  %v7479 = vadd.f32 %v7407, %v7478
  %v7480 = vrot.slane %v7479, 2
  %v7481 = vadd.f32 %v7479, %v7480
  %v7482 = vrot.slane %v7481, 1
  %v7483 = vadd.f32 %v7481, %v7482
  %v7484 = vrot.slane %v7408, 4
  %v7485 = vadd.f32 %v7408, %v7484
  %v7486 = vrot.slane %v7485, 2
  %v7487 = vadd.f32 %v7485, %v7486
  %v7488 = vrot.slane %v7487, 1
  %v7489 = vadd.f32 %v7487, %v7488
  %v7490 = vrot.slane %v7409, 4
  %v7491 = vadd.f32 %v7409, %v7490
  %v7492 = vrot.slane %v7491, 2
  %v7493 = vadd.f32 %v7491, %v7492
  %v7494 = vrot.slane %v7493, 1
  %v7495 = vadd.f32 %v7493, %v7494
  %v7496 = vrot.slane %v7410, 4
  %v7497 = vadd.f32 %v7410, %v7496
  %v7498 = vrot.slane %v7497, 2
  %v7499 = vadd.f32 %v7497, %v7498
  %v7500 = vrot.slane %v7499, 1
  %v7501 = vadd.f32 %v7499, %v7500
  %v7502 = vrot.slane %v7411, 4
  %v7503 = vadd.f32 %v7411, %v7502
  %v7504 = vrot.slane %v7503, 2
  %v7505 = vadd.f32 %v7503, %v7504
  %v7506 = vrot.slane %v7505, 1
  %v7507 = vadd.f32 %v7505, %v7506
  %v7508 = vmul.f32 %v239, %v675
  %v7509 = vmul.f32 %v292, %v728
  %v7510 = vmul.f32 %v345, %v675
  %v7511 = vmul.f32 %v398, %v728
  %v7512 = vmul.f32 %v451, %v675
  %v7513 = vmul.f32 %v504, %v728
  %v7514 = vmul.f32 %v557, %v675
  %v7515 = vmul.f32 %v610, %v728
  %v7516 = vmul.f32 %v663, %v675
  %v7517 = vmul.f32 %v716, %v728
  %v7518 = vmul.f32 %v769, %v675
  %v7519 = vmul.f32 %v822, %v728
  %v7520 = vmul.f32 %v875, %v675
  %v7521 = vmul.f32 %v928, %v728
  %v7522 = vmul.f32 %v981, %v675
  %v7523 = vmul.f32 %v1034, %v728
  %v7524 = vrot.slane %v7508, 4
  %v7525 = vadd.f32 %v7508, %v7524
  %v7526 = vrot.slane %v7525, 2
  %v7527 = vadd.f32 %v7525, %v7526
  %v7528 = vrot.slane %v7527, 1
  %v7529 = vadd.f32 %v7527, %v7528
  %v7530 = vrot.slane %v7509, 4
  %v7531 = vadd.f32 %v7509, %v7530
  %v7532 = vrot.slane %v7531, 2
  %v7533 = vadd.f32 %v7531, %v7532
  %v7534 = vrot.slane %v7533, 1
  %v7535 = vadd.f32 %v7533, %v7534
  %v7536 = vrot.slane %v7510, 4
  %v7537 = vadd.f32 %v7510, %v7536
  %v7538 = vrot.slane %v7537, 2
  %v7539 = vadd.f32 %v7537, %v7538
  %v7540 = vrot.slane %v7539, 1
  %v7541 = vadd.f32 %v7539, %v7540
  %v7542 = vrot.slane %v7511, 4
  %v7543 = vadd.f32 %v7511, %v7542
  %v7544 = vrot.slane %v7543, 2
  %v7545 = vadd.f32 %v7543, %v7544
  %v7546 = vrot.slane %v7545, 1
  %v7547 = vadd.f32 %v7545, %v7546
  %v7548 = vrot.slane %v7512, 4
  %v7549 = vadd.f32 %v7512, %v7548
  %v7550 = vrot.slane %v7549, 2
  %v7551 = vadd.f32 %v7549, %v7550
  %v7552 = vrot.slane %v7551, 1
  %v7553 = vadd.f32 %v7551, %v7552
  %v7554 = vrot.slane %v7513, 4
  %v7555 = vadd.f32 %v7513, %v7554
  %v7556 = vrot.slane %v7555, 2
  %v7557 = vadd.f32 %v7555, %v7556
  %v7558 = vrot.slane %v7557, 1
  %v7559 = vadd.f32 %v7557, %v7558
  %v7560 = vrot.slane %v7514, 4
  %v7561 = vadd.f32 %v7514, %v7560
  %v7562 = vrot.slane %v7561, 2
  %v7563 = vadd.f32 %v7561, %v7562
  %v7564 = vrot.slane %v7563, 1
  %v7565 = vadd.f32 %v7563, %v7564
  %v7566 = vrot.slane %v7515, 4
  %v7567 = vadd.f32 %v7515, %v7566
  %v7568 = vrot.slane %v7567, 2
  %v7569 = vadd.f32 %v7567, %v7568
  %v7570 = vrot.slane %v7569, 1
  %v7571 = vadd.f32 %v7569, %v7570
  %v7572 = vrot.slane %v7516, 4
  %v7573 = vadd.f32 %v7516, %v7572
  %v7574 = vrot.slane %v7573, 2
  %v7575 = vadd.f32 %v7573, %v7574
  %v7576 = vrot.slane %v7575, 1
  %v7577 = vadd.f32 %v7575, %v7576
  %v7578 = vrot.slane %v7517, 4
  %v7579 = vadd.f32 %v7517, %v7578
  %v7580 = vrot.slane %v7579, 2
  %v7581 = vadd.f32 %v7579, %v7580
  %v7582 = vrot.slane %v7581, 1
  %v7583 = vadd.f32 %v7581, %v7582
  %v7584 = vrot.slane %v7518, 4
  %v7585 = vadd.f32 %v7518, %v7584
  %v7586 = vrot.slane %v7585, 2
  %v7587 = vadd.f32 %v7585, %v7586
  %v7588 = vrot.slane %v7587, 1
  %v7589 = vadd.f32 %v7587, %v7588
  %v7590 = vrot.slane %v7519, 4
  %v7591 = vadd.f32 %v7519, %v7590
  %v7592 = vrot.slane %v7591, 2
  %v7593 = vadd.f32 %v7591, %v7592
  %v7594 = vrot.slane %v7593, 1
  %v7595 = vadd.f32 %v7593, %v7594
  %v7596 = vrot.slane %v7520, 4
  %v7597 = vadd.f32 %v7520, %v7596
  %v7598 = vrot.slane %v7597, 2
  %v7599 = vadd.f32 %v7597, %v7598
  %v7600 = vrot.slane %v7599, 1
  %v7601 = vadd.f32 %v7599, %v7600
  %v7602 = vrot.slane %v7521, 4
  %v7603 = vadd.f32 %v7521, %v7602
  %v7604 = vrot.slane %v7603, 2
  %v7605 = vadd.f32 %v7603, %v7604
  %v7606 = vrot.slane %v7605, 1
  %v7607 = vadd.f32 %v7605, %v7606
  %v7608 = vrot.slane %v7522, 4
  %v7609 = vadd.f32 %v7522, %v7608
  %v7610 = vrot.slane %v7609, 2
  %v7611 = vadd.f32 %v7609, %v7610
  %v7612 = vrot.slane %v7611, 1
  %v7613 = vadd.f32 %v7611, %v7612
  %v7614 = vrot.slane %v7523, 4
  %v7615 = vadd.f32 %v7523, %v7614
  %v7616 = vrot.slane %v7615, 2
  %v7617 = vadd.f32 %v7615, %v7616
  %v7618 = vrot.slane %v7617, 1
  %v7619 = vadd.f32 %v7617, %v7618
  %v7620 = vmul.f32 %v239, %v781
  %v7621 = vmul.f32 %v292, %v834
  %v7622 = vmul.f32 %v345, %v781
  %v7623 = vmul.f32 %v398, %v834
  %v7624 = vmul.f32 %v451, %v781
  %v7625 = vmul.f32 %v504, %v834
  %v7626 = vmul.f32 %v557, %v781
  %v7627 = vmul.f32 %v610, %v834
  %v7628 = vmul.f32 %v663, %v781
  %v7629 = vmul.f32 %v716, %v834
  %v7630 = vmul.f32 %v769, %v781
  %v7631 = vmul.f32 %v822, %v834
  %v7632 = vmul.f32 %v875, %v781
  %v7633 = vmul.f32 %v928, %v834
  %v7634 = vmul.f32 %v981, %v781
  %v7635 = vmul.f32 %v1034, %v834
  %v7636 = vrot.slane %v7620, 4
  %v7637 = vadd.f32 %v7620, %v7636
  %v7638 = vrot.slane %v7637, 2
  %v7639 = vadd.f32 %v7637, %v7638
  %v7640 = vrot.slane %v7639, 1
  %v7641 = vadd.f32 %v7639, %v7640
  %v7642 = vrot.slane %v7621, 4
  %v7643 = vadd.f32 %v7621, %v7642
  %v7644 = vrot.slane %v7643, 2
  %v7645 = vadd.f32 %v7643, %v7644
  %v7646 = vrot.slane %v7645, 1
  %v7647 = vadd.f32 %v7645, %v7646
  %v7648 = vrot.slane %v7622, 4
  %v7649 = vadd.f32 %v7622, %v7648
  %v7650 = vrot.slane %v7649, 2
  %v7651 = vadd.f32 %v7649, %v7650
  %v7652 = vrot.slane %v7651, 1
  %v7653 = vadd.f32 %v7651, %v7652
  %v7654 = vrot.slane %v7623, 4
  %v7655 = vadd.f32 %v7623, %v7654
  %v7656 = vrot.slane %v7655, 2
  %v7657 = vadd.f32 %v7655, %v7656
  %v7658 = vrot.slane %v7657, 1
  %v7659 = vadd.f32 %v7657, %v7658
  %v7660 = vrot.slane %v7624, 4
  %v7661 = vadd.f32 %v7624, %v7660
  %v7662 = vrot.slane %v7661, 2
  %v7663 = vadd.f32 %v7661, %v7662
  %v7664 = vrot.slane %v7663, 1
  %v7665 = vadd.f32 %v7663, %v7664
  %v7666 = vrot.slane %v7625, 4
  %v7667 = vadd.f32 %v7625, %v7666
  %v7668 = vrot.slane %v7667, 2
  %v7669 = vadd.f32 %v7667, %v7668
  %v7670 = vrot.slane %v7669, 1
  %v7671 = vadd.f32 %v7669, %v7670
  %v7672 = vrot.slane %v7626, 4
  %v7673 = vadd.f32 %v7626, %v7672
  %v7674 = vrot.slane %v7673, 2
  %v7675 = vadd.f32 %v7673, %v7674
  %v7676 = vrot.slane %v7675, 1
  %v7677 = vadd.f32 %v7675, %v7676
  %v7678 = vrot.slane %v7627, 4
  %v7679 = vadd.f32 %v7627, %v7678
  %v7680 = vrot.slane %v7679, 2
  %v7681 = vadd.f32 %v7679, %v7680
  %v7682 = vrot.slane %v7681, 1
  %v7683 = vadd.f32 %v7681, %v7682
  %v7684 = vrot.slane %v7628, 4
  %v7685 = vadd.f32 %v7628, %v7684
  %v7686 = vrot.slane %v7685, 2
  %v7687 = vadd.f32 %v7685, %v7686
  %v7688 = vrot.slane %v7687, 1
  %v7689 = vadd.f32 %v7687, %v7688
  %v7690 = vrot.slane %v7629, 4
  %v7691 = vadd.f32 %v7629, %v7690
  %v7692 = vrot.slane %v7691, 2
  %v7693 = vadd.f32 %v7691, %v7692
  %v7694 = vrot.slane %v7693, 1
  %v7695 = vadd.f32 %v7693, %v7694
  %v7696 = vrot.slane %v7630, 4
  %v7697 = vadd.f32 %v7630, %v7696
  %v7698 = vrot.slane %v7697, 2
  %v7699 = vadd.f32 %v7697, %v7698
  %v7700 = vrot.slane %v7699, 1
  %v7701 = vadd.f32 %v7699, %v7700
  %v7702 = vrot.slane %v7631, 4
  %v7703 = vadd.f32 %v7631, %v7702
  %v7704 = vrot.slane %v7703, 2
  %v7705 = vadd.f32 %v7703, %v7704
  %v7706 = vrot.slane %v7705, 1
  %v7707 = vadd.f32 %v7705, %v7706
  %v7708 = vrot.slane %v7632, 4
  %v7709 = vadd.f32 %v7632, %v7708
  %v7710 = vrot.slane %v7709, 2
  %v7711 = vadd.f32 %v7709, %v7710
  %v7712 = vrot.slane %v7711, 1
  %v7713 = vadd.f32 %v7711, %v7712
  %v7714 = vrot.slane %v7633, 4
  %v7715 = vadd.f32 %v7633, %v7714
  %v7716 = vrot.slane %v7715, 2
  %v7717 = vadd.f32 %v7715, %v7716
  %v7718 = vrot.slane %v7717, 1
  %v7719 = vadd.f32 %v7717, %v7718
  %v7720 = vrot.slane %v7634, 4
  %v7721 = vadd.f32 %v7634, %v7720
  %v7722 = vrot.slane %v7721, 2
  %v7723 = vadd.f32 %v7721, %v7722
  %v7724 = vrot.slane %v7723, 1
  %v7725 = vadd.f32 %v7723, %v7724
  %v7726 = vrot.slane %v7635, 4
  %v7727 = vadd.f32 %v7635, %v7726
  %v7728 = vrot.slane %v7727, 2
  %v7729 = vadd.f32 %v7727, %v7728
  %v7730 = vrot.slane %v7729, 1
  %v7731 = vadd.f32 %v7729, %v7730
  %v7732 = vmul.f32 %v239, %v887
  %v7733 = vmul.f32 %v292, %v940
  %v7734 = vmul.f32 %v345, %v887
  %v7735 = vmul.f32 %v398, %v940
  %v7736 = vmul.f32 %v451, %v887
  %v7737 = vmul.f32 %v504, %v940
  %v7738 = vmul.f32 %v557, %v887
  %v7739 = vmul.f32 %v610, %v940
  %v7740 = vmul.f32 %v663, %v887
  %v7741 = vmul.f32 %v716, %v940
  %v7742 = vmul.f32 %v769, %v887
  %v7743 = vmul.f32 %v822, %v940
  %v7744 = vmul.f32 %v875, %v887
  %v7745 = vmul.f32 %v928, %v940
  %v7746 = vmul.f32 %v981, %v887
  %v7747 = vmul.f32 %v1034, %v940
  %v7748 = vrot.slane %v7732, 4
  %v7749 = vadd.f32 %v7732, %v7748
  %v7750 = vrot.slane %v7749, 2
  %v7751 = vadd.f32 %v7749, %v7750
  %v7752 = vrot.slane %v7751, 1
  %v7753 = vadd.f32 %v7751, %v7752
  %v7754 = vrot.slane %v7733, 4
  %v7755 = vadd.f32 %v7733, %v7754
  %v7756 = vrot.slane %v7755, 2
  %v7757 = vadd.f32 %v7755, %v7756
  %v7758 = vrot.slane %v7757, 1
  %v7759 = vadd.f32 %v7757, %v7758
  %v7760 = vrot.slane %v7734, 4
  %v7761 = vadd.f32 %v7734, %v7760
  %v7762 = vrot.slane %v7761, 2
  %v7763 = vadd.f32 %v7761, %v7762
  %v7764 = vrot.slane %v7763, 1
  %v7765 = vadd.f32 %v7763, %v7764
  %v7766 = vrot.slane %v7735, 4
  %v7767 = vadd.f32 %v7735, %v7766
  %v7768 = vrot.slane %v7767, 2
  %v7769 = vadd.f32 %v7767, %v7768
  %v7770 = vrot.slane %v7769, 1
  %v7771 = vadd.f32 %v7769, %v7770
  %v7772 = vrot.slane %v7736, 4
  %v7773 = vadd.f32 %v7736, %v7772
  %v7774 = vrot.slane %v7773, 2
  %v7775 = vadd.f32 %v7773, %v7774
  %v7776 = vrot.slane %v7775, 1
  %v7777 = vadd.f32 %v7775, %v7776
  %v7778 = vrot.slane %v7737, 4
  %v7779 = vadd.f32 %v7737, %v7778
  %v7780 = vrot.slane %v7779, 2
  %v7781 = vadd.f32 %v7779, %v7780
  %v7782 = vrot.slane %v7781, 1
  %v7783 = vadd.f32 %v7781, %v7782
  %v7784 = vrot.slane %v7738, 4
  %v7785 = vadd.f32 %v7738, %v7784
  %v7786 = vrot.slane %v7785, 2
  %v7787 = vadd.f32 %v7785, %v7786
  %v7788 = vrot.slane %v7787, 1
  %v7789 = vadd.f32 %v7787, %v7788
  %v7790 = vrot.slane %v7739, 4
  %v7791 = vadd.f32 %v7739, %v7790
  %v7792 = vrot.slane %v7791, 2
  %v7793 = vadd.f32 %v7791, %v7792
  %v7794 = vrot.slane %v7793, 1
  %v7795 = vadd.f32 %v7793, %v7794
  %v7796 = vrot.slane %v7740, 4
  %v7797 = vadd.f32 %v7740, %v7796
  %v7798 = vrot.slane %v7797, 2
  %v7799 = vadd.f32 %v7797, %v7798
  %v7800 = vrot.slane %v7799, 1
  %v7801 = vadd.f32 %v7799, %v7800
  %v7802 = vrot.slane %v7741, 4
  %v7803 = vadd.f32 %v7741, %v7802
  %v7804 = vrot.slane %v7803, 2
  %v7805 = vadd.f32 %v7803, %v7804
  %v7806 = vrot.slane %v7805, 1
  %v7807 = vadd.f32 %v7805, %v7806
  %v7808 = vrot.slane %v7742, 4
  %v7809 = vadd.f32 %v7742, %v7808
  %v7810 = vrot.slane %v7809, 2
  %v7811 = vadd.f32 %v7809, %v7810
  %v7812 = vrot.slane %v7811, 1
  %v7813 = vadd.f32 %v7811, %v7812
  %v7814 = vrot.slane %v7743, 4
  %v7815 = vadd.f32 %v7743, %v7814
  %v7816 = vrot.slane %v7815, 2
  %v7817 = vadd.f32 %v7815, %v7816
  %v7818 = vrot.slane %v7817, 1
  %v7819 = vadd.f32 %v7817, %v7818
  %v7820 = vrot.slane %v7744, 4
  %v7821 = vadd.f32 %v7744, %v7820
  %v7822 = vrot.slane %v7821, 2
  %v7823 = vadd.f32 %v7821, %v7822
  %v7824 = vrot.slane %v7823, 1
  %v7825 = vadd.f32 %v7823, %v7824
  %v7826 = vrot.slane %v7745, 4
  %v7827 = vadd.f32 %v7745, %v7826
  %v7828 = vrot.slane %v7827, 2
  %v7829 = vadd.f32 %v7827, %v7828
  %v7830 = vrot.slane %v7829, 1
  %v7831 = vadd.f32 %v7829, %v7830
  %v7832 = vrot.slane %v7746, 4
  %v7833 = vadd.f32 %v7746, %v7832
  %v7834 = vrot.slane %v7833, 2
  %v7835 = vadd.f32 %v7833, %v7834
  %v7836 = vrot.slane %v7835, 1
  %v7837 = vadd.f32 %v7835, %v7836
  %v7838 = vrot.slane %v7747, 4
  %v7839 = vadd.f32 %v7747, %v7838
  %v7840 = vrot.slane %v7839, 2
  %v7841 = vadd.f32 %v7839, %v7840
  %v7842 = vrot.slane %v7841, 1
  %v7843 = vadd.f32 %v7841, %v7842
  %v7844 = vmul.f32 %v239, %v993
  %v7845 = vmul.f32 %v292, %v1046
  %v7846 = vmul.f32 %v345, %v993
  %v7847 = vmul.f32 %v398, %v1046
  %v7848 = vmul.f32 %v451, %v993
  %v7849 = vmul.f32 %v504, %v1046
  %v7850 = vmul.f32 %v557, %v993
  %v7851 = vmul.f32 %v610, %v1046
  %v7852 = vmul.f32 %v663, %v993
  %v7853 = vmul.f32 %v716, %v1046
  %v7854 = vmul.f32 %v769, %v993
  %v7855 = vmul.f32 %v822, %v1046
  %v7856 = vmul.f32 %v875, %v993
  %v7857 = vmul.f32 %v928, %v1046
  %v7858 = vmul.f32 %v981, %v993
  %v7859 = vmul.f32 %v1034, %v1046
  %v7860 = vrot.slane %v7844, 4
  %v7861 = vadd.f32 %v7844, %v7860
  %v7862 = vrot.slane %v7861, 2
  %v7863 = vadd.f32 %v7861, %v7862
  %v7864 = vrot.slane %v7863, 1
  %v7865 = vadd.f32 %v7863, %v7864
  %v7866 = vrot.slane %v7845, 4
  %v7867 = vadd.f32 %v7845, %v7866
  %v7868 = vrot.slane %v7867, 2
  %v7869 = vadd.f32 %v7867, %v7868
  %v7870 = vrot.slane %v7869, 1
  %v7871 = vadd.f32 %v7869, %v7870
  %v7872 = vrot.slane %v7846, 4
  %v7873 = vadd.f32 %v7846, %v7872
  %v7874 = vrot.slane %v7873, 2
  %v7875 = vadd.f32 %v7873, %v7874
  %v7876 = vrot.slane %v7875, 1
  %v7877 = vadd.f32 %v7875, %v7876
  %v7878 = vrot.slane %v7847, 4
  %v7879 = vadd.f32 %v7847, %v7878
  %v7880 = vrot.slane %v7879, 2
  %v7881 = vadd.f32 %v7879, %v7880
  %v7882 = vrot.slane %v7881, 1
  %v7883 = vadd.f32 %v7881, %v7882
  %v7884 = vrot.slane %v7848, 4
  %v7885 = vadd.f32 %v7848, %v7884
  %v7886 = vrot.slane %v7885, 2
  %v7887 = vadd.f32 %v7885, %v7886
  %v7888 = vrot.slane %v7887, 1
  %v7889 = vadd.f32 %v7887, %v7888
  %v7890 = vrot.slane %v7849, 4
  %v7891 = vadd.f32 %v7849, %v7890
  %v7892 = vrot.slane %v7891, 2
  %v7893 = vadd.f32 %v7891, %v7892
  %v7894 = vrot.slane %v7893, 1
  %v7895 = vadd.f32 %v7893, %v7894
  %v7896 = vrot.slane %v7850, 4
  %v7897 = vadd.f32 %v7850, %v7896
  %v7898 = vrot.slane %v7897, 2
  %v7899 = vadd.f32 %v7897, %v7898
  %v7900 = vrot.slane %v7899, 1
  %v7901 = vadd.f32 %v7899, %v7900
  %v7902 = vrot.slane %v7851, 4
  %v7903 = vadd.f32 %v7851, %v7902
  %v7904 = vrot.slane %v7903, 2
  %v7905 = vadd.f32 %v7903, %v7904
  %v7906 = vrot.slane %v7905, 1
  %v7907 = vadd.f32 %v7905, %v7906
  %v7908 = vrot.slane %v7852, 4
  %v7909 = vadd.f32 %v7852, %v7908
  %v7910 = vrot.slane %v7909, 2
  %v7911 = vadd.f32 %v7909, %v7910
  %v7912 = vrot.slane %v7911, 1
  %v7913 = vadd.f32 %v7911, %v7912
  %v7914 = vrot.slane %v7853, 4
  %v7915 = vadd.f32 %v7853, %v7914
  %v7916 = vrot.slane %v7915, 2
  %v7917 = vadd.f32 %v7915, %v7916
  %v7918 = vrot.slane %v7917, 1
  %v7919 = vadd.f32 %v7917, %v7918
  %v7920 = vrot.slane %v7854, 4
  %v7921 = vadd.f32 %v7854, %v7920
  %v7922 = vrot.slane %v7921, 2
  %v7923 = vadd.f32 %v7921, %v7922
  %v7924 = vrot.slane %v7923, 1
  %v7925 = vadd.f32 %v7923, %v7924
  %v7926 = vrot.slane %v7855, 4
  %v7927 = vadd.f32 %v7855, %v7926
  %v7928 = vrot.slane %v7927, 2
  %v7929 = vadd.f32 %v7927, %v7928
  %v7930 = vrot.slane %v7929, 1
  %v7931 = vadd.f32 %v7929, %v7930
  %v7932 = vrot.slane %v7856, 4
  %v7933 = vadd.f32 %v7856, %v7932
  %v7934 = vrot.slane %v7933, 2
  %v7935 = vadd.f32 %v7933, %v7934
  %v7936 = vrot.slane %v7935, 1
  %v7937 = vadd.f32 %v7935, %v7936
  %v7938 = vrot.slane %v7857, 4
  %v7939 = vadd.f32 %v7857, %v7938
  %v7940 = vrot.slane %v7939, 2
  %v7941 = vadd.f32 %v7939, %v7940
  %v7942 = vrot.slane %v7941, 1
  %v7943 = vadd.f32 %v7941, %v7942
  %v7944 = vrot.slane %v7858, 4
  %v7945 = vadd.f32 %v7858, %v7944
  %v7946 = vrot.slane %v7945, 2
  %v7947 = vadd.f32 %v7945, %v7946
  %v7948 = vrot.slane %v7947, 1
  %v7949 = vadd.f32 %v7947, %v7948
  %v7950 = vrot.slane %v7859, 4
  %v7951 = vadd.f32 %v7859, %v7950
  %v7952 = vrot.slane %v7951, 2
  %v7953 = vadd.f32 %v7951, %v7952
  %v7954 = vrot.slane %v7953, 1
  %v7955 = vadd.f32 %v7953, %v7954
  %v7956 = vmax.f32 %v7081, %v7193
  %v7957 = vmax.f32 %v7087, %v7199
  %v7958 = vmax.f32 %v7093, %v7205
  %v7959 = vmax.f32 %v7099, %v7211
  %v7960 = vmax.f32 %v7105, %v7217
  %v7961 = vmax.f32 %v7111, %v7223
  %v7962 = vmax.f32 %v7117, %v7229
  %v7963 = vmax.f32 %v7123, %v7235
  %v7964 = vmax.f32 %v7129, %v7241
  %v7965 = vmax.f32 %v7135, %v7247
  %v7966 = vmax.f32 %v7141, %v7253
  %v7967 = vmax.f32 %v7147, %v7259
  %v7968 = vmax.f32 %v7153, %v7265
  %v7969 = vmax.f32 %v7159, %v7271
  %v7970 = vmax.f32 %v7165, %v7277
  %v7971 = vmax.f32 %v7171, %v7283
  %v7972 = vmax.f32 %v7956, %v7305
  %v7973 = vmax.f32 %v7957, %v7311
  %v7974 = vmax.f32 %v7958, %v7317
  %v7975 = vmax.f32 %v7959, %v7323
  %v7976 = vmax.f32 %v7960, %v7329
  %v7977 = vmax.f32 %v7961, %v7335
  %v7978 = vmax.f32 %v7962, %v7341
  %v7979 = vmax.f32 %v7963, %v7347
  %v7980 = vmax.f32 %v7964, %v7353
  %v7981 = vmax.f32 %v7965, %v7359
  %v7982 = vmax.f32 %v7966, %v7365
  %v7983 = vmax.f32 %v7967, %v7371
  %v7984 = vmax.f32 %v7968, %v7377
  %v7985 = vmax.f32 %v7969, %v7383
  %v7986 = vmax.f32 %v7970, %v7389
  %v7987 = vmax.f32 %v7971, %v7395
  %v7988 = vmax.f32 %v7972, %v7417
  %v7989 = vmax.f32 %v7973, %v7423
  %v7990 = vmax.f32 %v7974, %v7429
  %v7991 = vmax.f32 %v7975, %v7435
  %v7992 = vmax.f32 %v7976, %v7441
  %v7993 = vmax.f32 %v7977, %v7447
  %v7994 = vmax.f32 %v7978, %v7453
  %v7995 = vmax.f32 %v7979, %v7459
  %v7996 = vmax.f32 %v7980, %v7465
  %v7997 = vmax.f32 %v7981, %v7471
  %v7998 = vmax.f32 %v7982, %v7477
  %v7999 = vmax.f32 %v7983, %v7483
  %v8000 = vmax.f32 %v7984, %v7489
  %v8001 = vmax.f32 %v7985, %v7495
  %v8002 = vmax.f32 %v7986, %v7501
  %v8003 = vmax.f32 %v7987, %v7507
  %v8004 = vmax.f32 %v7988, %v7529
  %v8005 = vmax.f32 %v7989, %v7535
  %v8006 = vmax.f32 %v7990, %v7541
  %v8007 = vmax.f32 %v7991, %v7547
  %v8008 = vmax.f32 %v7992, %v7553
  %v8009 = vmax.f32 %v7993, %v7559
  %v8010 = vmax.f32 %v7994, %v7565
  %v8011 = vmax.f32 %v7995, %v7571
  %v8012 = vmax.f32 %v7996, %v7577
  %v8013 = vmax.f32 %v7997, %v7583
  %v8014 = vmax.f32 %v7998, %v7589
  %v8015 = vmax.f32 %v7999, %v7595
  %v8016 = vmax.f32 %v8000, %v7601
  %v8017 = vmax.f32 %v8001, %v7607
  %v8018 = vmax.f32 %v8002, %v7613
  %v8019 = vmax.f32 %v8003, %v7619
  %v8020 = vmax.f32 %v8004, %v7641
  %v8021 = vmax.f32 %v8005, %v7647
  %v8022 = vmax.f32 %v8006, %v7653
  %v8023 = vmax.f32 %v8007, %v7659
  %v8024 = vmax.f32 %v8008, %v7665
  %v8025 = vmax.f32 %v8009, %v7671
  %v8026 = vmax.f32 %v8010, %v7677
  %v8027 = vmax.f32 %v8011, %v7683
  %v8028 = vmax.f32 %v8012, %v7689
  %v8029 = vmax.f32 %v8013, %v7695
  %v8030 = vmax.f32 %v8014, %v7701
  %v8031 = vmax.f32 %v8015, %v7707
  %v8032 = vmax.f32 %v8016, %v7713
  %v8033 = vmax.f32 %v8017, %v7719
  %v8034 = vmax.f32 %v8018, %v7725
  %v8035 = vmax.f32 %v8019, %v7731
  %v8036 = vmax.f32 %v8020, %v7753
  %v8037 = vmax.f32 %v8021, %v7759
  %v8038 = vmax.f32 %v8022, %v7765
  %v8039 = vmax.f32 %v8023, %v7771
  %v8040 = vmax.f32 %v8024, %v7777
  %v8041 = vmax.f32 %v8025, %v7783
  %v8042 = vmax.f32 %v8026, %v7789
  %v8043 = vmax.f32 %v8027, %v7795
  %v8044 = vmax.f32 %v8028, %v7801
  %v8045 = vmax.f32 %v8029, %v7807
  %v8046 = vmax.f32 %v8030, %v7813
  %v8047 = vmax.f32 %v8031, %v7819
  %v8048 = vmax.f32 %v8032, %v7825
  %v8049 = vmax.f32 %v8033, %v7831
  %v8050 = vmax.f32 %v8034, %v7837
  %v8051 = vmax.f32 %v8035, %v7843
  %v8052 = vmax.f32 %v8036, %v7865
  %v8053 = vmax.f32 %v8037, %v7871
  %v8054 = vmax.f32 %v8038, %v7877
  %v8055 = vmax.f32 %v8039, %v7883
  %v8056 = vmax.f32 %v8040, %v7889
  %v8057 = vmax.f32 %v8041, %v7895
  %v8058 = vmax.f32 %v8042, %v7901
  %v8059 = vmax.f32 %v8043, %v7907
  %v8060 = vmax.f32 %v8044, %v7913
  %v8061 = vmax.f32 %v8045, %v7919
  %v8062 = vmax.f32 %v8046, %v7925
  %v8063 = vmax.f32 %v8047, %v7931
  %v8064 = vmax.f32 %v8048, %v7937
  %v8065 = vmax.f32 %v8049, %v7943
  %v8066 = vmax.f32 %v8050, %v7949
  %v8067 = vmax.f32 %v8051, %v7955
  %v8068 = vsub.f32 %v7081, %v8052
  %v8069 = vsub.f32 %v7087, %v8053
  %v8070 = vsub.f32 %v7093, %v8054
  %v8071 = vsub.f32 %v7099, %v8055
  %v8072 = vsub.f32 %v7105, %v8056
  %v8073 = vsub.f32 %v7111, %v8057
  %v8074 = vsub.f32 %v7117, %v8058
  %v8075 = vsub.f32 %v7123, %v8059
  %v8076 = vsub.f32 %v7129, %v8060
  %v8077 = vsub.f32 %v7135, %v8061
  %v8078 = vsub.f32 %v7141, %v8062
  %v8079 = vsub.f32 %v7147, %v8063
  %v8080 = vsub.f32 %v7153, %v8064
  %v8081 = vsub.f32 %v7159, %v8065
  %v8082 = vsub.f32 %v7165, %v8066
  %v8083 = vsub.f32 %v7171, %v8067
  %v8084 = vmul.f32 %v8068, 1.442695
  %v8085 = vpow.pop %v8084
  %v8086 = vmul.f32 %v8069, 1.442695
  %v8087 = vpow.pop %v8086
  %v8088 = vmul.f32 %v8070, 1.442695
  %v8089 = vpow.pop %v8088
  %v8090 = vmul.f32 %v8071, 1.442695
  %v8091 = vpow.pop %v8090
  %v8092 = vmul.f32 %v8072, 1.442695
  %v8093 = vpow.pop %v8092
  %v8094 = vmul.f32 %v8073, 1.442695
  %v8095 = vpow.pop %v8094
  %v8096 = vmul.f32 %v8074, 1.442695
  %v8097 = vpow.pop %v8096
  %v8098 = vmul.f32 %v8075, 1.442695
  %v8099 = vpow.pop %v8098
  %v8100 = vmul.f32 %v8076, 1.442695
  %v8101 = vpow.pop %v8100
  %v8102 = vmul.f32 %v8077, 1.442695
  %v8103 = vpow.pop %v8102
  %v8104 = vmul.f32 %v8078, 1.442695
  %v8105 = vpow.pop %v8104
  %v8106 = vmul.f32 %v8079, 1.442695
  %v8107 = vpow.pop %v8106
  %v8108 = vmul.f32 %v8080, 1.442695
  %v8109 = vpow.pop %v8108
  %v8110 = vmul.f32 %v8081, 1.442695
  %v8111 = vpow.pop %v8110
  %v8112 = vmul.f32 %v8082, 1.442695
  %v8113 = vpow.pop %v8112
  %v8114 = vmul.f32 %v8083, 1.442695
  %v8115 = vpow.pop %v8114
  %v8116 = vsub.f32 %v7193, %v8052
  %v8117 = vsub.f32 %v7199, %v8053
  %v8118 = vsub.f32 %v7205, %v8054
  %v8119 = vsub.f32 %v7211, %v8055
  %v8120 = vsub.f32 %v7217, %v8056
  %v8121 = vsub.f32 %v7223, %v8057
  %v8122 = vsub.f32 %v7229, %v8058
  %v8123 = vsub.f32 %v7235, %v8059
  %v8124 = vsub.f32 %v7241, %v8060
  %v8125 = vsub.f32 %v7247, %v8061
  %v8126 = vsub.f32 %v7253, %v8062
  %v8127 = vsub.f32 %v7259, %v8063
  %v8128 = vsub.f32 %v7265, %v8064
  %v8129 = vsub.f32 %v7271, %v8065
  %v8130 = vsub.f32 %v7277, %v8066
  %v8131 = vsub.f32 %v7283, %v8067
  %v8132 = vmul.f32 %v8116, 1.442695
  %v8133 = vpow.pop %v8132
  %v8134 = vmul.f32 %v8117, 1.442695
  %v8135 = vpow.pop %v8134
  %v8136 = vmul.f32 %v8118, 1.442695
  %v8137 = vpow.pop %v8136
  %v8138 = vmul.f32 %v8119, 1.442695
  %v8139 = vpow.pop %v8138
  %v8140 = vmul.f32 %v8120, 1.442695
  %v8141 = vpow.pop %v8140
  %v8142 = vmul.f32 %v8121, 1.442695
  %v8143 = vpow.pop %v8142
  %v8144 = vmul.f32 %v8122, 1.442695
  %v8145 = vpow.pop %v8144
  %v8146 = vmul.f32 %v8123, 1.442695
  %v8147 = vpow.pop %v8146
  %v8148 = vmul.f32 %v8124, 1.442695
  %v8149 = vpow.pop %v8148
  %v8150 = vmul.f32 %v8125, 1.442695
  %v8151 = vpow.pop %v8150
  %v8152 = vmul.f32 %v8126, 1.442695
  %v8153 = vpow.pop %v8152
  %v8154 = vmul.f32 %v8127, 1.442695
  %v8155 = vpow.pop %v8154
  %v8156 = vmul.f32 %v8128, 1.442695
  %v8157 = vpow.pop %v8156
  %v8158 = vmul.f32 %v8129, 1.442695
  %v8159 = vpow.pop %v8158
  %v8160 = vmul.f32 %v8130, 1.442695
  %v8161 = vpow.pop %v8160
  %v8162 = vmul.f32 %v8131, 1.442695
  %v8163 = vpow.pop %v8162
  %v8164 = vsub.f32 %v7305, %v8052
  %v8165 = vsub.f32 %v7311, %v8053
  %v8166 = vsub.f32 %v7317, %v8054
  %v8167 = vsub.f32 %v7323, %v8055
  %v8168 = vsub.f32 %v7329, %v8056
  %v8169 = vsub.f32 %v7335, %v8057
  %v8170 = vsub.f32 %v7341, %v8058
  %v8171 = vsub.f32 %v7347, %v8059
  %v8172 = vsub.f32 %v7353, %v8060
  %v8173 = vsub.f32 %v7359, %v8061
  %v8174 = vsub.f32 %v7365, %v8062
  %v8175 = vsub.f32 %v7371, %v8063
  %v8176 = vsub.f32 %v7377, %v8064
  %v8177 = vsub.f32 %v7383, %v8065
  %v8178 = vsub.f32 %v7389, %v8066
  %v8179 = vsub.f32 %v7395, %v8067
  %v8180 = vmul.f32 %v8164, 1.442695
  %v8181 = vpow.pop %v8180
  %v8182 = vmul.f32 %v8165, 1.442695
  %v8183 = vpow.pop %v8182
  %v8184 = vmul.f32 %v8166, 1.442695
  %v8185 = vpow.pop %v8184
  %v8186 = vmul.f32 %v8167, 1.442695
  %v8187 = vpow.pop %v8186
  %v8188 = vmul.f32 %v8168, 1.442695
  %v8189 = vpow.pop %v8188
  %v8190 = vmul.f32 %v8169, 1.442695
  %v8191 = vpow.pop %v8190
  %v8192 = vmul.f32 %v8170, 1.442695
  %v8193 = vpow.pop %v8192
  %v8194 = vmul.f32 %v8171, 1.442695
  %v8195 = vpow.pop %v8194
  %v8196 = vmul.f32 %v8172, 1.442695
  %v8197 = vpow.pop %v8196
  %v8198 = vmul.f32 %v8173, 1.442695
  %v8199 = vpow.pop %v8198
  %v8200 = vmul.f32 %v8174, 1.442695
  %v8201 = vpow.pop %v8200
  %v8202 = vmul.f32 %v8175, 1.442695
  %v8203 = vpow.pop %v8202
  %v8204 = vmul.f32 %v8176, 1.442695
  %v8205 = vpow.pop %v8204
  %v8206 = vmul.f32 %v8177, 1.442695
  %v8207 = vpow.pop %v8206
  %v8208 = vmul.f32 %v8178, 1.442695
  %v8209 = vpow.pop %v8208
  %v8210 = vmul.f32 %v8179, 1.442695
  %v8211 = vpow.pop %v8210
  %v8212 = vsub.f32 %v7417, %v8052
  %v8213 = vsub.f32 %v7423, %v8053
  %v8214 = vsub.f32 %v7429, %v8054
  %v8215 = vsub.f32 %v7435, %v8055
  %v8216 = vsub.f32 %v7441, %v8056
  %v8217 = vsub.f32 %v7447, %v8057
  %v8218 = vsub.f32 %v7453, %v8058
  %v8219 = vsub.f32 %v7459, %v8059
  %v8220 = vsub.f32 %v7465, %v8060
  %v8221 = vsub.f32 %v7471, %v8061
  %v8222 = vsub.f32 %v7477, %v8062
  %v8223 = vsub.f32 %v7483, %v8063
  %v8224 = vsub.f32 %v7489, %v8064
  %v8225 = vsub.f32 %v7495, %v8065
  %v8226 = vsub.f32 %v7501, %v8066
  %v8227 = vsub.f32 %v7507, %v8067
  %v8228 = vmul.f32 %v8212, 1.442695
  %v8229 = vpow.pop %v8228
  %v8230 = vmul.f32 %v8213, 1.442695
  %v8231 = vpow.pop %v8230
  %v8232 = vmul.f32 %v8214, 1.442695
  %v8233 = vpow.pop %v8232
  %v8234 = vmul.f32 %v8215, 1.442695
  %v8235 = vpow.pop %v8234
  %v8236 = vmul.f32 %v8216, 1.442695
  %v8237 = vpow.pop %v8236
  %v8238 = vmul.f32 %v8217, 1.442695
  %v8239 = vpow.pop %v8238
  %v8240 = vmul.f32 %v8218, 1.442695
  %v8241 = vpow.pop %v8240
  %v8242 = vmul.f32 %v8219, 1.442695
  %v8243 = vpow.pop %v8242
  %v8244 = vmul.f32 %v8220, 1.442695
  %v8245 = vpow.pop %v8244
  %v8246 = vmul.f32 %v8221, 1.442695
  %v8247 = vpow.pop %v8246
  %v8248 = vmul.f32 %v8222, 1.442695
  %v8249 = vpow.pop %v8248
  %v8250 = vmul.f32 %v8223, 1.442695
  %v8251 = vpow.pop %v8250
  %v8252 = vmul.f32 %v8224, 1.442695
  %v8253 = vpow.pop %v8252
  %v8254 = vmul.f32 %v8225, 1.442695
  %v8255 = vpow.pop %v8254
  %v8256 = vmul.f32 %v8226, 1.442695
  %v8257 = vpow.pop %v8256
  %v8258 = vmul.f32 %v8227, 1.442695
  %v8259 = vpow.pop %v8258
  %v8260 = vsub.f32 %v7529, %v8052
  %v8261 = vsub.f32 %v7535, %v8053
  %v8262 = vsub.f32 %v7541, %v8054
  %v8263 = vsub.f32 %v7547, %v8055
  %v8264 = vsub.f32 %v7553, %v8056
  %v8265 = vsub.f32 %v7559, %v8057
  %v8266 = vsub.f32 %v7565, %v8058
  %v8267 = vsub.f32 %v7571, %v8059
  %v8268 = vsub.f32 %v7577, %v8060
  %v8269 = vsub.f32 %v7583, %v8061
  %v8270 = vsub.f32 %v7589, %v8062
  %v8271 = vsub.f32 %v7595, %v8063
  %v8272 = vsub.f32 %v7601, %v8064
  %v8273 = vsub.f32 %v7607, %v8065
  %v8274 = vsub.f32 %v7613, %v8066
  %v8275 = vsub.f32 %v7619, %v8067
  %v8276 = vmul.f32 %v8260, 1.442695
  %v8277 = vpow.pop %v8276
  %v8278 = vmul.f32 %v8261, 1.442695
  %v8279 = vpow.pop %v8278
  %v8280 = vmul.f32 %v8262, 1.442695
  %v8281 = vpow.pop %v8280
  %v8282 = vmul.f32 %v8263, 1.442695
  %v8283 = vpow.pop %v8282
  %v8284 = vmul.f32 %v8264, 1.442695
  %v8285 = vpow.pop %v8284
  %v8286 = vmul.f32 %v8265, 1.442695
  %v8287 = vpow.pop %v8286
  %v8288 = vmul.f32 %v8266, 1.442695
  %v8289 = vpow.pop %v8288
  %v8290 = vmul.f32 %v8267, 1.442695
  %v8291 = vpow.pop %v8290
  %v8292 = vmul.f32 %v8268, 1.442695
  %v8293 = vpow.pop %v8292
  %v8294 = vmul.f32 %v8269, 1.442695
  %v8295 = vpow.pop %v8294
  %v8296 = vmul.f32 %v8270, 1.442695
  %v8297 = vpow.pop %v8296
  %v8298 = vmul.f32 %v8271, 1.442695
  %v8299 = vpow.pop %v8298
  %v8300 = vmul.f32 %v8272, 1.442695
  %v8301 = vpow.pop %v8300
  %v8302 = vmul.f32 %v8273, 1.442695
  %v8303 = vpow.pop %v8302
  %v8304 = vmul.f32 %v8274, 1.442695
  %v8305 = vpow.pop %v8304
  %v8306 = vmul.f32 %v8275, 1.442695
  %v8307 = vpow.pop %v8306
  %v8308 = vsub.f32 %v7641, %v8052
  %v8309 = vsub.f32 %v7647, %v8053
  %v8310 = vsub.f32 %v7653, %v8054
  %v8311 = vsub.f32 %v7659, %v8055
  %v8312 = vsub.f32 %v7665, %v8056
  %v8313 = vsub.f32 %v7671, %v8057
  %v8314 = vsub.f32 %v7677, %v8058
  %v8315 = vsub.f32 %v7683, %v8059
  %v8316 = vsub.f32 %v7689, %v8060
  %v8317 = vsub.f32 %v7695, %v8061
  %v8318 = vsub.f32 %v7701, %v8062
  %v8319 = vsub.f32 %v7707, %v8063
  %v8320 = vsub.f32 %v7713, %v8064
  %v8321 = vsub.f32 %v7719, %v8065
  %v8322 = vsub.f32 %v7725, %v8066
  %v8323 = vsub.f32 %v7731, %v8067
  %v8324 = vmul.f32 %v8308, 1.442695
  %v8325 = vpow.pop %v8324
  %v8326 = vmul.f32 %v8309, 1.442695
  %v8327 = vpow.pop %v8326
  %v8328 = vmul.f32 %v8310, 1.442695
  %v8329 = vpow.pop %v8328
  %v8330 = vmul.f32 %v8311, 1.442695
  %v8331 = vpow.pop %v8330
  %v8332 = vmul.f32 %v8312, 1.442695
  %v8333 = vpow.pop %v8332
  %v8334 = vmul.f32 %v8313, 1.442695
  %v8335 = vpow.pop %v8334
  %v8336 = vmul.f32 %v8314, 1.442695
  %v8337 = vpow.pop %v8336
  %v8338 = vmul.f32 %v8315, 1.442695
  %v8339 = vpow.pop %v8338
  %v8340 = vmul.f32 %v8316, 1.442695
  %v8341 = vpow.pop %v8340
  %v8342 = vmul.f32 %v8317, 1.442695
  %v8343 = vpow.pop %v8342
  %v8344 = vmul.f32 %v8318, 1.442695
  %v8345 = vpow.pop %v8344
  %v8346 = vmul.f32 %v8319, 1.442695
  %v8347 = vpow.pop %v8346
  %v8348 = vmul.f32 %v8320, 1.442695
  %v8349 = vpow.pop %v8348
  %v8350 = vmul.f32 %v8321, 1.442695
  %v8351 = vpow.pop %v8350
  %v8352 = vmul.f32 %v8322, 1.442695
  %v8353 = vpow.pop %v8352
  %v8354 = vmul.f32 %v8323, 1.442695
  %v8355 = vpow.pop %v8354
  %v8356 = vsub.f32 %v7753, %v8052
  %v8357 = vsub.f32 %v7759, %v8053
  %v8358 = vsub.f32 %v7765, %v8054
  %v8359 = vsub.f32 %v7771, %v8055
  %v8360 = vsub.f32 %v7777, %v8056
  %v8361 = vsub.f32 %v7783, %v8057
  %v8362 = vsub.f32 %v7789, %v8058
  %v8363 = vsub.f32 %v7795, %v8059
  %v8364 = vsub.f32 %v7801, %v8060
  %v8365 = vsub.f32 %v7807, %v8061
  %v8366 = vsub.f32 %v7813, %v8062
  %v8367 = vsub.f32 %v7819, %v8063
  %v8368 = vsub.f32 %v7825, %v8064
  %v8369 = vsub.f32 %v7831, %v8065
  %v8370 = vsub.f32 %v7837, %v8066
  %v8371 = vsub.f32 %v7843, %v8067
  %v8372 = vmul.f32 %v8356, 1.442695
  %v8373 = vpow.pop %v8372
  %v8374 = vmul.f32 %v8357, 1.442695
  %v8375 = vpow.pop %v8374
  %v8376 = vmul.f32 %v8358, 1.442695
  %v8377 = vpow.pop %v8376
  %v8378 = vmul.f32 %v8359, 1.442695
  %v8379 = vpow.pop %v8378
  %v8380 = vmul.f32 %v8360, 1.442695
  %v8381 = vpow.pop %v8380
  %v8382 = vmul.f32 %v8361, 1.442695
  %v8383 = vpow.pop %v8382
  %v8384 = vmul.f32 %v8362, 1.442695
  %v8385 = vpow.pop %v8384
  %v8386 = vmul.f32 %v8363, 1.442695
  %v8387 = vpow.pop %v8386
  %v8388 = vmul.f32 %v8364, 1.442695
  %v8389 = vpow.pop %v8388
  %v8390 = vmul.f32 %v8365, 1.442695
  %v8391 = vpow.pop %v8390
  %v8392 = vmul.f32 %v8366, 1.442695
  %v8393 = vpow.pop %v8392
  %v8394 = vmul.f32 %v8367, 1.442695
  %v8395 = vpow.pop %v8394
  %v8396 = vmul.f32 %v8368, 1.442695
  %v8397 = vpow.pop %v8396
  %v8398 = vmul.f32 %v8369, 1.442695
  %v8399 = vpow.pop %v8398
  %v8400 = vmul.f32 %v8370, 1.442695
  %v8401 = vpow.pop %v8400
  %v8402 = vmul.f32 %v8371, 1.442695
  %v8403 = vpow.pop %v8402
  %v8404 = vsub.f32 %v7865, %v8052
  %v8405 = vsub.f32 %v7871, %v8053
  %v8406 = vsub.f32 %v7877, %v8054
  %v8407 = vsub.f32 %v7883, %v8055
  %v8408 = vsub.f32 %v7889, %v8056
  %v8409 = vsub.f32 %v7895, %v8057
  %v8410 = vsub.f32 %v7901, %v8058
  %v8411 = vsub.f32 %v7907, %v8059
  %v8412 = vsub.f32 %v7913, %v8060
  %v8413 = vsub.f32 %v7919, %v8061
  %v8414 = vsub.f32 %v7925, %v8062
  %v8415 = vsub.f32 %v7931, %v8063
  %v8416 = vsub.f32 %v7937, %v8064
  %v8417 = vsub.f32 %v7943, %v8065
  %v8418 = vsub.f32 %v7949, %v8066
  %v8419 = vsub.f32 %v7955, %v8067
  %v8420 = vmul.f32 %v8404, 1.442695
  %v8421 = vpow.pop %v8420
  %v8422 = vmul.f32 %v8405, 1.442695
  %v8423 = vpow.pop %v8422
  %v8424 = vmul.f32 %v8406, 1.442695
  %v8425 = vpow.pop %v8424
  %v8426 = vmul.f32 %v8407, 1.442695
  %v8427 = vpow.pop %v8426
  %v8428 = vmul.f32 %v8408, 1.442695
  %v8429 = vpow.pop %v8428
  %v8430 = vmul.f32 %v8409, 1.442695
  %v8431 = vpow.pop %v8430
  %v8432 = vmul.f32 %v8410, 1.442695
  %v8433 = vpow.pop %v8432
  %v8434 = vmul.f32 %v8411, 1.442695
  %v8435 = vpow.pop %v8434
  %v8436 = vmul.f32 %v8412, 1.442695
  %v8437 = vpow.pop %v8436
  %v8438 = vmul.f32 %v8413, 1.442695
  %v8439 = vpow.pop %v8438
  %v8440 = vmul.f32 %v8414, 1.442695
  %v8441 = vpow.pop %v8440
  %v8442 = vmul.f32 %v8415, 1.442695
  %v8443 = vpow.pop %v8442
  %v8444 = vmul.f32 %v8416, 1.442695
  %v8445 = vpow.pop %v8444
  %v8446 = vmul.f32 %v8417, 1.442695
  %v8447 = vpow.pop %v8446
  %v8448 = vmul.f32 %v8418, 1.442695
  %v8449 = vpow.pop %v8448
  %v8450 = vmul.f32 %v8419, 1.442695
  %v8451 = vpow.pop %v8450
  %v8452 = vadd.f32 %v8085, %v8133
  %v8453 = vadd.f32 %v8087, %v8135
  %v8454 = vadd.f32 %v8089, %v8137
  %v8455 = vadd.f32 %v8091, %v8139
  %v8456 = vadd.f32 %v8093, %v8141
  %v8457 = vadd.f32 %v8095, %v8143
  %v8458 = vadd.f32 %v8097, %v8145
  %v8459 = vadd.f32 %v8099, %v8147
  %v8460 = vadd.f32 %v8101, %v8149
  %v8461 = vadd.f32 %v8103, %v8151
  %v8462 = vadd.f32 %v8105, %v8153
  %v8463 = vadd.f32 %v8107, %v8155
  %v8464 = vadd.f32 %v8109, %v8157
  %v8465 = vadd.f32 %v8111, %v8159
  %v8466 = vadd.f32 %v8113, %v8161
  %v8467 = vadd.f32 %v8115, %v8163
  %v8468 = vadd.f32 %v8452, %v8181
  %v8469 = vadd.f32 %v8453, %v8183
  %v8470 = vadd.f32 %v8454, %v8185
  %v8471 = vadd.f32 %v8455, %v8187
  %v8472 = vadd.f32 %v8456, %v8189
  %v8473 = vadd.f32 %v8457, %v8191
  %v8474 = vadd.f32 %v8458, %v8193
  %v8475 = vadd.f32 %v8459, %v8195
  %v8476 = vadd.f32 %v8460, %v8197
  %v8477 = vadd.f32 %v8461, %v8199
  %v8478 = vadd.f32 %v8462, %v8201
  %v8479 = vadd.f32 %v8463, %v8203
  %v8480 = vadd.f32 %v8464, %v8205
  %v8481 = vadd.f32 %v8465, %v8207
  %v8482 = vadd.f32 %v8466, %v8209
  %v8483 = vadd.f32 %v8467, %v8211
  %v8484 = vadd.f32 %v8468, %v8229
  %v8485 = vadd.f32 %v8469, %v8231
  %v8486 = vadd.f32 %v8470, %v8233
  %v8487 = vadd.f32 %v8471, %v8235
  %v8488 = vadd.f32 %v8472, %v8237
  %v8489 = vadd.f32 %v8473, %v8239
  %v8490 = vadd.f32 %v8474, %v8241
  %v8491 = vadd.f32 %v8475, %v8243
  %v8492 = vadd.f32 %v8476, %v8245
  %v8493 = vadd.f32 %v8477, %v8247
  %v8494 = vadd.f32 %v8478, %v8249
  %v8495 = vadd.f32 %v8479, %v8251
  %v8496 = vadd.f32 %v8480, %v8253
  %v8497 = vadd.f32 %v8481, %v8255
  %v8498 = vadd.f32 %v8482, %v8257
  %v8499 = vadd.f32 %v8483, %v8259
  %v8500 = vadd.f32 %v8484, %v8277
  %v8501 = vadd.f32 %v8485, %v8279
  %v8502 = vadd.f32 %v8486, %v8281
  %v8503 = vadd.f32 %v8487, %v8283
  %v8504 = vadd.f32 %v8488, %v8285
  %v8505 = vadd.f32 %v8489, %v8287
  %v8506 = vadd.f32 %v8490, %v8289
  %v8507 = vadd.f32 %v8491, %v8291
  %v8508 = vadd.f32 %v8492, %v8293
  %v8509 = vadd.f32 %v8493, %v8295
  %v8510 = vadd.f32 %v8494, %v8297
  %v8511 = vadd.f32 %v8495, %v8299
  %v8512 = vadd.f32 %v8496, %v8301
  %v8513 = vadd.f32 %v8497, %v8303
  %v8514 = vadd.f32 %v8498, %v8305
  %v8515 = vadd.f32 %v8499, %v8307
  %v8516 = vadd.f32 %v8500, %v8325
  %v8517 = vadd.f32 %v8501, %v8327
  %v8518 = vadd.f32 %v8502, %v8329
  %v8519 = vadd.f32 %v8503, %v8331
  %v8520 = vadd.f32 %v8504, %v8333
  %v8521 = vadd.f32 %v8505, %v8335
  %v8522 = vadd.f32 %v8506, %v8337
  %v8523 = vadd.f32 %v8507, %v8339
  %v8524 = vadd.f32 %v8508, %v8341
  %v8525 = vadd.f32 %v8509, %v8343
  %v8526 = vadd.f32 %v8510, %v8345
  %v8527 = vadd.f32 %v8511, %v8347
  %v8528 = vadd.f32 %v8512, %v8349
  %v8529 = vadd.f32 %v8513, %v8351
  %v8530 = vadd.f32 %v8514, %v8353
  %v8531 = vadd.f32 %v8515, %v8355
  %v8532 = vadd.f32 %v8516, %v8373
  %v8533 = vadd.f32 %v8517, %v8375
  %v8534 = vadd.f32 %v8518, %v8377
  %v8535 = vadd.f32 %v8519, %v8379
  %v8536 = vadd.f32 %v8520, %v8381
  %v8537 = vadd.f32 %v8521, %v8383
  %v8538 = vadd.f32 %v8522, %v8385
  %v8539 = vadd.f32 %v8523, %v8387
  %v8540 = vadd.f32 %v8524, %v8389
  %v8541 = vadd.f32 %v8525, %v8391
  %v8542 = vadd.f32 %v8526, %v8393
  %v8543 = vadd.f32 %v8527, %v8395
  %v8544 = vadd.f32 %v8528, %v8397
  %v8545 = vadd.f32 %v8529, %v8399
  %v8546 = vadd.f32 %v8530, %v8401
  %v8547 = vadd.f32 %v8531, %v8403
  %v8548 = vadd.f32 %v8532, %v8421
  %v8549 = vadd.f32 %v8533, %v8423
  %v8550 = vadd.f32 %v8534, %v8425
  %v8551 = vadd.f32 %v8535, %v8427
  %v8552 = vadd.f32 %v8536, %v8429
  %v8553 = vadd.f32 %v8537, %v8431
  %v8554 = vadd.f32 %v8538, %v8433
  %v8555 = vadd.f32 %v8539, %v8435
  %v8556 = vadd.f32 %v8540, %v8437
  %v8557 = vadd.f32 %v8541, %v8439
  %v8558 = vadd.f32 %v8542, %v8441
  %v8559 = vadd.f32 %v8543, %v8443
  %v8560 = vadd.f32 %v8544, %v8445
  %v8561 = vadd.f32 %v8545, %v8447
  %v8562 = vadd.f32 %v8546, %v8449
  %v8563 = vadd.f32 %v8547, %v8451
  %v8564 = vrcp.pop %v8548
  %v8565 = vmul.f32 %v8548, %v8564
  %v8566 = vsub.f32 1.0, %v8565
  %v8567 = vmul.f32 %v8564, %v8566
  %v8568 = vadd.f32 %v8564, %v8567
  %vm8569 = vweird.f32 %v8548
  %vm8570 = vweird.f32 %v8564
  %vm8571 = vmor %vm8569, %vm8570
  %v8572 = vsel %vm8571, %v8564, %v8568
  %v8573 = vand.u32 2147483647, %v8548
  %vm8574 = vcmp.eq.f32.partialorder %v8573, 8.507059e+37
  %v8575 = vand.u32 %v8548, 2147483648
  %v8576 = vor.u32 1.1754944e-38, %v8575
  %v8577 = vsel %vm8574, %v8576, %v8572
  %v8578 = vmul.f32 1.0, %v8577
  %v8579 = vrcp.pop %v8549
  %v8580 = vmul.f32 %v8549, %v8579
  %v8581 = vsub.f32 1.0, %v8580
  %v8582 = vmul.f32 %v8579, %v8581
  %v8583 = vadd.f32 %v8579, %v8582
  %vm8584 = vweird.f32 %v8549
  %vm8585 = vweird.f32 %v8579
  %vm8586 = vmor %vm8584, %vm8585
  %v8587 = vsel %vm8586, %v8579, %v8583
  %v8588 = vand.u32 2147483647, %v8549
  %vm8589 = vcmp.eq.f32.partialorder %v8588, 8.507059e+37
  %v8590 = vand.u32 %v8549, 2147483648
  %v8591 = vor.u32 1.1754944e-38, %v8590
  %v8592 = vsel %vm8589, %v8591, %v8587
  %v8593 = vmul.f32 1.0, %v8592
  %v8594 = vrcp.pop %v8550
  %v8595 = vmul.f32 %v8550, %v8594
  %v8596 = vsub.f32 1.0, %v8595
  %v8597 = vmul.f32 %v8594, %v8596
  %v8598 = vadd.f32 %v8594, %v8597
  %vm8599 = vweird.f32 %v8550
  %vm8600 = vweird.f32 %v8594
  %vm8601 = vmor %vm8599, %vm8600
  %v8602 = vsel %vm8601, %v8594, %v8598
  %v8603 = vand.u32 2147483647, %v8550
  %vm8604 = vcmp.eq.f32.partialorder %v8603, 8.507059e+37
  %v8605 = vand.u32 %v8550, 2147483648
  %v8606 = vor.u32 1.1754944e-38, %v8605
  %v8607 = vsel %vm8604, %v8606, %v8602
  %v8608 = vmul.f32 1.0, %v8607
  %v8609 = vrcp.pop %v8551
  %v8610 = vmul.f32 %v8551, %v8609
  %v8611 = vsub.f32 1.0, %v8610
  %v8612 = vmul.f32 %v8609, %v8611
  %v8613 = vadd.f32 %v8609, %v8612
  %vm8614 = vweird.f32 %v8551
  %vm8615 = vweird.f32 %v8609
  %vm8616 = vmor %vm8614, %vm8615
  %v8617 = vsel %vm8616, %v8609, %v8613
  %v8618 = vand.u32 2147483647, %v8551
  %vm8619 = vcmp.eq.f32.partialorder %v8618, 8.507059e+37
  %v8620 = vand.u32 %v8551, 2147483648
  %v8621 = vor.u32 1.1754944e-38, %v8620
  %v8622 = vsel %vm8619, %v8621, %v8617
  %v8623 = vmul.f32 1.0, %v8622
  %v8624 = vrcp.pop %v8552
  %v8625 = vmul.f32 %v8552, %v8624
  %v8626 = vsub.f32 1.0, %v8625
  %v8627 = vmul.f32 %v8624, %v8626
  %v8628 = vadd.f32 %v8624, %v8627
  %vm8629 = vweird.f32 %v8552
  %vm8630 = vweird.f32 %v8624
  %vm8631 = vmor %vm8629, %vm8630
  %v8632 = vsel %vm8631, %v8624, %v8628
  %v8633 = vand.u32 2147483647, %v8552
  %vm8634 = vcmp.eq.f32.partialorder %v8633, 8.507059e+37
  %v8635 = vand.u32 %v8552, 2147483648
  %v8636 = vor.u32 1.1754944e-38, %v8635
  %v8637 = vsel %vm8634, %v8636, %v8632
  %v8638 = vmul.f32 1.0, %v8637
  %v8639 = vrcp.pop %v8553
  %v8640 = vmul.f32 %v8553, %v8639
  %v8641 = vsub.f32 1.0, %v8640
  %v8642 = vmul.f32 %v8639, %v8641
  %v8643 = vadd.f32 %v8639, %v8642
  %vm8644 = vweird.f32 %v8553
  %vm8645 = vweird.f32 %v8639
  %vm8646 = vmor %vm8644, %vm8645
  %v8647 = vsel %vm8646, %v8639, %v8643
  %v8648 = vand.u32 2147483647, %v8553
  %vm8649 = vcmp.eq.f32.partialorder %v8648, 8.507059e+37
  %v8650 = vand.u32 %v8553, 2147483648
  %v8651 = vor.u32 1.1754944e-38, %v8650
  %v8652 = vsel %vm8649, %v8651, %v8647
  %v8653 = vmul.f32 1.0, %v8652
  %v8654 = vrcp.pop %v8554
  %v8655 = vmul.f32 %v8554, %v8654
  %v8656 = vsub.f32 1.0, %v8655
  %v8657 = vmul.f32 %v8654, %v8656
  %v8658 = vadd.f32 %v8654, %v8657
  %vm8659 = vweird.f32 %v8554
  %vm8660 = vweird.f32 %v8654
  %vm8661 = vmor %vm8659, %vm8660
  %v8662 = vsel %vm8661, %v8654, %v8658
  %v8663 = vand.u32 2147483647, %v8554
  %vm8664 = vcmp.eq.f32.partialorder %v8663, 8.507059e+37
  %v8665 = vand.u32 %v8554, 2147483648
  %v8666 = vor.u32 1.1754944e-38, %v8665
  %v8667 = vsel %vm8664, %v8666, %v8662
  %v8668 = vmul.f32 1.0, %v8667
  %v8669 = vrcp.pop %v8555
  %v8670 = vmul.f32 %v8555, %v8669
  %v8671 = vsub.f32 1.0, %v8670
  %v8672 = vmul.f32 %v8669, %v8671
  %v8673 = vadd.f32 %v8669, %v8672
  %vm8674 = vweird.f32 %v8555
  %vm8675 = vweird.f32 %v8669
  %vm8676 = vmor %vm8674, %vm8675
  %v8677 = vsel %vm8676, %v8669, %v8673
  %v8678 = vand.u32 2147483647, %v8555
  %vm8679 = vcmp.eq.f32.partialorder %v8678, 8.507059e+37
  %v8680 = vand.u32 %v8555, 2147483648
  %v8681 = vor.u32 1.1754944e-38, %v8680
  %v8682 = vsel %vm8679, %v8681, %v8677
  %v8683 = vmul.f32 1.0, %v8682
  %v8684 = vrcp.pop %v8556
  %v8685 = vmul.f32 %v8556, %v8684
  %v8686 = vsub.f32 1.0, %v8685
  %v8687 = vmul.f32 %v8684, %v8686
  %v8688 = vadd.f32 %v8684, %v8687
  %vm8689 = vweird.f32 %v8556
  %vm8690 = vweird.f32 %v8684
  %vm8691 = vmor %vm8689, %vm8690
  %v8692 = vsel %vm8691, %v8684, %v8688
  %v8693 = vand.u32 2147483647, %v8556
  %vm8694 = vcmp.eq.f32.partialorder %v8693, 8.507059e+37
  %v8695 = vand.u32 %v8556, 2147483648
  %v8696 = vor.u32 1.1754944e-38, %v8695
  %v8697 = vsel %vm8694, %v8696, %v8692
  %v8698 = vmul.f32 1.0, %v8697
  %v8699 = vrcp.pop %v8557
  %v8700 = vmul.f32 %v8557, %v8699
  %v8701 = vsub.f32 1.0, %v8700
  %v8702 = vmul.f32 %v8699, %v8701
  %v8703 = vadd.f32 %v8699, %v8702
  %vm8704 = vweird.f32 %v8557
  %vm8705 = vweird.f32 %v8699
  %vm8706 = vmor %vm8704, %vm8705
  %v8707 = vsel %vm8706, %v8699, %v8703
  %v8708 = vand.u32 2147483647, %v8557
  %vm8709 = vcmp.eq.f32.partialorder %v8708, 8.507059e+37
  %v8710 = vand.u32 %v8557, 2147483648
  %v8711 = vor.u32 1.1754944e-38, %v8710
  %v8712 = vsel %vm8709, %v8711, %v8707
  %v8713 = vmul.f32 1.0, %v8712
  %v8714 = vrcp.pop %v8558
  %v8715 = vmul.f32 %v8558, %v8714
  %v8716 = vsub.f32 1.0, %v8715
  %v8717 = vmul.f32 %v8714, %v8716
  %v8718 = vadd.f32 %v8714, %v8717
  %vm8719 = vweird.f32 %v8558
  %vm8720 = vweird.f32 %v8714
  %vm8721 = vmor %vm8719, %vm8720
  %v8722 = vsel %vm8721, %v8714, %v8718
  %v8723 = vand.u32 2147483647, %v8558
  %vm8724 = vcmp.eq.f32.partialorder %v8723, 8.507059e+37
  %v8725 = vand.u32 %v8558, 2147483648
  %v8726 = vor.u32 1.1754944e-38, %v8725
  %v8727 = vsel %vm8724, %v8726, %v8722
  %v8728 = vmul.f32 1.0, %v8727
  %v8729 = vrcp.pop %v8559
  %v8730 = vmul.f32 %v8559, %v8729
  %v8731 = vsub.f32 1.0, %v8730
  %v8732 = vmul.f32 %v8729, %v8731
  %v8733 = vadd.f32 %v8729, %v8732
  %vm8734 = vweird.f32 %v8559
  %vm8735 = vweird.f32 %v8729
  %vm8736 = vmor %vm8734, %vm8735
  %v8737 = vsel %vm8736, %v8729, %v8733
  %v8738 = vand.u32 2147483647, %v8559
  %vm8739 = vcmp.eq.f32.partialorder %v8738, 8.507059e+37
  %v8740 = vand.u32 %v8559, 2147483648
  %v8741 = vor.u32 1.1754944e-38, %v8740
  %v8742 = vsel %vm8739, %v8741, %v8737
  %v8743 = vmul.f32 1.0, %v8742
  %v8744 = vrcp.pop %v8560
  %v8745 = vmul.f32 %v8560, %v8744
  %v8746 = vsub.f32 1.0, %v8745
  %v8747 = vmul.f32 %v8744, %v8746
  %v8748 = vadd.f32 %v8744, %v8747
  %vm8749 = vweird.f32 %v8560
  %vm8750 = vweird.f32 %v8744
  %vm8751 = vmor %vm8749, %vm8750
  %v8752 = vsel %vm8751, %v8744, %v8748
  %v8753 = vand.u32 2147483647, %v8560
  %vm8754 = vcmp.eq.f32.partialorder %v8753, 8.507059e+37
  %v8755 = vand.u32 %v8560, 2147483648
  %v8756 = vor.u32 1.1754944e-38, %v8755
  %v8757 = vsel %vm8754, %v8756, %v8752
  %v8758 = vmul.f32 1.0, %v8757
  %v8759 = vrcp.pop %v8561
  %v8760 = vmul.f32 %v8561, %v8759
  %v8761 = vsub.f32 1.0, %v8760
  %v8762 = vmul.f32 %v8759, %v8761
  %v8763 = vadd.f32 %v8759, %v8762
  %vm8764 = vweird.f32 %v8561
  %vm8765 = vweird.f32 %v8759
  %vm8766 = vmor %vm8764, %vm8765
  %v8767 = vsel %vm8766, %v8759, %v8763
  %v8768 = vand.u32 2147483647, %v8561
  %vm8769 = vcmp.eq.f32.partialorder %v8768, 8.507059e+37
  %v8770 = vand.u32 %v8561, 2147483648
  %v8771 = vor.u32 1.1754944e-38, %v8770
  %v8772 = vsel %vm8769, %v8771, %v8767
  %v8773 = vmul.f32 1.0, %v8772
  %v8774 = vrcp.pop %v8562
  %v8775 = vmul.f32 %v8562, %v8774
  %v8776 = vsub.f32 1.0, %v8775
  %v8777 = vmul.f32 %v8774, %v8776
  %v8778 = vadd.f32 %v8774, %v8777
  %vm8779 = vweird.f32 %v8562
  %vm8780 = vweird.f32 %v8774
  %vm8781 = vmor %vm8779, %vm8780
  %v8782 = vsel %vm8781, %v8774, %v8778
  %v8783 = vand.u32 2147483647, %v8562
  %vm8784 = vcmp.eq.f32.partialorder %v8783, 8.507059e+37
  %v8785 = vand.u32 %v8562, 2147483648
  %v8786 = vor.u32 1.1754944e-38, %v8785
  %v8787 = vsel %vm8784, %v8786, %v8782
  %v8788 = vmul.f32 1.0, %v8787
  %v8789 = vrcp.pop %v8563
  %v8790 = vmul.f32 %v8563, %v8789
  %v8791 = vsub.f32 1.0, %v8790
  %v8792 = vmul.f32 %v8789, %v8791
  %v8793 = vadd.f32 %v8789, %v8792
  %vm8794 = vweird.f32 %v8563
  %vm8795 = vweird.f32 %v8789
  %vm8796 = vmor %vm8794, %vm8795
  %v8797 = vsel %vm8796, %v8789, %v8793
  %v8798 = vand.u32 2147483647, %v8563
  %vm8799 = vcmp.eq.f32.partialorder %v8798, 8.507059e+37
  %v8800 = vand.u32 %v8563, 2147483648
  %v8801 = vor.u32 1.1754944e-38, %v8800
  %v8802 = vsel %vm8799, %v8801, %v8797
  %v8803 = vmul.f32 1.0, %v8802
  %v8804 = vmul.f32 %v263, %v8085
  %v8805 = vmul.f32 %v316, %v8087
  %v8806 = vmul.f32 %v263, %v8089
  %v8807 = vmul.f32 %v316, %v8091
  %v8808 = vmul.f32 %v263, %v8093
  %v8809 = vmul.f32 %v316, %v8095
  %v8810 = vmul.f32 %v263, %v8097
  %v8811 = vmul.f32 %v316, %v8099
  %v8812 = vmul.f32 %v263, %v8101
  %v8813 = vmul.f32 %v316, %v8103
  %v8814 = vmul.f32 %v263, %v8105
  %v8815 = vmul.f32 %v316, %v8107
  %v8816 = vmul.f32 %v263, %v8109
  %v8817 = vmul.f32 %v316, %v8111
  %v8818 = vmul.f32 %v263, %v8113
  %v8819 = vmul.f32 %v316, %v8115
  %v8820 = vmul.f32 %v369, %v8133
  %v8821 = vmul.f32 %v422, %v8135
  %v8822 = vmul.f32 %v369, %v8137
  %v8823 = vmul.f32 %v422, %v8139
  %v8824 = vmul.f32 %v369, %v8141
  %v8825 = vmul.f32 %v422, %v8143
  %v8826 = vmul.f32 %v369, %v8145
  %v8827 = vmul.f32 %v422, %v8147
  %v8828 = vmul.f32 %v369, %v8149
  %v8829 = vmul.f32 %v422, %v8151
  %v8830 = vmul.f32 %v369, %v8153
  %v8831 = vmul.f32 %v422, %v8155
  %v8832 = vmul.f32 %v369, %v8157
  %v8833 = vmul.f32 %v422, %v8159
  %v8834 = vmul.f32 %v369, %v8161
  %v8835 = vmul.f32 %v422, %v8163
  %v8836 = vadd.f32 %v8804, %v8820
  %v8837 = vadd.f32 %v8805, %v8821
  %v8838 = vadd.f32 %v8806, %v8822
  %v8839 = vadd.f32 %v8807, %v8823
  %v8840 = vadd.f32 %v8808, %v8824
  %v8841 = vadd.f32 %v8809, %v8825
  %v8842 = vadd.f32 %v8810, %v8826
  %v8843 = vadd.f32 %v8811, %v8827
  %v8844 = vadd.f32 %v8812, %v8828
  %v8845 = vadd.f32 %v8813, %v8829
  %v8846 = vadd.f32 %v8814, %v8830
  %v8847 = vadd.f32 %v8815, %v8831
  %v8848 = vadd.f32 %v8816, %v8832
  %v8849 = vadd.f32 %v8817, %v8833
  %v8850 = vadd.f32 %v8818, %v8834
  %v8851 = vadd.f32 %v8819, %v8835
  %v8852 = vmul.f32 %v475, %v8181
  %v8853 = vmul.f32 %v528, %v8183
  %v8854 = vmul.f32 %v475, %v8185
  %v8855 = vmul.f32 %v528, %v8187
  %v8856 = vmul.f32 %v475, %v8189
  %v8857 = vmul.f32 %v528, %v8191
  %v8858 = vmul.f32 %v475, %v8193
  %v8859 = vmul.f32 %v528, %v8195
  %v8860 = vmul.f32 %v475, %v8197
  %v8861 = vmul.f32 %v528, %v8199
  %v8862 = vmul.f32 %v475, %v8201
  %v8863 = vmul.f32 %v528, %v8203
  %v8864 = vmul.f32 %v475, %v8205
  %v8865 = vmul.f32 %v528, %v8207
  %v8866 = vmul.f32 %v475, %v8209
  %v8867 = vmul.f32 %v528, %v8211
  %v8868 = vadd.f32 %v8836, %v8852
  %v8869 = vadd.f32 %v8837, %v8853
  %v8870 = vadd.f32 %v8838, %v8854
  %v8871 = vadd.f32 %v8839, %v8855
  %v8872 = vadd.f32 %v8840, %v8856
  %v8873 = vadd.f32 %v8841, %v8857
  %v8874 = vadd.f32 %v8842, %v8858
  %v8875 = vadd.f32 %v8843, %v8859
  %v8876 = vadd.f32 %v8844, %v8860
  %v8877 = vadd.f32 %v8845, %v8861
  %v8878 = vadd.f32 %v8846, %v8862
  %v8879 = vadd.f32 %v8847, %v8863
  %v8880 = vadd.f32 %v8848, %v8864
  %v8881 = vadd.f32 %v8849, %v8865
  %v8882 = vadd.f32 %v8850, %v8866
  %v8883 = vadd.f32 %v8851, %v8867
  %v8884 = vmul.f32 %v581, %v8229
  %v8885 = vmul.f32 %v634, %v8231
  %v8886 = vmul.f32 %v581, %v8233
  %v8887 = vmul.f32 %v634, %v8235
  %v8888 = vmul.f32 %v581, %v8237
  %v8889 = vmul.f32 %v634, %v8239
  %v8890 = vmul.f32 %v581, %v8241
  %v8891 = vmul.f32 %v634, %v8243
  %v8892 = vmul.f32 %v581, %v8245
  %v8893 = vmul.f32 %v634, %v8247
  %v8894 = vmul.f32 %v581, %v8249
  %v8895 = vmul.f32 %v634, %v8251
  %v8896 = vmul.f32 %v581, %v8253
  %v8897 = vmul.f32 %v634, %v8255
  %v8898 = vmul.f32 %v581, %v8257
  %v8899 = vmul.f32 %v634, %v8259
  %v8900 = vadd.f32 %v8868, %v8884
  %v8901 = vadd.f32 %v8869, %v8885
  %v8902 = vadd.f32 %v8870, %v8886
  %v8903 = vadd.f32 %v8871, %v8887
  %v8904 = vadd.f32 %v8872, %v8888
  %v8905 = vadd.f32 %v8873, %v8889
  %v8906 = vadd.f32 %v8874, %v8890
  %v8907 = vadd.f32 %v8875, %v8891
  %v8908 = vadd.f32 %v8876, %v8892
  %v8909 = vadd.f32 %v8877, %v8893
  %v8910 = vadd.f32 %v8878, %v8894
  %v8911 = vadd.f32 %v8879, %v8895
  %v8912 = vadd.f32 %v8880, %v8896
  %v8913 = vadd.f32 %v8881, %v8897
  %v8914 = vadd.f32 %v8882, %v8898
  %v8915 = vadd.f32 %v8883, %v8899
  %v8916 = vmul.f32 %v687, %v8277
  %v8917 = vmul.f32 %v740, %v8279
  %v8918 = vmul.f32 %v687, %v8281
  %v8919 = vmul.f32 %v740, %v8283
  %v8920 = vmul.f32 %v687, %v8285
  %v8921 = vmul.f32 %v740, %v8287
  %v8922 = vmul.f32 %v687, %v8289
  %v8923 = vmul.f32 %v740, %v8291
  %v8924 = vmul.f32 %v687, %v8293
  %v8925 = vmul.f32 %v740, %v8295
  %v8926 = vmul.f32 %v687, %v8297
  %v8927 = vmul.f32 %v740, %v8299
  %v8928 = vmul.f32 %v687, %v8301
  %v8929 = vmul.f32 %v740, %v8303
  %v8930 = vmul.f32 %v687, %v8305
  %v8931 = vmul.f32 %v740, %v8307
  %v8932 = vadd.f32 %v8900, %v8916
  %v8933 = vadd.f32 %v8901, %v8917
  %v8934 = vadd.f32 %v8902, %v8918
  %v8935 = vadd.f32 %v8903, %v8919
  %v8936 = vadd.f32 %v8904, %v8920
  %v8937 = vadd.f32 %v8905, %v8921
  %v8938 = vadd.f32 %v8906, %v8922
  %v8939 = vadd.f32 %v8907, %v8923
  %v8940 = vadd.f32 %v8908, %v8924
  %v8941 = vadd.f32 %v8909, %v8925
  %v8942 = vadd.f32 %v8910, %v8926
  %v8943 = vadd.f32 %v8911, %v8927
  %v8944 = vadd.f32 %v8912, %v8928
  %v8945 = vadd.f32 %v8913, %v8929
  %v8946 = vadd.f32 %v8914, %v8930
  %v8947 = vadd.f32 %v8915, %v8931
  %v8948 = vmul.f32 %v793, %v8325
  %v8949 = vmul.f32 %v846, %v8327
  %v8950 = vmul.f32 %v793, %v8329
  %v8951 = vmul.f32 %v846, %v8331
  %v8952 = vmul.f32 %v793, %v8333
  %v8953 = vmul.f32 %v846, %v8335
  %v8954 = vmul.f32 %v793, %v8337
  %v8955 = vmul.f32 %v846, %v8339
  %v8956 = vmul.f32 %v793, %v8341
  %v8957 = vmul.f32 %v846, %v8343
  %v8958 = vmul.f32 %v793, %v8345
  %v8959 = vmul.f32 %v846, %v8347
  %v8960 = vmul.f32 %v793, %v8349
  %v8961 = vmul.f32 %v846, %v8351
  %v8962 = vmul.f32 %v793, %v8353
  %v8963 = vmul.f32 %v846, %v8355
  %v8964 = vadd.f32 %v8932, %v8948
  %v8965 = vadd.f32 %v8933, %v8949
  %v8966 = vadd.f32 %v8934, %v8950
  %v8967 = vadd.f32 %v8935, %v8951
  %v8968 = vadd.f32 %v8936, %v8952
  %v8969 = vadd.f32 %v8937, %v8953
  %v8970 = vadd.f32 %v8938, %v8954
  %v8971 = vadd.f32 %v8939, %v8955
  %v8972 = vadd.f32 %v8940, %v8956
  %v8973 = vadd.f32 %v8941, %v8957
  %v8974 = vadd.f32 %v8942, %v8958
  %v8975 = vadd.f32 %v8943, %v8959
  %v8976 = vadd.f32 %v8944, %v8960
  %v8977 = vadd.f32 %v8945, %v8961
  %v8978 = vadd.f32 %v8946, %v8962
  %v8979 = vadd.f32 %v8947, %v8963
  %v8980 = vmul.f32 %v899, %v8373
  %v8981 = vmul.f32 %v952, %v8375
  %v8982 = vmul.f32 %v899, %v8377
  %v8983 = vmul.f32 %v952, %v8379
  %v8984 = vmul.f32 %v899, %v8381
  %v8985 = vmul.f32 %v952, %v8383
  %v8986 = vmul.f32 %v899, %v8385
  %v8987 = vmul.f32 %v952, %v8387
  %v8988 = vmul.f32 %v899, %v8389
  %v8989 = vmul.f32 %v952, %v8391
  %v8990 = vmul.f32 %v899, %v8393
  %v8991 = vmul.f32 %v952, %v8395
  %v8992 = vmul.f32 %v899, %v8397
  %v8993 = vmul.f32 %v952, %v8399
  %v8994 = vmul.f32 %v899, %v8401
  %v8995 = vmul.f32 %v952, %v8403
  %v8996 = vadd.f32 %v8964, %v8980
  %v8997 = vadd.f32 %v8965, %v8981
  %v8998 = vadd.f32 %v8966, %v8982
  %v8999 = vadd.f32 %v8967, %v8983
  %v9000 = vadd.f32 %v8968, %v8984
  %v9001 = vadd.f32 %v8969, %v8985
  %v9002 = vadd.f32 %v8970, %v8986
  %v9003 = vadd.f32 %v8971, %v8987
  %v9004 = vadd.f32 %v8972, %v8988
  %v9005 = vadd.f32 %v8973, %v8989
  %v9006 = vadd.f32 %v8974, %v8990
  %v9007 = vadd.f32 %v8975, %v8991
  %v9008 = vadd.f32 %v8976, %v8992
  %v9009 = vadd.f32 %v8977, %v8993
  %v9010 = vadd.f32 %v8978, %v8994
  %v9011 = vadd.f32 %v8979, %v8995
  %v9012 = vmul.f32 %v1005, %v8421
  %v9013 = vmul.f32 %v1058, %v8423
  %v9014 = vmul.f32 %v1005, %v8425
  %v9015 = vmul.f32 %v1058, %v8427
  %v9016 = vmul.f32 %v1005, %v8429
  %v9017 = vmul.f32 %v1058, %v8431
  %v9018 = vmul.f32 %v1005, %v8433
  %v9019 = vmul.f32 %v1058, %v8435
  %v9020 = vmul.f32 %v1005, %v8437
  %v9021 = vmul.f32 %v1058, %v8439
  %v9022 = vmul.f32 %v1005, %v8441
  %v9023 = vmul.f32 %v1058, %v8443
  %v9024 = vmul.f32 %v1005, %v8445
  %v9025 = vmul.f32 %v1058, %v8447
  %v9026 = vmul.f32 %v1005, %v8449
  %v9027 = vmul.f32 %v1058, %v8451
  %v9028 = vadd.f32 %v8996, %v9012
  %v9029 = vadd.f32 %v8997, %v9013
  %v9030 = vadd.f32 %v8998, %v9014
  %v9031 = vadd.f32 %v8999, %v9015
  %v9032 = vadd.f32 %v9000, %v9016
  %v9033 = vadd.f32 %v9001, %v9017
  %v9034 = vadd.f32 %v9002, %v9018
  %v9035 = vadd.f32 %v9003, %v9019
  %v9036 = vadd.f32 %v9004, %v9020
  %v9037 = vadd.f32 %v9005, %v9021
  %v9038 = vadd.f32 %v9006, %v9022
  %v9039 = vadd.f32 %v9007, %v9023
  %v9040 = vadd.f32 %v9008, %v9024
  %v9041 = vadd.f32 %v9009, %v9025
  %v9042 = vadd.f32 %v9010, %v9026
  %v9043 = vadd.f32 %v9011, %v9027
  %v9044 = vmul.f32 %v9028, %v8578
  %v9045 = vmul.f32 %v9029, %v8593
  %v9046 = vmul.f32 %v9030, %v8608
  %v9047 = vmul.f32 %v9031, %v8623
  %v9048 = vmul.f32 %v9032, %v8638
  %v9049 = vmul.f32 %v9033, %v8653
  %v9050 = vmul.f32 %v9034, %v8668
  %v9051 = vmul.f32 %v9035, %v8683
  %v9052 = vmul.f32 %v9036, %v8698
  %v9053 = vmul.f32 %v9037, %v8713
  %v9054 = vmul.f32 %v9038, %v8728
  %v9055 = vmul.f32 %v9039, %v8743
  %v9056 = vmul.f32 %v9040, %v8758
  %v9057 = vmul.f32 %v9041, %v8773
  %v9058 = vmul.f32 %v9042, %v8788
  %v9059 = vmul.f32 %v9043, %v8803
  %v9060 = vld [vmem:[%s3] sm:$0xff]
  %v9061 = vld [vmem:[%s3 + $0x8] sm:$0xff]
  %v9062 = vld [vmem:[%s3 + $0x10] sm:$0xff]
  %v9063 = vld [vmem:[%s3 + $0x18] sm:$0xff]
  %v9064 = vld [vmem:[%s4] sm:$0xff]
  %v9065 = vld [vmem:[%s4 + $0x8] sm:$0xff]
  %v9066 = vld [vmem:[%s4 + $0x10] sm:$0xff]
  %v9067 = vld [vmem:[%s4 + $0x18] sm:$0xff]
  %9069 = vset.pattern.permute.xlu0 0
  %9070 = vperm.xlu0 %9069, %v9064
  %v9071 = vpop.permute.xlu0 %9070
  %9074 = vset.pattern.permute.xlu0 0
  %9075 = vperm.xlu0 %9074, %v9065
  %v9076 = vpop.permute.xlu0 %9075
  %9079 = vset.pattern.permute.xlu0 0
  %9080 = vperm.xlu0 %9079, %v9066
  %v9081 = vpop.permute.xlu0 %9080
  %9084 = vset.pattern.permute.xlu0 0
  %9085 = vperm.xlu0 %9084, %v9067
  %v9086 = vpop.permute.xlu0 %9085
  %v9089 = vsel %vm175, %v9060, 0
  %v9092 = vsel %vm175, %v9061, 0
  %v9095 = vsel %vm175, %v9062, 0
  %v9098 = vsel %vm175, %v9063, 0
  %9100 = vmatpush.msra.mxu0 0.0
  %9101 = vmatpush.msra.mxu0 0.0
  %9102 = vmatpush.msra.mxu0 0.0
  %9103 = vmatpush.msra.mxu0 0.0
  %9104 = vmatpush.msra.mxu0 0.0
  %9105 = vmatpush.msra.mxu0 0.0
  %9106 = vmatpush.msra.mxu0 0.0
  %9107 = vmatpush.msra.mxu0 0.0
  %9108 = vmatpush.msra.mxu0 0.0
  %9109 = vmatpush.msra.mxu0 0.0
  %9110 = vmatpush.msra.mxu0 0.0
  %9111 = vmatpush.msra.mxu0 0.0
  %9112 = vmatpush.msra.mxu0 %v9044
  %9113 = vmatpush.msra.mxu0 %v7044
  %9114 = vmatpush.msra.mxu0 %v5044
  %9115 = vmatpush.msra.mxu0 %v3044
  %9116 = vmatmul.f32.gmra.mxu0 %v9089
  %v9117 = vpop.f32.mrf.mxu0
  %v9118 = vadd.f32 %v9071, %v9117
  %9119 = vmatmul.f32.gmra.mxu0 %v9092
  %v9120 = vpop.f32.mrf.mxu0
  %v9121 = vadd.f32 %v9076, %v9120
  %9122 = vmatmul.f32.gmra.mxu0 %v9095
  %v9123 = vpop.f32.mrf.mxu0
  %v9124 = vadd.f32 %v9081, %v9123
  %9125 = vmatmul.f32.gmra.mxu0 %v9098
  %v9126 = vpop.f32.mrf.mxu0
  %v9127 = vadd.f32 %v9086, %v9126
  %9128 = vdwg.mxu0
  %9129 = vmatpush.msra.mxu0 0.0
  %9130 = vmatpush.msra.mxu0 0.0
  %9131 = vmatpush.msra.mxu0 0.0
  %9132 = vmatpush.msra.mxu0 0.0
  %9133 = vmatpush.msra.mxu0 0.0
  %9134 = vmatpush.msra.mxu0 0.0
  %9135 = vmatpush.msra.mxu0 0.0
  %9136 = vmatpush.msra.mxu0 0.0
  %9137 = vmatpush.msra.mxu0 0.0
  %9138 = vmatpush.msra.mxu0 0.0
  %9139 = vmatpush.msra.mxu0 0.0
  %9140 = vmatpush.msra.mxu0 0.0
  %9141 = vmatpush.msra.mxu0 %v9045
  %9142 = vmatpush.msra.mxu0 %v7045
  %9143 = vmatpush.msra.mxu0 %v5045
  %9144 = vmatpush.msra.mxu0 %v3045
  %9145 = vmatmul.f32.gmra.mxu0 %v9089
  %v9146 = vpop.f32.mrf.mxu0
  %v9147 = vadd.f32 %v9071, %v9146
  %9148 = vmatmul.f32.gmra.mxu0 %v9092
  %v9149 = vpop.f32.mrf.mxu0
  %v9150 = vadd.f32 %v9076, %v9149
  %9151 = vmatmul.f32.gmra.mxu0 %v9095
  %v9152 = vpop.f32.mrf.mxu0
  %v9153 = vadd.f32 %v9081, %v9152
  %9154 = vmatmul.f32.gmra.mxu0 %v9098
  %v9155 = vpop.f32.mrf.mxu0
  %v9156 = vadd.f32 %v9086, %v9155
  %9157 = vdwg.mxu0
  %9158 = vmatpush.msra.mxu0 0.0
  %9159 = vmatpush.msra.mxu0 0.0
  %9160 = vmatpush.msra.mxu0 0.0
  %9161 = vmatpush.msra.mxu0 0.0
  %9162 = vmatpush.msra.mxu0 0.0
  %9163 = vmatpush.msra.mxu0 0.0
  %9164 = vmatpush.msra.mxu0 0.0
  %9165 = vmatpush.msra.mxu0 0.0
  %9166 = vmatpush.msra.mxu0 0.0
  %9167 = vmatpush.msra.mxu0 0.0
  %9168 = vmatpush.msra.mxu0 0.0
  %9169 = vmatpush.msra.mxu0 0.0
  %9170 = vmatpush.msra.mxu0 %v9046
  %9171 = vmatpush.msra.mxu0 %v7046
  %9172 = vmatpush.msra.mxu0 %v5046
  %9173 = vmatpush.msra.mxu0 %v3046
  %9174 = vmatmul.f32.gmra.mxu0 %v9089
  %v9175 = vpop.f32.mrf.mxu0
  %v9176 = vadd.f32 %v9071, %v9175
  %9177 = vmatmul.f32.gmra.mxu0 %v9092
  %v9178 = vpop.f32.mrf.mxu0
  %v9179 = vadd.f32 %v9076, %v9178
  %9180 = vmatmul.f32.gmra.mxu0 %v9095
  %v9181 = vpop.f32.mrf.mxu0
  %v9182 = vadd.f32 %v9081, %v9181
  %9183 = vmatmul.f32.gmra.mxu0 %v9098
  %v9184 = vpop.f32.mrf.mxu0
  %v9185 = vadd.f32 %v9086, %v9184
  %9186 = vdwg.mxu0
  %9187 = vmatpush.msra.mxu0 0.0
  %9188 = vmatpush.msra.mxu0 0.0
  %9189 = vmatpush.msra.mxu0 0.0
  %9190 = vmatpush.msra.mxu0 0.0
  %9191 = vmatpush.msra.mxu0 0.0
  %9192 = vmatpush.msra.mxu0 0.0
  %9193 = vmatpush.msra.mxu0 0.0
  %9194 = vmatpush.msra.mxu0 0.0
  %9195 = vmatpush.msra.mxu0 0.0
  %9196 = vmatpush.msra.mxu0 0.0
  %9197 = vmatpush.msra.mxu0 0.0
  %9198 = vmatpush.msra.mxu0 0.0
  %9199 = vmatpush.msra.mxu0 %v9047
  %9200 = vmatpush.msra.mxu0 %v7047
  %9201 = vmatpush.msra.mxu0 %v5047
  %9202 = vmatpush.msra.mxu0 %v3047
  %9203 = vmatmul.f32.gmra.mxu0 %v9089
  %v9204 = vpop.f32.mrf.mxu0
  %v9205 = vadd.f32 %v9071, %v9204
  %9206 = vmatmul.f32.gmra.mxu0 %v9092
  %v9207 = vpop.f32.mrf.mxu0
  %v9208 = vadd.f32 %v9076, %v9207
  %9209 = vmatmul.f32.gmra.mxu0 %v9095
  %v9210 = vpop.f32.mrf.mxu0
  %v9211 = vadd.f32 %v9081, %v9210
  %9212 = vmatmul.f32.gmra.mxu0 %v9098
  %v9213 = vpop.f32.mrf.mxu0
  %v9214 = vadd.f32 %v9086, %v9213
  %9215 = vdwg.mxu0
  %9216 = vmatpush.msra.mxu0 0.0
  %9217 = vmatpush.msra.mxu0 0.0
  %9218 = vmatpush.msra.mxu0 0.0
  %9219 = vmatpush.msra.mxu0 0.0
  %9220 = vmatpush.msra.mxu0 0.0
  %9221 = vmatpush.msra.mxu0 0.0
  %9222 = vmatpush.msra.mxu0 0.0
  %9223 = vmatpush.msra.mxu0 0.0
  %9224 = vmatpush.msra.mxu0 0.0
  %9225 = vmatpush.msra.mxu0 0.0
  %9226 = vmatpush.msra.mxu0 0.0
  %9227 = vmatpush.msra.mxu0 0.0
  %9228 = vmatpush.msra.mxu0 %v9048
  %9229 = vmatpush.msra.mxu0 %v7048
  %9230 = vmatpush.msra.mxu0 %v5048
  %9231 = vmatpush.msra.mxu0 %v3048
  %9232 = vmatmul.f32.gmra.mxu0 %v9089
  %v9233 = vpop.f32.mrf.mxu0
  %v9234 = vadd.f32 %v9071, %v9233
  %9235 = vmatmul.f32.gmra.mxu0 %v9092
  %v9236 = vpop.f32.mrf.mxu0
  %v9237 = vadd.f32 %v9076, %v9236
  %9238 = vmatmul.f32.gmra.mxu0 %v9095
  %v9239 = vpop.f32.mrf.mxu0
  %v9240 = vadd.f32 %v9081, %v9239
  %9241 = vmatmul.f32.gmra.mxu0 %v9098
  %v9242 = vpop.f32.mrf.mxu0
  %v9243 = vadd.f32 %v9086, %v9242
  %9244 = vdwg.mxu0
  %9245 = vmatpush.msra.mxu0 0.0
  %9246 = vmatpush.msra.mxu0 0.0
  %9247 = vmatpush.msra.mxu0 0.0
  %9248 = vmatpush.msra.mxu0 0.0
  %9249 = vmatpush.msra.mxu0 0.0
  %9250 = vmatpush.msra.mxu0 0.0
  %9251 = vmatpush.msra.mxu0 0.0
  %9252 = vmatpush.msra.mxu0 0.0
  %9253 = vmatpush.msra.mxu0 0.0
  %9254 = vmatpush.msra.mxu0 0.0
  %9255 = vmatpush.msra.mxu0 0.0
  %9256 = vmatpush.msra.mxu0 0.0
  %9257 = vmatpush.msra.mxu0 %v9049
  %9258 = vmatpush.msra.mxu0 %v7049
  %9259 = vmatpush.msra.mxu0 %v5049
  %9260 = vmatpush.msra.mxu0 %v3049
  %9261 = vmatmul.f32.gmra.mxu0 %v9089
  %v9262 = vpop.f32.mrf.mxu0
  %v9263 = vadd.f32 %v9071, %v9262
  %9264 = vmatmul.f32.gmra.mxu0 %v9092
  %v9265 = vpop.f32.mrf.mxu0
  %v9266 = vadd.f32 %v9076, %v9265
  %9267 = vmatmul.f32.gmra.mxu0 %v9095
  %v9268 = vpop.f32.mrf.mxu0
  %v9269 = vadd.f32 %v9081, %v9268
  %9270 = vmatmul.f32.gmra.mxu0 %v9098
  %v9271 = vpop.f32.mrf.mxu0
  %v9272 = vadd.f32 %v9086, %v9271
  %9273 = vdwg.mxu0
  %9274 = vmatpush.msra.mxu0 0.0
  %9275 = vmatpush.msra.mxu0 0.0
  %9276 = vmatpush.msra.mxu0 0.0
  %9277 = vmatpush.msra.mxu0 0.0
  %9278 = vmatpush.msra.mxu0 0.0
  %9279 = vmatpush.msra.mxu0 0.0
  %9280 = vmatpush.msra.mxu0 0.0
  %9281 = vmatpush.msra.mxu0 0.0
  %9282 = vmatpush.msra.mxu0 0.0
  %9283 = vmatpush.msra.mxu0 0.0
  %9284 = vmatpush.msra.mxu0 0.0
  %9285 = vmatpush.msra.mxu0 0.0
  %9286 = vmatpush.msra.mxu0 %v9050
  %9287 = vmatpush.msra.mxu0 %v7050
  %9288 = vmatpush.msra.mxu0 %v5050
  %9289 = vmatpush.msra.mxu0 %v3050
  %9290 = vmatmul.f32.gmra.mxu0 %v9089
  %v9291 = vpop.f32.mrf.mxu0
  %v9292 = vadd.f32 %v9071, %v9291
  %9293 = vmatmul.f32.gmra.mxu0 %v9092
  %v9294 = vpop.f32.mrf.mxu0
  %v9295 = vadd.f32 %v9076, %v9294
  %9296 = vmatmul.f32.gmra.mxu0 %v9095
  %v9297 = vpop.f32.mrf.mxu0
  %v9298 = vadd.f32 %v9081, %v9297
  %9299 = vmatmul.f32.gmra.mxu0 %v9098
  %v9300 = vpop.f32.mrf.mxu0
  %v9301 = vadd.f32 %v9086, %v9300
  %9302 = vdwg.mxu0
  %9303 = vmatpush.msra.mxu0 0.0
  %9304 = vmatpush.msra.mxu0 0.0
  %9305 = vmatpush.msra.mxu0 0.0
  %9306 = vmatpush.msra.mxu0 0.0
  %9307 = vmatpush.msra.mxu0 0.0
  %9308 = vmatpush.msra.mxu0 0.0
  %9309 = vmatpush.msra.mxu0 0.0
  %9310 = vmatpush.msra.mxu0 0.0
  %9311 = vmatpush.msra.mxu0 0.0
  %9312 = vmatpush.msra.mxu0 0.0
  %9313 = vmatpush.msra.mxu0 0.0
  %9314 = vmatpush.msra.mxu0 0.0
  %9315 = vmatpush.msra.mxu0 %v9051
  %9316 = vmatpush.msra.mxu0 %v7051
  %9317 = vmatpush.msra.mxu0 %v5051
  %9318 = vmatpush.msra.mxu0 %v3051
  %9319 = vmatmul.f32.gmra.mxu0 %v9089
  %v9320 = vpop.f32.mrf.mxu0
  %v9321 = vadd.f32 %v9071, %v9320
  %9322 = vmatmul.f32.gmra.mxu0 %v9092
  %v9323 = vpop.f32.mrf.mxu0
  %v9324 = vadd.f32 %v9076, %v9323
  %9325 = vmatmul.f32.gmra.mxu0 %v9095
  %v9326 = vpop.f32.mrf.mxu0
  %v9327 = vadd.f32 %v9081, %v9326
  %9328 = vmatmul.f32.gmra.mxu0 %v9098
  %v9329 = vpop.f32.mrf.mxu0
  %v9330 = vadd.f32 %v9086, %v9329
  %9331 = vdwg.mxu0
  %9332 = vmatpush.msra.mxu0 0.0
  %9333 = vmatpush.msra.mxu0 0.0
  %9334 = vmatpush.msra.mxu0 0.0
  %9335 = vmatpush.msra.mxu0 0.0
  %9336 = vmatpush.msra.mxu0 0.0
  %9337 = vmatpush.msra.mxu0 0.0
  %9338 = vmatpush.msra.mxu0 0.0
  %9339 = vmatpush.msra.mxu0 0.0
  %9340 = vmatpush.msra.mxu0 0.0
  %9341 = vmatpush.msra.mxu0 0.0
  %9342 = vmatpush.msra.mxu0 0.0
  %9343 = vmatpush.msra.mxu0 0.0
  %9344 = vmatpush.msra.mxu0 %v9052
  %9345 = vmatpush.msra.mxu0 %v7052
  %9346 = vmatpush.msra.mxu0 %v5052
  %9347 = vmatpush.msra.mxu0 %v3052
  %9348 = vmatmul.f32.gmra.mxu0 %v9089
  %v9349 = vpop.f32.mrf.mxu0
  %v9350 = vadd.f32 %v9071, %v9349
  %9351 = vmatmul.f32.gmra.mxu0 %v9092
  %v9352 = vpop.f32.mrf.mxu0
  %v9353 = vadd.f32 %v9076, %v9352
  %9354 = vmatmul.f32.gmra.mxu0 %v9095
  %v9355 = vpop.f32.mrf.mxu0
  %v9356 = vadd.f32 %v9081, %v9355
  %9357 = vmatmul.f32.gmra.mxu0 %v9098
  %v9358 = vpop.f32.mrf.mxu0
  %v9359 = vadd.f32 %v9086, %v9358
  %9360 = vdwg.mxu0
  %9361 = vmatpush.msra.mxu0 0.0
  %9362 = vmatpush.msra.mxu0 0.0
  %9363 = vmatpush.msra.mxu0 0.0
  %9364 = vmatpush.msra.mxu0 0.0
  %9365 = vmatpush.msra.mxu0 0.0
  %9366 = vmatpush.msra.mxu0 0.0
  %9367 = vmatpush.msra.mxu0 0.0
  %9368 = vmatpush.msra.mxu0 0.0
  %9369 = vmatpush.msra.mxu0 0.0
  %9370 = vmatpush.msra.mxu0 0.0
  %9371 = vmatpush.msra.mxu0 0.0
  %9372 = vmatpush.msra.mxu0 0.0
  %9373 = vmatpush.msra.mxu0 %v9053
  %9374 = vmatpush.msra.mxu0 %v7053
  %9375 = vmatpush.msra.mxu0 %v5053
  %9376 = vmatpush.msra.mxu0 %v3053
  %9377 = vmatmul.f32.gmra.mxu0 %v9089
  %v9378 = vpop.f32.mrf.mxu0
  %v9379 = vadd.f32 %v9071, %v9378
  %9380 = vmatmul.f32.gmra.mxu0 %v9092
  %v9381 = vpop.f32.mrf.mxu0
  %v9382 = vadd.f32 %v9076, %v9381
  %9383 = vmatmul.f32.gmra.mxu0 %v9095
  %v9384 = vpop.f32.mrf.mxu0
  %v9385 = vadd.f32 %v9081, %v9384
  %9386 = vmatmul.f32.gmra.mxu0 %v9098
  %v9387 = vpop.f32.mrf.mxu0
  %v9388 = vadd.f32 %v9086, %v9387
  %9389 = vdwg.mxu0
  %9390 = vmatpush.msra.mxu0 0.0
  %9391 = vmatpush.msra.mxu0 0.0
  %9392 = vmatpush.msra.mxu0 0.0
  %9393 = vmatpush.msra.mxu0 0.0
  %9394 = vmatpush.msra.mxu0 0.0
  %9395 = vmatpush.msra.mxu0 0.0
  %9396 = vmatpush.msra.mxu0 0.0
  %9397 = vmatpush.msra.mxu0 0.0
  %9398 = vmatpush.msra.mxu0 0.0
  %9399 = vmatpush.msra.mxu0 0.0
  %9400 = vmatpush.msra.mxu0 0.0
  %9401 = vmatpush.msra.mxu0 0.0
  %9402 = vmatpush.msra.mxu0 %v9054
  %9403 = vmatpush.msra.mxu0 %v7054
  %9404 = vmatpush.msra.mxu0 %v5054
  %9405 = vmatpush.msra.mxu0 %v3054
  %9406 = vmatmul.f32.gmra.mxu0 %v9089
  %v9407 = vpop.f32.mrf.mxu0
  %v9408 = vadd.f32 %v9071, %v9407
  %9409 = vmatmul.f32.gmra.mxu0 %v9092
  %v9410 = vpop.f32.mrf.mxu0
  %v9411 = vadd.f32 %v9076, %v9410
  %9412 = vmatmul.f32.gmra.mxu0 %v9095
  %v9413 = vpop.f32.mrf.mxu0
  %v9414 = vadd.f32 %v9081, %v9413
  %9415 = vmatmul.f32.gmra.mxu0 %v9098
  %v9416 = vpop.f32.mrf.mxu0
  %v9417 = vadd.f32 %v9086, %v9416
  %9418 = vdwg.mxu0
  %9419 = vmatpush.msra.mxu0 0.0
  %9420 = vmatpush.msra.mxu0 0.0
  %9421 = vmatpush.msra.mxu0 0.0
  %9422 = vmatpush.msra.mxu0 0.0
  %9423 = vmatpush.msra.mxu0 0.0
  %9424 = vmatpush.msra.mxu0 0.0
  %9425 = vmatpush.msra.mxu0 0.0
  %9426 = vmatpush.msra.mxu0 0.0
  %9427 = vmatpush.msra.mxu0 0.0
  %9428 = vmatpush.msra.mxu0 0.0
  %9429 = vmatpush.msra.mxu0 0.0
  %9430 = vmatpush.msra.mxu0 0.0
  %9431 = vmatpush.msra.mxu0 %v9055
  %9432 = vmatpush.msra.mxu0 %v7055
  %9433 = vmatpush.msra.mxu0 %v5055
  %9434 = vmatpush.msra.mxu0 %v3055
  %9435 = vmatmul.f32.gmra.mxu0 %v9089
  %v9436 = vpop.f32.mrf.mxu0
  %v9437 = vadd.f32 %v9071, %v9436
  %9438 = vmatmul.f32.gmra.mxu0 %v9092
  %v9439 = vpop.f32.mrf.mxu0
  %v9440 = vadd.f32 %v9076, %v9439
  %9441 = vmatmul.f32.gmra.mxu0 %v9095
  %v9442 = vpop.f32.mrf.mxu0
  %v9443 = vadd.f32 %v9081, %v9442
  %9444 = vmatmul.f32.gmra.mxu0 %v9098
  %v9445 = vpop.f32.mrf.mxu0
  %v9446 = vadd.f32 %v9086, %v9445
  %9447 = vdwg.mxu0
  %9448 = vmatpush.msra.mxu0 0.0
  %9449 = vmatpush.msra.mxu0 0.0
  %9450 = vmatpush.msra.mxu0 0.0
  %9451 = vmatpush.msra.mxu0 0.0
  %9452 = vmatpush.msra.mxu0 0.0
  %9453 = vmatpush.msra.mxu0 0.0
  %9454 = vmatpush.msra.mxu0 0.0
  %9455 = vmatpush.msra.mxu0 0.0
  %9456 = vmatpush.msra.mxu0 0.0
  %9457 = vmatpush.msra.mxu0 0.0
  %9458 = vmatpush.msra.mxu0 0.0
  %9459 = vmatpush.msra.mxu0 0.0
  %9460 = vmatpush.msra.mxu0 %v9056
  %9461 = vmatpush.msra.mxu0 %v7056
  %9462 = vmatpush.msra.mxu0 %v5056
  %9463 = vmatpush.msra.mxu0 %v3056
  %9464 = vmatmul.f32.gmra.mxu0 %v9089
  %v9465 = vpop.f32.mrf.mxu0
  %v9466 = vadd.f32 %v9071, %v9465
  %9467 = vmatmul.f32.gmra.mxu0 %v9092
  %v9468 = vpop.f32.mrf.mxu0
  %v9469 = vadd.f32 %v9076, %v9468
  %9470 = vmatmul.f32.gmra.mxu0 %v9095
  %v9471 = vpop.f32.mrf.mxu0
  %v9472 = vadd.f32 %v9081, %v9471
  %9473 = vmatmul.f32.gmra.mxu0 %v9098
  %v9474 = vpop.f32.mrf.mxu0
  %v9475 = vadd.f32 %v9086, %v9474
  %9476 = vdwg.mxu0
  %9477 = vmatpush.msra.mxu0 0.0
  %9478 = vmatpush.msra.mxu0 0.0
  %9479 = vmatpush.msra.mxu0 0.0
  %9480 = vmatpush.msra.mxu0 0.0
  %9481 = vmatpush.msra.mxu0 0.0
  %9482 = vmatpush.msra.mxu0 0.0
  %9483 = vmatpush.msra.mxu0 0.0
  %9484 = vmatpush.msra.mxu0 0.0
  %9485 = vmatpush.msra.mxu0 0.0
  %9486 = vmatpush.msra.mxu0 0.0
  %9487 = vmatpush.msra.mxu0 0.0
  %9488 = vmatpush.msra.mxu0 0.0
  %9489 = vmatpush.msra.mxu0 %v9057
  %9490 = vmatpush.msra.mxu0 %v7057
  %9491 = vmatpush.msra.mxu0 %v5057
  %9492 = vmatpush.msra.mxu0 %v3057
  %9493 = vmatmul.f32.gmra.mxu0 %v9089
  %v9494 = vpop.f32.mrf.mxu0
  %v9495 = vadd.f32 %v9071, %v9494
  %9496 = vmatmul.f32.gmra.mxu0 %v9092
  %v9497 = vpop.f32.mrf.mxu0
  %v9498 = vadd.f32 %v9076, %v9497
  %9499 = vmatmul.f32.gmra.mxu0 %v9095
  %v9500 = vpop.f32.mrf.mxu0
  %v9501 = vadd.f32 %v9081, %v9500
  %9502 = vmatmul.f32.gmra.mxu0 %v9098
  %v9503 = vpop.f32.mrf.mxu0
  %v9504 = vadd.f32 %v9086, %v9503
  %9505 = vdwg.mxu0
  %9506 = vmatpush.msra.mxu0 0.0
  %9507 = vmatpush.msra.mxu0 0.0
  %9508 = vmatpush.msra.mxu0 0.0
  %9509 = vmatpush.msra.mxu0 0.0
  %9510 = vmatpush.msra.mxu0 0.0
  %9511 = vmatpush.msra.mxu0 0.0
  %9512 = vmatpush.msra.mxu0 0.0
  %9513 = vmatpush.msra.mxu0 0.0
  %9514 = vmatpush.msra.mxu0 0.0
  %9515 = vmatpush.msra.mxu0 0.0
  %9516 = vmatpush.msra.mxu0 0.0
  %9517 = vmatpush.msra.mxu0 0.0
  %9518 = vmatpush.msra.mxu0 %v9058
  %9519 = vmatpush.msra.mxu0 %v7058
  %9520 = vmatpush.msra.mxu0 %v5058
  %9521 = vmatpush.msra.mxu0 %v3058
  %9522 = vmatmul.f32.gmra.mxu0 %v9089
  %v9523 = vpop.f32.mrf.mxu0
  %v9524 = vadd.f32 %v9071, %v9523
  %9525 = vmatmul.f32.gmra.mxu0 %v9092
  %v9526 = vpop.f32.mrf.mxu0
  %v9527 = vadd.f32 %v9076, %v9526
  %9528 = vmatmul.f32.gmra.mxu0 %v9095
  %v9529 = vpop.f32.mrf.mxu0
  %v9530 = vadd.f32 %v9081, %v9529
  %9531 = vmatmul.f32.gmra.mxu0 %v9098
  %v9532 = vpop.f32.mrf.mxu0
  %v9533 = vadd.f32 %v9086, %v9532
  %9534 = vdwg.mxu0
  %9535 = vmatpush.msra.mxu0 0.0
  %9536 = vmatpush.msra.mxu0 0.0
  %9537 = vmatpush.msra.mxu0 0.0
  %9538 = vmatpush.msra.mxu0 0.0
  %9539 = vmatpush.msra.mxu0 0.0
  %9540 = vmatpush.msra.mxu0 0.0
  %9541 = vmatpush.msra.mxu0 0.0
  %9542 = vmatpush.msra.mxu0 0.0
  %9543 = vmatpush.msra.mxu0 0.0
  %9544 = vmatpush.msra.mxu0 0.0
  %9545 = vmatpush.msra.mxu0 0.0
  %9546 = vmatpush.msra.mxu0 0.0
  %9547 = vmatpush.msra.mxu0 %v9059
  %9548 = vmatpush.msra.mxu0 %v7059
  %9549 = vmatpush.msra.mxu0 %v5059
  %9550 = vmatpush.msra.mxu0 %v3059
  %9551 = vmatmul.f32.gmra.mxu0 %v9089
  %v9552 = vpop.f32.mrf.mxu0
  %v9553 = vadd.f32 %v9071, %v9552
  %9554 = vmatmul.f32.gmra.mxu0 %v9092
  %v9555 = vpop.f32.mrf.mxu0
  %v9556 = vadd.f32 %v9076, %v9555
  %9557 = vmatmul.f32.gmra.mxu0 %v9095
  %v9558 = vpop.f32.mrf.mxu0
  %v9559 = vadd.f32 %v9081, %v9558
  %9560 = vmatmul.f32.gmra.mxu0 %v9098
  %v9561 = vpop.f32.mrf.mxu0
  %v9562 = vadd.f32 %v9086, %v9561
  %9563 = vdwg.mxu0
  %9564 = vst [vmem:[%s5] sm:$0xff] %v9118
  %9565 = vst [vmem:[%s5 + $0x8] sm:$0xff] %v9147
  %9566 = vst [vmem:[%s5 + $0x10] sm:$0xff] %v9121
  %9567 = vst [vmem:[%s5 + $0x18] sm:$0xff] %v9150
  %9568 = vst [vmem:[%s5 + $0x20] sm:$0xff] %v9124
  %9569 = vst [vmem:[%s5 + $0x28] sm:$0xff] %v9153
  %9570 = vst [vmem:[%s5 + $0x30] sm:$0xff] %v9127
  %9571 = vst [vmem:[%s5 + $0x38] sm:$0xff] %v9156
  %s9572 = scalar_lea.vmem %s5, 64
  %9573 = vst [vmem:[%s9572] sm:$0xff] %v9176
  %9574 = vst [vmem:[%s9572 + $0x8] sm:$0xff] %v9205
  %9575 = vst [vmem:[%s9572 + $0x10] sm:$0xff] %v9179
  %9576 = vst [vmem:[%s9572 + $0x18] sm:$0xff] %v9208
  %9577 = vst [vmem:[%s9572 + $0x20] sm:$0xff] %v9182
  %9578 = vst [vmem:[%s9572 + $0x28] sm:$0xff] %v9211
  %9579 = vst [vmem:[%s9572 + $0x30] sm:$0xff] %v9185
  %9580 = vst [vmem:[%s9572 + $0x38] sm:$0xff] %v9214
  %s9581 = scalar_lea.vmem %s5, 128
  %9582 = vst [vmem:[%s9581] sm:$0xff] %v9234
  %9583 = vst [vmem:[%s9581 + $0x8] sm:$0xff] %v9263
  %9584 = vst [vmem:[%s9581 + $0x10] sm:$0xff] %v9237
  %9585 = vst [vmem:[%s9581 + $0x18] sm:$0xff] %v9266
  %9586 = vst [vmem:[%s9581 + $0x20] sm:$0xff] %v9240
  %9587 = vst [vmem:[%s9581 + $0x28] sm:$0xff] %v9269
  %9588 = vst [vmem:[%s9581 + $0x30] sm:$0xff] %v9243
  %9589 = vst [vmem:[%s9581 + $0x38] sm:$0xff] %v9272
  %s9590 = scalar_lea.vmem %s5, 192
  %9591 = vst [vmem:[%s9590] sm:$0xff] %v9292
  %9592 = vst [vmem:[%s9590 + $0x8] sm:$0xff] %v9321
  %9593 = vst [vmem:[%s9590 + $0x10] sm:$0xff] %v9295
  %9594 = vst [vmem:[%s9590 + $0x18] sm:$0xff] %v9324
  %9595 = vst [vmem:[%s9590 + $0x20] sm:$0xff] %v9298
  %9596 = vst [vmem:[%s9590 + $0x28] sm:$0xff] %v9327
  %9597 = vst [vmem:[%s9590 + $0x30] sm:$0xff] %v9301
  %9598 = vst [vmem:[%s9590 + $0x38] sm:$0xff] %v9330
  %s9599 = scalar_lea.vmem %s5, 256
  %9600 = vst [vmem:[%s9599] sm:$0xff] %v9350
  %9601 = vst [vmem:[%s9599 + $0x8] sm:$0xff] %v9379
  %9602 = vst [vmem:[%s9599 + $0x10] sm:$0xff] %v9353
  %9603 = vst [vmem:[%s9599 + $0x18] sm:$0xff] %v9382
  %9604 = vst [vmem:[%s9599 + $0x20] sm:$0xff] %v9356
  %9605 = vst [vmem:[%s9599 + $0x28] sm:$0xff] %v9385
  %9606 = vst [vmem:[%s9599 + $0x30] sm:$0xff] %v9359
  %9607 = vst [vmem:[%s9599 + $0x38] sm:$0xff] %v9388
  %s9608 = scalar_lea.vmem %s5, 320
  %9609 = vst [vmem:[%s9608] sm:$0xff] %v9408
  %9610 = vst [vmem:[%s9608 + $0x8] sm:$0xff] %v9437
  %9611 = vst [vmem:[%s9608 + $0x10] sm:$0xff] %v9411
  %9612 = vst [vmem:[%s9608 + $0x18] sm:$0xff] %v9440
  %9613 = vst [vmem:[%s9608 + $0x20] sm:$0xff] %v9414
  %9614 = vst [vmem:[%s9608 + $0x28] sm:$0xff] %v9443
  %9615 = vst [vmem:[%s9608 + $0x30] sm:$0xff] %v9417
  %9616 = vst [vmem:[%s9608 + $0x38] sm:$0xff] %v9446
  %s9617 = scalar_lea.vmem %s5, 384
  %9618 = vst [vmem:[%s9617] sm:$0xff] %v9466
  %9619 = vst [vmem:[%s9617 + $0x8] sm:$0xff] %v9495
  %9620 = vst [vmem:[%s9617 + $0x10] sm:$0xff] %v9469
  %9621 = vst [vmem:[%s9617 + $0x18] sm:$0xff] %v9498
  %9622 = vst [vmem:[%s9617 + $0x20] sm:$0xff] %v9472
  %9623 = vst [vmem:[%s9617 + $0x28] sm:$0xff] %v9501
  %9624 = vst [vmem:[%s9617 + $0x30] sm:$0xff] %v9475
  %9625 = vst [vmem:[%s9617 + $0x38] sm:$0xff] %v9504
  %s9626 = scalar_lea.vmem %s5, 448
  %9627 = vst [vmem:[%s9626] sm:$0xff] %v9524
  %9628 = vst [vmem:[%s9626 + $0x8] sm:$0xff] %v9553
  %9629 = vst [vmem:[%s9626 + $0x10] sm:$0xff] %v9527
  %9630 = vst [vmem:[%s9626 + $0x18] sm:$0xff] %v9556
  %9631 = vst [vmem:[%s9626 + $0x20] sm:$0xff] %v9530
  %9632 = vst [vmem:[%s9626 + $0x28] sm:$0xff] %v9559
  %9633 = vst [vmem:[%s9626 + $0x30] sm:$0xff] %v9533
  %9634 = vst [vmem:[%s9626 + $0x38] sm:$0xff] %v9562
  // Predicated region
  $region22: #{attention_block_nlp_forward.1} parent=0 // pred_check
    _
  $region23: #{attention_block_nlp_forward.1} parent=0 // pred_check_branch
    %9636 = sbr.rel (0) target = $region25
  $region24: #{attention_block_nlp_forward.1} parent=0 // pred_region
    _
  $region25: #{attention_block_nlp_forward.1} parent=0 // pred_fallthru
    _
  // Predicated region
  $region26: #{attention_block_nlp_forward.1} parent=0 // pred_check
    _
  $region27: #{attention_block_nlp_forward.1} parent=0 // pred_check_branch
    %9638 = sbr.rel (0) target = $region29
  $region28: #{attention_block_nlp_forward.1} parent=0 // pred_region
    _
  $region29: #{attention_block_nlp_forward.1} parent=0 // pred_fallthru
    _

</llo_original>
